<compile_context>
chip_gen: v7x
topology: tpu7x:2x2x1
jax: 0.10.0
libtpu: 0.0.40
codegen_flags: <defaults>
</compile_context>

<pallas_src>
import functools

import jax
import jax.numpy as jnp
from jax.experimental import pallas as pl
from jax.experimental.pallas import tpu as pltpu

NEG_SLOPE = 0.01  # nn.LeakyReLU default negative_slope


# ---------------------------------------------------------------------------
# Kernel 1: rel_embedding  (Conv3x3 -> LeakyReLU -> Conv3x3), fused per batch-block.
# ---------------------------------------------------------------------------
def rel_embedding_kernel(x_ref, w1_ref, b1_ref, w2_ref, b2_ref, o_ref, buf_ref,
                         *, pad):
    # x_ref  : (Nb, H, W, C)  f32   unpadded NHWC input block
    # w*_ref : (3, 3, C, C)   bf16  conv weights, (kH, kW, Cin, Cout)
    # b*_ref : (1, C)         f32   conv biases
    # o_ref  : (Nb, H, W, C)  f32   output block
    # buf_ref: (Nb, L, C)     f32   VMEM scratch: flattened halo buffer
    #          layout [left pad | zero row (W) | H*W interior | zero row (W) | right pad]
    #          with the interior starting at a sublane-aligned offset (pad + W).
    Nb, H, W, C = o_ref.shape
    HW = H * W
    M = Nb * HW
    P = pad

    # Column index of every flattened pixel.  The W-axis halo is handled
    # logically (mask the wrap garbage) instead of with a physically padded,
    # misaligned store.  Pure VPU work that overlaps with the MXU matmuls.
    x_id = jax.lax.broadcasted_iota(jnp.int32, (Nb, H, W, C), 2).reshape(Nb, HW, C)
    not_left_edge = x_id > 0          # valid when the tap looks one column left
    not_right_edge = x_id < (W - 1)   # valid when the tap looks one column right

    def conv3x3(w_ref):
        # 3x3 "SAME" conv as 9 shifted (M, C) x (C, C) bf16 MXU matmuls,
        # f32 accumulation.  Patches are read straight from the halo buffer
        # (static ref slices), never materialising the whole block.
        acc = jnp.zeros((M, C), jnp.float32)
        for dy in range(3):
            for dx in range(3):
                off = P + dy * W + (dx - 1)            # static flat offset of this tap
                patch = buf_ref[:, off:off + HW, :].astype(jnp.bfloat16)
                if dx == 0:    # x == 0 rows read wrap garbage -> mask to zero
                    patch = jnp.where(not_left_edge, patch, jnp.zeros_like(patch))
                elif dx == 2:  # x == W-1 rows read wrap garbage -> mask to zero
                    patch = jnp.where(not_right_edge, patch, jnp.zeros_like(patch))
                acc = acc + jnp.dot(patch.reshape(M, C), w_ref[dy, dx],
                                    preferred_element_type=jnp.float32)
        return acc

    # Zero only the two halo rows (y = -1 and y = H).  The interior is fully
    # rewritten below, so no full-scratch zero fill is needed.  Done every grid
    # step (2*W rows, tiny) so the kernel stays correct under megacore
    # ("parallel") partitioning of the grid.
    zero_row = jnp.zeros((Nb, W, C), jnp.float32)
    buf_ref[:, P:P + W, :] = zero_row
    buf_ref[:, P + W + HW:P + 2 * W + HW, :] = zero_row

    # Stage the input block into the interior (sublane-aligned store).
    buf_ref[:, P + W:P + W + HW, :] = x_ref[...].reshape(Nb, HW, C)

    # ---- conv1 + bias + LeakyReLU (f32) ----
    y = conv3x3(w1_ref) + b1_ref[...]
    y = jnp.where(y > 0, y, NEG_SLOPE * y)

    # Re-stage the conv1 activation into the same interior (aligned store; the
    # halo rows are still zero) and run conv2.
    buf_ref[:, P + W:P + W + HW, :] = y.reshape(Nb, HW, C)
    out = conv3x3(w2_ref) + b2_ref[...]

    o_ref[...] = out.reshape(Nb, H, W, C).astype(o_ref.dtype)


def rel_embedding(spatial_rel_nchw, w1, b1, w2, b2):
    """nn.Sequential(Conv2d(256,256,3,1,1), LeakyReLU(), Conv2d(256,256,3,1,1)).

    spatial_rel_nchw: (N, 256, H, W) float32 (PyTorch NCHW layout)
    w1, w2: (256, 256, 3, 3) PyTorch OIHW;  b1, b2: (256,)
    returns (N, 256, H, W) float32
    """
    N, C, H, W = spatial_rel_nchw.shape
    x = jnp.transpose(spatial_rel_nchw, (0, 2, 3, 1)).astype(jnp.float32)  # NHWC
    # bf16 operands for the MXU (f32 accumulation happens inside the kernel).
    w1k = jnp.transpose(w1, (2, 3, 1, 0)).astype(jnp.bfloat16)  # (kH,kW,Cin,Cout)
    w2k = jnp.transpose(w2, (2, 3, 1, 0)).astype(jnp.bfloat16)
    b1k = b1.reshape(1, C).astype(jnp.float32)
    b2k = b2.reshape(1, C).astype(jnp.float32)

    # Fold batch elements into one grid step so the matmul M dimension
    # (nb * H * W) is a healthy fraction of the MXU width without blowing vregs.
    nb = 1
    for d in range(1, N + 1):
        if N % d == 0 and d * H * W <= 256:
            nb = d
    # TODO(synk): for production feature-map sizes add an H-tile grid axis with
    # a 1-row halo (and single-buffer the grid-invariant weights via
    # pipeline_mode=pl.Buffered(1)) to bound VMEM on v7x / v5e.

    # Flat halo-buffer geometry:
    #   [left pad (P) | zero row (W) | H*W interior | zero row (W) | right pad]
    # P is chosen so the interior starts at a sublane-aligned offset (P + W) and
    # the most-negative tap offset (P - 1) stays in bounds.
    pad = (-W) % 8
    if pad == 0:
        pad = 8
    buf_len = pad + (H + 2) * W + 1
    buf_len = ((buf_len + 7) // 8) * 8

    kernel = functools.partial(rel_embedding_kernel, pad=pad)

    out_nhwc = pl.pallas_call(
        kernel,
        out_shape=jax.ShapeDtypeStruct((N, H, W, C), jnp.float32),
        grid_spec=pltpu.PrefetchScalarGridSpec(
            num_scalar_prefetch=0,
            grid=(N // nb,),
            in_specs=[
                pl.BlockSpec((nb, H, W, C), lambda n: (n, 0, 0, 0)),
                # grid-invariant weights / biases (constant index map => no re-DMA)
                pl.BlockSpec((3, 3, C, C), lambda n: (0, 0, 0, 0)),
                pl.BlockSpec((1, C), lambda n: (0, 0)),
                pl.BlockSpec((3, 3, C, C), lambda n: (0, 0, 0, 0)),
                pl.BlockSpec((1, C), lambda n: (0, 0)),
            ],
            out_specs=pl.BlockSpec((nb, H, W, C), lambda n: (n, 0, 0, 0)),
            scratch_shapes=[pltpu.VMEM((nb, buf_len, C), jnp.float32)],
        ),
        compiler_params=pltpu.CompilerParams(
            dimension_semantics=("parallel",),
            vmem_limit_bytes=48 * 1024 * 1024,
        ),
    )(x, w1k, b1k, w2k, b2k)
    return jnp.transpose(out_nhwc, (0, 3, 1, 2))  # back to NCHW


# ---------------------------------------------------------------------------
# Kernel 2: regressed_pts = sigmoid(pts_regressor(img)) * (max_z - min_z) + min_z
# (only the elementwise scaling; the SynSin UNet regressor is external)
# ---------------------------------------------------------------------------
def depth_scale_kernel(x_ref, o_ref, *, min_z, max_z):
    x = x_ref[...]
    # Numerically stable sigmoid via tanh (EUP op): sigmoid(x) = 0.5*(tanh(x/2)+1).
    s = 0.5 * (jnp.tanh(0.5 * x) + 1.0)
    o_ref[...] = s * (max_z - min_z) + min_z


def regressed_pts(regressor_logits_nchw, min_z, max_z):
    # TODO(synk): SynSin pts_regressor (UNet) has no definition here; this
    # kernel only implements the documented sigmoid/affine depth mapping.
    N = regressor_logits_nchw.shape[0]
    H, W = regressor_logits_nchw.shape[2], regressor_logits_nchw.shape[3]
    # Lane-dense layout: (N, H*W) so loads/stores are full-lane.
    x = regressor_logits_nchw.reshape(N, H * W).astype(jnp.float32)
    kernel = functools.partial(depth_scale_kernel,
                               min_z=float(min_z), max_z=float(max_z))
    out = pl.pallas_call(
        kernel,
        out_shape=jax.ShapeDtypeStruct((N, H * W), jnp.float32),
        grid=(1,),
        in_specs=[pl.BlockSpec((N, H * W), lambda i: (0, 0))],
        out_specs=pl.BlockSpec((N, H * W), lambda i: (0, 0)),
    )(x)
    return out.reshape(N, 1, H, W)


# ---------------------------------------------------------------------------
# RelTrans-forward equivalent (tractable subset)
# ---------------------------------------------------------------------------
def rel_trans_forward(batch, params, *, min_z=1.0, max_z=10.0):
    # TODO(synk): RSModel relationship_spatializer is undefined -> 'spatial_rel'
    # is taken directly from the batch instead of being computed from
    # (rel_features, bbox, [W, W]).
    spatial_rel = batch["spatial_rel"]

    emb = rel_embedding(spatial_rel,
                        params["w1"], params["b1"],
                        params["w2"], params["b2"])

    pts3d = regressed_pts(batch["pts_regressor_logits"], min_z, max_z)

    # TODO(synk): pts_transformer.forward_justpts (point-cloud splatting) and
    # Reprojector have no definitions; gen_fs / fs_result cannot be computed.
    fs_result = emb
    return fs_result, pts3d


# ---------------------------------------------------------------------------
# Pure-JAX reference with the same bf16-operand / f32-accumulate policy
# ---------------------------------------------------------------------------
def ref_rel_embedding(x, w1, b1, w2, b2):
    dn = ("NCHW", "OIHW", "NCHW")
    y = jax.lax.conv_general_dilated(
        x.astype(jnp.bfloat16), w1.astype(jnp.bfloat16), (1, 1), "SAME",
        dimension_numbers=dn, preferred_element_type=jnp.float32)
    y = y + b1[None, :, None, None]
    y = jnp.where(y > 0, y, NEG_SLOPE * y)
    y = jax.lax.conv_general_dilated(
        y.astype(jnp.bfloat16), w2.astype(jnp.bfloat16), (1, 1), "SAME",
        dimension_numbers=dn, preferred_element_type=jnp.float32)
    return y + b2[None, :, None, None]


if __name__ == "__main__":
    key = jax.random.PRNGKey(0)
    k1, k2, k3, k4, k5, k6 = jax.random.split(key, 6)

    N, C, H, W = 2, 256, 8, 8          # C=256 fixed by the module; small spatial
    IMG_H = IMG_W = 16

    # Deterministic parameter init (module __init__ gives the shapes).
    params = {
        "w1": jax.random.normal(k1, (C, C, 3, 3), jnp.float32) * 0.02,
        "b1": jax.random.normal(k2, (C,), jnp.float32) * 0.02,
        "w2": jax.random.normal(k3, (C, C, 3, 3), jnp.float32) * 0.02,
        "b2": jax.random.normal(k4, (C,), jnp.float32) * 0.02,
    }

    batch = {
        "spatial_rel": jax.random.normal(k5, (N, C, H, W), jnp.float32),
        "pts_regressor_logits": jax.random.normal(k6, (N, 1, IMG_H, IMG_W),
                                                  jnp.float32),
    }

    fs_result, pts3d = rel_trans_forward(batch, params, min_z=1.0, max_z=10.0)
    fs_result = jax.block_until_ready(fs_result)
    pts3d = jax.block_until_ready(pts3d)

    assert fs_result.shape == (N, C, H, W)
    assert pts3d.shape == (N, 1, IMG_H, IMG_W)

    # Verify the Pallas conv-lrelu-conv against the XLA reference (same
    # bf16-in / f32-accumulate precision policy as the kernel).
    ref = ref_rel_embedding(batch["spatial_rel"], params["w1"], params["b1"],
                            params["w2"], params["b2"])
    assert jnp.allclose(fs_result, ref, atol=2e-3, rtol=2e-3), "rel_embedding mismatch"

    # Verify the depth-scale kernel.
    ref_pts = jax.nn.sigmoid(batch["pts_regressor_logits"]) * (10.0 - 1.0) + 1.0
    assert jnp.allclose(pts3d, ref_pts, atol=1e-4, rtol=1e-4), "depth scale mismatch"

    print("KERNEL_OK")
</pallas_src>

<mosaic_0001>
module attributes {stable_mosaic.version = 11 : i64} {
  func.func @rel_embedding_kernel(%arg0: i32, %arg1: memref<2x8x8x256xf32, #tpu.memory_space<vmem>>, %arg2: memref<3x3x256x256xbf16, #tpu.memory_space<vmem>>, %arg3: memref<1x256xf32, #tpu.memory_space<vmem>>, %arg4: memref<3x3x256x256xbf16, #tpu.memory_space<vmem>>, %arg5: memref<1x256xf32, #tpu.memory_space<vmem>>, %arg6: memref<2x8x8x256xf32, #tpu.memory_space<vmem>>, %arg7: memref<2x96x256xf32, #tpu.memory_space<vmem>>) attributes {dimension_semantics = [#tpu.dimension_semantics<parallel>], iteration_bounds = array<i64: 1>, scalar_prefetch = 0 : i64, scratch_operands = 1 : i64, tpu.core_type = #tpu.core_type<tc>, window_params = [{transform_indices = @transform_0, window_bounds = array<i64: 2, 8, 8, 256>}, {pipeline_mode = #tpu.pipeline_mode<synchronous>, transform_indices = @transform_1, window_bounds = array<i64: 3, 3, 256, 256>}, {pipeline_mode = #tpu.pipeline_mode<synchronous>, transform_indices = @transform_2, window_bounds = array<i64: 1, 256>}, {pipeline_mode = #tpu.pipeline_mode<synchronous>, transform_indices = @transform_3, window_bounds = array<i64: 3, 3, 256, 256>}, {pipeline_mode = #tpu.pipeline_mode<synchronous>, transform_indices = @transform_4, window_bounds = array<i64: 1, 256>}, {transform_indices = @transform_5, window_bounds = array<i64: 2, 8, 8, 256>}]} {
    %0 = tpu.iota {dimensions = array<i32: 2>} : vector<2x8x8x256xi32>
    %1 = vector.shape_cast %0 : vector<2x8x8x256xi32> to vector<2x64x256xi32>
    %c0_i32 = arith.constant 0 : i32
    %2 = vector.broadcast %c0_i32 : i32 to vector<2x64x256xi32>
    %3 = arith.cmpi sgt, %1, %2 : vector<2x64x256xi32>
    %c7_i32 = arith.constant 7 : i32
    %4 = vector.broadcast %c7_i32 : i32 to vector<2x64x256xi32>
    %5 = arith.cmpi slt, %1, %4 : vector<2x64x256xi32>
    %cst = arith.constant 0.000000e+00 : f32
    %6 = vector.broadcast %cst : f32 to vector<2x8x256xf32>
    %c0 = arith.constant 0 : index
    %c8 = arith.constant 8 : index
    %c0_0 = arith.constant 0 : index
    %7 = vector.load %arg7[%c0, %c8, %c0_0] : memref<2x96x256xf32, #tpu.memory_space<vmem>>, vector<2x8x256xf32>
    tpu.vector_store %arg7[%c0, %c8, %c0_0], %6 {strides = array<i32>} : memref<2x96x256xf32, #tpu.memory_space<vmem>>, vector<2x8x256xf32>,
    %c0_1 = arith.constant 0 : index
    %c80 = arith.constant 80 : index
    %c0_2 = arith.constant 0 : index
    %8 = vector.load %arg7[%c0_1, %c80, %c0_2] : memref<2x96x256xf32, #tpu.memory_space<vmem>>, vector<2x8x256xf32>
    tpu.vector_store %arg7[%c0_1, %c80, %c0_2], %6 {strides = array<i32>} : memref<2x96x256xf32, #tpu.memory_space<vmem>>, vector<2x8x256xf32>,
    %c0_3 = arith.constant 0 : index
    %c0_4 = arith.constant 0 : index
    %c0_5 = arith.constant 0 : index
    %c0_6 = arith.constant 0 : index
    %9 = vector.load %arg1[%c0_3, %c0_4, %c0_5, %c0_6] : memref<2x8x8x256xf32, #tpu.memory_space<vmem>>, vector<2x8x8x256xf32>
    %10 = vector.shape_cast %9 : vector<2x8x8x256xf32> to vector<2x64x256xf32>
    %c0_7 = arith.constant 0 : index
    %c16 = arith.constant 16 : index
    %c0_8 = arith.constant 0 : index
    %11 = vector.load %arg7[%c0_7, %c16, %c0_8] : memref<2x96x256xf32, #tpu.memory_space<vmem>>, vector<2x64x256xf32>
    tpu.vector_store %arg7[%c0_7, %c16, %c0_8], %10 {strides = array<i32>} : memref<2x96x256xf32, #tpu.memory_space<vmem>>, vector<2x64x256xf32>,
    %cst_9 = arith.constant 0.000000e+00 : f32
    %12 = vector.broadcast %cst_9 : f32 to vector<128x256xf32>
    %c0_10 = arith.constant 0 : index
    %c7 = arith.constant 7 : index
    %c0_11 = arith.constant 0 : index
    %13 = vector.load %arg7[%c0_10, %c7, %c0_11] : memref<2x96x256xf32, #tpu.memory_space<vmem>>, vector<2x64x256xf32>
    %14 = arith.truncf %13 : vector<2x64x256xf32> to vector<2x64x256xbf16>
    %cst_12 = arith.constant 0.000000e+00 : bf16
    %15 = vector.broadcast %cst_12 : bf16 to vector<2x64x256xbf16>
    %16 = arith.select %3, %14, %15 : vector<2x64x256xi1>, vector<2x64x256xbf16>
    %17 = vector.shape_cast %16 : vector<2x64x256xbf16> to vector<128x256xbf16>
    %c0_13 = arith.constant 0 : index
    %c0_14 = arith.constant 0 : index
    %c0_15 = arith.constant 0 : index
    %c0_16 = arith.constant 0 : index
    %18 = vector.load %arg2[%c0_13, %c0_14, %c0_15, %c0_16] : memref<3x3x256x256xbf16, #tpu.memory_space<vmem>>, vector<1x1x256x256xbf16>
    %19 = vector.shape_cast %18 : vector<1x1x256x256xbf16> to vector<256x256xbf16>
    %cst_17 = arith.constant dense<0.000000e+00> : vector<128x256xf32>
    %20 = tpu.matmul %17, %19, %cst_17 {dimension_numbers = #tpu.dot_dimension_numbers<[1], [0], [0], [1], [0, 0, 1, 1], [], []>} : vector<128x256xbf16>, vector<256x256xbf16>, vector<128x256xf32> -> vector<128x256xf32>
    %21 = arith.addf %12, %20 : vector<128x256xf32>
    %c0_18 = arith.constant 0 : index
    %c8_19 = arith.constant 8 : index
    %c0_20 = arith.constant 0 : index
    %22 = vector.load %arg7[%c0_18, %c8_19, %c0_20] : memref<2x96x256xf32, #tpu.memory_space<vmem>>, vector<2x64x256xf32>
    %23 = arith.truncf %22 : vector<2x64x256xf32> to vector<2x64x256xbf16>
    %24 = vector.shape_cast %23 : vector<2x64x256xbf16> to vector<128x256xbf16>
    %c0_21 = arith.constant 0 : index
    %c1 = arith.constant 1 : index
    %c0_22 = arith.constant 0 : index
    %c0_23 = arith.constant 0 : index
    %25 = vector.load %arg2[%c0_21, %c1, %c0_22, %c0_23] : memref<3x3x256x256xbf16, #tpu.memory_space<vmem>>, vector<1x1x256x256xbf16>
    %26 = vector.shape_cast %25 : vector<1x1x256x256xbf16> to vector<256x256xbf16>
    %cst_24 = arith.constant dense<0.000000e+00> : vector<128x256xf32>
    %27 = tpu.matmul %24, %26, %cst_24 {dimension_numbers = #tpu.dot_dimension_numbers<[1], [0], [0], [1], [0, 0, 1, 1], [], []>} : vector<128x256xbf16>, vector<256x256xbf16>, vector<128x256xf32> -> vector<128x256xf32>
    %28 = arith.addf %21, %27 : vector<128x256xf32>
    %c0_25 = arith.constant 0 : index
    %c9 = arith.constant 9 : index
    %c0_26 = arith.constant 0 : index
    %29 = vector.load %arg7[%c0_25, %c9, %c0_26] : memref<2x96x256xf32, #tpu.memory_space<vmem>>, vector<2x64x256xf32>
    %30 = arith.truncf %29 : vector<2x64x256xf32> to vector<2x64x256xbf16>
    %cst_27 = arith.constant 0.000000e+00 : bf16
    %31 = vector.broadcast %cst_27 : bf16 to vector<2x64x256xbf16>
    %32 = arith.select %5, %30, %31 : vector<2x64x256xi1>, vector<2x64x256xbf16>
    %33 = vector.shape_cast %32 : vector<2x64x256xbf16> to vector<128x256xbf16>
    %c0_28 = arith.constant 0 : index
    %c2 = arith.constant 2 : index
    %c0_29 = arith.constant 0 : index
    %c0_30 = arith.constant 0 : index
    %34 = vector.load %arg2[%c0_28, %c2, %c0_29, %c0_30] : memref<3x3x256x256xbf16, #tpu.memory_space<vmem>>, vector<1x1x256x256xbf16>
    %35 = vector.shape_cast %34 : vector<1x1x256x256xbf16> to vector<256x256xbf16>
    %cst_31 = arith.constant dense<0.000000e+00> : vector<128x256xf32>
    %36 = tpu.matmul %33, %35, %cst_31 {dimension_numbers = #tpu.dot_dimension_numbers<[1], [0], [0], [1], [0, 0, 1, 1], [], []>} : vector<128x256xbf16>, vector<256x256xbf16>, vector<128x256xf32> -> vector<128x256xf32>
    %37 = arith.addf %28, %36 : vector<128x256xf32>
    %c0_32 = arith.constant 0 : index
    %c15 = arith.constant 15 : index
    %c0_33 = arith.constant 0 : index
    %38 = vector.load %arg7[%c0_32, %c15, %c0_33] : memref<2x96x256xf32, #tpu.memory_space<vmem>>, vector<2x64x256xf32>
    %39 = arith.truncf %38 : vector<2x64x256xf32> to vector<2x64x256xbf16>
    %cst_34 = arith.constant 0.000000e+00 : bf16
    %40 = vector.broadcast %cst_34 : bf16 to vector<2x64x256xbf16>
    %41 = arith.select %3, %39, %40 : vector<2x64x256xi1>, vector<2x64x256xbf16>
    %42 = vector.shape_cast %41 : vector<2x64x256xbf16> to vector<128x256xbf16>
    %c1_35 = arith.constant 1 : index
    %c0_36 = arith.constant 0 : index
    %c0_37 = arith.constant 0 : index
    %c0_38 = arith.constant 0 : index
    %43 = vector.load %arg2[%c1_35, %c0_36, %c0_37, %c0_38] : memref<3x3x256x256xbf16, #tpu.memory_space<vmem>>, vector<1x1x256x256xbf16>
    %44 = vector.shape_cast %43 : vector<1x1x256x256xbf16> to vector<256x256xbf16>
    %cst_39 = arith.constant dense<0.000000e+00> : vector<128x256xf32>
    %45 = tpu.matmul %42, %44, %cst_39 {dimension_numbers = #tpu.dot_dimension_numbers<[1], [0], [0], [1], [0, 0, 1, 1], [], []>} : vector<128x256xbf16>, vector<256x256xbf16>, vector<128x256xf32> -> vector<128x256xf32>
    %46 = arith.addf %37, %45 : vector<128x256xf32>
    %c0_40 = arith.constant 0 : index
    %c16_41 = arith.constant 16 : index
    %c0_42 = arith.constant 0 : index
    %47 = vector.load %arg7[%c0_40, %c16_41, %c0_42] : memref<2x96x256xf32, #tpu.memory_space<vmem>>, vector<2x64x256xf32>
    %48 = arith.truncf %47 : vector<2x64x256xf32> to vector<2x64x256xbf16>
    %49 = vector.shape_cast %48 : vector<2x64x256xbf16> to vector<128x256xbf16>
    %c1_43 = arith.constant 1 : index
    %c1_44 = arith.constant 1 : index
    %c0_45 = arith.constant 0 : index
    %c0_46 = arith.constant 0 : index
    %50 = vector.load %arg2[%c1_43, %c1_44, %c0_45, %c0_46] : memref<3x3x256x256xbf16, #tpu.memory_space<vmem>>, vector<1x1x256x256xbf16>
    %51 = vector.shape_cast %50 : vector<1x1x256x256xbf16> to vector<256x256xbf16>
    %cst_47 = arith.constant dense<0.000000e+00> : vector<128x256xf32>
    %52 = tpu.matmul %49, %51, %cst_47 {dimension_numbers = #tpu.dot_dimension_numbers<[1], [0], [0], [1], [0, 0, 1, 1], [], []>} : vector<128x256xbf16>, vector<256x256xbf16>, vector<128x256xf32> -> vector<128x256xf32>
    %53 = arith.addf %46, %52 : vector<128x256xf32>
    %c0_48 = arith.constant 0 : index
    %c17 = arith.constant 17 : index
    %c0_49 = arith.constant 0 : index
    %54 = vector.load %arg7[%c0_48, %c17, %c0_49] : memref<2x96x256xf32, #tpu.memory_space<vmem>>, vector<2x64x256xf32>
    %55 = arith.truncf %54 : vector<2x64x256xf32> to vector<2x64x256xbf16>
    %cst_50 = arith.constant 0.000000e+00 : bf16
    %56 = vector.broadcast %cst_50 : bf16 to vector<2x64x256xbf16>
    %57 = arith.select %5, %55, %56 : vector<2x64x256xi1>, vector<2x64x256xbf16>
    %58 = vector.shape_cast %57 : vector<2x64x256xbf16> to vector<128x256xbf16>
    %c1_51 = arith.constant 1 : index
    %c2_52 = arith.constant 2 : index
    %c0_53 = arith.constant 0 : index
    %c0_54 = arith.constant 0 : index
    %59 = vector.load %arg2[%c1_51, %c2_52, %c0_53, %c0_54] : memref<3x3x256x256xbf16, #tpu.memory_space<vmem>>, vector<1x1x256x256xbf16>
    %60 = vector.shape_cast %59 : vector<1x1x256x256xbf16> to vector<256x256xbf16>
    %cst_55 = arith.constant dense<0.000000e+00> : vector<128x256xf32>
    %61 = tpu.matmul %58, %60, %cst_55 {dimension_numbers = #tpu.dot_dimension_numbers<[1], [0], [0], [1], [0, 0, 1, 1], [], []>} : vector<128x256xbf16>, vector<256x256xbf16>, vector<128x256xf32> -> vector<128x256xf32>
    %62 = arith.addf %53, %61 : vector<128x256xf32>
    %c0_56 = arith.constant 0 : index
    %c23 = arith.constant 23 : index
    %c0_57 = arith.constant 0 : index
    %63 = vector.load %arg7[%c0_56, %c23, %c0_57] : memref<2x96x256xf32, #tpu.memory_space<vmem>>, vector<2x64x256xf32>
    %64 = arith.truncf %63 : vector<2x64x256xf32> to vector<2x64x256xbf16>
    %cst_58 = arith.constant 0.000000e+00 : bf16
    %65 = vector.broadcast %cst_58 : bf16 to vector<2x64x256xbf16>
    %66 = arith.select %3, %64, %65 : vector<2x64x256xi1>, vector<2x64x256xbf16>
    %67 = vector.shape_cast %66 : vector<2x64x256xbf16> to vector<128x256xbf16>
    %c2_59 = arith.constant 2 : index
    %c0_60 = arith.constant 0 : index
    %c0_61 = arith.constant 0 : index
    %c0_62 = arith.constant 0 : index
    %68 = vector.load %arg2[%c2_59, %c0_60, %c0_61, %c0_62] : memref<3x3x256x256xbf16, #tpu.memory_space<vmem>>, vector<1x1x256x256xbf16>
    %69 = vector.shape_cast %68 : vector<1x1x256x256xbf16> to vector<256x256xbf16>
    %cst_63 = arith.constant dense<0.000000e+00> : vector<128x256xf32>
    %70 = tpu.matmul %67, %69, %cst_63 {dimension_numbers = #tpu.dot_dimension_numbers<[1], [0], [0], [1], [0, 0, 1, 1], [], []>} : vector<128x256xbf16>, vector<256x256xbf16>, vector<128x256xf32> -> vector<128x256xf32>
    %71 = arith.addf %62, %70 : vector<128x256xf32>
    %c0_64 = arith.constant 0 : index
    %c24 = arith.constant 24 : index
    %c0_65 = arith.constant 0 : index
    %72 = vector.load %arg7[%c0_64, %c24, %c0_65] : memref<2x96x256xf32, #tpu.memory_space<vmem>>, vector<2x64x256xf32>
    %73 = arith.truncf %72 : vector<2x64x256xf32> to vector<2x64x256xbf16>
    %74 = vector.shape_cast %73 : vector<2x64x256xbf16> to vector<128x256xbf16>
    %c2_66 = arith.constant 2 : index
    %c1_67 = arith.constant 1 : index
    %c0_68 = arith.constant 0 : index
    %c0_69 = arith.constant 0 : index
    %75 = vector.load %arg2[%c2_66, %c1_67, %c0_68, %c0_69] : memref<3x3x256x256xbf16, #tpu.memory_space<vmem>>, vector<1x1x256x256xbf16>
    %76 = vector.shape_cast %75 : vector<1x1x256x256xbf16> to vector<256x256xbf16>
    %cst_70 = arith.constant dense<0.000000e+00> : vector<128x256xf32>
    %77 = tpu.matmul %74, %76, %cst_70 {dimension_numbers = #tpu.dot_dimension_numbers<[1], [0], [0], [1], [0, 0, 1, 1], [], []>} : vector<128x256xbf16>, vector<256x256xbf16>, vector<128x256xf32> -> vector<128x256xf32>
    %78 = arith.addf %71, %77 : vector<128x256xf32>
    %c0_71 = arith.constant 0 : index
    %c25 = arith.constant 25 : index
    %c0_72 = arith.constant 0 : index
    %79 = vector.load %arg7[%c0_71, %c25, %c0_72] : memref<2x96x256xf32, #tpu.memory_space<vmem>>, vector<2x64x256xf32>
    %80 = arith.truncf %79 : vector<2x64x256xf32> to vector<2x64x256xbf16>
    %cst_73 = arith.constant 0.000000e+00 : bf16
    %81 = vector.broadcast %cst_73 : bf16 to vector<2x64x256xbf16>
    %82 = arith.select %5, %80, %81 : vector<2x64x256xi1>, vector<2x64x256xbf16>
    %83 = vector.shape_cast %82 : vector<2x64x256xbf16> to vector<128x256xbf16>
    %c2_74 = arith.constant 2 : index
    %c2_75 = arith.constant 2 : index
    %c0_76 = arith.constant 0 : index
    %c0_77 = arith.constant 0 : index
    %84 = vector.load %arg2[%c2_74, %c2_75, %c0_76, %c0_77] : memref<3x3x256x256xbf16, #tpu.memory_space<vmem>>, vector<1x1x256x256xbf16>
    %85 = vector.shape_cast %84 : vector<1x1x256x256xbf16> to vector<256x256xbf16>
    %cst_78 = arith.constant dense<0.000000e+00> : vector<128x256xf32>
    %86 = tpu.matmul %83, %85, %cst_78 {dimension_numbers = #tpu.dot_dimension_numbers<[1], [0], [0], [1], [0, 0, 1, 1], [], []>} : vector<128x256xbf16>, vector<256x256xbf16>, vector<128x256xf32> -> vector<128x256xf32>
    %87 = arith.addf %78, %86 : vector<128x256xf32>
    %c0_79 = arith.constant 0 : index
    %c0_80 = arith.constant 0 : index
    %88 = vector.load %arg3[%c0_79, %c0_80] : memref<1x256xf32, #tpu.memory_space<vmem>>, vector<1x256xf32>
    %89 = vector.broadcast %88 : vector<1x256xf32> to vector<128x256xf32>
    %90 = arith.addf %87, %89 : vector<128x256xf32>
    %cst_81 = arith.constant 0.000000e+00 : f32
    %91 = vector.broadcast %cst_81 : f32 to vector<128x256xf32>
    %92 = arith.cmpf ogt, %90, %91 : vector<128x256xf32>
    %cst_82 = arith.constant 0.00999999977 : f32
    %93 = vector.broadcast %cst_82 : f32 to vector<128x256xf32>
    %94 = arith.mulf %93, %90 : vector<128x256xf32>
    %95 = arith.select %92, %90, %94 : vector<128x256xi1>, vector<128x256xf32>
    %96 = vector.shape_cast %95 : vector<128x256xf32> to vector<2x64x256xf32>
    %c0_83 = arith.constant 0 : index
    %c16_84 = arith.constant 16 : index
    %c0_85 = arith.constant 0 : index
    %97 = vector.load %arg7[%c0_83, %c16_84, %c0_85] : memref<2x96x256xf32, #tpu.memory_space<vmem>>, vector<2x64x256xf32>
    tpu.vector_store %arg7[%c0_83, %c16_84, %c0_85], %96 {strides = array<i32>} : memref<2x96x256xf32, #tpu.memory_space<vmem>>, vector<2x64x256xf32>,
    %cst_86 = arith.constant 0.000000e+00 : f32
    %98 = vector.broadcast %cst_86 : f32 to vector<128x256xf32>
    %c0_87 = arith.constant 0 : index
    %c7_88 = arith.constant 7 : index
    %c0_89 = arith.constant 0 : index
    %99 = vector.load %arg7[%c0_87, %c7_88, %c0_89] : memref<2x96x256xf32, #tpu.memory_space<vmem>>, vector<2x64x256xf32>
    %100 = arith.truncf %99 : vector<2x64x256xf32> to vector<2x64x256xbf16>
    %cst_90 = arith.constant 0.000000e+00 : bf16
    %101 = vector.broadcast %cst_90 : bf16 to vector<2x64x256xbf16>
    %102 = arith.select %3, %100, %101 : vector<2x64x256xi1>, vector<2x64x256xbf16>
    %103 = vector.shape_cast %102 : vector<2x64x256xbf16> to vector<128x256xbf16>
    %c0_91 = arith.constant 0 : index
    %c0_92 = arith.constant 0 : index
    %c0_93 = arith.constant 0 : index
    %c0_94 = arith.constant 0 : index
    %104 = vector.load %arg4[%c0_91, %c0_92, %c0_93, %c0_94] : memref<3x3x256x256xbf16, #tpu.memory_space<vmem>>, vector<1x1x256x256xbf16>
    %105 = vector.shape_cast %104 : vector<1x1x256x256xbf16> to vector<256x256xbf16>
    %cst_95 = arith.constant dense<0.000000e+00> : vector<128x256xf32>
    %106 = tpu.matmul %103, %105, %cst_95 {dimension_numbers = #tpu.dot_dimension_numbers<[1], [0], [0], [1], [0, 0, 1, 1], [], []>} : vector<128x256xbf16>, vector<256x256xbf16>, vector<128x256xf32> -> vector<128x256xf32>
    %107 = arith.addf %98, %106 : vector<128x256xf32>
    %c0_96 = arith.constant 0 : index
    %c8_97 = arith.constant 8 : index
    %c0_98 = arith.constant 0 : index
    %108 = vector.load %arg7[%c0_96, %c8_97, %c0_98] : memref<2x96x256xf32, #tpu.memory_space<vmem>>, vector<2x64x256xf32>
    %109 = arith.truncf %108 : vector<2x64x256xf32> to vector<2x64x256xbf16>
    %110 = vector.shape_cast %109 : vector<2x64x256xbf16> to vector<128x256xbf16>
    %c0_99 = arith.constant 0 : index
    %c1_100 = arith.constant 1 : index
    %c0_101 = arith.constant 0 : index
    %c0_102 = arith.constant 0 : index
    %111 = vector.load %arg4[%c0_99, %c1_100, %c0_101, %c0_102] : memref<3x3x256x256xbf16, #tpu.memory_space<vmem>>, vector<1x1x256x256xbf16>
    %112 = vector.shape_cast %111 : vector<1x1x256x256xbf16> to vector<256x256xbf16>
    %cst_103 = arith.constant dense<0.000000e+00> : vector<128x256xf32>
    %113 = tpu.matmul %110, %112, %cst_103 {dimension_numbers = #tpu.dot_dimension_numbers<[1], [0], [0], [1], [0, 0, 1, 1], [], []>} : vector<128x256xbf16>, vector<256x256xbf16>, vector<128x256xf32> -> vector<128x256xf32>
    %114 = arith.addf %107, %113 : vector<128x256xf32>
    %c0_104 = arith.constant 0 : index
    %c9_105 = arith.constant 9 : index
    %c0_106 = arith.constant 0 : index
    %115 = vector.load %arg7[%c0_104, %c9_105, %c0_106] : memref<2x96x256xf32, #tpu.memory_space<vmem>>, vector<2x64x256xf32>
    %116 = arith.truncf %115 : vector<2x64x256xf32> to vector<2x64x256xbf16>
    %cst_107 = arith.constant 0.000000e+00 : bf16
    %117 = vector.broadcast %cst_107 : bf16 to vector<2x64x256xbf16>
    %118 = arith.select %5, %116, %117 : vector<2x64x256xi1>, vector<2x64x256xbf16>
    %119 = vector.shape_cast %118 : vector<2x64x256xbf16> to vector<128x256xbf16>
    %c0_108 = arith.constant 0 : index
    %c2_109 = arith.constant 2 : index
    %c0_110 = arith.constant 0 : index
    %c0_111 = arith.constant 0 : index
    %120 = vector.load %arg4[%c0_108, %c2_109, %c0_110, %c0_111] : memref<3x3x256x256xbf16, #tpu.memory_space<vmem>>, vector<1x1x256x256xbf16>
    %121 = vector.shape_cast %120 : vector<1x1x256x256xbf16> to vector<256x256xbf16>
    %cst_112 = arith.constant dense<0.000000e+00> : vector<128x256xf32>
    %122 = tpu.matmul %119, %121, %cst_112 {dimension_numbers = #tpu.dot_dimension_numbers<[1], [0], [0], [1], [0, 0, 1, 1], [], []>} : vector<128x256xbf16>, vector<256x256xbf16>, vector<128x256xf32> -> vector<128x256xf32>
    %123 = arith.addf %114, %122 : vector<128x256xf32>
    %c0_113 = arith.constant 0 : index
    %c15_114 = arith.constant 15 : index
    %c0_115 = arith.constant 0 : index
    %124 = vector.load %arg7[%c0_113, %c15_114, %c0_115] : memref<2x96x256xf32, #tpu.memory_space<vmem>>, vector<2x64x256xf32>
    %125 = arith.truncf %124 : vector<2x64x256xf32> to vector<2x64x256xbf16>
    %cst_116 = arith.constant 0.000000e+00 : bf16
    %126 = vector.broadcast %cst_116 : bf16 to vector<2x64x256xbf16>
    %127 = arith.select %3, %125, %126 : vector<2x64x256xi1>, vector<2x64x256xbf16>
    %128 = vector.shape_cast %127 : vector<2x64x256xbf16> to vector<128x256xbf16>
    %c1_117 = arith.constant 1 : index
    %c0_118 = arith.constant 0 : index
    %c0_119 = arith.constant 0 : index
    %c0_120 = arith.constant 0 : index
    %129 = vector.load %arg4[%c1_117, %c0_118, %c0_119, %c0_120] : memref<3x3x256x256xbf16, #tpu.memory_space<vmem>>, vector<1x1x256x256xbf16>
    %130 = vector.shape_cast %129 : vector<1x1x256x256xbf16> to vector<256x256xbf16>
    %cst_121 = arith.constant dense<0.000000e+00> : vector<128x256xf32>
    %131 = tpu.matmul %128, %130, %cst_121 {dimension_numbers = #tpu.dot_dimension_numbers<[1], [0], [0], [1], [0, 0, 1, 1], [], []>} : vector<128x256xbf16>, vector<256x256xbf16>, vector<128x256xf32> -> vector<128x256xf32>
    %132 = arith.addf %123, %131 : vector<128x256xf32>
    %c0_122 = arith.constant 0 : index
    %c16_123 = arith.constant 16 : index
    %c0_124 = arith.constant 0 : index
    %133 = vector.load %arg7[%c0_122, %c16_123, %c0_124] : memref<2x96x256xf32, #tpu.memory_space<vmem>>, vector<2x64x256xf32>
    %134 = arith.truncf %133 : vector<2x64x256xf32> to vector<2x64x256xbf16>
    %135 = vector.shape_cast %134 : vector<2x64x256xbf16> to vector<128x256xbf16>
    %c1_125 = arith.constant 1 : index
    %c1_126 = arith.constant 1 : index
    %c0_127 = arith.constant 0 : index
    %c0_128 = arith.constant 0 : index
    %136 = vector.load %arg4[%c1_125, %c1_126, %c0_127, %c0_128] : memref<3x3x256x256xbf16, #tpu.memory_space<vmem>>, vector<1x1x256x256xbf16>
    %137 = vector.shape_cast %136 : vector<1x1x256x256xbf16> to vector<256x256xbf16>
    %cst_129 = arith.constant dense<0.000000e+00> : vector<128x256xf32>
    %138 = tpu.matmul %135, %137, %cst_129 {dimension_numbers = #tpu.dot_dimension_numbers<[1], [0], [0], [1], [0, 0, 1, 1], [], []>} : vector<128x256xbf16>, vector<256x256xbf16>, vector<128x256xf32> -> vector<128x256xf32>
    %139 = arith.addf %132, %138 : vector<128x256xf32>
    %c0_130 = arith.constant 0 : index
    %c17_131 = arith.constant 17 : index
    %c0_132 = arith.constant 0 : index
    %140 = vector.load %arg7[%c0_130, %c17_131, %c0_132] : memref<2x96x256xf32, #tpu.memory_space<vmem>>, vector<2x64x256xf32>
    %141 = arith.truncf %140 : vector<2x64x256xf32> to vector<2x64x256xbf16>
    %cst_133 = arith.constant 0.000000e+00 : bf16
    %142 = vector.broadcast %cst_133 : bf16 to vector<2x64x256xbf16>
    %143 = arith.select %5, %141, %142 : vector<2x64x256xi1>, vector<2x64x256xbf16>
    %144 = vector.shape_cast %143 : vector<2x64x256xbf16> to vector<128x256xbf16>
    %c1_134 = arith.constant 1 : index
    %c2_135 = arith.constant 2 : index
    %c0_136 = arith.constant 0 : index
    %c0_137 = arith.constant 0 : index
    %145 = vector.load %arg4[%c1_134, %c2_135, %c0_136, %c0_137] : memref<3x3x256x256xbf16, #tpu.memory_space<vmem>>, vector<1x1x256x256xbf16>
    %146 = vector.shape_cast %145 : vector<1x1x256x256xbf16> to vector<256x256xbf16>
    %cst_138 = arith.constant dense<0.000000e+00> : vector<128x256xf32>
    %147 = tpu.matmul %144, %146, %cst_138 {dimension_numbers = #tpu.dot_dimension_numbers<[1], [0], [0], [1], [0, 0, 1, 1], [], []>} : vector<128x256xbf16>, vector<256x256xbf16>, vector<128x256xf32> -> vector<128x256xf32>
    %148 = arith.addf %139, %147 : vector<128x256xf32>
    %c0_139 = arith.constant 0 : index
    %c23_140 = arith.constant 23 : index
    %c0_141 = arith.constant 0 : index
    %149 = vector.load %arg7[%c0_139, %c23_140, %c0_141] : memref<2x96x256xf32, #tpu.memory_space<vmem>>, vector<2x64x256xf32>
    %150 = arith.truncf %149 : vector<2x64x256xf32> to vector<2x64x256xbf16>
    %cst_142 = arith.constant 0.000000e+00 : bf16
    %151 = vector.broadcast %cst_142 : bf16 to vector<2x64x256xbf16>
    %152 = arith.select %3, %150, %151 : vector<2x64x256xi1>, vector<2x64x256xbf16>
    %153 = vector.shape_cast %152 : vector<2x64x256xbf16> to vector<128x256xbf16>
    %c2_143 = arith.constant 2 : index
    %c0_144 = arith.constant 0 : index
    %c0_145 = arith.constant 0 : index
    %c0_146 = arith.constant 0 : index
    %154 = vector.load %arg4[%c2_143, %c0_144, %c0_145, %c0_146] : memref<3x3x256x256xbf16, #tpu.memory_space<vmem>>, vector<1x1x256x256xbf16>
    %155 = vector.shape_cast %154 : vector<1x1x256x256xbf16> to vector<256x256xbf16>
    %cst_147 = arith.constant dense<0.000000e+00> : vector<128x256xf32>
    %156 = tpu.matmul %153, %155, %cst_147 {dimension_numbers = #tpu.dot_dimension_numbers<[1], [0], [0], [1], [0, 0, 1, 1], [], []>} : vector<128x256xbf16>, vector<256x256xbf16>, vector<128x256xf32> -> vector<128x256xf32>
    %157 = arith.addf %148, %156 : vector<128x256xf32>
    %c0_148 = arith.constant 0 : index
    %c24_149 = arith.constant 24 : index
    %c0_150 = arith.constant 0 : index
    %158 = vector.load %arg7[%c0_148, %c24_149, %c0_150] : memref<2x96x256xf32, #tpu.memory_space<vmem>>, vector<2x64x256xf32>
    %159 = arith.truncf %158 : vector<2x64x256xf32> to vector<2x64x256xbf16>
    %160 = vector.shape_cast %159 : vector<2x64x256xbf16> to vector<128x256xbf16>
    %c2_151 = arith.constant 2 : index
    %c1_152 = arith.constant 1 : index
    %c0_153 = arith.constant 0 : index
    %c0_154 = arith.constant 0 : index
    %161 = vector.load %arg4[%c2_151, %c1_152, %c0_153, %c0_154] : memref<3x3x256x256xbf16, #tpu.memory_space<vmem>>, vector<1x1x256x256xbf16>
    %162 = vector.shape_cast %161 : vector<1x1x256x256xbf16> to vector<256x256xbf16>
    %cst_155 = arith.constant dense<0.000000e+00> : vector<128x256xf32>
    %163 = tpu.matmul %160, %162, %cst_155 {dimension_numbers = #tpu.dot_dimension_numbers<[1], [0], [0], [1], [0, 0, 1, 1], [], []>} : vector<128x256xbf16>, vector<256x256xbf16>, vector<128x256xf32> -> vector<128x256xf32>
    %164 = arith.addf %157, %163 : vector<128x256xf32>
    %c0_156 = arith.constant 0 : index
    %c25_157 = arith.constant 25 : index
    %c0_158 = arith.constant 0 : index
    %165 = vector.load %arg7[%c0_156, %c25_157, %c0_158] : memref<2x96x256xf32, #tpu.memory_space<vmem>>, vector<2x64x256xf32>
    %166 = arith.truncf %165 : vector<2x64x256xf32> to vector<2x64x256xbf16>
    %cst_159 = arith.constant 0.000000e+00 : bf16
    %167 = vector.broadcast %cst_159 : bf16 to vector<2x64x256xbf16>
    %168 = arith.select %5, %166, %167 : vector<2x64x256xi1>, vector<2x64x256xbf16>
    %169 = vector.shape_cast %168 : vector<2x64x256xbf16> to vector<128x256xbf16>
    %c2_160 = arith.constant 2 : index
    %c2_161 = arith.constant 2 : index
    %c0_162 = arith.constant 0 : index
    %c0_163 = arith.constant 0 : index
    %170 = vector.load %arg4[%c2_160, %c2_161, %c0_162, %c0_163] : memref<3x3x256x256xbf16, #tpu.memory_space<vmem>>, vector<1x1x256x256xbf16>
    %171 = vector.shape_cast %170 : vector<1x1x256x256xbf16> to vector<256x256xbf16>
    %cst_164 = arith.constant dense<0.000000e+00> : vector<128x256xf32>
    %172 = tpu.matmul %169, %171, %cst_164 {dimension_numbers = #tpu.dot_dimension_numbers<[1], [0], [0], [1], [0, 0, 1, 1], [], []>} : vector<128x256xbf16>, vector<256x256xbf16>, vector<128x256xf32> -> vector<128x256xf32>
    %173 = arith.addf %164, %172 : vector<128x256xf32>
    %c0_165 = arith.constant 0 : index
    %c0_166 = arith.constant 0 : index
    %174 = vector.load %arg5[%c0_165, %c0_166] : memref<1x256xf32, #tpu.memory_space<vmem>>, vector<1x256xf32>
    %175 = vector.broadcast %174 : vector<1x256xf32> to vector<128x256xf32>
    %176 = arith.addf %173, %175 : vector<128x256xf32>
    %177 = vector.shape_cast %176 : vector<128x256xf32> to vector<2x8x8x256xf32>
    %c0_167 = arith.constant 0 : index
    %c0_168 = arith.constant 0 : index
    %c0_169 = arith.constant 0 : index
    %c0_170 = arith.constant 0 : index
    %178 = vector.load %arg6[%c0_167, %c0_168, %c0_169, %c0_170] : memref<2x8x8x256xf32, #tpu.memory_space<vmem>>, vector<2x8x8x256xf32>
    tpu.vector_store %arg6[%c0_167, %c0_168, %c0_169, %c0_170], %177 {strides = array<i32>} : memref<2x8x8x256xf32, #tpu.memory_space<vmem>>, vector<2x8x8x256xf32>,
    return
  }
  func.func @transform_0(%arg0: i32) -> (i32, i32, i32, i32) {
    %c0_i32 = arith.constant 0 : i32
    %c0_i32_0 = arith.constant 0 : i32
    %c0_i32_1 = arith.constant 0 : i32
    %c0_i32_2 = arith.constant 0 : i32
    return %arg0, %c0_i32, %c0_i32_0, %c0_i32_1 : i32, i32, i32, i32
  }
  func.func @transform_1(%arg0: i32) -> (i32, i32, i32, i32) {
    %c0_i32 = arith.constant 0 : i32
    %c0_i32_0 = arith.constant 0 : i32
    %c0_i32_1 = arith.constant 0 : i32
    %c0_i32_2 = arith.constant 0 : i32
    %c0_i32_3 = arith.constant 0 : i32
    return %c0_i32, %c0_i32_0, %c0_i32_1, %c0_i32_2 : i32, i32, i32, i32
  }
  func.func @transform_2(%arg0: i32) -> (i32, i32) {
    %c0_i32 = arith.constant 0 : i32
    %c0_i32_0 = arith.constant 0 : i32
    %c0_i32_1 = arith.constant 0 : i32
    return %c0_i32, %c0_i32_0 : i32, i32
  }
  func.func @transform_3(%arg0: i32) -> (i32, i32, i32, i32) {
    %c0_i32 = arith.constant 0 : i32
    %c0_i32_0 = arith.constant 0 : i32
    %c0_i32_1 = arith.constant 0 : i32
    %c0_i32_2 = arith.constant 0 : i32
    %c0_i32_3 = arith.constant 0 : i32
    return %c0_i32, %c0_i32_0, %c0_i32_1, %c0_i32_2 : i32, i32, i32, i32
  }
  func.func @transform_4(%arg0: i32) -> (i32, i32) {
    %c0_i32 = arith.constant 0 : i32
    %c0_i32_0 = arith.constant 0 : i32
    %c0_i32_1 = arith.constant 0 : i32
    return %c0_i32, %c0_i32_0 : i32, i32
  }
  func.func @transform_5(%arg0: i32) -> (i32, i32, i32, i32) {
    %c0_i32 = arith.constant 0 : i32
    %c0_i32_0 = arith.constant 0 : i32
    %c0_i32_1 = arith.constant 0 : i32
    %c0_i32_2 = arith.constant 0 : i32
    return %arg0, %c0_i32, %c0_i32_0, %c0_i32_1 : i32, i32, i32, i32
  }
}

</mosaic_0001>

<llo_original>
// kernel: tpu_custom_call.1
$region0: #{tpu_custom_call.1}
  #allocation0 [shape = 'u32[]', space=smem, size = 0x4, offset = 0x4, fixed_abs, tag = 'smem constant byte address 0x4 - core index']
  #allocation1 [shape = 'u32[144,128]{1,0:T(1,128)}', space=vmem, size = 0x12000, scoped, tag = 'internal scratch']
  #allocation2 [shape = 'f32[2,96,256]{2,1,0:T(8,128)}', space=vmem, size = 0x30000, scoped, tag = 'scratch operand']
  %s0 = inlined_call_operand.hbm [shape: f32[2,8,8,256], index: 0, kind: input, shape index: {}]
  %s1 = inlined_call_operand.hbm [shape: bf16[3,3,256,256], index: 1, kind: input, shape index: {}]
  %s2 = inlined_call_operand.hbm [shape: f32[1,256], index: 2, kind: input, shape index: {}]
  %s3 = inlined_call_operand.hbm [shape: bf16[3,3,256,256], index: 3, kind: input, shape index: {}]
  %s4 = inlined_call_operand.hbm [shape: f32[1,256], index: 4, kind: input, shape index: {}]
  %s5 = inlined_call_operand.hbm [shape: f32[2,8,8,256], index: 5, kind: output, shape index: {}]
  %s6 = sld [smem:[#allocation0]]
  $region50: #{tpu_custom_call.1} parent=0
    _
  %s8 = ssub.s32 1, %s6
  %s9 = scalar_select 0, %s8, %s6
  $region1: #{tpu_custom_call.1} parent=0
    #allocation3 [shape = 'u8[131072]{0}', space=vmem, size = 0x20000, scoped, tag = 'input window, operand 0, single buffered']
    #allocation4 [shape = 's32[1]{0}', space=sflag, size = 0x4, scoped, tag = 'scoped memory for tpu_custom_call.1']
    #allocation5 [shape = 's32[1]{0}', space=sflag, size = 0x4, scoped, tag = 'scoped memory for tpu_custom_call.1']
    #allocation6 [shape = 'u8[1179648]{0}', space=vmem, size = 0x120000, scoped, tag = 'input window, operand 1, single buffered']
    #allocation7 [shape = 's32[1]{0}', space=sflag, size = 0x4, scoped, tag = 'scoped memory for tpu_custom_call.1']
    #allocation8 [shape = 'u8[1024]{0}', space=vmem, size = 0x400, scoped, tag = 'input window, operand 2, single buffered']
    #allocation9 [shape = 'u8[1179648]{0}', space=vmem, size = 0x120000, scoped, tag = 'input window, operand 3, single buffered']
    #allocation10 [shape = 's32[1]{0}', space=sflag, size = 0x4, scoped, tag = 'scoped memory for tpu_custom_call.1']
    #allocation11 [shape = 'u8[1024]{0}', space=vmem, size = 0x400, scoped, tag = 'input window, operand 4, single buffered']
    #allocation12 [shape = 'u8[131072]{0}', space=vmem, size = 0x20000, scoped, tag = 'output window, operand 0, single buffered']
    %10 = vsyncpa [#allocation4], 0
    %11 = vsyncpa [#allocation7], 0
    %12 = vsyncpa [#allocation10], 0
    %13 = vsyncpa [#allocation5], 0
    // Predicated region
    $region2: #{tpu_custom_call.1} parent=1 // pred_check
      _
    $region3: #{tpu_custom_call.1} parent=1 // pred_check_branch
      %15 = sbr.rel (0) target = $region5
    $region4: #{tpu_custom_call.1} parent=1 // pred_region
      %s17 = ssub.s32 4096, 4096
      %18 = vsyncadd [#allocation4], %s17
      %s19 = sshll.u32 [#allocation3], 4
      %s20 = int_to_ptr.vmem [resolvable:$true] %s19
      %25 = dma.hbm_to_vmem [thread:$0]  %s0, 4096, %s20, [#allocation4], 256, 256, 16
    $region5: #{tpu_custom_call.1} parent=1 // pred_fallthru
      _
    // Predicated region
    $region6: #{tpu_custom_call.1} parent=1 // pred_check
      _
    $region7: #{tpu_custom_call.1} parent=1 // pred_check_branch
      %27 = sbr.rel (0) target = $region9
    $region8: #{tpu_custom_call.1} parent=1 // pred_region
      %s29 = ssub.s32 36864, 36864
      %30 = vsyncadd [#allocation7], %s29
      %s31 = sshll.u32 [#allocation6], 4
      %s32 = int_to_ptr.vmem [resolvable:$true] %s31
      %37 = dma.hbm_to_vmem [thread:$0]  %s1, 36864, %s32, [#allocation7], 128, 128, 8
    $region9: #{tpu_custom_call.1} parent=1 // pred_fallthru
      _
    // Predicated region
    $region10: #{tpu_custom_call.1} parent=1 // pred_check
      _
    $region11: #{tpu_custom_call.1} parent=1 // pred_check_branch
      %39 = sbr.rel (0) target = $region13
    $region12: #{tpu_custom_call.1} parent=1 // pred_region
      %s41 = ssub.s32 32, 32
      %42 = vsyncadd [#allocation7], %s41
      %s44 = sshll.u32 [#allocation8], 4
      %s45 = int_to_ptr.vmem [resolvable:$true] %s44
      %47 = dma.hbm_to_vmem [thread:$0]  %s2, 32, %s45, [#allocation7]
    $region13: #{tpu_custom_call.1} parent=1 // pred_fallthru
      _
    // Predicated region
    $region14: #{tpu_custom_call.1} parent=1 // pred_check
      _
    $region15: #{tpu_custom_call.1} parent=1 // pred_check_branch
      %49 = sbr.rel (0) target = $region17
    $region16: #{tpu_custom_call.1} parent=1 // pred_region
      %s51 = ssub.s32 36864, 36864
      %52 = vsyncadd [#allocation10], %s51
      %s53 = sshll.u32 [#allocation9], 4
      %s54 = int_to_ptr.vmem [resolvable:$true] %s53
      %59 = dma.hbm_to_vmem [thread:$0]  %s3, 36864, %s54, [#allocation10], 128, 128, 8
    $region17: #{tpu_custom_call.1} parent=1 // pred_fallthru
      _
    // Predicated region
    $region18: #{tpu_custom_call.1} parent=1 // pred_check
      _
    $region19: #{tpu_custom_call.1} parent=1 // pred_check_branch
      %61 = sbr.rel (0) target = $region21
    $region20: #{tpu_custom_call.1} parent=1 // pred_region
      %s63 = ssub.s32 32, 32
      %64 = vsyncadd [#allocation10], %s63
      %s66 = sshll.u32 [#allocation11], 4
      %s67 = int_to_ptr.vmem [resolvable:$true] %s66
      %69 = dma.hbm_to_vmem [thread:$0]  %s4, 32, %s67, [#allocation10]
    $region21: #{tpu_custom_call.1} parent=1 // pred_fallthru
      _
    // Predicated region
    $region22: #{tpu_custom_call.1} parent=1 // pred_check
      _
    $region23: #{tpu_custom_call.1} parent=1 // pred_check_branch
      %71 = sbr.rel (0) target = $region25
    $region24: #{tpu_custom_call.1} parent=1 // pred_region
      %72 = dma.done [#allocation4], 4096
    $region25: #{tpu_custom_call.1} parent=1 // pred_fallthru
      _
    // Predicated region
    $region26: #{tpu_custom_call.1} parent=1 // pred_check
      _
    $region27: #{tpu_custom_call.1} parent=1 // pred_check_branch
      %74 = sbr.rel (0) target = $region29
    $region28: #{tpu_custom_call.1} parent=1 // pred_region
      %75 = dma.done [#allocation7], 36864
    $region29: #{tpu_custom_call.1} parent=1 // pred_fallthru
      _
    // Predicated region
    $region30: #{tpu_custom_call.1} parent=1 // pred_check
      _
    $region31: #{tpu_custom_call.1} parent=1 // pred_check_branch
      %77 = sbr.rel (0) target = $region33
    $region32: #{tpu_custom_call.1} parent=1 // pred_region
      %78 = dma.done [#allocation7], 32
    $region33: #{tpu_custom_call.1} parent=1 // pred_fallthru
      _
    // Predicated region
    $region34: #{tpu_custom_call.1} parent=1 // pred_check
      _
    $region35: #{tpu_custom_call.1} parent=1 // pred_check_branch
      %80 = sbr.rel (0) target = $region37
    $region36: #{tpu_custom_call.1} parent=1 // pred_region
      %81 = dma.done [#allocation10], 36864
    $region37: #{tpu_custom_call.1} parent=1 // pred_fallthru
      _
    // Predicated region
    $region38: #{tpu_custom_call.1} parent=1 // pred_check
      _
    $region39: #{tpu_custom_call.1} parent=1 // pred_check_branch
      %83 = sbr.rel (0) target = $region41
    $region40: #{tpu_custom_call.1} parent=1 // pred_region
      %84 = dma.done [#allocation10], 32
    $region41: #{tpu_custom_call.1} parent=1 // pred_fallthru
      _
    %v88 = vlaneseq
    %v89 = vshrl.u32 %v88, 7
    %vm90 = vcmp.gt.s32.totalorder %v89, 0
    %vm91 = vcmp.lt.s32.totalorder %v89, 7
    %92 = vst [vmem:[#allocation2 + $0x10] sm:$0xff] 0.0
    %93 = vst [vmem:[#allocation2 + $0x18] sm:$0xff] 0.0
    %94 = vst [vmem:[#allocation2 + $0xd0] sm:$0xff] 0.0
    %95 = vst [vmem:[#allocation2 + $0xd8] sm:$0xff] 0.0
    %96 = vst [vmem:[#allocation2 + $0xa0] sm:$0xff] 0.0
    %97 = vst [vmem:[#allocation2 + $0xa8] sm:$0xff] 0.0
    %98 = vst [vmem:[#allocation2 + $0x160] sm:$0xff] 0.0
    %99 = vst [vmem:[#allocation2 + $0x168] sm:$0xff] 0.0
    %v100 = vld [vmem:[#allocation3] sm:$0xff]
    %v101 = vld [vmem:[#allocation3 + $0x8] sm:$0xff]
    %v102 = vld [vmem:[#allocation3 + $0x10] sm:$0xff]
    %v103 = vld [vmem:[#allocation3 + $0x18] sm:$0xff]
    %v104 = vld [vmem:[#allocation3 + $0x20] sm:$0xff]
    %v105 = vld [vmem:[#allocation3 + $0x28] sm:$0xff]
    %v106 = vld [vmem:[#allocation3 + $0x30] sm:$0xff]
    %v107 = vld [vmem:[#allocation3 + $0x38] sm:$0xff]
    %v108 = vld [vmem:[#allocation3 + $0x40] sm:$0xff]
    %v109 = vld [vmem:[#allocation3 + $0x48] sm:$0xff]
    %v110 = vld [vmem:[#allocation3 + $0x50] sm:$0xff]
    %v111 = vld [vmem:[#allocation3 + $0x58] sm:$0xff]
    %v112 = vld [vmem:[#allocation3 + $0x60] sm:$0xff]
    %v113 = vld [vmem:[#allocation3 + $0x68] sm:$0xff]
    %v114 = vld [vmem:[#allocation3 + $0x70] sm:$0xff]
    %v115 = vld [vmem:[#allocation3 + $0x78] sm:$0xff]
    %v116 = vld [vmem:[#allocation3 + $0x80] sm:$0xff]
    %v117 = vld [vmem:[#allocation3 + $0x88] sm:$0xff]
    %v118 = vld [vmem:[#allocation3 + $0x90] sm:$0xff]
    %v119 = vld [vmem:[#allocation3 + $0x98] sm:$0xff]
    %v120 = vld [vmem:[#allocation3 + $0xa0] sm:$0xff]
    %v121 = vld [vmem:[#allocation3 + $0xa8] sm:$0xff]
    %v122 = vld [vmem:[#allocation3 + $0xb0] sm:$0xff]
    %v123 = vld [vmem:[#allocation3 + $0xb8] sm:$0xff]
    %v124 = vld [vmem:[#allocation3 + $0xc0] sm:$0xff]
    %v125 = vld [vmem:[#allocation3 + $0xc8] sm:$0xff]
    %v126 = vld [vmem:[#allocation3 + $0xd0] sm:$0xff]
    %v127 = vld [vmem:[#allocation3 + $0xd8] sm:$0xff]
    %v128 = vld [vmem:[#allocation3 + $0xe0] sm:$0xff]
    %v129 = vld [vmem:[#allocation3 + $0xe8] sm:$0xff]
    %v130 = vld [vmem:[#allocation3 + $0xf0] sm:$0xff]
    %v131 = vld [vmem:[#allocation3 + $0xf8] sm:$0xff]
    %132 = vst [vmem:[#allocation2 + $0x20] sm:$0xff] %v100
    %133 = vst [vmem:[#allocation2 + $0x28] sm:$0xff] %v101
    %134 = vst [vmem:[#allocation2 + $0x30] sm:$0xff] %v102
    %135 = vst [vmem:[#allocation2 + $0x38] sm:$0xff] %v103
    %136 = vst [vmem:[#allocation2 + $0x40] sm:$0xff] %v104
    %137 = vst [vmem:[#allocation2 + $0x48] sm:$0xff] %v105
    %138 = vst [vmem:[#allocation2 + $0x50] sm:$0xff] %v106
    %139 = vst [vmem:[#allocation2 + $0x58] sm:$0xff] %v107
    %140 = vst [vmem:[#allocation2 + $0x60] sm:$0xff] %v108
    %141 = vst [vmem:[#allocation2 + $0x68] sm:$0xff] %v109
    %142 = vst [vmem:[#allocation2 + $0x70] sm:$0xff] %v110
    %143 = vst [vmem:[#allocation2 + $0x78] sm:$0xff] %v111
    %144 = vst [vmem:[#allocation2 + $0x80] sm:$0xff] %v112
    %145 = vst [vmem:[#allocation2 + $0x88] sm:$0xff] %v113
    %146 = vst [vmem:[#allocation2 + $0x90] sm:$0xff] %v114
    %147 = vst [vmem:[#allocation2 + $0x98] sm:$0xff] %v115
    %148 = vst [vmem:[#allocation2 + $0xe0] sm:$0xff] %v116
    %149 = vst [vmem:[#allocation2 + $0xe8] sm:$0xff] %v117
    %150 = vst [vmem:[#allocation2 + $0xf0] sm:$0xff] %v118
    %151 = vst [vmem:[#allocation2 + $0xf8] sm:$0xff] %v119
    %152 = vst [vmem:[#allocation2 + $0x100] sm:$0xff] %v120
    %153 = vst [vmem:[#allocation2 + $0x108] sm:$0xff] %v121
    %154 = vst [vmem:[#allocation2 + $0x110] sm:$0xff] %v122
    %155 = vst [vmem:[#allocation2 + $0x118] sm:$0xff] %v123
    %156 = vst [vmem:[#allocation2 + $0x120] sm:$0xff] %v124
    %157 = vst [vmem:[#allocation2 + $0x128] sm:$0xff] %v125
    %158 = vst [vmem:[#allocation2 + $0x130] sm:$0xff] %v126
    %159 = vst [vmem:[#allocation2 + $0x138] sm:$0xff] %v127
    %160 = vst [vmem:[#allocation2 + $0x140] sm:$0xff] %v128
    %161 = vst [vmem:[#allocation2 + $0x148] sm:$0xff] %v129
    %162 = vst [vmem:[#allocation2 + $0x150] sm:$0xff] %v130
    %163 = vst [vmem:[#allocation2 + $0x158] sm:$0xff] %v131
    %v164 = vld [vmem:[#allocation2] sm:$0x80]
    %v165 = vld [vmem:[#allocation2 + $0x8] sm:$0x80]
    %v166 = vld [vmem:[#allocation2 + $0x10] sm:$0xff]
    %v167 = vld [vmem:[#allocation2 + $0x18] sm:$0xff]
    %v168 = vld [vmem:[#allocation2 + $0x20] sm:$0xff]
    %v169 = vld [vmem:[#allocation2 + $0x28] sm:$0xff]
    %v170 = vld [vmem:[#allocation2 + $0x30] sm:$0xff]
    %v171 = vld [vmem:[#allocation2 + $0x38] sm:$0xff]
    %v172 = vld [vmem:[#allocation2 + $0x40] sm:$0xff]
    %v173 = vld [vmem:[#allocation2 + $0x48] sm:$0xff]
    %v174 = vld [vmem:[#allocation2 + $0x50] sm:$0xff]
    %v175 = vld [vmem:[#allocation2 + $0x58] sm:$0xff]
    %v176 = vld [vmem:[#allocation2 + $0x60] sm:$0xff]
    %v177 = vld [vmem:[#allocation2 + $0x68] sm:$0xff]
    %v178 = vld [vmem:[#allocation2 + $0x70] sm:$0xff]
    %v179 = vld [vmem:[#allocation2 + $0x78] sm:$0xff]
    %v180 = vld [vmem:[#allocation2 + $0x80] sm:$0x7f]
    %v181 = vld [vmem:[#allocation2 + $0x88] sm:$0x7f]
    %v182 = vld [vmem:[#allocation2 + $0xc0] sm:$0x80]
    %v183 = vld [vmem:[#allocation2 + $0xc8] sm:$0x80]
    %v184 = vld [vmem:[#allocation2 + $0xd0] sm:$0xff]
    %v185 = vld [vmem:[#allocation2 + $0xd8] sm:$0xff]
    %v186 = vld [vmem:[#allocation2 + $0xe0] sm:$0xff]
    %v187 = vld [vmem:[#allocation2 + $0xe8] sm:$0xff]
    %v188 = vld [vmem:[#allocation2 + $0xf0] sm:$0xff]
    %v189 = vld [vmem:[#allocation2 + $0xf8] sm:$0xff]
    %v190 = vld [vmem:[#allocation2 + $0x100] sm:$0xff]
    %v191 = vld [vmem:[#allocation2 + $0x108] sm:$0xff]
    %v192 = vld [vmem:[#allocation2 + $0x110] sm:$0xff]
    %v193 = vld [vmem:[#allocation2 + $0x118] sm:$0xff]
    %v194 = vld [vmem:[#allocation2 + $0x120] sm:$0xff]
    %v195 = vld [vmem:[#allocation2 + $0x128] sm:$0xff]
    %v196 = vld [vmem:[#allocation2 + $0x130] sm:$0xff]
    %v197 = vld [vmem:[#allocation2 + $0x138] sm:$0xff]
    %v198 = vld [vmem:[#allocation2 + $0x140] sm:$0x7f]
    %v199 = vld [vmem:[#allocation2 + $0x148] sm:$0x7f]
    %v200 = vpack.c.bf16 %v166, %v164
    %v201 = vpack.c.bf16 %v167, %v165
    %v202 = vpack.c.bf16 %v170, %v168
    %v203 = vpack.c.bf16 %v171, %v169
    %v204 = vpack.c.bf16 %v174, %v172
    %v205 = vpack.c.bf16 %v175, %v173
    %v206 = vpack.c.bf16 %v178, %v176
    %v207 = vpack.c.bf16 %v179, %v177
    %v208 = vpack.c.bf16 %v180, %v180
    %v209 = vpack.c.bf16 %v181, %v181
    %v210 = vpack.c.bf16 %v184, %v182
    %v211 = vpack.c.bf16 %v185, %v183
    %v212 = vpack.c.bf16 %v188, %v186
    %v213 = vpack.c.bf16 %v189, %v187
    %v214 = vpack.c.bf16 %v192, %v190
    %v215 = vpack.c.bf16 %v193, %v191
    %v216 = vpack.c.bf16 %v196, %v194
    %v217 = vpack.c.bf16 %v197, %v195
    %v218 = vpack.c.bf16 %v198, %v198
    %v219 = vpack.c.bf16 %v199, %v199
    %vm220 = vmpackc.low %vm90, %vm90
    %v221 = vsel %vm220, 65537, 0
    %v222 = vunpack.c.l.b16 %v221
    %v223 = vpack.c.b16 %v222, %v222
    %vm224 = vsmask.f32 3328
    %v226 = vshrl.u32 %v223, 16
    %v228 = vrot.slane %v226, 4
    %v229 = vshll.u32 %v223, 16
    %v231 = vrot.slane %v229, 5
    %v232 = vor.u32 %v228, %v231
    %v233 = vsel %vm224, %v232, %v232
    %vm234 = vcmp.ne.s16.totalorder %v232, 0
    %vm235 = vcmp.ne.s16.totalorder %v233, 0
    %v236 = vsel %vm234, %v200, 0
    %v237 = vsel %vm234, %v201, 0
    %v238 = vsel %vm235, %v202, 0
    %v239 = vsel %vm235, %v203, 0
    %v240 = vsel %vm235, %v204, 0
    %v241 = vsel %vm235, %v205, 0
    %v242 = vsel %vm235, %v206, 0
    %v243 = vsel %vm235, %v207, 0
    %v244 = vsel %vm234, %v208, 0
    %v245 = vsel %vm234, %v209, 0
    %v246 = vsel %vm234, %v210, 0
    %v247 = vsel %vm234, %v211, 0
    %v248 = vsel %vm235, %v212, 0
    %v249 = vsel %vm235, %v213, 0
    %v250 = vsel %vm235, %v214, 0
    %v251 = vsel %vm235, %v215, 0
    %v252 = vsel %vm235, %v216, 0
    %v253 = vsel %vm235, %v217, 0
    %v254 = vsel %vm234, %v218, 0
    %v255 = vsel %vm234, %v219, 0
    %vm256 = vsmask.f32 4352
    %v258 = vshrl.u32 %v236, 16
    %v260 = vrot.slane %v258, 3
    %v261 = vshll.u32 %v236, 16
    %v263 = vrot.slane %v261, 4
    %v264 = vor.u32 %v260, %v263
    %v266 = vshrl.u32 %v238, 16
    %v268 = vrot.slane %v266, 3
    %v269 = vshll.u32 %v238, 16
    %v271 = vrot.slane %v269, 4
    %v272 = vor.u32 %v268, %v271
    %v273 = vsel %vm256, %v264, %v272
    %v275 = vshrl.u32 %v237, 16
    %v277 = vrot.slane %v275, 3
    %v278 = vshll.u32 %v237, 16
    %v280 = vrot.slane %v278, 4
    %v281 = vor.u32 %v277, %v280
    %v283 = vshrl.u32 %v239, 16
    %v285 = vrot.slane %v283, 3
    %v286 = vshll.u32 %v239, 16
    %v288 = vrot.slane %v286, 4
    %v289 = vor.u32 %v285, %v288
    %v290 = vsel %vm256, %v281, %v289
    %v292 = vshrl.u32 %v240, 16
    %v294 = vrot.slane %v292, 3
    %v295 = vshll.u32 %v240, 16
    %v297 = vrot.slane %v295, 4
    %v298 = vor.u32 %v294, %v297
    %v299 = vsel %vm256, %v272, %v298
    %v301 = vshrl.u32 %v241, 16
    %v303 = vrot.slane %v301, 3
    %v304 = vshll.u32 %v241, 16
    %v306 = vrot.slane %v304, 4
    %v307 = vor.u32 %v303, %v306
    %v308 = vsel %vm256, %v289, %v307
    %v310 = vshrl.u32 %v242, 16
    %v312 = vrot.slane %v310, 3
    %v313 = vshll.u32 %v242, 16
    %v315 = vrot.slane %v313, 4
    %v316 = vor.u32 %v312, %v315
    %v317 = vsel %vm256, %v298, %v316
    %v319 = vshrl.u32 %v243, 16
    %v321 = vrot.slane %v319, 3
    %v322 = vshll.u32 %v243, 16
    %v324 = vrot.slane %v322, 4
    %v325 = vor.u32 %v321, %v324
    %v326 = vsel %vm256, %v307, %v325
    %v328 = vshrl.u32 %v244, 16
    %v330 = vrot.slane %v328, 3
    %v331 = vshll.u32 %v244, 16
    %v333 = vrot.slane %v331, 4
    %v334 = vor.u32 %v330, %v333
    %v335 = vsel %vm256, %v316, %v334
    %v337 = vshrl.u32 %v245, 16
    %v339 = vrot.slane %v337, 3
    %v340 = vshll.u32 %v245, 16
    %v342 = vrot.slane %v340, 4
    %v343 = vor.u32 %v339, %v342
    %v344 = vsel %vm256, %v325, %v343
    %v346 = vshrl.u32 %v246, 16
    %v348 = vrot.slane %v346, 3
    %v349 = vshll.u32 %v246, 16
    %v351 = vrot.slane %v349, 4
    %v352 = vor.u32 %v348, %v351
    %v354 = vshrl.u32 %v248, 16
    %v356 = vrot.slane %v354, 3
    %v357 = vshll.u32 %v248, 16
    %v359 = vrot.slane %v357, 4
    %v360 = vor.u32 %v356, %v359
    %v361 = vsel %vm256, %v352, %v360
    %v363 = vshrl.u32 %v247, 16
    %v365 = vrot.slane %v363, 3
    %v366 = vshll.u32 %v247, 16
    %v368 = vrot.slane %v366, 4
    %v369 = vor.u32 %v365, %v368
    %v371 = vshrl.u32 %v249, 16
    %v373 = vrot.slane %v371, 3
    %v374 = vshll.u32 %v249, 16
    %v376 = vrot.slane %v374, 4
    %v377 = vor.u32 %v373, %v376
    %v378 = vsel %vm256, %v369, %v377
    %v380 = vshrl.u32 %v250, 16
    %v382 = vrot.slane %v380, 3
    %v383 = vshll.u32 %v250, 16
    %v385 = vrot.slane %v383, 4
    %v386 = vor.u32 %v382, %v385
    %v387 = vsel %vm256, %v360, %v386
    %v389 = vshrl.u32 %v251, 16
    %v391 = vrot.slane %v389, 3
    %v392 = vshll.u32 %v251, 16
    %v394 = vrot.slane %v392, 4
    %v395 = vor.u32 %v391, %v394
    %v396 = vsel %vm256, %v377, %v395
    %v398 = vshrl.u32 %v252, 16
    %v400 = vrot.slane %v398, 3
    %v401 = vshll.u32 %v252, 16
    %v403 = vrot.slane %v401, 4
    %v404 = vor.u32 %v400, %v403
    %v405 = vsel %vm256, %v386, %v404
    %v407 = vshrl.u32 %v253, 16
    %v409 = vrot.slane %v407, 3
    %v410 = vshll.u32 %v253, 16
    %v412 = vrot.slane %v410, 4
    %v413 = vor.u32 %v409, %v412
    %v414 = vsel %vm256, %v395, %v413
    %v416 = vshrl.u32 %v254, 16
    %v418 = vrot.slane %v416, 3
    %v419 = vshll.u32 %v254, 16
    %v421 = vrot.slane %v419, 4
    %v422 = vor.u32 %v418, %v421
    %v423 = vsel %vm256, %v404, %v422
    %v425 = vshrl.u32 %v255, 16
    %v427 = vrot.slane %v425, 3
    %v428 = vshll.u32 %v255, 16
    %v430 = vrot.slane %v428, 4
    %v431 = vor.u32 %v427, %v430
    %v432 = vsel %vm256, %v413, %v431
    %v449 = vld [vmem:[#allocation6] sm:$0xff]
    %v450 = vld [vmem:[#allocation6 + $0x8] sm:$0xff]
    %v451 = vld [vmem:[#allocation6 + $0x10] sm:$0xff]
    %v452 = vld [vmem:[#allocation6 + $0x18] sm:$0xff]
    %v453 = vld [vmem:[#allocation6 + $0x20] sm:$0xff]
    %v454 = vld [vmem:[#allocation6 + $0x28] sm:$0xff]
    %v455 = vld [vmem:[#allocation6 + $0x30] sm:$0xff]
    %v456 = vld [vmem:[#allocation6 + $0x38] sm:$0xff]
    %v457 = vld [vmem:[#allocation6 + $0x40] sm:$0xff]
    %v458 = vld [vmem:[#allocation6 + $0x48] sm:$0xff]
    %v459 = vld [vmem:[#allocation6 + $0x50] sm:$0xff]
    %v460 = vld [vmem:[#allocation6 + $0x58] sm:$0xff]
    %v461 = vld [vmem:[#allocation6 + $0x60] sm:$0xff]
    %v462 = vld [vmem:[#allocation6 + $0x68] sm:$0xff]
    %v463 = vld [vmem:[#allocation6 + $0x70] sm:$0xff]
    %v464 = vld [vmem:[#allocation6 + $0x78] sm:$0xff]
    %v465 = vld [vmem:[#allocation6 + $0x80] sm:$0xff]
    %v466 = vld [vmem:[#allocation6 + $0x88] sm:$0xff]
    %v467 = vld [vmem:[#allocation6 + $0x90] sm:$0xff]
    %v468 = vld [vmem:[#allocation6 + $0x98] sm:$0xff]
    %v469 = vld [vmem:[#allocation6 + $0xa0] sm:$0xff]
    %v470 = vld [vmem:[#allocation6 + $0xa8] sm:$0xff]
    %v471 = vld [vmem:[#allocation6 + $0xb0] sm:$0xff]
    %v472 = vld [vmem:[#allocation6 + $0xb8] sm:$0xff]
    %v473 = vld [vmem:[#allocation6 + $0xc0] sm:$0xff]
    %v474 = vld [vmem:[#allocation6 + $0xc8] sm:$0xff]
    %v475 = vld [vmem:[#allocation6 + $0xd0] sm:$0xff]
    %v476 = vld [vmem:[#allocation6 + $0xd8] sm:$0xff]
    %v477 = vld [vmem:[#allocation6 + $0xe0] sm:$0xff]
    %v478 = vld [vmem:[#allocation6 + $0xe8] sm:$0xff]
    %v479 = vld [vmem:[#allocation6 + $0xf0] sm:$0xff]
    %v480 = vld [vmem:[#allocation6 + $0xf8] sm:$0xff]
    %v481 = vld [vmem:[#allocation2 + $0x80] sm:$0xff]
    %v482 = vld [vmem:[#allocation2 + $0x88] sm:$0xff]
    %v483 = vld [vmem:[#allocation2 + $0x140] sm:$0xff]
    %v484 = vld [vmem:[#allocation2 + $0x148] sm:$0xff]
    %v485 = vpack.c.bf16 %v168, %v166
    %v486 = vpack.c.bf16 %v169, %v167
    %v487 = vpack.c.bf16 %v172, %v170
    %v488 = vpack.c.bf16 %v173, %v171
    %v489 = vpack.c.bf16 %v176, %v174
    %v490 = vpack.c.bf16 %v177, %v175
    %v491 = vpack.c.bf16 %v481, %v178
    %v492 = vpack.c.bf16 %v482, %v179
    %v493 = vpack.c.bf16 %v186, %v184
    %v494 = vpack.c.bf16 %v187, %v185
    %v495 = vpack.c.bf16 %v190, %v188
    %v496 = vpack.c.bf16 %v191, %v189
    %v497 = vpack.c.bf16 %v194, %v192
    %v498 = vpack.c.bf16 %v195, %v193
    %v499 = vpack.c.bf16 %v483, %v196
    %v500 = vpack.c.bf16 %v484, %v197
    %s501 = scalar_lea.vmem [#allocation6], 256
    %v502 = vld [vmem:[%s501] sm:$0xff]
    %v503 = vld [vmem:[%s501 + $0x8] sm:$0xff]
    %v504 = vld [vmem:[%s501 + $0x10] sm:$0xff]
    %v505 = vld [vmem:[%s501 + $0x18] sm:$0xff]
    %v506 = vld [vmem:[%s501 + $0x20] sm:$0xff]
    %v507 = vld [vmem:[%s501 + $0x28] sm:$0xff]
    %v508 = vld [vmem:[%s501 + $0x30] sm:$0xff]
    %v509 = vld [vmem:[%s501 + $0x38] sm:$0xff]
    %v510 = vld [vmem:[%s501 + $0x40] sm:$0xff]
    %v511 = vld [vmem:[%s501 + $0x48] sm:$0xff]
    %v512 = vld [vmem:[%s501 + $0x50] sm:$0xff]
    %v513 = vld [vmem:[%s501 + $0x58] sm:$0xff]
    %v514 = vld [vmem:[%s501 + $0x60] sm:$0xff]
    %v515 = vld [vmem:[%s501 + $0x68] sm:$0xff]
    %v516 = vld [vmem:[%s501 + $0x70] sm:$0xff]
    %v517 = vld [vmem:[%s501 + $0x78] sm:$0xff]
    %v518 = vld [vmem:[%s501 + $0x80] sm:$0xff]
    %v519 = vld [vmem:[%s501 + $0x88] sm:$0xff]
    %v520 = vld [vmem:[%s501 + $0x90] sm:$0xff]
    %v521 = vld [vmem:[%s501 + $0x98] sm:$0xff]
    %v522 = vld [vmem:[%s501 + $0xa0] sm:$0xff]
    %v523 = vld [vmem:[%s501 + $0xa8] sm:$0xff]
    %v524 = vld [vmem:[%s501 + $0xb0] sm:$0xff]
    %v525 = vld [vmem:[%s501 + $0xb8] sm:$0xff]
    %v526 = vld [vmem:[%s501 + $0xc0] sm:$0xff]
    %v527 = vld [vmem:[%s501 + $0xc8] sm:$0xff]
    %v528 = vld [vmem:[%s501 + $0xd0] sm:$0xff]
    %v529 = vld [vmem:[%s501 + $0xd8] sm:$0xff]
    %v530 = vld [vmem:[%s501 + $0xe0] sm:$0xff]
    %v531 = vld [vmem:[%s501 + $0xe8] sm:$0xff]
    %v532 = vld [vmem:[%s501 + $0xf0] sm:$0xff]
    %v533 = vld [vmem:[%s501 + $0xf8] sm:$0xff]
    %v566 = vunpack.c.l.b16 %v502
    %v567 = vunpack.c.h.b16 %v502
    %v568 = vunpack.c.l.b16 %v503
    %v569 = vunpack.c.h.b16 %v503
    %v570 = vunpack.c.l.b16 %v504
    %v571 = vunpack.c.h.b16 %v504
    %v572 = vunpack.c.l.b16 %v505
    %v573 = vunpack.c.h.b16 %v505
    %v574 = vunpack.c.l.b16 %v506
    %v575 = vunpack.c.h.b16 %v506
    %v576 = vunpack.c.l.b16 %v507
    %v577 = vunpack.c.h.b16 %v507
    %v578 = vunpack.c.l.b16 %v508
    %v579 = vunpack.c.h.b16 %v508
    %v580 = vunpack.c.l.b16 %v509
    %v581 = vunpack.c.h.b16 %v509
    %v582 = vunpack.c.l.b16 %v510
    %v583 = vunpack.c.h.b16 %v510
    %v584 = vunpack.c.l.b16 %v511
    %v585 = vunpack.c.h.b16 %v511
    %v586 = vunpack.c.l.b16 %v512
    %v587 = vunpack.c.h.b16 %v512
    %v588 = vunpack.c.l.b16 %v513
    %v589 = vunpack.c.h.b16 %v513
    %v590 = vunpack.c.l.b16 %v514
    %v591 = vunpack.c.h.b16 %v514
    %v592 = vunpack.c.l.b16 %v515
    %v593 = vunpack.c.h.b16 %v515
    %v594 = vunpack.c.l.b16 %v516
    %v595 = vunpack.c.h.b16 %v516
    %v596 = vunpack.c.l.b16 %v517
    %v597 = vunpack.c.h.b16 %v517
    %v598 = vunpack.c.l.b16 %v518
    %v599 = vunpack.c.h.b16 %v518
    %v600 = vunpack.c.l.b16 %v519
    %v601 = vunpack.c.h.b16 %v519
    %v602 = vunpack.c.l.b16 %v520
    %v603 = vunpack.c.h.b16 %v520
    %v604 = vunpack.c.l.b16 %v521
    %v605 = vunpack.c.h.b16 %v521
    %v606 = vunpack.c.l.b16 %v522
    %v607 = vunpack.c.h.b16 %v522
    %v608 = vunpack.c.l.b16 %v523
    %v609 = vunpack.c.h.b16 %v523
    %v610 = vunpack.c.l.b16 %v524
    %v611 = vunpack.c.h.b16 %v524
    %v612 = vunpack.c.l.b16 %v525
    %v613 = vunpack.c.h.b16 %v525
    %v614 = vunpack.c.l.b16 %v526
    %v615 = vunpack.c.h.b16 %v526
    %v616 = vunpack.c.l.b16 %v527
    %v617 = vunpack.c.h.b16 %v527
    %v618 = vunpack.c.l.b16 %v528
    %v619 = vunpack.c.h.b16 %v528
    %v620 = vunpack.c.l.b16 %v529
    %v621 = vunpack.c.h.b16 %v529
    %v622 = vunpack.c.l.b16 %v530
    %v623 = vunpack.c.h.b16 %v530
    %v624 = vunpack.c.l.b16 %v531
    %v625 = vunpack.c.h.b16 %v531
    %v626 = vunpack.c.l.b16 %v532
    %v627 = vunpack.c.h.b16 %v532
    %v628 = vunpack.c.l.b16 %v533
    %v629 = vunpack.c.h.b16 %v533
    %v630 = vpack.c.b16 %v568, %v566
    %v631 = vpack.c.b16 %v569, %v567
    %v632 = vpack.c.b16 %v572, %v570
    %v633 = vpack.c.b16 %v573, %v571
    %v634 = vpack.c.b16 %v576, %v574
    %v635 = vpack.c.b16 %v577, %v575
    %v636 = vpack.c.b16 %v580, %v578
    %v637 = vpack.c.b16 %v581, %v579
    %v638 = vpack.c.b16 %v584, %v582
    %v639 = vpack.c.b16 %v585, %v583
    %v640 = vpack.c.b16 %v588, %v586
    %v641 = vpack.c.b16 %v589, %v587
    %v642 = vpack.c.b16 %v592, %v590
    %v643 = vpack.c.b16 %v593, %v591
    %v644 = vpack.c.b16 %v596, %v594
    %v645 = vpack.c.b16 %v597, %v595
    %v646 = vpack.c.b16 %v600, %v598
    %v647 = vpack.c.b16 %v601, %v599
    %v648 = vpack.c.b16 %v604, %v602
    %v649 = vpack.c.b16 %v605, %v603
    %v650 = vpack.c.b16 %v608, %v606
    %v651 = vpack.c.b16 %v609, %v607
    %v652 = vpack.c.b16 %v612, %v610
    %v653 = vpack.c.b16 %v613, %v611
    %v654 = vpack.c.b16 %v616, %v614
    %v655 = vpack.c.b16 %v617, %v615
    %v656 = vpack.c.b16 %v620, %v618
    %v657 = vpack.c.b16 %v621, %v619
    %v658 = vpack.c.b16 %v624, %v622
    %v659 = vpack.c.b16 %v625, %v623
    %v660 = vpack.c.b16 %v628, %v626
    %v661 = vpack.c.b16 %v629, %v627
    %694 = vmatprep.subr.bf16.mxu0 %v631
    %695 = vmatpush1.bf16.msra.mxu0 %v630
    %696 = vmatprep.subr.bf16.mxu0 %v633
    %697 = vmatpush1.bf16.msra.mxu0 %v632
    %698 = vmatprep.subr.bf16.mxu0 %v635
    %699 = vmatpush1.bf16.msra.mxu0 %v634
    %700 = vmatprep.subr.bf16.mxu0 %v637
    %701 = vmatpush1.bf16.msra.mxu0 %v636
    %702 = vmatprep.subr.bf16.mxu0 %v639
    %703 = vmatpush1.bf16.msra.mxu0 %v638
    %704 = vmatprep.subr.bf16.mxu0 %v641
    %705 = vmatpush1.bf16.msra.mxu0 %v640
    %706 = vmatprep.subr.bf16.mxu0 %v643
    %707 = vmatpush1.bf16.msra.mxu0 %v642
    %708 = vmatprep.subr.bf16.mxu0 %v645
    %709 = vmatpush1.bf16.msra.mxu0 %v644
    %710 = vmatprep.subr.bf16.mxu0 %v647
    %711 = vmatpush1.bf16.msra.mxu0 %v646
    %712 = vmatprep.subr.bf16.mxu0 %v649
    %713 = vmatpush1.bf16.msra.mxu0 %v648
    %714 = vmatprep.subr.bf16.mxu0 %v651
    %715 = vmatpush1.bf16.msra.mxu0 %v650
    %716 = vmatprep.subr.bf16.mxu0 %v653
    %717 = vmatpush1.bf16.msra.mxu0 %v652
    %718 = vmatprep.subr.bf16.mxu0 %v655
    %719 = vmatpush1.bf16.msra.mxu0 %v654
    %720 = vmatprep.subr.bf16.mxu0 %v657
    %721 = vmatpush1.bf16.msra.mxu0 %v656
    %722 = vmatprep.subr.bf16.mxu0 %v659
    %723 = vmatpush1.bf16.msra.mxu0 %v658
    %724 = vmatprep.subr.bf16.mxu0 %v661
    %725 = vmatpush1.bf16.msra.mxu0 %v660
    %726 = vmatprep.mubr.bf16.mxu0 %v486
    %727 = vmatmul.mubr.bf16.gmra.mrb[0].mxu0 %v485
    %v728 = vpop.f32.mrb[0].mxu0
    %v729 = vadd.f32 0.0, %v728
    %v730 = vpop.f32.mrb[0].mxu0
    %v731 = vadd.f32 0.0, %v730
    %v732 = vpop.f32.mrb[0].mxu0
    %v733 = vadd.f32 0.0, %v732
    %v734 = vpop.f32.mrb[0].mxu0
    %v735 = vadd.f32 0.0, %v734
    %736 = vmatprep.mubr.bf16.mxu0 %v488
    %737 = vmatmul.mubr.bf16.gmra.mrb[0].mxu0 %v487
    %v738 = vpop.f32.mrb[0].mxu0
    %v739 = vadd.f32 0.0, %v738
    %v740 = vpop.f32.mrb[0].mxu0
    %v741 = vadd.f32 0.0, %v740
    %v742 = vpop.f32.mrb[0].mxu0
    %v743 = vadd.f32 0.0, %v742
    %v744 = vpop.f32.mrb[0].mxu0
    %v745 = vadd.f32 0.0, %v744
    %746 = vmatprep.mubr.bf16.mxu0 %v490
    %747 = vmatmul.mubr.bf16.gmra.mrb[0].mxu0 %v489
    %v748 = vpop.f32.mrb[0].mxu0
    %v749 = vadd.f32 0.0, %v748
    %v750 = vpop.f32.mrb[0].mxu0
    %v751 = vadd.f32 0.0, %v750
    %v752 = vpop.f32.mrb[0].mxu0
    %v753 = vadd.f32 0.0, %v752
    %v754 = vpop.f32.mrb[0].mxu0
    %v755 = vadd.f32 0.0, %v754
    %756 = vmatprep.mubr.bf16.mxu0 %v492
    %757 = vmatmul.mubr.bf16.gmra.mrb[0].mxu0 %v491
    %v758 = vpop.f32.mrb[0].mxu0
    %v759 = vadd.f32 0.0, %v758
    %v760 = vpop.f32.mrb[0].mxu0
    %v761 = vadd.f32 0.0, %v760
    %v762 = vpop.f32.mrb[0].mxu0
    %v763 = vadd.f32 0.0, %v762
    %v764 = vpop.f32.mrb[0].mxu0
    %v765 = vadd.f32 0.0, %v764
    %766 = vmatprep.mubr.bf16.mxu0 %v494
    %767 = vmatmul.mubr.bf16.gmra.mrb[0].mxu0 %v493
    %v768 = vpop.f32.mrb[0].mxu0
    %v769 = vadd.f32 0.0, %v768
    %v770 = vpop.f32.mrb[0].mxu0
    %v771 = vadd.f32 0.0, %v770
    %v772 = vpop.f32.mrb[0].mxu0
    %v773 = vadd.f32 0.0, %v772
    %v774 = vpop.f32.mrb[0].mxu0
    %v775 = vadd.f32 0.0, %v774
    %776 = vmatprep.mubr.bf16.mxu0 %v496
    %777 = vmatmul.mubr.bf16.gmra.mrb[0].mxu0 %v495
    %v778 = vpop.f32.mrb[0].mxu0
    %v779 = vadd.f32 0.0, %v778
    %v780 = vpop.f32.mrb[0].mxu0
    %v781 = vadd.f32 0.0, %v780
    %v782 = vpop.f32.mrb[0].mxu0
    %v783 = vadd.f32 0.0, %v782
    %v784 = vpop.f32.mrb[0].mxu0
    %v785 = vadd.f32 0.0, %v784
    %786 = vmatprep.mubr.bf16.mxu0 %v498
    %787 = vmatmul.mubr.bf16.gmra.mrb[0].mxu0 %v497
    %v788 = vpop.f32.mrb[0].mxu0
    %v789 = vadd.f32 0.0, %v788
    %v790 = vpop.f32.mrb[0].mxu0
    %v791 = vadd.f32 0.0, %v790
    %v792 = vpop.f32.mrb[0].mxu0
    %v793 = vadd.f32 0.0, %v792
    %v794 = vpop.f32.mrb[0].mxu0
    %v795 = vadd.f32 0.0, %v794
    %796 = vmatprep.mubr.bf16.mxu0 %v500
    %797 = vmatmul.mubr.bf16.gmra.mrb[0].mxu0 %v499
    %v798 = vpop.f32.mrb[0].mxu0
    %v799 = vadd.f32 0.0, %v798
    %v800 = vpop.f32.mrb[0].mxu0
    %v801 = vadd.f32 0.0, %v800
    %v802 = vpop.f32.mrb[0].mxu0
    %v803 = vadd.f32 0.0, %v802
    %v804 = vpop.f32.mrb[0].mxu0
    %v805 = vadd.f32 0.0, %v804
    %806 = vdwg.mxu0
    %v839 = vunpack.c.l.b16 %v449
    %v840 = vunpack.c.h.b16 %v449
    %v841 = vunpack.c.l.b16 %v450
    %v842 = vunpack.c.h.b16 %v450
    %v843 = vunpack.c.l.b16 %v451
    %v844 = vunpack.c.h.b16 %v451
    %v845 = vunpack.c.l.b16 %v452
    %v846 = vunpack.c.h.b16 %v452
    %v847 = vunpack.c.l.b16 %v453
    %v848 = vunpack.c.h.b16 %v453
    %v849 = vunpack.c.l.b16 %v454
    %v850 = vunpack.c.h.b16 %v454
    %v851 = vunpack.c.l.b16 %v455
    %v852 = vunpack.c.h.b16 %v455
    %v853 = vunpack.c.l.b16 %v456
    %v854 = vunpack.c.h.b16 %v456
    %v855 = vunpack.c.l.b16 %v457
    %v856 = vunpack.c.h.b16 %v457
    %v857 = vunpack.c.l.b16 %v458
    %v858 = vunpack.c.h.b16 %v458
    %v859 = vunpack.c.l.b16 %v459
    %v860 = vunpack.c.h.b16 %v459
    %v861 = vunpack.c.l.b16 %v460
    %v862 = vunpack.c.h.b16 %v460
    %v863 = vunpack.c.l.b16 %v461
    %v864 = vunpack.c.h.b16 %v461
    %v865 = vunpack.c.l.b16 %v462
    %v866 = vunpack.c.h.b16 %v462
    %v867 = vunpack.c.l.b16 %v463
    %v868 = vunpack.c.h.b16 %v463
    %v869 = vunpack.c.l.b16 %v464
    %v870 = vunpack.c.h.b16 %v464
    %v871 = vunpack.c.l.b16 %v465
    %v872 = vunpack.c.h.b16 %v465
    %v873 = vunpack.c.l.b16 %v466
    %v874 = vunpack.c.h.b16 %v466
    %v875 = vunpack.c.l.b16 %v467
    %v876 = vunpack.c.h.b16 %v467
    %v877 = vunpack.c.l.b16 %v468
    %v878 = vunpack.c.h.b16 %v468
    %v879 = vunpack.c.l.b16 %v469
    %v880 = vunpack.c.h.b16 %v469
    %v881 = vunpack.c.l.b16 %v470
    %v882 = vunpack.c.h.b16 %v470
    %v883 = vunpack.c.l.b16 %v471
    %v884 = vunpack.c.h.b16 %v471
    %v885 = vunpack.c.l.b16 %v472
    %v886 = vunpack.c.h.b16 %v472
    %v887 = vunpack.c.l.b16 %v473
    %v888 = vunpack.c.h.b16 %v473
    %v889 = vunpack.c.l.b16 %v474
    %v890 = vunpack.c.h.b16 %v474
    %v891 = vunpack.c.l.b16 %v475
    %v892 = vunpack.c.h.b16 %v475
    %v893 = vunpack.c.l.b16 %v476
    %v894 = vunpack.c.h.b16 %v476
    %v895 = vunpack.c.l.b16 %v477
    %v896 = vunpack.c.h.b16 %v477
    %v897 = vunpack.c.l.b16 %v478
    %v898 = vunpack.c.h.b16 %v478
    %v899 = vunpack.c.l.b16 %v479
    %v900 = vunpack.c.h.b16 %v479
    %v901 = vunpack.c.l.b16 %v480
    %v902 = vunpack.c.h.b16 %v480
    %v903 = vpack.c.b16 %v841, %v839
    %v904 = vpack.c.b16 %v842, %v840
    %v905 = vpack.c.b16 %v845, %v843
    %v906 = vpack.c.b16 %v846, %v844
    %v907 = vpack.c.b16 %v849, %v847
    %v908 = vpack.c.b16 %v850, %v848
    %v909 = vpack.c.b16 %v853, %v851
    %v910 = vpack.c.b16 %v854, %v852
    %v911 = vpack.c.b16 %v857, %v855
    %v912 = vpack.c.b16 %v858, %v856
    %v913 = vpack.c.b16 %v861, %v859
    %v914 = vpack.c.b16 %v862, %v860
    %v915 = vpack.c.b16 %v865, %v863
    %v916 = vpack.c.b16 %v866, %v864
    %v917 = vpack.c.b16 %v869, %v867
    %v918 = vpack.c.b16 %v870, %v868
    %v919 = vpack.c.b16 %v873, %v871
    %v920 = vpack.c.b16 %v874, %v872
    %v921 = vpack.c.b16 %v877, %v875
    %v922 = vpack.c.b16 %v878, %v876
    %v923 = vpack.c.b16 %v881, %v879
    %v924 = vpack.c.b16 %v882, %v880
    %v925 = vpack.c.b16 %v885, %v883
    %v926 = vpack.c.b16 %v886, %v884
    %v927 = vpack.c.b16 %v889, %v887
    %v928 = vpack.c.b16 %v890, %v888
    %v929 = vpack.c.b16 %v893, %v891
    %v930 = vpack.c.b16 %v894, %v892
    %v931 = vpack.c.b16 %v897, %v895
    %v932 = vpack.c.b16 %v898, %v896
    %v933 = vpack.c.b16 %v901, %v899
    %v934 = vpack.c.b16 %v902, %v900
    %967 = vmatprep.subr.bf16.mxu0 %v904
    %968 = vmatpush1.bf16.msra.mxu0 %v903
    %969 = vmatprep.subr.bf16.mxu0 %v906
    %970 = vmatpush1.bf16.msra.mxu0 %v905
    %971 = vmatprep.subr.bf16.mxu0 %v908
    %972 = vmatpush1.bf16.msra.mxu0 %v907
    %973 = vmatprep.subr.bf16.mxu0 %v910
    %974 = vmatpush1.bf16.msra.mxu0 %v909
    %975 = vmatprep.subr.bf16.mxu0 %v912
    %976 = vmatpush1.bf16.msra.mxu0 %v911
    %977 = vmatprep.subr.bf16.mxu0 %v914
    %978 = vmatpush1.bf16.msra.mxu0 %v913
    %979 = vmatprep.subr.bf16.mxu0 %v916
    %980 = vmatpush1.bf16.msra.mxu0 %v915
    %981 = vmatprep.subr.bf16.mxu0 %v918
    %982 = vmatpush1.bf16.msra.mxu0 %v917
    %983 = vmatprep.subr.bf16.mxu0 %v920
    %984 = vmatpush1.bf16.msra.mxu0 %v919
    %985 = vmatprep.subr.bf16.mxu0 %v922
    %986 = vmatpush1.bf16.msra.mxu0 %v921
    %987 = vmatprep.subr.bf16.mxu0 %v924
    %988 = vmatpush1.bf16.msra.mxu0 %v923
    %989 = vmatprep.subr.bf16.mxu0 %v926
    %990 = vmatpush1.bf16.msra.mxu0 %v925
    %991 = vmatprep.subr.bf16.mxu0 %v928
    %992 = vmatpush1.bf16.msra.mxu0 %v927
    %993 = vmatprep.subr.bf16.mxu0 %v930
    %994 = vmatpush1.bf16.msra.mxu0 %v929
    %995 = vmatprep.subr.bf16.mxu0 %v932
    %996 = vmatpush1.bf16.msra.mxu0 %v931
    %997 = vmatprep.subr.bf16.mxu0 %v934
    %998 = vmatpush1.bf16.msra.mxu0 %v933
    %999 = vmatprep.mubr.bf16.mxu0 %v290
    %1000 = vmatmul.mubr.bf16.gmra.mrb[0].mxu0 %v273
    %v1001 = vpop.f32.mrb[0].mxu0
    %v1002 = vadd.f32 %v729, %v1001
    %v1003 = vpop.f32.mrb[0].mxu0
    %v1004 = vadd.f32 %v731, %v1003
    %v1005 = vpop.f32.mrb[0].mxu0
    %v1006 = vadd.f32 %v733, %v1005
    %v1007 = vpop.f32.mrb[0].mxu0
    %v1008 = vadd.f32 %v735, %v1007
    %1009 = vmatprep.mubr.bf16.mxu0 %v308
    %1010 = vmatmul.mubr.bf16.gmra.mrb[0].mxu0 %v299
    %v1011 = vpop.f32.mrb[0].mxu0
    %v1012 = vadd.f32 %v739, %v1011
    %v1013 = vpop.f32.mrb[0].mxu0
    %v1014 = vadd.f32 %v741, %v1013
    %v1015 = vpop.f32.mrb[0].mxu0
    %v1016 = vadd.f32 %v743, %v1015
    %v1017 = vpop.f32.mrb[0].mxu0
    %v1018 = vadd.f32 %v745, %v1017
    %1019 = vmatprep.mubr.bf16.mxu0 %v326
    %1020 = vmatmul.mubr.bf16.gmra.mrb[0].mxu0 %v317
    %v1021 = vpop.f32.mrb[0].mxu0
    %v1022 = vadd.f32 %v749, %v1021
    %v1023 = vpop.f32.mrb[0].mxu0
    %v1024 = vadd.f32 %v751, %v1023
    %v1025 = vpop.f32.mrb[0].mxu0
    %v1026 = vadd.f32 %v753, %v1025
    %v1027 = vpop.f32.mrb[0].mxu0
    %v1028 = vadd.f32 %v755, %v1027
    %1029 = vmatprep.mubr.bf16.mxu0 %v344
    %1030 = vmatmul.mubr.bf16.gmra.mrb[0].mxu0 %v335
    %v1031 = vpop.f32.mrb[0].mxu0
    %v1032 = vadd.f32 %v759, %v1031
    %v1033 = vpop.f32.mrb[0].mxu0
    %v1034 = vadd.f32 %v761, %v1033
    %v1035 = vpop.f32.mrb[0].mxu0
    %v1036 = vadd.f32 %v763, %v1035
    %v1037 = vpop.f32.mrb[0].mxu0
    %v1038 = vadd.f32 %v765, %v1037
    %1039 = vmatprep.mubr.bf16.mxu0 %v378
    %1040 = vmatmul.mubr.bf16.gmra.mrb[0].mxu0 %v361
    %v1041 = vpop.f32.mrb[0].mxu0
    %v1042 = vadd.f32 %v769, %v1041
    %v1043 = vpop.f32.mrb[0].mxu0
    %v1044 = vadd.f32 %v771, %v1043
    %v1045 = vpop.f32.mrb[0].mxu0
    %v1046 = vadd.f32 %v773, %v1045
    %v1047 = vpop.f32.mrb[0].mxu0
    %v1048 = vadd.f32 %v775, %v1047
    %1049 = vmatprep.mubr.bf16.mxu0 %v396
    %1050 = vmatmul.mubr.bf16.gmra.mrb[0].mxu0 %v387
    %v1051 = vpop.f32.mrb[0].mxu0
    %v1052 = vadd.f32 %v779, %v1051
    %v1053 = vpop.f32.mrb[0].mxu0
    %v1054 = vadd.f32 %v781, %v1053
    %v1055 = vpop.f32.mrb[0].mxu0
    %v1056 = vadd.f32 %v783, %v1055
    %v1057 = vpop.f32.mrb[0].mxu0
    %v1058 = vadd.f32 %v785, %v1057
    %1059 = vmatprep.mubr.bf16.mxu0 %v414
    %1060 = vmatmul.mubr.bf16.gmra.mrb[0].mxu0 %v405
    %v1061 = vpop.f32.mrb[0].mxu0
    %v1062 = vadd.f32 %v789, %v1061
    %v1063 = vpop.f32.mrb[0].mxu0
    %v1064 = vadd.f32 %v791, %v1063
    %v1065 = vpop.f32.mrb[0].mxu0
    %v1066 = vadd.f32 %v793, %v1065
    %v1067 = vpop.f32.mrb[0].mxu0
    %v1068 = vadd.f32 %v795, %v1067
    %1069 = vmatprep.mubr.bf16.mxu0 %v432
    %1070 = vmatmul.mubr.bf16.gmra.mrb[0].mxu0 %v423
    %v1071 = vpop.f32.mrb[0].mxu0
    %v1072 = vadd.f32 %v799, %v1071
    %v1073 = vpop.f32.mrb[0].mxu0
    %v1074 = vadd.f32 %v801, %v1073
    %v1075 = vpop.f32.mrb[0].mxu0
    %v1076 = vadd.f32 %v803, %v1075
    %v1077 = vpop.f32.mrb[0].mxu0
    %v1078 = vadd.f32 %v805, %v1077
    %1079 = vdwg.mxu0
    %v1080 = vld [vmem:[#allocation2 + $0x10] sm:$0xfe]
    %v1081 = vld [vmem:[#allocation2 + $0x18] sm:$0xfe]
    %v1082 = vld [vmem:[#allocation2 + $0x20] sm:$0xff]
    %v1083 = vld [vmem:[#allocation2 + $0x28] sm:$0xff]
    %v1084 = vld [vmem:[#allocation2 + $0x30] sm:$0xff]
    %v1085 = vld [vmem:[#allocation2 + $0x38] sm:$0xff]
    %v1086 = vld [vmem:[#allocation2 + $0x40] sm:$0xff]
    %v1087 = vld [vmem:[#allocation2 + $0x48] sm:$0xff]
    %v1088 = vld [vmem:[#allocation2 + $0x50] sm:$0xff]
    %v1089 = vld [vmem:[#allocation2 + $0x58] sm:$0xff]
    %v1090 = vld [vmem:[#allocation2 + $0x60] sm:$0xff]
    %v1091 = vld [vmem:[#allocation2 + $0x68] sm:$0xff]
    %v1092 = vld [vmem:[#allocation2 + $0x70] sm:$0xff]
    %v1093 = vld [vmem:[#allocation2 + $0x78] sm:$0xff]
    %v1094 = vld [vmem:[#allocation2 + $0x80] sm:$0xff]
    %v1095 = vld [vmem:[#allocation2 + $0x88] sm:$0xff]
    %v1096 = vld [vmem:[#allocation2 + $0x90] sm:$0x1]
    %v1097 = vld [vmem:[#allocation2 + $0x98] sm:$0x1]
    %v1098 = vld [vmem:[#allocation2 + $0xd0] sm:$0xfe]
    %v1099 = vld [vmem:[#allocation2 + $0xd8] sm:$0xfe]
    %v1100 = vld [vmem:[#allocation2 + $0xe0] sm:$0xff]
    %v1101 = vld [vmem:[#allocation2 + $0xe8] sm:$0xff]
    %v1102 = vld [vmem:[#allocation2 + $0xf0] sm:$0xff]
    %v1103 = vld [vmem:[#allocation2 + $0xf8] sm:$0xff]
    %v1104 = vld [vmem:[#allocation2 + $0x100] sm:$0xff]
    %v1105 = vld [vmem:[#allocation2 + $0x108] sm:$0xff]
    %v1106 = vld [vmem:[#allocation2 + $0x110] sm:$0xff]
    %v1107 = vld [vmem:[#allocation2 + $0x118] sm:$0xff]
    %v1108 = vld [vmem:[#allocation2 + $0x120] sm:$0xff]
    %v1109 = vld [vmem:[#allocation2 + $0x128] sm:$0xff]
    %v1110 = vld [vmem:[#allocation2 + $0x130] sm:$0xff]
    %v1111 = vld [vmem:[#allocation2 + $0x138] sm:$0xff]
    %v1112 = vld [vmem:[#allocation2 + $0x140] sm:$0xff]
    %v1113 = vld [vmem:[#allocation2 + $0x148] sm:$0xff]
    %v1114 = vld [vmem:[#allocation2 + $0x150] sm:$0x1]
    %v1115 = vld [vmem:[#allocation2 + $0x158] sm:$0x1]
    %v1116 = vpack.c.bf16 %v1082, %v1080
    %v1117 = vpack.c.bf16 %v1083, %v1081
    %v1118 = vpack.c.bf16 %v1086, %v1084
    %v1119 = vpack.c.bf16 %v1087, %v1085
    %v1120 = vpack.c.bf16 %v1090, %v1088
    %v1121 = vpack.c.bf16 %v1091, %v1089
    %v1122 = vpack.c.bf16 %v1094, %v1092
    %v1123 = vpack.c.bf16 %v1095, %v1093
    %v1124 = vpack.c.bf16 %v1096, %v1096
    %v1125 = vpack.c.bf16 %v1097, %v1097
    %v1126 = vpack.c.bf16 %v1100, %v1098
    %v1127 = vpack.c.bf16 %v1101, %v1099
    %v1128 = vpack.c.bf16 %v1104, %v1102
    %v1129 = vpack.c.bf16 %v1105, %v1103
    %v1130 = vpack.c.bf16 %v1108, %v1106
    %v1131 = vpack.c.bf16 %v1109, %v1107
    %v1132 = vpack.c.bf16 %v1112, %v1110
    %v1133 = vpack.c.bf16 %v1113, %v1111
    %v1134 = vpack.c.bf16 %v1114, %v1114
    %v1135 = vpack.c.bf16 %v1115, %v1115
    %vm1136 = vmpackc.low %vm91, %vm91
    %v1137 = vsel %vm1136, 65537, 0
    %v1138 = vunpack.c.l.b16 %v1137
    %v1139 = vpack.c.b16 %v1138, %v1138
    %vm1140 = vsmask.f32 256
    %v1142 = vshrl.u32 %v1139, 16
    %v1144 = vrot.slane %v1142, 7
    %v1145 = vshll.u32 %v1139, 16
    %v1147 = vor.u32 %v1144, %v1145
    %v1148 = vsel %vm1140, %v1144, %v1147
    %vm1149 = vcmp.ne.s16.totalorder %v1147, 0
    %vm1150 = vcmp.ne.s16.totalorder %v1148, 0
    %vm1151 = vcmp.ne.s16.totalorder %v1144, 0
    %v1152 = vsel %vm1149, %v1116, 0
    %v1153 = vsel %vm1149, %v1117, 0
    %v1154 = vsel %vm1150, %v1118, 0
    %v1155 = vsel %vm1150, %v1119, 0
    %v1156 = vsel %vm1150, %v1120, 0
    %v1157 = vsel %vm1150, %v1121, 0
    %v1158 = vsel %vm1150, %v1122, 0
    %v1159 = vsel %vm1150, %v1123, 0
    %v1160 = vsel %vm1151, %v1124, 0
    %v1161 = vsel %vm1151, %v1125, 0
    %v1162 = vsel %vm1149, %v1126, 0
    %v1163 = vsel %vm1149, %v1127, 0
    %v1164 = vsel %vm1150, %v1128, 0
    %v1165 = vsel %vm1150, %v1129, 0
    %v1166 = vsel %vm1150, %v1130, 0
    %v1167 = vsel %vm1150, %v1131, 0
    %v1168 = vsel %vm1150, %v1132, 0
    %v1169 = vsel %vm1150, %v1133, 0
    %v1170 = vsel %vm1151, %v1134, 0
    %v1171 = vsel %vm1151, %v1135, 0
    %vm1172 = vsmask.f32 7424
    %v1174 = vshrl.u32 %v1152, 16
    %v1176 = vshll.u32 %v1152, 16
    %v1178 = vrot.slane %v1176, 1
    %v1179 = vor.u32 %v1174, %v1178
    %v1181 = vshll.u32 %v1154, 16
    %v1183 = vrot.slane %v1181, 1
    %v1184 = vsel %vm1172, %v1179, %v1183
    %v1186 = vshrl.u32 %v1153, 16
    %v1188 = vshll.u32 %v1153, 16
    %v1190 = vrot.slane %v1188, 1
    %v1191 = vor.u32 %v1186, %v1190
    %v1193 = vshll.u32 %v1155, 16
    %v1195 = vrot.slane %v1193, 1
    %v1196 = vsel %vm1172, %v1191, %v1195
    %v1197 = vshrl.u32 %v1154, 16
    %v1199 = vor.u32 %v1197, %v1183
    %v1201 = vshll.u32 %v1156, 16
    %v1203 = vrot.slane %v1201, 1
    %v1204 = vsel %vm1172, %v1199, %v1203
    %v1205 = vshrl.u32 %v1155, 16
    %v1207 = vor.u32 %v1205, %v1195
    %v1209 = vshll.u32 %v1157, 16
    %v1211 = vrot.slane %v1209, 1
    %v1212 = vsel %vm1172, %v1207, %v1211
    %v1213 = vshrl.u32 %v1156, 16
    %v1215 = vor.u32 %v1213, %v1203
    %v1217 = vshll.u32 %v1158, 16
    %v1219 = vrot.slane %v1217, 1
    %v1220 = vsel %vm1172, %v1215, %v1219
    %v1221 = vshrl.u32 %v1157, 16
    %v1223 = vor.u32 %v1221, %v1211
    %v1225 = vshll.u32 %v1159, 16
    %v1227 = vrot.slane %v1225, 1
    %v1228 = vsel %vm1172, %v1223, %v1227
    %v1229 = vshrl.u32 %v1158, 16
    %v1231 = vor.u32 %v1229, %v1219
    %v1233 = vshll.u32 %v1160, 16
    %v1235 = vrot.slane %v1233, 1
    %v1236 = vsel %vm1172, %v1231, %v1235
    %v1237 = vshrl.u32 %v1159, 16
    %v1239 = vor.u32 %v1237, %v1227
    %v1241 = vshll.u32 %v1161, 16
    %v1243 = vrot.slane %v1241, 1
    %v1244 = vsel %vm1172, %v1239, %v1243
    %v1246 = vshrl.u32 %v1162, 16
    %v1248 = vshll.u32 %v1162, 16
    %v1250 = vrot.slane %v1248, 1
    %v1251 = vor.u32 %v1246, %v1250
    %v1253 = vshll.u32 %v1164, 16
    %v1255 = vrot.slane %v1253, 1
    %v1256 = vsel %vm1172, %v1251, %v1255
    %v1258 = vshrl.u32 %v1163, 16
    %v1260 = vshll.u32 %v1163, 16
    %v1262 = vrot.slane %v1260, 1
    %v1263 = vor.u32 %v1258, %v1262
    %v1265 = vshll.u32 %v1165, 16
    %v1267 = vrot.slane %v1265, 1
    %v1268 = vsel %vm1172, %v1263, %v1267
    %v1269 = vshrl.u32 %v1164, 16
    %v1271 = vor.u32 %v1269, %v1255
    %v1273 = vshll.u32 %v1166, 16
    %v1275 = vrot.slane %v1273, 1
    %v1276 = vsel %vm1172, %v1271, %v1275
    %v1277 = vshrl.u32 %v1165, 16
    %v1279 = vor.u32 %v1277, %v1267
    %v1281 = vshll.u32 %v1167, 16
    %v1283 = vrot.slane %v1281, 1
    %v1284 = vsel %vm1172, %v1279, %v1283
    %v1285 = vshrl.u32 %v1166, 16
    %v1287 = vor.u32 %v1285, %v1275
    %v1289 = vshll.u32 %v1168, 16
    %v1291 = vrot.slane %v1289, 1
    %v1292 = vsel %vm1172, %v1287, %v1291
    %v1293 = vshrl.u32 %v1167, 16
    %v1295 = vor.u32 %v1293, %v1283
    %v1297 = vshll.u32 %v1169, 16
    %v1299 = vrot.slane %v1297, 1
    %v1300 = vsel %vm1172, %v1295, %v1299
    %v1301 = vshrl.u32 %v1168, 16
    %v1303 = vor.u32 %v1301, %v1291
    %v1305 = vshll.u32 %v1170, 16
    %v1307 = vrot.slane %v1305, 1
    %v1308 = vsel %vm1172, %v1303, %v1307
    %v1309 = vshrl.u32 %v1169, 16
    %v1311 = vor.u32 %v1309, %v1299
    %v1313 = vshll.u32 %v1171, 16
    %v1315 = vrot.slane %v1313, 1
    %v1316 = vsel %vm1172, %v1311, %v1315
    %s1333 = scalar_lea.vmem [#allocation6], 512
    %v1334 = vld [vmem:[%s1333] sm:$0xff]
    %v1335 = vld [vmem:[%s1333 + $0x8] sm:$0xff]
    %v1336 = vld [vmem:[%s1333 + $0x10] sm:$0xff]
    %v1337 = vld [vmem:[%s1333 + $0x18] sm:$0xff]
    %v1338 = vld [vmem:[%s1333 + $0x20] sm:$0xff]
    %v1339 = vld [vmem:[%s1333 + $0x28] sm:$0xff]
    %v1340 = vld [vmem:[%s1333 + $0x30] sm:$0xff]
    %v1341 = vld [vmem:[%s1333 + $0x38] sm:$0xff]
    %v1342 = vld [vmem:[%s1333 + $0x40] sm:$0xff]
    %v1343 = vld [vmem:[%s1333 + $0x48] sm:$0xff]
    %v1344 = vld [vmem:[%s1333 + $0x50] sm:$0xff]
    %v1345 = vld [vmem:[%s1333 + $0x58] sm:$0xff]
    %v1346 = vld [vmem:[%s1333 + $0x60] sm:$0xff]
    %v1347 = vld [vmem:[%s1333 + $0x68] sm:$0xff]
    %v1348 = vld [vmem:[%s1333 + $0x70] sm:$0xff]
    %v1349 = vld [vmem:[%s1333 + $0x78] sm:$0xff]
    %v1350 = vld [vmem:[%s1333 + $0x80] sm:$0xff]
    %v1351 = vld [vmem:[%s1333 + $0x88] sm:$0xff]
    %v1352 = vld [vmem:[%s1333 + $0x90] sm:$0xff]
    %v1353 = vld [vmem:[%s1333 + $0x98] sm:$0xff]
    %v1354 = vld [vmem:[%s1333 + $0xa0] sm:$0xff]
    %v1355 = vld [vmem:[%s1333 + $0xa8] sm:$0xff]
    %v1356 = vld [vmem:[%s1333 + $0xb0] sm:$0xff]
    %v1357 = vld [vmem:[%s1333 + $0xb8] sm:$0xff]
    %v1358 = vld [vmem:[%s1333 + $0xc0] sm:$0xff]
    %v1359 = vld [vmem:[%s1333 + $0xc8] sm:$0xff]
    %v1360 = vld [vmem:[%s1333 + $0xd0] sm:$0xff]
    %v1361 = vld [vmem:[%s1333 + $0xd8] sm:$0xff]
    %v1362 = vld [vmem:[%s1333 + $0xe0] sm:$0xff]
    %v1363 = vld [vmem:[%s1333 + $0xe8] sm:$0xff]
    %v1364 = vld [vmem:[%s1333 + $0xf0] sm:$0xff]
    %v1365 = vld [vmem:[%s1333 + $0xf8] sm:$0xff]
    %v1398 = vunpack.c.l.b16 %v1334
    %v1399 = vunpack.c.h.b16 %v1334
    %v1400 = vunpack.c.l.b16 %v1335
    %v1401 = vunpack.c.h.b16 %v1335
    %v1402 = vunpack.c.l.b16 %v1336
    %v1403 = vunpack.c.h.b16 %v1336
    %v1404 = vunpack.c.l.b16 %v1337
    %v1405 = vunpack.c.h.b16 %v1337
    %v1406 = vunpack.c.l.b16 %v1338
    %v1407 = vunpack.c.h.b16 %v1338
    %v1408 = vunpack.c.l.b16 %v1339
    %v1409 = vunpack.c.h.b16 %v1339
    %v1410 = vunpack.c.l.b16 %v1340
    %v1411 = vunpack.c.h.b16 %v1340
    %v1412 = vunpack.c.l.b16 %v1341
    %v1413 = vunpack.c.h.b16 %v1341
    %v1414 = vunpack.c.l.b16 %v1342
    %v1415 = vunpack.c.h.b16 %v1342
    %v1416 = vunpack.c.l.b16 %v1343
    %v1417 = vunpack.c.h.b16 %v1343
    %v1418 = vunpack.c.l.b16 %v1344
    %v1419 = vunpack.c.h.b16 %v1344
    %v1420 = vunpack.c.l.b16 %v1345
    %v1421 = vunpack.c.h.b16 %v1345
    %v1422 = vunpack.c.l.b16 %v1346
    %v1423 = vunpack.c.h.b16 %v1346
    %v1424 = vunpack.c.l.b16 %v1347
    %v1425 = vunpack.c.h.b16 %v1347
    %v1426 = vunpack.c.l.b16 %v1348
    %v1427 = vunpack.c.h.b16 %v1348
    %v1428 = vunpack.c.l.b16 %v1349
    %v1429 = vunpack.c.h.b16 %v1349
    %v1430 = vunpack.c.l.b16 %v1350
    %v1431 = vunpack.c.h.b16 %v1350
    %v1432 = vunpack.c.l.b16 %v1351
    %v1433 = vunpack.c.h.b16 %v1351
    %v1434 = vunpack.c.l.b16 %v1352
    %v1435 = vunpack.c.h.b16 %v1352
    %v1436 = vunpack.c.l.b16 %v1353
    %v1437 = vunpack.c.h.b16 %v1353
    %v1438 = vunpack.c.l.b16 %v1354
    %v1439 = vunpack.c.h.b16 %v1354
    %v1440 = vunpack.c.l.b16 %v1355
    %v1441 = vunpack.c.h.b16 %v1355
    %v1442 = vunpack.c.l.b16 %v1356
    %v1443 = vunpack.c.h.b16 %v1356
    %v1444 = vunpack.c.l.b16 %v1357
    %v1445 = vunpack.c.h.b16 %v1357
    %v1446 = vunpack.c.l.b16 %v1358
    %v1447 = vunpack.c.h.b16 %v1358
    %v1448 = vunpack.c.l.b16 %v1359
    %v1449 = vunpack.c.h.b16 %v1359
    %v1450 = vunpack.c.l.b16 %v1360
    %v1451 = vunpack.c.h.b16 %v1360
    %v1452 = vunpack.c.l.b16 %v1361
    %v1453 = vunpack.c.h.b16 %v1361
    %v1454 = vunpack.c.l.b16 %v1362
    %v1455 = vunpack.c.h.b16 %v1362
    %v1456 = vunpack.c.l.b16 %v1363
    %v1457 = vunpack.c.h.b16 %v1363
    %v1458 = vunpack.c.l.b16 %v1364
    %v1459 = vunpack.c.h.b16 %v1364
    %v1460 = vunpack.c.l.b16 %v1365
    %v1461 = vunpack.c.h.b16 %v1365
    %v1462 = vpack.c.b16 %v1400, %v1398
    %v1463 = vpack.c.b16 %v1401, %v1399
    %v1464 = vpack.c.b16 %v1404, %v1402
    %v1465 = vpack.c.b16 %v1405, %v1403
    %v1466 = vpack.c.b16 %v1408, %v1406
    %v1467 = vpack.c.b16 %v1409, %v1407
    %v1468 = vpack.c.b16 %v1412, %v1410
    %v1469 = vpack.c.b16 %v1413, %v1411
    %v1470 = vpack.c.b16 %v1416, %v1414
    %v1471 = vpack.c.b16 %v1417, %v1415
    %v1472 = vpack.c.b16 %v1420, %v1418
    %v1473 = vpack.c.b16 %v1421, %v1419
    %v1474 = vpack.c.b16 %v1424, %v1422
    %v1475 = vpack.c.b16 %v1425, %v1423
    %v1476 = vpack.c.b16 %v1428, %v1426
    %v1477 = vpack.c.b16 %v1429, %v1427
    %v1478 = vpack.c.b16 %v1432, %v1430
    %v1479 = vpack.c.b16 %v1433, %v1431
    %v1480 = vpack.c.b16 %v1436, %v1434
    %v1481 = vpack.c.b16 %v1437, %v1435
    %v1482 = vpack.c.b16 %v1440, %v1438
    %v1483 = vpack.c.b16 %v1441, %v1439
    %v1484 = vpack.c.b16 %v1444, %v1442
    %v1485 = vpack.c.b16 %v1445, %v1443
    %v1486 = vpack.c.b16 %v1448, %v1446
    %v1487 = vpack.c.b16 %v1449, %v1447
    %v1488 = vpack.c.b16 %v1452, %v1450
    %v1489 = vpack.c.b16 %v1453, %v1451
    %v1490 = vpack.c.b16 %v1456, %v1454
    %v1491 = vpack.c.b16 %v1457, %v1455
    %v1492 = vpack.c.b16 %v1460, %v1458
    %v1493 = vpack.c.b16 %v1461, %v1459
    %1526 = vmatprep.subr.bf16.mxu0 %v1463
    %1527 = vmatpush1.bf16.msra.mxu0 %v1462
    %1528 = vmatprep.subr.bf16.mxu0 %v1465
    %1529 = vmatpush1.bf16.msra.mxu0 %v1464
    %1530 = vmatprep.subr.bf16.mxu0 %v1467
    %1531 = vmatpush1.bf16.msra.mxu0 %v1466
    %1532 = vmatprep.subr.bf16.mxu0 %v1469
    %1533 = vmatpush1.bf16.msra.mxu0 %v1468
    %1534 = vmatprep.subr.bf16.mxu0 %v1471
    %1535 = vmatpush1.bf16.msra.mxu0 %v1470
    %1536 = vmatprep.subr.bf16.mxu0 %v1473
    %1537 = vmatpush1.bf16.msra.mxu0 %v1472
    %1538 = vmatprep.subr.bf16.mxu0 %v1475
    %1539 = vmatpush1.bf16.msra.mxu0 %v1474
    %1540 = vmatprep.subr.bf16.mxu0 %v1477
    %1541 = vmatpush1.bf16.msra.mxu0 %v1476
    %1542 = vmatprep.subr.bf16.mxu0 %v1479
    %1543 = vmatpush1.bf16.msra.mxu0 %v1478
    %1544 = vmatprep.subr.bf16.mxu0 %v1481
    %1545 = vmatpush1.bf16.msra.mxu0 %v1480
    %1546 = vmatprep.subr.bf16.mxu0 %v1483
    %1547 = vmatpush1.bf16.msra.mxu0 %v1482
    %1548 = vmatprep.subr.bf16.mxu0 %v1485
    %1549 = vmatpush1.bf16.msra.mxu0 %v1484
    %1550 = vmatprep.subr.bf16.mxu0 %v1487
    %1551 = vmatpush1.bf16.msra.mxu0 %v1486
    %1552 = vmatprep.subr.bf16.mxu0 %v1489
    %1553 = vmatpush1.bf16.msra.mxu0 %v1488
    %1554 = vmatprep.subr.bf16.mxu0 %v1491
    %1555 = vmatpush1.bf16.msra.mxu0 %v1490
    %1556 = vmatprep.subr.bf16.mxu0 %v1493
    %1557 = vmatpush1.bf16.msra.mxu0 %v1492
    %1558 = vmatprep.mubr.bf16.mxu0 %v1196
    %1559 = vmatmul.mubr.bf16.gmra.mrb[0].mxu0 %v1184
    %v1560 = vpop.f32.mrb[0].mxu0
    %v1561 = vadd.f32 0.0, %v1560
    %v1562 = vpop.f32.mrb[0].mxu0
    %v1563 = vadd.f32 0.0, %v1562
    %v1564 = vpop.f32.mrb[0].mxu0
    %v1565 = vadd.f32 0.0, %v1564
    %v1566 = vpop.f32.mrb[0].mxu0
    %v1567 = vadd.f32 0.0, %v1566
    %1568 = vmatprep.mubr.bf16.mxu0 %v1212
    %1569 = vmatmul.mubr.bf16.gmra.mrb[0].mxu0 %v1204
    %v1570 = vpop.f32.mrb[0].mxu0
    %v1571 = vadd.f32 0.0, %v1570
    %v1572 = vpop.f32.mrb[0].mxu0
    %v1573 = vadd.f32 0.0, %v1572
    %v1574 = vpop.f32.mrb[0].mxu0
    %v1575 = vadd.f32 0.0, %v1574
    %v1576 = vpop.f32.mrb[0].mxu0
    %v1577 = vadd.f32 0.0, %v1576
    %1578 = vmatprep.mubr.bf16.mxu0 %v1228
    %1579 = vmatmul.mubr.bf16.gmra.mrb[0].mxu0 %v1220
    %v1580 = vpop.f32.mrb[0].mxu0
    %v1581 = vadd.f32 0.0, %v1580
    %v1582 = vpop.f32.mrb[0].mxu0
    %v1583 = vadd.f32 0.0, %v1582
    %v1584 = vpop.f32.mrb[0].mxu0
    %v1585 = vadd.f32 0.0, %v1584
    %v1586 = vpop.f32.mrb[0].mxu0
    %v1587 = vadd.f32 0.0, %v1586
    %1588 = vmatprep.mubr.bf16.mxu0 %v1244
    %1589 = vmatmul.mubr.bf16.gmra.mrb[0].mxu0 %v1236
    %v1590 = vpop.f32.mrb[0].mxu0
    %v1591 = vadd.f32 0.0, %v1590
    %v1592 = vpop.f32.mrb[0].mxu0
    %v1593 = vadd.f32 0.0, %v1592
    %v1594 = vpop.f32.mrb[0].mxu0
    %v1595 = vadd.f32 0.0, %v1594
    %v1596 = vpop.f32.mrb[0].mxu0
    %v1597 = vadd.f32 0.0, %v1596
    %1598 = vmatprep.mubr.bf16.mxu0 %v1268
    %1599 = vmatmul.mubr.bf16.gmra.mrb[0].mxu0 %v1256
    %v1600 = vpop.f32.mrb[0].mxu0
    %v1601 = vadd.f32 0.0, %v1600
    %v1602 = vpop.f32.mrb[0].mxu0
    %v1603 = vadd.f32 0.0, %v1602
    %v1604 = vpop.f32.mrb[0].mxu0
    %v1605 = vadd.f32 0.0, %v1604
    %v1606 = vpop.f32.mrb[0].mxu0
    %v1607 = vadd.f32 0.0, %v1606
    %1608 = vmatprep.mubr.bf16.mxu0 %v1284
    %1609 = vmatmul.mubr.bf16.gmra.mrb[0].mxu0 %v1276
    %v1610 = vpop.f32.mrb[0].mxu0
    %v1611 = vadd.f32 0.0, %v1610
    %v1612 = vpop.f32.mrb[0].mxu0
    %v1613 = vadd.f32 0.0, %v1612
    %v1614 = vpop.f32.mrb[0].mxu0
    %v1615 = vadd.f32 0.0, %v1614
    %v1616 = vpop.f32.mrb[0].mxu0
    %v1617 = vadd.f32 0.0, %v1616
    %1618 = vmatprep.mubr.bf16.mxu0 %v1300
    %1619 = vmatmul.mubr.bf16.gmra.mrb[0].mxu0 %v1292
    %v1620 = vpop.f32.mrb[0].mxu0
    %v1621 = vadd.f32 0.0, %v1620
    %v1622 = vpop.f32.mrb[0].mxu0
    %v1623 = vadd.f32 0.0, %v1622
    %v1624 = vpop.f32.mrb[0].mxu0
    %v1625 = vadd.f32 0.0, %v1624
    %v1626 = vpop.f32.mrb[0].mxu0
    %v1627 = vadd.f32 0.0, %v1626
    %1628 = vmatprep.mubr.bf16.mxu0 %v1316
    %1629 = vmatmul.mubr.bf16.gmra.mrb[0].mxu0 %v1308
    %v1630 = vpop.f32.mrb[0].mxu0
    %v1631 = vadd.f32 0.0, %v1630
    %v1632 = vpop.f32.mrb[0].mxu0
    %v1633 = vadd.f32 0.0, %v1632
    %v1634 = vpop.f32.mrb[0].mxu0
    %v1635 = vadd.f32 0.0, %v1634
    %v1636 = vpop.f32.mrb[0].mxu0
    %v1637 = vadd.f32 0.0, %v1636
    %1638 = vdwg.mxu0
    %v1639 = vadd.f32 %v1002, %v1561
    %v1640 = vadd.f32 %v1004, %v1563
    %v1641 = vadd.f32 %v1006, %v1565
    %v1642 = vadd.f32 %v1008, %v1567
    %v1643 = vadd.f32 %v1012, %v1571
    %v1644 = vadd.f32 %v1014, %v1573
    %v1645 = vadd.f32 %v1016, %v1575
    %v1646 = vadd.f32 %v1018, %v1577
    %v1647 = vadd.f32 %v1022, %v1581
    %v1648 = vadd.f32 %v1024, %v1583
    %v1649 = vadd.f32 %v1026, %v1585
    %v1650 = vadd.f32 %v1028, %v1587
    %v1651 = vadd.f32 %v1032, %v1591
    %v1652 = vadd.f32 %v1034, %v1593
    %v1653 = vadd.f32 %v1036, %v1595
    %v1654 = vadd.f32 %v1038, %v1597
    %v1655 = vadd.f32 %v1042, %v1601
    %v1656 = vadd.f32 %v1044, %v1603
    %v1657 = vadd.f32 %v1046, %v1605
    %v1658 = vadd.f32 %v1048, %v1607
    %v1659 = vadd.f32 %v1052, %v1611
    %v1660 = vadd.f32 %v1054, %v1613
    %v1661 = vadd.f32 %v1056, %v1615
    %v1662 = vadd.f32 %v1058, %v1617
    %v1663 = vadd.f32 %v1062, %v1621
    %v1664 = vadd.f32 %v1064, %v1623
    %v1665 = vadd.f32 %v1066, %v1625
    %v1666 = vadd.f32 %v1068, %v1627
    %v1667 = vadd.f32 %v1072, %v1631
    %v1668 = vadd.f32 %v1074, %v1633
    %v1669 = vadd.f32 %v1076, %v1635
    %v1670 = vadd.f32 %v1078, %v1637
    %v1671 = vld [vmem:[#allocation2 + $0x10] sm:$0x80]
    %v1672 = vld [vmem:[#allocation2 + $0x18] sm:$0x80]
    %v1673 = vld [vmem:[#allocation2 + $0x90] sm:$0x7f]
    %v1674 = vld [vmem:[#allocation2 + $0x98] sm:$0x7f]
    %v1675 = vld [vmem:[#allocation2 + $0xd0] sm:$0x80]
    %v1676 = vld [vmem:[#allocation2 + $0xd8] sm:$0x80]
    %v1677 = vld [vmem:[#allocation2 + $0x150] sm:$0x7f]
    %v1678 = vld [vmem:[#allocation2 + $0x158] sm:$0x7f]
    %v1679 = vpack.c.bf16 %v1082, %v1671
    %v1680 = vpack.c.bf16 %v1083, %v1672
    %v1681 = vpack.c.bf16 %v1673, %v1673
    %v1682 = vpack.c.bf16 %v1674, %v1674
    %v1683 = vpack.c.bf16 %v1100, %v1675
    %v1684 = vpack.c.bf16 %v1101, %v1676
    %v1685 = vpack.c.bf16 %v1677, %v1677
    %v1686 = vpack.c.bf16 %v1678, %v1678
    %v1687 = vsel %vm234, %v1679, 0
    %v1688 = vsel %vm234, %v1680, 0
    %v1689 = vsel %vm235, %v1118, 0
    %v1690 = vsel %vm235, %v1119, 0
    %v1691 = vsel %vm235, %v1120, 0
    %v1692 = vsel %vm235, %v1121, 0
    %v1693 = vsel %vm235, %v1122, 0
    %v1694 = vsel %vm235, %v1123, 0
    %v1695 = vsel %vm234, %v1681, 0
    %v1696 = vsel %vm234, %v1682, 0
    %v1697 = vsel %vm234, %v1683, 0
    %v1698 = vsel %vm234, %v1684, 0
    %v1699 = vsel %vm235, %v1128, 0
    %v1700 = vsel %vm235, %v1129, 0
    %v1701 = vsel %vm235, %v1130, 0
    %v1702 = vsel %vm235, %v1131, 0
    %v1703 = vsel %vm235, %v1132, 0
    %v1704 = vsel %vm235, %v1133, 0
    %v1705 = vsel %vm234, %v1685, 0
    %v1706 = vsel %vm234, %v1686, 0
    %v1708 = vshrl.u32 %v1687, 16
    %v1710 = vrot.slane %v1708, 3
    %v1711 = vshll.u32 %v1687, 16
    %v1713 = vrot.slane %v1711, 4
    %v1714 = vor.u32 %v1710, %v1713
    %v1716 = vshrl.u32 %v1689, 16
    %v1718 = vrot.slane %v1716, 3
    %v1719 = vshll.u32 %v1689, 16
    %v1721 = vrot.slane %v1719, 4
    %v1722 = vor.u32 %v1718, %v1721
    %v1723 = vsel %vm256, %v1714, %v1722
    %v1725 = vshrl.u32 %v1688, 16
    %v1727 = vrot.slane %v1725, 3
    %v1728 = vshll.u32 %v1688, 16
    %v1730 = vrot.slane %v1728, 4
    %v1731 = vor.u32 %v1727, %v1730
    %v1733 = vshrl.u32 %v1690, 16
    %v1735 = vrot.slane %v1733, 3
    %v1736 = vshll.u32 %v1690, 16
    %v1738 = vrot.slane %v1736, 4
    %v1739 = vor.u32 %v1735, %v1738
    %v1740 = vsel %vm256, %v1731, %v1739
    %v1742 = vshrl.u32 %v1691, 16
    %v1744 = vrot.slane %v1742, 3
    %v1745 = vshll.u32 %v1691, 16
    %v1747 = vrot.slane %v1745, 4
    %v1748 = vor.u32 %v1744, %v1747
    %v1749 = vsel %vm256, %v1722, %v1748
    %v1751 = vshrl.u32 %v1692, 16
    %v1753 = vrot.slane %v1751, 3
    %v1754 = vshll.u32 %v1692, 16
    %v1756 = vrot.slane %v1754, 4
    %v1757 = vor.u32 %v1753, %v1756
    %v1758 = vsel %vm256, %v1739, %v1757
    %v1760 = vshrl.u32 %v1693, 16
    %v1762 = vrot.slane %v1760, 3
    %v1763 = vshll.u32 %v1693, 16
    %v1765 = vrot.slane %v1763, 4
    %v1766 = vor.u32 %v1762, %v1765
    %v1767 = vsel %vm256, %v1748, %v1766
    %v1769 = vshrl.u32 %v1694, 16
    %v1771 = vrot.slane %v1769, 3
    %v1772 = vshll.u32 %v1694, 16
    %v1774 = vrot.slane %v1772, 4
    %v1775 = vor.u32 %v1771, %v1774
    %v1776 = vsel %vm256, %v1757, %v1775
    %v1778 = vshrl.u32 %v1695, 16
    %v1780 = vrot.slane %v1778, 3
    %v1781 = vshll.u32 %v1695, 16
    %v1783 = vrot.slane %v1781, 4
    %v1784 = vor.u32 %v1780, %v1783
    %v1785 = vsel %vm256, %v1766, %v1784
    %v1787 = vshrl.u32 %v1696, 16
    %v1789 = vrot.slane %v1787, 3
    %v1790 = vshll.u32 %v1696, 16
    %v1792 = vrot.slane %v1790, 4
    %v1793 = vor.u32 %v1789, %v1792
    %v1794 = vsel %vm256, %v1775, %v1793
    %v1796 = vshrl.u32 %v1697, 16
    %v1798 = vrot.slane %v1796, 3
    %v1799 = vshll.u32 %v1697, 16
    %v1801 = vrot.slane %v1799, 4
    %v1802 = vor.u32 %v1798, %v1801
    %v1804 = vshrl.u32 %v1699, 16
    %v1806 = vrot.slane %v1804, 3
    %v1807 = vshll.u32 %v1699, 16
    %v1809 = vrot.slane %v1807, 4
    %v1810 = vor.u32 %v1806, %v1809
    %v1811 = vsel %vm256, %v1802, %v1810
    %v1813 = vshrl.u32 %v1698, 16
    %v1815 = vrot.slane %v1813, 3
    %v1816 = vshll.u32 %v1698, 16
    %v1818 = vrot.slane %v1816, 4
    %v1819 = vor.u32 %v1815, %v1818
    %v1821 = vshrl.u32 %v1700, 16
    %v1823 = vrot.slane %v1821, 3
    %v1824 = vshll.u32 %v1700, 16
    %v1826 = vrot.slane %v1824, 4
    %v1827 = vor.u32 %v1823, %v1826
    %v1828 = vsel %vm256, %v1819, %v1827
    %v1830 = vshrl.u32 %v1701, 16
    %v1832 = vrot.slane %v1830, 3
    %v1833 = vshll.u32 %v1701, 16
    %v1835 = vrot.slane %v1833, 4
    %v1836 = vor.u32 %v1832, %v1835
    %v1837 = vsel %vm256, %v1810, %v1836
    %v1839 = vshrl.u32 %v1702, 16
    %v1841 = vrot.slane %v1839, 3
    %v1842 = vshll.u32 %v1702, 16
    %v1844 = vrot.slane %v1842, 4
    %v1845 = vor.u32 %v1841, %v1844
    %v1846 = vsel %vm256, %v1827, %v1845
    %v1848 = vshrl.u32 %v1703, 16
    %v1850 = vrot.slane %v1848, 3
    %v1851 = vshll.u32 %v1703, 16
    %v1853 = vrot.slane %v1851, 4
    %v1854 = vor.u32 %v1850, %v1853
    %v1855 = vsel %vm256, %v1836, %v1854
    %v1857 = vshrl.u32 %v1704, 16
    %v1859 = vrot.slane %v1857, 3
    %v1860 = vshll.u32 %v1704, 16
    %v1862 = vrot.slane %v1860, 4
    %v1863 = vor.u32 %v1859, %v1862
    %v1864 = vsel %vm256, %v1845, %v1863
    %v1866 = vshrl.u32 %v1705, 16
    %v1868 = vrot.slane %v1866, 3
    %v1869 = vshll.u32 %v1705, 16
    %v1871 = vrot.slane %v1869, 4
    %v1872 = vor.u32 %v1868, %v1871
    %v1873 = vsel %vm256, %v1854, %v1872
    %v1875 = vshrl.u32 %v1706, 16
    %v1877 = vrot.slane %v1875, 3
    %v1878 = vshll.u32 %v1706, 16
    %v1880 = vrot.slane %v1878, 4
    %v1881 = vor.u32 %v1877, %v1880
    %v1882 = vsel %vm256, %v1863, %v1881
    %s1899 = scalar_lea.vmem [#allocation6], 768
    %v1900 = vld [vmem:[%s1899] sm:$0xff]
    %v1901 = vld [vmem:[%s1899 + $0x8] sm:$0xff]
    %v1902 = vld [vmem:[%s1899 + $0x10] sm:$0xff]
    %v1903 = vld [vmem:[%s1899 + $0x18] sm:$0xff]
    %v1904 = vld [vmem:[%s1899 + $0x20] sm:$0xff]
    %v1905 = vld [vmem:[%s1899 + $0x28] sm:$0xff]
    %v1906 = vld [vmem:[%s1899 + $0x30] sm:$0xff]
    %v1907 = vld [vmem:[%s1899 + $0x38] sm:$0xff]
    %v1908 = vld [vmem:[%s1899 + $0x40] sm:$0xff]
    %v1909 = vld [vmem:[%s1899 + $0x48] sm:$0xff]
    %v1910 = vld [vmem:[%s1899 + $0x50] sm:$0xff]
    %v1911 = vld [vmem:[%s1899 + $0x58] sm:$0xff]
    %v1912 = vld [vmem:[%s1899 + $0x60] sm:$0xff]
    %v1913 = vld [vmem:[%s1899 + $0x68] sm:$0xff]
    %v1914 = vld [vmem:[%s1899 + $0x70] sm:$0xff]
    %v1915 = vld [vmem:[%s1899 + $0x78] sm:$0xff]
    %v1916 = vld [vmem:[%s1899 + $0x80] sm:$0xff]
    %v1917 = vld [vmem:[%s1899 + $0x88] sm:$0xff]
    %v1918 = vld [vmem:[%s1899 + $0x90] sm:$0xff]
    %v1919 = vld [vmem:[%s1899 + $0x98] sm:$0xff]
    %v1920 = vld [vmem:[%s1899 + $0xa0] sm:$0xff]
    %v1921 = vld [vmem:[%s1899 + $0xa8] sm:$0xff]
    %v1922 = vld [vmem:[%s1899 + $0xb0] sm:$0xff]
    %v1923 = vld [vmem:[%s1899 + $0xb8] sm:$0xff]
    %v1924 = vld [vmem:[%s1899 + $0xc0] sm:$0xff]
    %v1925 = vld [vmem:[%s1899 + $0xc8] sm:$0xff]
    %v1926 = vld [vmem:[%s1899 + $0xd0] sm:$0xff]
    %v1927 = vld [vmem:[%s1899 + $0xd8] sm:$0xff]
    %v1928 = vld [vmem:[%s1899 + $0xe0] sm:$0xff]
    %v1929 = vld [vmem:[%s1899 + $0xe8] sm:$0xff]
    %v1930 = vld [vmem:[%s1899 + $0xf0] sm:$0xff]
    %v1931 = vld [vmem:[%s1899 + $0xf8] sm:$0xff]
    %v1964 = vunpack.c.l.b16 %v1900
    %v1965 = vunpack.c.h.b16 %v1900
    %v1966 = vunpack.c.l.b16 %v1901
    %v1967 = vunpack.c.h.b16 %v1901
    %v1968 = vunpack.c.l.b16 %v1902
    %v1969 = vunpack.c.h.b16 %v1902
    %v1970 = vunpack.c.l.b16 %v1903
    %v1971 = vunpack.c.h.b16 %v1903
    %v1972 = vunpack.c.l.b16 %v1904
    %v1973 = vunpack.c.h.b16 %v1904
    %v1974 = vunpack.c.l.b16 %v1905
    %v1975 = vunpack.c.h.b16 %v1905
    %v1976 = vunpack.c.l.b16 %v1906
    %v1977 = vunpack.c.h.b16 %v1906
    %v1978 = vunpack.c.l.b16 %v1907
    %v1979 = vunpack.c.h.b16 %v1907
    %v1980 = vunpack.c.l.b16 %v1908
    %v1981 = vunpack.c.h.b16 %v1908
    %v1982 = vunpack.c.l.b16 %v1909
    %v1983 = vunpack.c.h.b16 %v1909
    %v1984 = vunpack.c.l.b16 %v1910
    %v1985 = vunpack.c.h.b16 %v1910
    %v1986 = vunpack.c.l.b16 %v1911
    %v1987 = vunpack.c.h.b16 %v1911
    %v1988 = vunpack.c.l.b16 %v1912
    %v1989 = vunpack.c.h.b16 %v1912
    %v1990 = vunpack.c.l.b16 %v1913
    %v1991 = vunpack.c.h.b16 %v1913
    %v1992 = vunpack.c.l.b16 %v1914
    %v1993 = vunpack.c.h.b16 %v1914
    %v1994 = vunpack.c.l.b16 %v1915
    %v1995 = vunpack.c.h.b16 %v1915
    %v1996 = vunpack.c.l.b16 %v1916
    %v1997 = vunpack.c.h.b16 %v1916
    %v1998 = vunpack.c.l.b16 %v1917
    %v1999 = vunpack.c.h.b16 %v1917
    %v2000 = vunpack.c.l.b16 %v1918
    %v2001 = vunpack.c.h.b16 %v1918
    %v2002 = vunpack.c.l.b16 %v1919
    %v2003 = vunpack.c.h.b16 %v1919
    %v2004 = vunpack.c.l.b16 %v1920
    %v2005 = vunpack.c.h.b16 %v1920
    %v2006 = vunpack.c.l.b16 %v1921
    %v2007 = vunpack.c.h.b16 %v1921
    %v2008 = vunpack.c.l.b16 %v1922
    %v2009 = vunpack.c.h.b16 %v1922
    %v2010 = vunpack.c.l.b16 %v1923
    %v2011 = vunpack.c.h.b16 %v1923
    %v2012 = vunpack.c.l.b16 %v1924
    %v2013 = vunpack.c.h.b16 %v1924
    %v2014 = vunpack.c.l.b16 %v1925
    %v2015 = vunpack.c.h.b16 %v1925
    %v2016 = vunpack.c.l.b16 %v1926
    %v2017 = vunpack.c.h.b16 %v1926
    %v2018 = vunpack.c.l.b16 %v1927
    %v2019 = vunpack.c.h.b16 %v1927
    %v2020 = vunpack.c.l.b16 %v1928
    %v2021 = vunpack.c.h.b16 %v1928
    %v2022 = vunpack.c.l.b16 %v1929
    %v2023 = vunpack.c.h.b16 %v1929
    %v2024 = vunpack.c.l.b16 %v1930
    %v2025 = vunpack.c.h.b16 %v1930
    %v2026 = vunpack.c.l.b16 %v1931
    %v2027 = vunpack.c.h.b16 %v1931
    %v2028 = vpack.c.b16 %v1966, %v1964
    %v2029 = vpack.c.b16 %v1967, %v1965
    %v2030 = vpack.c.b16 %v1970, %v1968
    %v2031 = vpack.c.b16 %v1971, %v1969
    %v2032 = vpack.c.b16 %v1974, %v1972
    %v2033 = vpack.c.b16 %v1975, %v1973
    %v2034 = vpack.c.b16 %v1978, %v1976
    %v2035 = vpack.c.b16 %v1979, %v1977
    %v2036 = vpack.c.b16 %v1982, %v1980
    %v2037 = vpack.c.b16 %v1983, %v1981
    %v2038 = vpack.c.b16 %v1986, %v1984
    %v2039 = vpack.c.b16 %v1987, %v1985
    %v2040 = vpack.c.b16 %v1990, %v1988
    %v2041 = vpack.c.b16 %v1991, %v1989
    %v2042 = vpack.c.b16 %v1994, %v1992
    %v2043 = vpack.c.b16 %v1995, %v1993
    %v2044 = vpack.c.b16 %v1998, %v1996
    %v2045 = vpack.c.b16 %v1999, %v1997
    %v2046 = vpack.c.b16 %v2002, %v2000
    %v2047 = vpack.c.b16 %v2003, %v2001
    %v2048 = vpack.c.b16 %v2006, %v2004
    %v2049 = vpack.c.b16 %v2007, %v2005
    %v2050 = vpack.c.b16 %v2010, %v2008
    %v2051 = vpack.c.b16 %v2011, %v2009
    %v2052 = vpack.c.b16 %v2014, %v2012
    %v2053 = vpack.c.b16 %v2015, %v2013
    %v2054 = vpack.c.b16 %v2018, %v2016
    %v2055 = vpack.c.b16 %v2019, %v2017
    %v2056 = vpack.c.b16 %v2022, %v2020
    %v2057 = vpack.c.b16 %v2023, %v2021
    %v2058 = vpack.c.b16 %v2026, %v2024
    %v2059 = vpack.c.b16 %v2027, %v2025
    %2092 = vmatprep.subr.bf16.mxu0 %v2029
    %2093 = vmatpush1.bf16.msra.mxu0 %v2028
    %2094 = vmatprep.subr.bf16.mxu0 %v2031
    %2095 = vmatpush1.bf16.msra.mxu0 %v2030
    %2096 = vmatprep.subr.bf16.mxu0 %v2033
    %2097 = vmatpush1.bf16.msra.mxu0 %v2032
    %2098 = vmatprep.subr.bf16.mxu0 %v2035
    %2099 = vmatpush1.bf16.msra.mxu0 %v2034
    %2100 = vmatprep.subr.bf16.mxu0 %v2037
    %2101 = vmatpush1.bf16.msra.mxu0 %v2036
    %2102 = vmatprep.subr.bf16.mxu0 %v2039
    %2103 = vmatpush1.bf16.msra.mxu0 %v2038
    %2104 = vmatprep.subr.bf16.mxu0 %v2041
    %2105 = vmatpush1.bf16.msra.mxu0 %v2040
    %2106 = vmatprep.subr.bf16.mxu0 %v2043
    %2107 = vmatpush1.bf16.msra.mxu0 %v2042
    %2108 = vmatprep.subr.bf16.mxu0 %v2045
    %2109 = vmatpush1.bf16.msra.mxu0 %v2044
    %2110 = vmatprep.subr.bf16.mxu0 %v2047
    %2111 = vmatpush1.bf16.msra.mxu0 %v2046
    %2112 = vmatprep.subr.bf16.mxu0 %v2049
    %2113 = vmatpush1.bf16.msra.mxu0 %v2048
    %2114 = vmatprep.subr.bf16.mxu0 %v2051
    %2115 = vmatpush1.bf16.msra.mxu0 %v2050
    %2116 = vmatprep.subr.bf16.mxu0 %v2053
    %2117 = vmatpush1.bf16.msra.mxu0 %v2052
    %2118 = vmatprep.subr.bf16.mxu0 %v2055
    %2119 = vmatpush1.bf16.msra.mxu0 %v2054
    %2120 = vmatprep.subr.bf16.mxu0 %v2057
    %2121 = vmatpush1.bf16.msra.mxu0 %v2056
    %2122 = vmatprep.subr.bf16.mxu0 %v2059
    %2123 = vmatpush1.bf16.msra.mxu0 %v2058
    %2124 = vmatprep.mubr.bf16.mxu0 %v1740
    %2125 = vmatmul.mubr.bf16.gmra.mrb[0].mxu0 %v1723
    %v2126 = vpop.f32.mrb[0].mxu0
    %v2127 = vadd.f32 0.0, %v2126
    %v2128 = vpop.f32.mrb[0].mxu0
    %v2129 = vadd.f32 0.0, %v2128
    %v2130 = vpop.f32.mrb[0].mxu0
    %v2131 = vadd.f32 0.0, %v2130
    %v2132 = vpop.f32.mrb[0].mxu0
    %v2133 = vadd.f32 0.0, %v2132
    %2134 = vmatprep.mubr.bf16.mxu0 %v1758
    %2135 = vmatmul.mubr.bf16.gmra.mrb[0].mxu0 %v1749
    %v2136 = vpop.f32.mrb[0].mxu0
    %v2137 = vadd.f32 0.0, %v2136
    %v2138 = vpop.f32.mrb[0].mxu0
    %v2139 = vadd.f32 0.0, %v2138
    %v2140 = vpop.f32.mrb[0].mxu0
    %v2141 = vadd.f32 0.0, %v2140
    %v2142 = vpop.f32.mrb[0].mxu0
    %v2143 = vadd.f32 0.0, %v2142
    %2144 = vmatprep.mubr.bf16.mxu0 %v1776
    %2145 = vmatmul.mubr.bf16.gmra.mrb[0].mxu0 %v1767
    %v2146 = vpop.f32.mrb[0].mxu0
    %v2147 = vadd.f32 0.0, %v2146
    %v2148 = vpop.f32.mrb[0].mxu0
    %v2149 = vadd.f32 0.0, %v2148
    %v2150 = vpop.f32.mrb[0].mxu0
    %v2151 = vadd.f32 0.0, %v2150
    %v2152 = vpop.f32.mrb[0].mxu0
    %v2153 = vadd.f32 0.0, %v2152
    %2154 = vmatprep.mubr.bf16.mxu0 %v1794
    %2155 = vmatmul.mubr.bf16.gmra.mrb[0].mxu0 %v1785
    %v2156 = vpop.f32.mrb[0].mxu0
    %v2157 = vadd.f32 0.0, %v2156
    %v2158 = vpop.f32.mrb[0].mxu0
    %v2159 = vadd.f32 0.0, %v2158
    %v2160 = vpop.f32.mrb[0].mxu0
    %v2161 = vadd.f32 0.0, %v2160
    %v2162 = vpop.f32.mrb[0].mxu0
    %v2163 = vadd.f32 0.0, %v2162
    %2164 = vmatprep.mubr.bf16.mxu0 %v1828
    %2165 = vmatmul.mubr.bf16.gmra.mrb[0].mxu0 %v1811
    %v2166 = vpop.f32.mrb[0].mxu0
    %v2167 = vadd.f32 0.0, %v2166
    %v2168 = vpop.f32.mrb[0].mxu0
    %v2169 = vadd.f32 0.0, %v2168
    %v2170 = vpop.f32.mrb[0].mxu0
    %v2171 = vadd.f32 0.0, %v2170
    %v2172 = vpop.f32.mrb[0].mxu0
    %v2173 = vadd.f32 0.0, %v2172
    %2174 = vmatprep.mubr.bf16.mxu0 %v1846
    %2175 = vmatmul.mubr.bf16.gmra.mrb[0].mxu0 %v1837
    %v2176 = vpop.f32.mrb[0].mxu0
    %v2177 = vadd.f32 0.0, %v2176
    %v2178 = vpop.f32.mrb[0].mxu0
    %v2179 = vadd.f32 0.0, %v2178
    %v2180 = vpop.f32.mrb[0].mxu0
    %v2181 = vadd.f32 0.0, %v2180
    %v2182 = vpop.f32.mrb[0].mxu0
    %v2183 = vadd.f32 0.0, %v2182
    %2184 = vmatprep.mubr.bf16.mxu0 %v1864
    %2185 = vmatmul.mubr.bf16.gmra.mrb[0].mxu0 %v1855
    %v2186 = vpop.f32.mrb[0].mxu0
    %v2187 = vadd.f32 0.0, %v2186
    %v2188 = vpop.f32.mrb[0].mxu0
    %v2189 = vadd.f32 0.0, %v2188
    %v2190 = vpop.f32.mrb[0].mxu0
    %v2191 = vadd.f32 0.0, %v2190
    %v2192 = vpop.f32.mrb[0].mxu0
    %v2193 = vadd.f32 0.0, %v2192
    %2194 = vmatprep.mubr.bf16.mxu0 %v1882
    %2195 = vmatmul.mubr.bf16.gmra.mrb[0].mxu0 %v1873
    %v2196 = vpop.f32.mrb[0].mxu0
    %v2197 = vadd.f32 0.0, %v2196
    %v2198 = vpop.f32.mrb[0].mxu0
    %v2199 = vadd.f32 0.0, %v2198
    %v2200 = vpop.f32.mrb[0].mxu0
    %v2201 = vadd.f32 0.0, %v2200
    %v2202 = vpop.f32.mrb[0].mxu0
    %v2203 = vadd.f32 0.0, %v2202
    %2204 = vdwg.mxu0
    %v2205 = vadd.f32 %v1639, %v2127
    %v2206 = vadd.f32 %v1640, %v2129
    %v2207 = vadd.f32 %v1641, %v2131
    %v2208 = vadd.f32 %v1642, %v2133
    %v2209 = vadd.f32 %v1643, %v2137
    %v2210 = vadd.f32 %v1644, %v2139
    %v2211 = vadd.f32 %v1645, %v2141
    %v2212 = vadd.f32 %v1646, %v2143
    %v2213 = vadd.f32 %v1647, %v2147
    %v2214 = vadd.f32 %v1648, %v2149
    %v2215 = vadd.f32 %v1649, %v2151
    %v2216 = vadd.f32 %v1650, %v2153
    %v2217 = vadd.f32 %v1651, %v2157
    %v2218 = vadd.f32 %v1652, %v2159
    %v2219 = vadd.f32 %v1653, %v2161
    %v2220 = vadd.f32 %v1654, %v2163
    %v2221 = vadd.f32 %v1655, %v2167
    %v2222 = vadd.f32 %v1656, %v2169
    %v2223 = vadd.f32 %v1657, %v2171
    %v2224 = vadd.f32 %v1658, %v2173
    %v2225 = vadd.f32 %v1659, %v2177
    %v2226 = vadd.f32 %v1660, %v2179
    %v2227 = vadd.f32 %v1661, %v2181
    %v2228 = vadd.f32 %v1662, %v2183
    %v2229 = vadd.f32 %v1663, %v2187
    %v2230 = vadd.f32 %v1664, %v2189
    %v2231 = vadd.f32 %v1665, %v2191
    %v2232 = vadd.f32 %v1666, %v2193
    %v2233 = vadd.f32 %v1667, %v2197
    %v2234 = vadd.f32 %v1668, %v2199
    %v2235 = vadd.f32 %v1669, %v2201
    %v2236 = vadd.f32 %v1670, %v2203
    %v2237 = vld [vmem:[#allocation2 + $0x90] sm:$0xff]
    %v2238 = vld [vmem:[#allocation2 + $0x98] sm:$0xff]
    %v2239 = vld [vmem:[#allocation2 + $0x150] sm:$0xff]
    %v2240 = vld [vmem:[#allocation2 + $0x158] sm:$0xff]
    %v2241 = vpack.c.bf16 %v1084, %v1082
    %v2242 = vpack.c.bf16 %v1085, %v1083
    %v2243 = vpack.c.bf16 %v1088, %v1086
    %v2244 = vpack.c.bf16 %v1089, %v1087
    %v2245 = vpack.c.bf16 %v1092, %v1090
    %v2246 = vpack.c.bf16 %v1093, %v1091
    %v2247 = vpack.c.bf16 %v2237, %v1094
    %v2248 = vpack.c.bf16 %v2238, %v1095
    %v2249 = vpack.c.bf16 %v1102, %v1100
    %v2250 = vpack.c.bf16 %v1103, %v1101
    %v2251 = vpack.c.bf16 %v1106, %v1104
    %v2252 = vpack.c.bf16 %v1107, %v1105
    %v2253 = vpack.c.bf16 %v1110, %v1108
    %v2254 = vpack.c.bf16 %v1111, %v1109
    %v2255 = vpack.c.bf16 %v2239, %v1112
    %v2256 = vpack.c.bf16 %v2240, %v1113
    %s2257 = scalar_lea.vmem [#allocation6], 1024
    %v2258 = vld [vmem:[%s2257] sm:$0xff]
    %v2259 = vld [vmem:[%s2257 + $0x8] sm:$0xff]
    %v2260 = vld [vmem:[%s2257 + $0x10] sm:$0xff]
    %v2261 = vld [vmem:[%s2257 + $0x18] sm:$0xff]
    %v2262 = vld [vmem:[%s2257 + $0x20] sm:$0xff]
    %v2263 = vld [vmem:[%s2257 + $0x28] sm:$0xff]
    %v2264 = vld [vmem:[%s2257 + $0x30] sm:$0xff]
    %v2265 = vld [vmem:[%s2257 + $0x38] sm:$0xff]
    %v2266 = vld [vmem:[%s2257 + $0x40] sm:$0xff]
    %v2267 = vld [vmem:[%s2257 + $0x48] sm:$0xff]
    %v2268 = vld [vmem:[%s2257 + $0x50] sm:$0xff]
    %v2269 = vld [vmem:[%s2257 + $0x58] sm:$0xff]
    %v2270 = vld [vmem:[%s2257 + $0x60] sm:$0xff]
    %v2271 = vld [vmem:[%s2257 + $0x68] sm:$0xff]
    %v2272 = vld [vmem:[%s2257 + $0x70] sm:$0xff]
    %v2273 = vld [vmem:[%s2257 + $0x78] sm:$0xff]
    %v2274 = vld [vmem:[%s2257 + $0x80] sm:$0xff]
    %v2275 = vld [vmem:[%s2257 + $0x88] sm:$0xff]
    %v2276 = vld [vmem:[%s2257 + $0x90] sm:$0xff]
    %v2277 = vld [vmem:[%s2257 + $0x98] sm:$0xff]
    %v2278 = vld [vmem:[%s2257 + $0xa0] sm:$0xff]
    %v2279 = vld [vmem:[%s2257 + $0xa8] sm:$0xff]
    %v2280 = vld [vmem:[%s2257 + $0xb0] sm:$0xff]
    %v2281 = vld [vmem:[%s2257 + $0xb8] sm:$0xff]
    %v2282 = vld [vmem:[%s2257 + $0xc0] sm:$0xff]
    %v2283 = vld [vmem:[%s2257 + $0xc8] sm:$0xff]
    %v2284 = vld [vmem:[%s2257 + $0xd0] sm:$0xff]
    %v2285 = vld [vmem:[%s2257 + $0xd8] sm:$0xff]
    %v2286 = vld [vmem:[%s2257 + $0xe0] sm:$0xff]
    %v2287 = vld [vmem:[%s2257 + $0xe8] sm:$0xff]
    %v2288 = vld [vmem:[%s2257 + $0xf0] sm:$0xff]
    %v2289 = vld [vmem:[%s2257 + $0xf8] sm:$0xff]
    %v2322 = vunpack.c.l.b16 %v2258
    %v2323 = vunpack.c.h.b16 %v2258
    %v2324 = vunpack.c.l.b16 %v2259
    %v2325 = vunpack.c.h.b16 %v2259
    %v2326 = vunpack.c.l.b16 %v2260
    %v2327 = vunpack.c.h.b16 %v2260
    %v2328 = vunpack.c.l.b16 %v2261
    %v2329 = vunpack.c.h.b16 %v2261
    %v2330 = vunpack.c.l.b16 %v2262
    %v2331 = vunpack.c.h.b16 %v2262
    %v2332 = vunpack.c.l.b16 %v2263
    %v2333 = vunpack.c.h.b16 %v2263
    %v2334 = vunpack.c.l.b16 %v2264
    %v2335 = vunpack.c.h.b16 %v2264
    %v2336 = vunpack.c.l.b16 %v2265
    %v2337 = vunpack.c.h.b16 %v2265
    %v2338 = vunpack.c.l.b16 %v2266
    %v2339 = vunpack.c.h.b16 %v2266
    %v2340 = vunpack.c.l.b16 %v2267
    %v2341 = vunpack.c.h.b16 %v2267
    %v2342 = vunpack.c.l.b16 %v2268
    %v2343 = vunpack.c.h.b16 %v2268
    %v2344 = vunpack.c.l.b16 %v2269
    %v2345 = vunpack.c.h.b16 %v2269
    %v2346 = vunpack.c.l.b16 %v2270
    %v2347 = vunpack.c.h.b16 %v2270
    %v2348 = vunpack.c.l.b16 %v2271
    %v2349 = vunpack.c.h.b16 %v2271
    %v2350 = vunpack.c.l.b16 %v2272
    %v2351 = vunpack.c.h.b16 %v2272
    %v2352 = vunpack.c.l.b16 %v2273
    %v2353 = vunpack.c.h.b16 %v2273
    %v2354 = vunpack.c.l.b16 %v2274
    %v2355 = vunpack.c.h.b16 %v2274
    %v2356 = vunpack.c.l.b16 %v2275
    %v2357 = vunpack.c.h.b16 %v2275
    %v2358 = vunpack.c.l.b16 %v2276
    %v2359 = vunpack.c.h.b16 %v2276
    %v2360 = vunpack.c.l.b16 %v2277
    %v2361 = vunpack.c.h.b16 %v2277
    %v2362 = vunpack.c.l.b16 %v2278
    %v2363 = vunpack.c.h.b16 %v2278
    %v2364 = vunpack.c.l.b16 %v2279
    %v2365 = vunpack.c.h.b16 %v2279
    %v2366 = vunpack.c.l.b16 %v2280
    %v2367 = vunpack.c.h.b16 %v2280
    %v2368 = vunpack.c.l.b16 %v2281
    %v2369 = vunpack.c.h.b16 %v2281
    %v2370 = vunpack.c.l.b16 %v2282
    %v2371 = vunpack.c.h.b16 %v2282
    %v2372 = vunpack.c.l.b16 %v2283
    %v2373 = vunpack.c.h.b16 %v2283
    %v2374 = vunpack.c.l.b16 %v2284
    %v2375 = vunpack.c.h.b16 %v2284
    %v2376 = vunpack.c.l.b16 %v2285
    %v2377 = vunpack.c.h.b16 %v2285
    %v2378 = vunpack.c.l.b16 %v2286
    %v2379 = vunpack.c.h.b16 %v2286
    %v2380 = vunpack.c.l.b16 %v2287
    %v2381 = vunpack.c.h.b16 %v2287
    %v2382 = vunpack.c.l.b16 %v2288
    %v2383 = vunpack.c.h.b16 %v2288
    %v2384 = vunpack.c.l.b16 %v2289
    %v2385 = vunpack.c.h.b16 %v2289
    %v2386 = vpack.c.b16 %v2324, %v2322
    %v2387 = vpack.c.b16 %v2325, %v2323
    %v2388 = vpack.c.b16 %v2328, %v2326
    %v2389 = vpack.c.b16 %v2329, %v2327
    %v2390 = vpack.c.b16 %v2332, %v2330
    %v2391 = vpack.c.b16 %v2333, %v2331
    %v2392 = vpack.c.b16 %v2336, %v2334
    %v2393 = vpack.c.b16 %v2337, %v2335
    %v2394 = vpack.c.b16 %v2340, %v2338
    %v2395 = vpack.c.b16 %v2341, %v2339
    %v2396 = vpack.c.b16 %v2344, %v2342
    %v2397 = vpack.c.b16 %v2345, %v2343
    %v2398 = vpack.c.b16 %v2348, %v2346
    %v2399 = vpack.c.b16 %v2349, %v2347
    %v2400 = vpack.c.b16 %v2352, %v2350
    %v2401 = vpack.c.b16 %v2353, %v2351
    %v2402 = vpack.c.b16 %v2356, %v2354
    %v2403 = vpack.c.b16 %v2357, %v2355
    %v2404 = vpack.c.b16 %v2360, %v2358
    %v2405 = vpack.c.b16 %v2361, %v2359
    %v2406 = vpack.c.b16 %v2364, %v2362
    %v2407 = vpack.c.b16 %v2365, %v2363
    %v2408 = vpack.c.b16 %v2368, %v2366
    %v2409 = vpack.c.b16 %v2369, %v2367
    %v2410 = vpack.c.b16 %v2372, %v2370
    %v2411 = vpack.c.b16 %v2373, %v2371
    %v2412 = vpack.c.b16 %v2376, %v2374
    %v2413 = vpack.c.b16 %v2377, %v2375
    %v2414 = vpack.c.b16 %v2380, %v2378
    %v2415 = vpack.c.b16 %v2381, %v2379
    %v2416 = vpack.c.b16 %v2384, %v2382
    %v2417 = vpack.c.b16 %v2385, %v2383
    %2450 = vmatprep.subr.bf16.mxu0 %v2387
    %2451 = vmatpush1.bf16.msra.mxu0 %v2386
    %2452 = vmatprep.subr.bf16.mxu0 %v2389
    %2453 = vmatpush1.bf16.msra.mxu0 %v2388
    %2454 = vmatprep.subr.bf16.mxu0 %v2391
    %2455 = vmatpush1.bf16.msra.mxu0 %v2390
    %2456 = vmatprep.subr.bf16.mxu0 %v2393
    %2457 = vmatpush1.bf16.msra.mxu0 %v2392
    %2458 = vmatprep.subr.bf16.mxu0 %v2395
    %2459 = vmatpush1.bf16.msra.mxu0 %v2394
    %2460 = vmatprep.subr.bf16.mxu0 %v2397
    %2461 = vmatpush1.bf16.msra.mxu0 %v2396
    %2462 = vmatprep.subr.bf16.mxu0 %v2399
    %2463 = vmatpush1.bf16.msra.mxu0 %v2398
    %2464 = vmatprep.subr.bf16.mxu0 %v2401
    %2465 = vmatpush1.bf16.msra.mxu0 %v2400
    %2466 = vmatprep.subr.bf16.mxu0 %v2403
    %2467 = vmatpush1.bf16.msra.mxu0 %v2402
    %2468 = vmatprep.subr.bf16.mxu0 %v2405
    %2469 = vmatpush1.bf16.msra.mxu0 %v2404
    %2470 = vmatprep.subr.bf16.mxu0 %v2407
    %2471 = vmatpush1.bf16.msra.mxu0 %v2406
    %2472 = vmatprep.subr.bf16.mxu0 %v2409
    %2473 = vmatpush1.bf16.msra.mxu0 %v2408
    %2474 = vmatprep.subr.bf16.mxu0 %v2411
    %2475 = vmatpush1.bf16.msra.mxu0 %v2410
    %2476 = vmatprep.subr.bf16.mxu0 %v2413
    %2477 = vmatpush1.bf16.msra.mxu0 %v2412
    %2478 = vmatprep.subr.bf16.mxu0 %v2415
    %2479 = vmatpush1.bf16.msra.mxu0 %v2414
    %2480 = vmatprep.subr.bf16.mxu0 %v2417
    %2481 = vmatpush1.bf16.msra.mxu0 %v2416
    %2482 = vmatprep.mubr.bf16.mxu0 %v2242
    %2483 = vmatmul.mubr.bf16.gmra.mrb[0].mxu0 %v2241
    %v2484 = vpop.f32.mrb[0].mxu0
    %v2485 = vadd.f32 0.0, %v2484
    %v2486 = vpop.f32.mrb[0].mxu0
    %v2487 = vadd.f32 0.0, %v2486
    %v2488 = vpop.f32.mrb[0].mxu0
    %v2489 = vadd.f32 0.0, %v2488
    %v2490 = vpop.f32.mrb[0].mxu0
    %v2491 = vadd.f32 0.0, %v2490
    %2492 = vmatprep.mubr.bf16.mxu0 %v2244
    %2493 = vmatmul.mubr.bf16.gmra.mrb[0].mxu0 %v2243
    %v2494 = vpop.f32.mrb[0].mxu0
    %v2495 = vadd.f32 0.0, %v2494
    %v2496 = vpop.f32.mrb[0].mxu0
    %v2497 = vadd.f32 0.0, %v2496
    %v2498 = vpop.f32.mrb[0].mxu0
    %v2499 = vadd.f32 0.0, %v2498
    %v2500 = vpop.f32.mrb[0].mxu0
    %v2501 = vadd.f32 0.0, %v2500
    %2502 = vmatprep.mubr.bf16.mxu0 %v2246
    %2503 = vmatmul.mubr.bf16.gmra.mrb[0].mxu0 %v2245
    %v2504 = vpop.f32.mrb[0].mxu0
    %v2505 = vadd.f32 0.0, %v2504
    %v2506 = vpop.f32.mrb[0].mxu0
    %v2507 = vadd.f32 0.0, %v2506
    %v2508 = vpop.f32.mrb[0].mxu0
    %v2509 = vadd.f32 0.0, %v2508
    %v2510 = vpop.f32.mrb[0].mxu0
    %v2511 = vadd.f32 0.0, %v2510
    %2512 = vmatprep.mubr.bf16.mxu0 %v2248
    %2513 = vmatmul.mubr.bf16.gmra.mrb[0].mxu0 %v2247
    %v2514 = vpop.f32.mrb[0].mxu0
    %v2515 = vadd.f32 0.0, %v2514
    %v2516 = vpop.f32.mrb[0].mxu0
    %v2517 = vadd.f32 0.0, %v2516
    %v2518 = vpop.f32.mrb[0].mxu0
    %v2519 = vadd.f32 0.0, %v2518
    %v2520 = vpop.f32.mrb[0].mxu0
    %v2521 = vadd.f32 0.0, %v2520
    %2522 = vmatprep.mubr.bf16.mxu0 %v2250
    %2523 = vmatmul.mubr.bf16.gmra.mrb[0].mxu0 %v2249
    %v2524 = vpop.f32.mrb[0].mxu0
    %v2525 = vadd.f32 0.0, %v2524
    %v2526 = vpop.f32.mrb[0].mxu0
    %v2527 = vadd.f32 0.0, %v2526
    %v2528 = vpop.f32.mrb[0].mxu0
    %v2529 = vadd.f32 0.0, %v2528
    %v2530 = vpop.f32.mrb[0].mxu0
    %v2531 = vadd.f32 0.0, %v2530
    %2532 = vmatprep.mubr.bf16.mxu0 %v2252
    %2533 = vmatmul.mubr.bf16.gmra.mrb[0].mxu0 %v2251
    %v2534 = vpop.f32.mrb[0].mxu0
    %v2535 = vadd.f32 0.0, %v2534
    %v2536 = vpop.f32.mrb[0].mxu0
    %v2537 = vadd.f32 0.0, %v2536
    %v2538 = vpop.f32.mrb[0].mxu0
    %v2539 = vadd.f32 0.0, %v2538
    %v2540 = vpop.f32.mrb[0].mxu0
    %v2541 = vadd.f32 0.0, %v2540
    %2542 = vmatprep.mubr.bf16.mxu0 %v2254
    %2543 = vmatmul.mubr.bf16.gmra.mrb[0].mxu0 %v2253
    %v2544 = vpop.f32.mrb[0].mxu0
    %v2545 = vadd.f32 0.0, %v2544
    %v2546 = vpop.f32.mrb[0].mxu0
    %v2547 = vadd.f32 0.0, %v2546
    %v2548 = vpop.f32.mrb[0].mxu0
    %v2549 = vadd.f32 0.0, %v2548
    %v2550 = vpop.f32.mrb[0].mxu0
    %v2551 = vadd.f32 0.0, %v2550
    %2552 = vmatprep.mubr.bf16.mxu0 %v2256
    %2553 = vmatmul.mubr.bf16.gmra.mrb[0].mxu0 %v2255
    %v2554 = vpop.f32.mrb[0].mxu0
    %v2555 = vadd.f32 0.0, %v2554
    %v2556 = vpop.f32.mrb[0].mxu0
    %v2557 = vadd.f32 0.0, %v2556
    %v2558 = vpop.f32.mrb[0].mxu0
    %v2559 = vadd.f32 0.0, %v2558
    %v2560 = vpop.f32.mrb[0].mxu0
    %v2561 = vadd.f32 0.0, %v2560
    %2562 = vdwg.mxu0
    %v2563 = vadd.f32 %v2205, %v2485
    %v2564 = vadd.f32 %v2206, %v2487
    %v2565 = vadd.f32 %v2207, %v2489
    %v2566 = vadd.f32 %v2208, %v2491
    %v2567 = vadd.f32 %v2209, %v2495
    %v2568 = vadd.f32 %v2210, %v2497
    %v2569 = vadd.f32 %v2211, %v2499
    %v2570 = vadd.f32 %v2212, %v2501
    %v2571 = vadd.f32 %v2213, %v2505
    %v2572 = vadd.f32 %v2214, %v2507
    %v2573 = vadd.f32 %v2215, %v2509
    %v2574 = vadd.f32 %v2216, %v2511
    %v2575 = vadd.f32 %v2217, %v2515
    %v2576 = vadd.f32 %v2218, %v2517
    %v2577 = vadd.f32 %v2219, %v2519
    %v2578 = vadd.f32 %v2220, %v2521
    %v2579 = vadd.f32 %v2221, %v2525
    %v2580 = vadd.f32 %v2222, %v2527
    %v2581 = vadd.f32 %v2223, %v2529
    %v2582 = vadd.f32 %v2224, %v2531
    %v2583 = vadd.f32 %v2225, %v2535
    %v2584 = vadd.f32 %v2226, %v2537
    %v2585 = vadd.f32 %v2227, %v2539
    %v2586 = vadd.f32 %v2228, %v2541
    %v2587 = vadd.f32 %v2229, %v2545
    %v2588 = vadd.f32 %v2230, %v2547
    %v2589 = vadd.f32 %v2231, %v2549
    %v2590 = vadd.f32 %v2232, %v2551
    %v2591 = vadd.f32 %v2233, %v2555
    %v2592 = vadd.f32 %v2234, %v2557
    %v2593 = vadd.f32 %v2235, %v2559
    %v2594 = vadd.f32 %v2236, %v2561
    %v2595 = vld [vmem:[#allocation2 + $0x20] sm:$0xfe]
    %v2596 = vld [vmem:[#allocation2 + $0x28] sm:$0xfe]
    %v2597 = vld [vmem:[#allocation2 + $0x30] sm:$0xff]
    %v2598 = vld [vmem:[#allocation2 + $0x38] sm:$0xff]
    %v2599 = vld [vmem:[#allocation2 + $0x40] sm:$0xff]
    %v2600 = vld [vmem:[#allocation2 + $0x48] sm:$0xff]
    %v2601 = vld [vmem:[#allocation2 + $0x50] sm:$0xff]
    %v2602 = vld [vmem:[#allocation2 + $0x58] sm:$0xff]
    %v2603 = vld [vmem:[#allocation2 + $0x60] sm:$0xff]
    %v2604 = vld [vmem:[#allocation2 + $0x68] sm:$0xff]
    %v2605 = vld [vmem:[#allocation2 + $0x70] sm:$0xff]
    %v2606 = vld [vmem:[#allocation2 + $0x78] sm:$0xff]
    %v2607 = vld [vmem:[#allocation2 + $0x80] sm:$0xff]
    %v2608 = vld [vmem:[#allocation2 + $0x88] sm:$0xff]
    %v2609 = vld [vmem:[#allocation2 + $0x90] sm:$0xff]
    %v2610 = vld [vmem:[#allocation2 + $0x98] sm:$0xff]
    %v2611 = vld [vmem:[#allocation2 + $0xa0] sm:$0x1]
    %v2612 = vld [vmem:[#allocation2 + $0xa8] sm:$0x1]
    %v2613 = vld [vmem:[#allocation2 + $0xe0] sm:$0xfe]
    %v2614 = vld [vmem:[#allocation2 + $0xe8] sm:$0xfe]
    %v2615 = vld [vmem:[#allocation2 + $0xf0] sm:$0xff]
    %v2616 = vld [vmem:[#allocation2 + $0xf8] sm:$0xff]
    %v2617 = vld [vmem:[#allocation2 + $0x100] sm:$0xff]
    %v2618 = vld [vmem:[#allocation2 + $0x108] sm:$0xff]
    %v2619 = vld [vmem:[#allocation2 + $0x110] sm:$0xff]
    %v2620 = vld [vmem:[#allocation2 + $0x118] sm:$0xff]
    %v2621 = vld [vmem:[#allocation2 + $0x120] sm:$0xff]
    %v2622 = vld [vmem:[#allocation2 + $0x128] sm:$0xff]
    %v2623 = vld [vmem:[#allocation2 + $0x130] sm:$0xff]
    %v2624 = vld [vmem:[#allocation2 + $0x138] sm:$0xff]
    %v2625 = vld [vmem:[#allocation2 + $0x140] sm:$0xff]
    %v2626 = vld [vmem:[#allocation2 + $0x148] sm:$0xff]
    %v2627 = vld [vmem:[#allocation2 + $0x150] sm:$0xff]
    %v2628 = vld [vmem:[#allocation2 + $0x158] sm:$0xff]
    %v2629 = vld [vmem:[#allocation2 + $0x160] sm:$0x1]
    %v2630 = vld [vmem:[#allocation2 + $0x168] sm:$0x1]
    %v2631 = vpack.c.bf16 %v2597, %v2595
    %v2632 = vpack.c.bf16 %v2598, %v2596
    %v2633 = vpack.c.bf16 %v2601, %v2599
    %v2634 = vpack.c.bf16 %v2602, %v2600
    %v2635 = vpack.c.bf16 %v2605, %v2603
    %v2636 = vpack.c.bf16 %v2606, %v2604
    %v2637 = vpack.c.bf16 %v2609, %v2607
    %v2638 = vpack.c.bf16 %v2610, %v2608
    %v2639 = vpack.c.bf16 %v2611, %v2611
    %v2640 = vpack.c.bf16 %v2612, %v2612
    %v2641 = vpack.c.bf16 %v2615, %v2613
    %v2642 = vpack.c.bf16 %v2616, %v2614
    %v2643 = vpack.c.bf16 %v2619, %v2617
    %v2644 = vpack.c.bf16 %v2620, %v2618
    %v2645 = vpack.c.bf16 %v2623, %v2621
    %v2646 = vpack.c.bf16 %v2624, %v2622
    %v2647 = vpack.c.bf16 %v2627, %v2625
    %v2648 = vpack.c.bf16 %v2628, %v2626
    %v2649 = vpack.c.bf16 %v2629, %v2629
    %v2650 = vpack.c.bf16 %v2630, %v2630
    %v2651 = vsel %vm1149, %v2631, 0
    %v2652 = vsel %vm1149, %v2632, 0
    %v2653 = vsel %vm1150, %v2633, 0
    %v2654 = vsel %vm1150, %v2634, 0
    %v2655 = vsel %vm1150, %v2635, 0
    %v2656 = vsel %vm1150, %v2636, 0
    %v2657 = vsel %vm1150, %v2637, 0
    %v2658 = vsel %vm1150, %v2638, 0
    %v2659 = vsel %vm1151, %v2639, 0
    %v2660 = vsel %vm1151, %v2640, 0
    %v2661 = vsel %vm1149, %v2641, 0
    %v2662 = vsel %vm1149, %v2642, 0
    %v2663 = vsel %vm1150, %v2643, 0
    %v2664 = vsel %vm1150, %v2644, 0
    %v2665 = vsel %vm1150, %v2645, 0
    %v2666 = vsel %vm1150, %v2646, 0
    %v2667 = vsel %vm1150, %v2647, 0
    %v2668 = vsel %vm1150, %v2648, 0
    %v2669 = vsel %vm1151, %v2649, 0
    %v2670 = vsel %vm1151, %v2650, 0
    %v2672 = vshrl.u32 %v2651, 16
    %v2674 = vshll.u32 %v2651, 16
    %v2676 = vrot.slane %v2674, 1
    %v2677 = vor.u32 %v2672, %v2676
    %v2679 = vshll.u32 %v2653, 16
    %v2681 = vrot.slane %v2679, 1
    %v2682 = vsel %vm1172, %v2677, %v2681
    %v2684 = vshrl.u32 %v2652, 16
    %v2686 = vshll.u32 %v2652, 16
    %v2688 = vrot.slane %v2686, 1
    %v2689 = vor.u32 %v2684, %v2688
    %v2691 = vshll.u32 %v2654, 16
    %v2693 = vrot.slane %v2691, 1
    %v2694 = vsel %vm1172, %v2689, %v2693
    %v2695 = vshrl.u32 %v2653, 16
    %v2697 = vor.u32 %v2695, %v2681
    %v2699 = vshll.u32 %v2655, 16
    %v2701 = vrot.slane %v2699, 1
    %v2702 = vsel %vm1172, %v2697, %v2701
    %v2703 = vshrl.u32 %v2654, 16
    %v2705 = vor.u32 %v2703, %v2693
    %v2707 = vshll.u32 %v2656, 16
    %v2709 = vrot.slane %v2707, 1
    %v2710 = vsel %vm1172, %v2705, %v2709
    %v2711 = vshrl.u32 %v2655, 16
    %v2713 = vor.u32 %v2711, %v2701
    %v2715 = vshll.u32 %v2657, 16
    %v2717 = vrot.slane %v2715, 1
    %v2718 = vsel %vm1172, %v2713, %v2717
    %v2719 = vshrl.u32 %v2656, 16
    %v2721 = vor.u32 %v2719, %v2709
    %v2723 = vshll.u32 %v2658, 16
    %v2725 = vrot.slane %v2723, 1
    %v2726 = vsel %vm1172, %v2721, %v2725
    %v2727 = vshrl.u32 %v2657, 16
    %v2729 = vor.u32 %v2727, %v2717
    %v2731 = vshll.u32 %v2659, 16
    %v2733 = vrot.slane %v2731, 1
    %v2734 = vsel %vm1172, %v2729, %v2733
    %v2735 = vshrl.u32 %v2658, 16
    %v2737 = vor.u32 %v2735, %v2725
    %v2739 = vshll.u32 %v2660, 16
    %v2741 = vrot.slane %v2739, 1
    %v2742 = vsel %vm1172, %v2737, %v2741
    %v2744 = vshrl.u32 %v2661, 16
    %v2746 = vshll.u32 %v2661, 16
    %v2748 = vrot.slane %v2746, 1
    %v2749 = vor.u32 %v2744, %v2748
    %v2751 = vshll.u32 %v2663, 16
    %v2753 = vrot.slane %v2751, 1
    %v2754 = vsel %vm1172, %v2749, %v2753
    %v2756 = vshrl.u32 %v2662, 16
    %v2758 = vshll.u32 %v2662, 16
    %v2760 = vrot.slane %v2758, 1
    %v2761 = vor.u32 %v2756, %v2760
    %v2763 = vshll.u32 %v2664, 16
    %v2765 = vrot.slane %v2763, 1
    %v2766 = vsel %vm1172, %v2761, %v2765
    %v2767 = vshrl.u32 %v2663, 16
    %v2769 = vor.u32 %v2767, %v2753
    %v2771 = vshll.u32 %v2665, 16
    %v2773 = vrot.slane %v2771, 1
    %v2774 = vsel %vm1172, %v2769, %v2773
    %v2775 = vshrl.u32 %v2664, 16
    %v2777 = vor.u32 %v2775, %v2765
    %v2779 = vshll.u32 %v2666, 16
    %v2781 = vrot.slane %v2779, 1
    %v2782 = vsel %vm1172, %v2777, %v2781
    %v2783 = vshrl.u32 %v2665, 16
    %v2785 = vor.u32 %v2783, %v2773
    %v2787 = vshll.u32 %v2667, 16
    %v2789 = vrot.slane %v2787, 1
    %v2790 = vsel %vm1172, %v2785, %v2789
    %v2791 = vshrl.u32 %v2666, 16
    %v2793 = vor.u32 %v2791, %v2781
    %v2795 = vshll.u32 %v2668, 16
    %v2797 = vrot.slane %v2795, 1
    %v2798 = vsel %vm1172, %v2793, %v2797
    %v2799 = vshrl.u32 %v2667, 16
    %v2801 = vor.u32 %v2799, %v2789
    %v2803 = vshll.u32 %v2669, 16
    %v2805 = vrot.slane %v2803, 1
    %v2806 = vsel %vm1172, %v2801, %v2805
    %v2807 = vshrl.u32 %v2668, 16
    %v2809 = vor.u32 %v2807, %v2797
    %v2811 = vshll.u32 %v2670, 16
    %v2813 = vrot.slane %v2811, 1
    %v2814 = vsel %vm1172, %v2809, %v2813
    %s2831 = scalar_lea.vmem [#allocation6], 1280
    %v2832 = vld [vmem:[%s2831] sm:$0xff]
    %v2833 = vld [vmem:[%s2831 + $0x8] sm:$0xff]
    %v2834 = vld [vmem:[%s2831 + $0x10] sm:$0xff]
    %v2835 = vld [vmem:[%s2831 + $0x18] sm:$0xff]
    %v2836 = vld [vmem:[%s2831 + $0x20] sm:$0xff]
    %v2837 = vld [vmem:[%s2831 + $0x28] sm:$0xff]
    %v2838 = vld [vmem:[%s2831 + $0x30] sm:$0xff]
    %v2839 = vld [vmem:[%s2831 + $0x38] sm:$0xff]
    %v2840 = vld [vmem:[%s2831 + $0x40] sm:$0xff]
    %v2841 = vld [vmem:[%s2831 + $0x48] sm:$0xff]
    %v2842 = vld [vmem:[%s2831 + $0x50] sm:$0xff]
    %v2843 = vld [vmem:[%s2831 + $0x58] sm:$0xff]
    %v2844 = vld [vmem:[%s2831 + $0x60] sm:$0xff]
    %v2845 = vld [vmem:[%s2831 + $0x68] sm:$0xff]
    %v2846 = vld [vmem:[%s2831 + $0x70] sm:$0xff]
    %v2847 = vld [vmem:[%s2831 + $0x78] sm:$0xff]
    %v2848 = vld [vmem:[%s2831 + $0x80] sm:$0xff]
    %v2849 = vld [vmem:[%s2831 + $0x88] sm:$0xff]
    %v2850 = vld [vmem:[%s2831 + $0x90] sm:$0xff]
    %v2851 = vld [vmem:[%s2831 + $0x98] sm:$0xff]
    %v2852 = vld [vmem:[%s2831 + $0xa0] sm:$0xff]
    %v2853 = vld [vmem:[%s2831 + $0xa8] sm:$0xff]
    %v2854 = vld [vmem:[%s2831 + $0xb0] sm:$0xff]
    %v2855 = vld [vmem:[%s2831 + $0xb8] sm:$0xff]
    %v2856 = vld [vmem:[%s2831 + $0xc0] sm:$0xff]
    %v2857 = vld [vmem:[%s2831 + $0xc8] sm:$0xff]
    %v2858 = vld [vmem:[%s2831 + $0xd0] sm:$0xff]
    %v2859 = vld [vmem:[%s2831 + $0xd8] sm:$0xff]
    %v2860 = vld [vmem:[%s2831 + $0xe0] sm:$0xff]
    %v2861 = vld [vmem:[%s2831 + $0xe8] sm:$0xff]
    %v2862 = vld [vmem:[%s2831 + $0xf0] sm:$0xff]
    %v2863 = vld [vmem:[%s2831 + $0xf8] sm:$0xff]
    %v2896 = vunpack.c.l.b16 %v2832
    %v2897 = vunpack.c.h.b16 %v2832
    %v2898 = vunpack.c.l.b16 %v2833
    %v2899 = vunpack.c.h.b16 %v2833
    %v2900 = vunpack.c.l.b16 %v2834
    %v2901 = vunpack.c.h.b16 %v2834
    %v2902 = vunpack.c.l.b16 %v2835
    %v2903 = vunpack.c.h.b16 %v2835
    %v2904 = vunpack.c.l.b16 %v2836
    %v2905 = vunpack.c.h.b16 %v2836
    %v2906 = vunpack.c.l.b16 %v2837
    %v2907 = vunpack.c.h.b16 %v2837
    %v2908 = vunpack.c.l.b16 %v2838
    %v2909 = vunpack.c.h.b16 %v2838
    %v2910 = vunpack.c.l.b16 %v2839
    %v2911 = vunpack.c.h.b16 %v2839
    %v2912 = vunpack.c.l.b16 %v2840
    %v2913 = vunpack.c.h.b16 %v2840
    %v2914 = vunpack.c.l.b16 %v2841
    %v2915 = vunpack.c.h.b16 %v2841
    %v2916 = vunpack.c.l.b16 %v2842
    %v2917 = vunpack.c.h.b16 %v2842
    %v2918 = vunpack.c.l.b16 %v2843
    %v2919 = vunpack.c.h.b16 %v2843
    %v2920 = vunpack.c.l.b16 %v2844
    %v2921 = vunpack.c.h.b16 %v2844
    %v2922 = vunpack.c.l.b16 %v2845
    %v2923 = vunpack.c.h.b16 %v2845
    %v2924 = vunpack.c.l.b16 %v2846
    %v2925 = vunpack.c.h.b16 %v2846
    %v2926 = vunpack.c.l.b16 %v2847
    %v2927 = vunpack.c.h.b16 %v2847
    %v2928 = vunpack.c.l.b16 %v2848
    %v2929 = vunpack.c.h.b16 %v2848
    %v2930 = vunpack.c.l.b16 %v2849
    %v2931 = vunpack.c.h.b16 %v2849
    %v2932 = vunpack.c.l.b16 %v2850
    %v2933 = vunpack.c.h.b16 %v2850
    %v2934 = vunpack.c.l.b16 %v2851
    %v2935 = vunpack.c.h.b16 %v2851
    %v2936 = vunpack.c.l.b16 %v2852
    %v2937 = vunpack.c.h.b16 %v2852
    %v2938 = vunpack.c.l.b16 %v2853
    %v2939 = vunpack.c.h.b16 %v2853
    %v2940 = vunpack.c.l.b16 %v2854
    %v2941 = vunpack.c.h.b16 %v2854
    %v2942 = vunpack.c.l.b16 %v2855
    %v2943 = vunpack.c.h.b16 %v2855
    %v2944 = vunpack.c.l.b16 %v2856
    %v2945 = vunpack.c.h.b16 %v2856
    %v2946 = vunpack.c.l.b16 %v2857
    %v2947 = vunpack.c.h.b16 %v2857
    %v2948 = vunpack.c.l.b16 %v2858
    %v2949 = vunpack.c.h.b16 %v2858
    %v2950 = vunpack.c.l.b16 %v2859
    %v2951 = vunpack.c.h.b16 %v2859
    %v2952 = vunpack.c.l.b16 %v2860
    %v2953 = vunpack.c.h.b16 %v2860
    %v2954 = vunpack.c.l.b16 %v2861
    %v2955 = vunpack.c.h.b16 %v2861
    %v2956 = vunpack.c.l.b16 %v2862
    %v2957 = vunpack.c.h.b16 %v2862
    %v2958 = vunpack.c.l.b16 %v2863
    %v2959 = vunpack.c.h.b16 %v2863
    %v2960 = vpack.c.b16 %v2898, %v2896
    %v2961 = vpack.c.b16 %v2899, %v2897
    %v2962 = vpack.c.b16 %v2902, %v2900
    %v2963 = vpack.c.b16 %v2903, %v2901
    %v2964 = vpack.c.b16 %v2906, %v2904
    %v2965 = vpack.c.b16 %v2907, %v2905
    %v2966 = vpack.c.b16 %v2910, %v2908
    %v2967 = vpack.c.b16 %v2911, %v2909
    %v2968 = vpack.c.b16 %v2914, %v2912
    %v2969 = vpack.c.b16 %v2915, %v2913
    %v2970 = vpack.c.b16 %v2918, %v2916
    %v2971 = vpack.c.b16 %v2919, %v2917
    %v2972 = vpack.c.b16 %v2922, %v2920
    %v2973 = vpack.c.b16 %v2923, %v2921
    %v2974 = vpack.c.b16 %v2926, %v2924
    %v2975 = vpack.c.b16 %v2927, %v2925
    %v2976 = vpack.c.b16 %v2930, %v2928
    %v2977 = vpack.c.b16 %v2931, %v2929
    %v2978 = vpack.c.b16 %v2934, %v2932
    %v2979 = vpack.c.b16 %v2935, %v2933
    %v2980 = vpack.c.b16 %v2938, %v2936
    %v2981 = vpack.c.b16 %v2939, %v2937
    %v2982 = vpack.c.b16 %v2942, %v2940
    %v2983 = vpack.c.b16 %v2943, %v2941
    %v2984 = vpack.c.b16 %v2946, %v2944
    %v2985 = vpack.c.b16 %v2947, %v2945
    %v2986 = vpack.c.b16 %v2950, %v2948
    %v2987 = vpack.c.b16 %v2951, %v2949
    %v2988 = vpack.c.b16 %v2954, %v2952
    %v2989 = vpack.c.b16 %v2955, %v2953
    %v2990 = vpack.c.b16 %v2958, %v2956
    %v2991 = vpack.c.b16 %v2959, %v2957
    %3024 = vmatprep.subr.bf16.mxu0 %v2961
    %3025 = vmatpush1.bf16.msra.mxu0 %v2960
    %3026 = vmatprep.subr.bf16.mxu0 %v2963
    %3027 = vmatpush1.bf16.msra.mxu0 %v2962
    %3028 = vmatprep.subr.bf16.mxu0 %v2965
    %3029 = vmatpush1.bf16.msra.mxu0 %v2964
    %3030 = vmatprep.subr.bf16.mxu0 %v2967
    %3031 = vmatpush1.bf16.msra.mxu0 %v2966
    %3032 = vmatprep.subr.bf16.mxu0 %v2969
    %3033 = vmatpush1.bf16.msra.mxu0 %v2968
    %3034 = vmatprep.subr.bf16.mxu0 %v2971
    %3035 = vmatpush1.bf16.msra.mxu0 %v2970
    %3036 = vmatprep.subr.bf16.mxu0 %v2973
    %3037 = vmatpush1.bf16.msra.mxu0 %v2972
    %3038 = vmatprep.subr.bf16.mxu0 %v2975
    %3039 = vmatpush1.bf16.msra.mxu0 %v2974
    %3040 = vmatprep.subr.bf16.mxu0 %v2977
    %3041 = vmatpush1.bf16.msra.mxu0 %v2976
    %3042 = vmatprep.subr.bf16.mxu0 %v2979
    %3043 = vmatpush1.bf16.msra.mxu0 %v2978
    %3044 = vmatprep.subr.bf16.mxu0 %v2981
    %3045 = vmatpush1.bf16.msra.mxu0 %v2980
    %3046 = vmatprep.subr.bf16.mxu0 %v2983
    %3047 = vmatpush1.bf16.msra.mxu0 %v2982
    %3048 = vmatprep.subr.bf16.mxu0 %v2985
    %3049 = vmatpush1.bf16.msra.mxu0 %v2984
    %3050 = vmatprep.subr.bf16.mxu0 %v2987
    %3051 = vmatpush1.bf16.msra.mxu0 %v2986
    %3052 = vmatprep.subr.bf16.mxu0 %v2989
    %3053 = vmatpush1.bf16.msra.mxu0 %v2988
    %3054 = vmatprep.subr.bf16.mxu0 %v2991
    %3055 = vmatpush1.bf16.msra.mxu0 %v2990
    %3056 = vmatprep.mubr.bf16.mxu0 %v2694
    %3057 = vmatmul.mubr.bf16.gmra.mrb[0].mxu0 %v2682
    %v3058 = vpop.f32.mrb[0].mxu0
    %v3059 = vadd.f32 0.0, %v3058
    %v3060 = vpop.f32.mrb[0].mxu0
    %v3061 = vadd.f32 0.0, %v3060
    %v3062 = vpop.f32.mrb[0].mxu0
    %v3063 = vadd.f32 0.0, %v3062
    %v3064 = vpop.f32.mrb[0].mxu0
    %v3065 = vadd.f32 0.0, %v3064
    %3066 = vmatprep.mubr.bf16.mxu0 %v2710
    %3067 = vmatmul.mubr.bf16.gmra.mrb[0].mxu0 %v2702
    %v3068 = vpop.f32.mrb[0].mxu0
    %v3069 = vadd.f32 0.0, %v3068
    %v3070 = vpop.f32.mrb[0].mxu0
    %v3071 = vadd.f32 0.0, %v3070
    %v3072 = vpop.f32.mrb[0].mxu0
    %v3073 = vadd.f32 0.0, %v3072
    %v3074 = vpop.f32.mrb[0].mxu0
    %v3075 = vadd.f32 0.0, %v3074
    %3076 = vmatprep.mubr.bf16.mxu0 %v2726
    %3077 = vmatmul.mubr.bf16.gmra.mrb[0].mxu0 %v2718
    %v3078 = vpop.f32.mrb[0].mxu0
    %v3079 = vadd.f32 0.0, %v3078
    %v3080 = vpop.f32.mrb[0].mxu0
    %v3081 = vadd.f32 0.0, %v3080
    %v3082 = vpop.f32.mrb[0].mxu0
    %v3083 = vadd.f32 0.0, %v3082
    %v3084 = vpop.f32.mrb[0].mxu0
    %v3085 = vadd.f32 0.0, %v3084
    %3086 = vmatprep.mubr.bf16.mxu0 %v2742
    %3087 = vmatmul.mubr.bf16.gmra.mrb[0].mxu0 %v2734
    %v3088 = vpop.f32.mrb[0].mxu0
    %v3089 = vadd.f32 0.0, %v3088
    %v3090 = vpop.f32.mrb[0].mxu0
    %v3091 = vadd.f32 0.0, %v3090
    %v3092 = vpop.f32.mrb[0].mxu0
    %v3093 = vadd.f32 0.0, %v3092
    %v3094 = vpop.f32.mrb[0].mxu0
    %v3095 = vadd.f32 0.0, %v3094
    %3096 = vmatprep.mubr.bf16.mxu0 %v2766
    %3097 = vmatmul.mubr.bf16.gmra.mrb[0].mxu0 %v2754
    %v3098 = vpop.f32.mrb[0].mxu0
    %v3099 = vadd.f32 0.0, %v3098
    %v3100 = vpop.f32.mrb[0].mxu0
    %v3101 = vadd.f32 0.0, %v3100
    %v3102 = vpop.f32.mrb[0].mxu0
    %v3103 = vadd.f32 0.0, %v3102
    %v3104 = vpop.f32.mrb[0].mxu0
    %v3105 = vadd.f32 0.0, %v3104
    %3106 = vmatprep.mubr.bf16.mxu0 %v2782
    %3107 = vmatmul.mubr.bf16.gmra.mrb[0].mxu0 %v2774
    %v3108 = vpop.f32.mrb[0].mxu0
    %v3109 = vadd.f32 0.0, %v3108
    %v3110 = vpop.f32.mrb[0].mxu0
    %v3111 = vadd.f32 0.0, %v3110
    %v3112 = vpop.f32.mrb[0].mxu0
    %v3113 = vadd.f32 0.0, %v3112
    %v3114 = vpop.f32.mrb[0].mxu0
    %v3115 = vadd.f32 0.0, %v3114
    %3116 = vmatprep.mubr.bf16.mxu0 %v2798
    %3117 = vmatmul.mubr.bf16.gmra.mrb[0].mxu0 %v2790
    %v3118 = vpop.f32.mrb[0].mxu0
    %v3119 = vadd.f32 0.0, %v3118
    %v3120 = vpop.f32.mrb[0].mxu0
    %v3121 = vadd.f32 0.0, %v3120
    %v3122 = vpop.f32.mrb[0].mxu0
    %v3123 = vadd.f32 0.0, %v3122
    %v3124 = vpop.f32.mrb[0].mxu0
    %v3125 = vadd.f32 0.0, %v3124
    %3126 = vmatprep.mubr.bf16.mxu0 %v2814
    %3127 = vmatmul.mubr.bf16.gmra.mrb[0].mxu0 %v2806
    %v3128 = vpop.f32.mrb[0].mxu0
    %v3129 = vadd.f32 0.0, %v3128
    %v3130 = vpop.f32.mrb[0].mxu0
    %v3131 = vadd.f32 0.0, %v3130
    %v3132 = vpop.f32.mrb[0].mxu0
    %v3133 = vadd.f32 0.0, %v3132
    %v3134 = vpop.f32.mrb[0].mxu0
    %v3135 = vadd.f32 0.0, %v3134
    %3136 = vdwg.mxu0
    %v3137 = vadd.f32 %v2563, %v3059
    %v3138 = vadd.f32 %v2564, %v3061
    %v3139 = vadd.f32 %v2565, %v3063
    %v3140 = vadd.f32 %v2566, %v3065
    %v3141 = vadd.f32 %v2567, %v3069
    %v3142 = vadd.f32 %v2568, %v3071
    %v3143 = vadd.f32 %v2569, %v3073
    %v3144 = vadd.f32 %v2570, %v3075
    %v3145 = vadd.f32 %v2571, %v3079
    %v3146 = vadd.f32 %v2572, %v3081
    %v3147 = vadd.f32 %v2573, %v3083
    %v3148 = vadd.f32 %v2574, %v3085
    %v3149 = vadd.f32 %v2575, %v3089
    %v3150 = vadd.f32 %v2576, %v3091
    %v3151 = vadd.f32 %v2577, %v3093
    %v3152 = vadd.f32 %v2578, %v3095
    %v3153 = vadd.f32 %v2579, %v3099
    %v3154 = vadd.f32 %v2580, %v3101
    %v3155 = vadd.f32 %v2581, %v3103
    %v3156 = vadd.f32 %v2582, %v3105
    %v3157 = vadd.f32 %v2583, %v3109
    %v3158 = vadd.f32 %v2584, %v3111
    %v3159 = vadd.f32 %v2585, %v3113
    %v3160 = vadd.f32 %v2586, %v3115
    %v3161 = vadd.f32 %v2587, %v3119
    %v3162 = vadd.f32 %v2588, %v3121
    %v3163 = vadd.f32 %v2589, %v3123
    %v3164 = vadd.f32 %v2590, %v3125
    %v3165 = vadd.f32 %v2591, %v3129
    %v3166 = vadd.f32 %v2592, %v3131
    %v3167 = vadd.f32 %v2593, %v3133
    %v3168 = vadd.f32 %v2594, %v3135
    %v3169 = vld [vmem:[#allocation2 + $0x20] sm:$0x80]
    %v3170 = vld [vmem:[#allocation2 + $0x28] sm:$0x80]
    %v3171 = vld [vmem:[#allocation2 + $0xa0] sm:$0x7f]
    %v3172 = vld [vmem:[#allocation2 + $0xa8] sm:$0x7f]
    %v3173 = vld [vmem:[#allocation2 + $0xe0] sm:$0x80]
    %v3174 = vld [vmem:[#allocation2 + $0xe8] sm:$0x80]
    %v3175 = vld [vmem:[#allocation2 + $0x160] sm:$0x7f]
    %v3176 = vld [vmem:[#allocation2 + $0x168] sm:$0x7f]
    %v3177 = vpack.c.bf16 %v2597, %v3169
    %v3178 = vpack.c.bf16 %v2598, %v3170
    %v3179 = vpack.c.bf16 %v3171, %v3171
    %v3180 = vpack.c.bf16 %v3172, %v3172
    %v3181 = vpack.c.bf16 %v2615, %v3173
    %v3182 = vpack.c.bf16 %v2616, %v3174
    %v3183 = vpack.c.bf16 %v3175, %v3175
    %v3184 = vpack.c.bf16 %v3176, %v3176
    %v3185 = vsel %vm234, %v3177, 0
    %v3186 = vsel %vm234, %v3178, 0
    %v3187 = vsel %vm235, %v2633, 0
    %v3188 = vsel %vm235, %v2634, 0
    %v3189 = vsel %vm235, %v2635, 0
    %v3190 = vsel %vm235, %v2636, 0
    %v3191 = vsel %vm235, %v2637, 0
    %v3192 = vsel %vm235, %v2638, 0
    %v3193 = vsel %vm234, %v3179, 0
    %v3194 = vsel %vm234, %v3180, 0
    %v3195 = vsel %vm234, %v3181, 0
    %v3196 = vsel %vm234, %v3182, 0
    %v3197 = vsel %vm235, %v2643, 0
    %v3198 = vsel %vm235, %v2644, 0
    %v3199 = vsel %vm235, %v2645, 0
    %v3200 = vsel %vm235, %v2646, 0
    %v3201 = vsel %vm235, %v2647, 0
    %v3202 = vsel %vm235, %v2648, 0
    %v3203 = vsel %vm234, %v3183, 0
    %v3204 = vsel %vm234, %v3184, 0
    %v3206 = vshrl.u32 %v3185, 16
    %v3208 = vrot.slane %v3206, 3
    %v3209 = vshll.u32 %v3185, 16
    %v3211 = vrot.slane %v3209, 4
    %v3212 = vor.u32 %v3208, %v3211
    %v3214 = vshrl.u32 %v3187, 16
    %v3216 = vrot.slane %v3214, 3
    %v3217 = vshll.u32 %v3187, 16
    %v3219 = vrot.slane %v3217, 4
    %v3220 = vor.u32 %v3216, %v3219
    %v3221 = vsel %vm256, %v3212, %v3220
    %v3223 = vshrl.u32 %v3186, 16
    %v3225 = vrot.slane %v3223, 3
    %v3226 = vshll.u32 %v3186, 16
    %v3228 = vrot.slane %v3226, 4
    %v3229 = vor.u32 %v3225, %v3228
    %v3231 = vshrl.u32 %v3188, 16
    %v3233 = vrot.slane %v3231, 3
    %v3234 = vshll.u32 %v3188, 16
    %v3236 = vrot.slane %v3234, 4
    %v3237 = vor.u32 %v3233, %v3236
    %v3238 = vsel %vm256, %v3229, %v3237
    %v3240 = vshrl.u32 %v3189, 16
    %v3242 = vrot.slane %v3240, 3
    %v3243 = vshll.u32 %v3189, 16
    %v3245 = vrot.slane %v3243, 4
    %v3246 = vor.u32 %v3242, %v3245
    %v3247 = vsel %vm256, %v3220, %v3246
    %v3249 = vshrl.u32 %v3190, 16
    %v3251 = vrot.slane %v3249, 3
    %v3252 = vshll.u32 %v3190, 16
    %v3254 = vrot.slane %v3252, 4
    %v3255 = vor.u32 %v3251, %v3254
    %v3256 = vsel %vm256, %v3237, %v3255
    %v3258 = vshrl.u32 %v3191, 16
    %v3260 = vrot.slane %v3258, 3
    %v3261 = vshll.u32 %v3191, 16
    %v3263 = vrot.slane %v3261, 4
    %v3264 = vor.u32 %v3260, %v3263
    %v3265 = vsel %vm256, %v3246, %v3264
    %v3267 = vshrl.u32 %v3192, 16
    %v3269 = vrot.slane %v3267, 3
    %v3270 = vshll.u32 %v3192, 16
    %v3272 = vrot.slane %v3270, 4
    %v3273 = vor.u32 %v3269, %v3272
    %v3274 = vsel %vm256, %v3255, %v3273
    %v3276 = vshrl.u32 %v3193, 16
    %v3278 = vrot.slane %v3276, 3
    %v3279 = vshll.u32 %v3193, 16
    %v3281 = vrot.slane %v3279, 4
    %v3282 = vor.u32 %v3278, %v3281
    %v3283 = vsel %vm256, %v3264, %v3282
    %v3285 = vshrl.u32 %v3194, 16
    %v3287 = vrot.slane %v3285, 3
    %v3288 = vshll.u32 %v3194, 16
    %v3290 = vrot.slane %v3288, 4
    %v3291 = vor.u32 %v3287, %v3290
    %v3292 = vsel %vm256, %v3273, %v3291
    %v3294 = vshrl.u32 %v3195, 16
    %v3296 = vrot.slane %v3294, 3
    %v3297 = vshll.u32 %v3195, 16
    %v3299 = vrot.slane %v3297, 4
    %v3300 = vor.u32 %v3296, %v3299
    %v3302 = vshrl.u32 %v3197, 16
    %v3304 = vrot.slane %v3302, 3
    %v3305 = vshll.u32 %v3197, 16
    %v3307 = vrot.slane %v3305, 4
    %v3308 = vor.u32 %v3304, %v3307
    %v3309 = vsel %vm256, %v3300, %v3308
    %v3311 = vshrl.u32 %v3196, 16
    %v3313 = vrot.slane %v3311, 3
    %v3314 = vshll.u32 %v3196, 16
    %v3316 = vrot.slane %v3314, 4
    %v3317 = vor.u32 %v3313, %v3316
    %v3319 = vshrl.u32 %v3198, 16
    %v3321 = vrot.slane %v3319, 3
    %v3322 = vshll.u32 %v3198, 16
    %v3324 = vrot.slane %v3322, 4
    %v3325 = vor.u32 %v3321, %v3324
    %v3326 = vsel %vm256, %v3317, %v3325
    %v3328 = vshrl.u32 %v3199, 16
    %v3330 = vrot.slane %v3328, 3
    %v3331 = vshll.u32 %v3199, 16
    %v3333 = vrot.slane %v3331, 4
    %v3334 = vor.u32 %v3330, %v3333
    %v3335 = vsel %vm256, %v3308, %v3334
    %v3337 = vshrl.u32 %v3200, 16
    %v3339 = vrot.slane %v3337, 3
    %v3340 = vshll.u32 %v3200, 16
    %v3342 = vrot.slane %v3340, 4
    %v3343 = vor.u32 %v3339, %v3342
    %v3344 = vsel %vm256, %v3325, %v3343
    %v3346 = vshrl.u32 %v3201, 16
    %v3348 = vrot.slane %v3346, 3
    %v3349 = vshll.u32 %v3201, 16
    %v3351 = vrot.slane %v3349, 4
    %v3352 = vor.u32 %v3348, %v3351
    %v3353 = vsel %vm256, %v3334, %v3352
    %v3355 = vshrl.u32 %v3202, 16
    %v3357 = vrot.slane %v3355, 3
    %v3358 = vshll.u32 %v3202, 16
    %v3360 = vrot.slane %v3358, 4
    %v3361 = vor.u32 %v3357, %v3360
    %v3362 = vsel %vm256, %v3343, %v3361
    %v3364 = vshrl.u32 %v3203, 16
    %v3366 = vrot.slane %v3364, 3
    %v3367 = vshll.u32 %v3203, 16
    %v3369 = vrot.slane %v3367, 4
    %v3370 = vor.u32 %v3366, %v3369
    %v3371 = vsel %vm256, %v3352, %v3370
    %v3373 = vshrl.u32 %v3204, 16
    %v3375 = vrot.slane %v3373, 3
    %v3376 = vshll.u32 %v3204, 16
    %v3378 = vrot.slane %v3376, 4
    %v3379 = vor.u32 %v3375, %v3378
    %v3380 = vsel %vm256, %v3361, %v3379
    %s3397 = scalar_lea.vmem [#allocation6], 1536
    %v3398 = vld [vmem:[%s3397] sm:$0xff]
    %v3399 = vld [vmem:[%s3397 + $0x8] sm:$0xff]
    %v3400 = vld [vmem:[%s3397 + $0x10] sm:$0xff]
    %v3401 = vld [vmem:[%s3397 + $0x18] sm:$0xff]
    %v3402 = vld [vmem:[%s3397 + $0x20] sm:$0xff]
    %v3403 = vld [vmem:[%s3397 + $0x28] sm:$0xff]
    %v3404 = vld [vmem:[%s3397 + $0x30] sm:$0xff]
    %v3405 = vld [vmem:[%s3397 + $0x38] sm:$0xff]
    %v3406 = vld [vmem:[%s3397 + $0x40] sm:$0xff]
    %v3407 = vld [vmem:[%s3397 + $0x48] sm:$0xff]
    %v3408 = vld [vmem:[%s3397 + $0x50] sm:$0xff]
    %v3409 = vld [vmem:[%s3397 + $0x58] sm:$0xff]
    %v3410 = vld [vmem:[%s3397 + $0x60] sm:$0xff]
    %v3411 = vld [vmem:[%s3397 + $0x68] sm:$0xff]
    %v3412 = vld [vmem:[%s3397 + $0x70] sm:$0xff]
    %v3413 = vld [vmem:[%s3397 + $0x78] sm:$0xff]
    %v3414 = vld [vmem:[%s3397 + $0x80] sm:$0xff]
    %v3415 = vld [vmem:[%s3397 + $0x88] sm:$0xff]
    %v3416 = vld [vmem:[%s3397 + $0x90] sm:$0xff]
    %v3417 = vld [vmem:[%s3397 + $0x98] sm:$0xff]
    %v3418 = vld [vmem:[%s3397 + $0xa0] sm:$0xff]
    %v3419 = vld [vmem:[%s3397 + $0xa8] sm:$0xff]
    %v3420 = vld [vmem:[%s3397 + $0xb0] sm:$0xff]
    %v3421 = vld [vmem:[%s3397 + $0xb8] sm:$0xff]
    %v3422 = vld [vmem:[%s3397 + $0xc0] sm:$0xff]
    %v3423 = vld [vmem:[%s3397 + $0xc8] sm:$0xff]
    %v3424 = vld [vmem:[%s3397 + $0xd0] sm:$0xff]
    %v3425 = vld [vmem:[%s3397 + $0xd8] sm:$0xff]
    %v3426 = vld [vmem:[%s3397 + $0xe0] sm:$0xff]
    %v3427 = vld [vmem:[%s3397 + $0xe8] sm:$0xff]
    %v3428 = vld [vmem:[%s3397 + $0xf0] sm:$0xff]
    %v3429 = vld [vmem:[%s3397 + $0xf8] sm:$0xff]
    %v3462 = vunpack.c.l.b16 %v3398
    %v3463 = vunpack.c.h.b16 %v3398
    %v3464 = vunpack.c.l.b16 %v3399
    %v3465 = vunpack.c.h.b16 %v3399
    %v3466 = vunpack.c.l.b16 %v3400
    %v3467 = vunpack.c.h.b16 %v3400
    %v3468 = vunpack.c.l.b16 %v3401
    %v3469 = vunpack.c.h.b16 %v3401
    %v3470 = vunpack.c.l.b16 %v3402
    %v3471 = vunpack.c.h.b16 %v3402
    %v3472 = vunpack.c.l.b16 %v3403
    %v3473 = vunpack.c.h.b16 %v3403
    %v3474 = vunpack.c.l.b16 %v3404
    %v3475 = vunpack.c.h.b16 %v3404
    %v3476 = vunpack.c.l.b16 %v3405
    %v3477 = vunpack.c.h.b16 %v3405
    %v3478 = vunpack.c.l.b16 %v3406
    %v3479 = vunpack.c.h.b16 %v3406
    %v3480 = vunpack.c.l.b16 %v3407
    %v3481 = vunpack.c.h.b16 %v3407
    %v3482 = vunpack.c.l.b16 %v3408
    %v3483 = vunpack.c.h.b16 %v3408
    %v3484 = vunpack.c.l.b16 %v3409
    %v3485 = vunpack.c.h.b16 %v3409
    %v3486 = vunpack.c.l.b16 %v3410
    %v3487 = vunpack.c.h.b16 %v3410
    %v3488 = vunpack.c.l.b16 %v3411
    %v3489 = vunpack.c.h.b16 %v3411
    %v3490 = vunpack.c.l.b16 %v3412
    %v3491 = vunpack.c.h.b16 %v3412
    %v3492 = vunpack.c.l.b16 %v3413
    %v3493 = vunpack.c.h.b16 %v3413
    %v3494 = vunpack.c.l.b16 %v3414
    %v3495 = vunpack.c.h.b16 %v3414
    %v3496 = vunpack.c.l.b16 %v3415
    %v3497 = vunpack.c.h.b16 %v3415
    %v3498 = vunpack.c.l.b16 %v3416
    %v3499 = vunpack.c.h.b16 %v3416
    %v3500 = vunpack.c.l.b16 %v3417
    %v3501 = vunpack.c.h.b16 %v3417
    %v3502 = vunpack.c.l.b16 %v3418
    %v3503 = vunpack.c.h.b16 %v3418
    %v3504 = vunpack.c.l.b16 %v3419
    %v3505 = vunpack.c.h.b16 %v3419
    %v3506 = vunpack.c.l.b16 %v3420
    %v3507 = vunpack.c.h.b16 %v3420
    %v3508 = vunpack.c.l.b16 %v3421
    %v3509 = vunpack.c.h.b16 %v3421
    %v3510 = vunpack.c.l.b16 %v3422
    %v3511 = vunpack.c.h.b16 %v3422
    %v3512 = vunpack.c.l.b16 %v3423
    %v3513 = vunpack.c.h.b16 %v3423
    %v3514 = vunpack.c.l.b16 %v3424
    %v3515 = vunpack.c.h.b16 %v3424
    %v3516 = vunpack.c.l.b16 %v3425
    %v3517 = vunpack.c.h.b16 %v3425
    %v3518 = vunpack.c.l.b16 %v3426
    %v3519 = vunpack.c.h.b16 %v3426
    %v3520 = vunpack.c.l.b16 %v3427
    %v3521 = vunpack.c.h.b16 %v3427
    %v3522 = vunpack.c.l.b16 %v3428
    %v3523 = vunpack.c.h.b16 %v3428
    %v3524 = vunpack.c.l.b16 %v3429
    %v3525 = vunpack.c.h.b16 %v3429
    %v3526 = vpack.c.b16 %v3464, %v3462
    %v3527 = vpack.c.b16 %v3465, %v3463
    %v3528 = vpack.c.b16 %v3468, %v3466
    %v3529 = vpack.c.b16 %v3469, %v3467
    %v3530 = vpack.c.b16 %v3472, %v3470
    %v3531 = vpack.c.b16 %v3473, %v3471
    %v3532 = vpack.c.b16 %v3476, %v3474
    %v3533 = vpack.c.b16 %v3477, %v3475
    %v3534 = vpack.c.b16 %v3480, %v3478
    %v3535 = vpack.c.b16 %v3481, %v3479
    %v3536 = vpack.c.b16 %v3484, %v3482
    %v3537 = vpack.c.b16 %v3485, %v3483
    %v3538 = vpack.c.b16 %v3488, %v3486
    %v3539 = vpack.c.b16 %v3489, %v3487
    %v3540 = vpack.c.b16 %v3492, %v3490
    %v3541 = vpack.c.b16 %v3493, %v3491
    %v3542 = vpack.c.b16 %v3496, %v3494
    %v3543 = vpack.c.b16 %v3497, %v3495
    %v3544 = vpack.c.b16 %v3500, %v3498
    %v3545 = vpack.c.b16 %v3501, %v3499
    %v3546 = vpack.c.b16 %v3504, %v3502
    %v3547 = vpack.c.b16 %v3505, %v3503
    %v3548 = vpack.c.b16 %v3508, %v3506
    %v3549 = vpack.c.b16 %v3509, %v3507
    %v3550 = vpack.c.b16 %v3512, %v3510
    %v3551 = vpack.c.b16 %v3513, %v3511
    %v3552 = vpack.c.b16 %v3516, %v3514
    %v3553 = vpack.c.b16 %v3517, %v3515
    %v3554 = vpack.c.b16 %v3520, %v3518
    %v3555 = vpack.c.b16 %v3521, %v3519
    %v3556 = vpack.c.b16 %v3524, %v3522
    %v3557 = vpack.c.b16 %v3525, %v3523
    %3590 = vmatprep.subr.bf16.mxu0 %v3527
    %3591 = vmatpush1.bf16.msra.mxu0 %v3526
    %3592 = vmatprep.subr.bf16.mxu0 %v3529
    %3593 = vmatpush1.bf16.msra.mxu0 %v3528
    %3594 = vmatprep.subr.bf16.mxu0 %v3531
    %3595 = vmatpush1.bf16.msra.mxu0 %v3530
    %3596 = vmatprep.subr.bf16.mxu0 %v3533
    %3597 = vmatpush1.bf16.msra.mxu0 %v3532
    %3598 = vmatprep.subr.bf16.mxu0 %v3535
    %3599 = vmatpush1.bf16.msra.mxu0 %v3534
    %3600 = vmatprep.subr.bf16.mxu0 %v3537
    %3601 = vmatpush1.bf16.msra.mxu0 %v3536
    %3602 = vmatprep.subr.bf16.mxu0 %v3539
    %3603 = vmatpush1.bf16.msra.mxu0 %v3538
    %3604 = vmatprep.subr.bf16.mxu0 %v3541
    %3605 = vmatpush1.bf16.msra.mxu0 %v3540
    %3606 = vmatprep.subr.bf16.mxu0 %v3543
    %3607 = vmatpush1.bf16.msra.mxu0 %v3542
    %3608 = vmatprep.subr.bf16.mxu0 %v3545
    %3609 = vmatpush1.bf16.msra.mxu0 %v3544
    %3610 = vmatprep.subr.bf16.mxu0 %v3547
    %3611 = vmatpush1.bf16.msra.mxu0 %v3546
    %3612 = vmatprep.subr.bf16.mxu0 %v3549
    %3613 = vmatpush1.bf16.msra.mxu0 %v3548
    %3614 = vmatprep.subr.bf16.mxu0 %v3551
    %3615 = vmatpush1.bf16.msra.mxu0 %v3550
    %3616 = vmatprep.subr.bf16.mxu0 %v3553
    %3617 = vmatpush1.bf16.msra.mxu0 %v3552
    %3618 = vmatprep.subr.bf16.mxu0 %v3555
    %3619 = vmatpush1.bf16.msra.mxu0 %v3554
    %3620 = vmatprep.subr.bf16.mxu0 %v3557
    %3621 = vmatpush1.bf16.msra.mxu0 %v3556
    %3622 = vmatprep.mubr.bf16.mxu0 %v3238
    %3623 = vmatmul.mubr.bf16.gmra.mrb[0].mxu0 %v3221
    %v3624 = vpop.f32.mrb[0].mxu0
    %v3625 = vadd.f32 0.0, %v3624
    %v3626 = vpop.f32.mrb[0].mxu0
    %v3627 = vadd.f32 0.0, %v3626
    %v3628 = vpop.f32.mrb[0].mxu0
    %v3629 = vadd.f32 0.0, %v3628
    %v3630 = vpop.f32.mrb[0].mxu0
    %v3631 = vadd.f32 0.0, %v3630
    %3632 = vmatprep.mubr.bf16.mxu0 %v3256
    %3633 = vmatmul.mubr.bf16.gmra.mrb[0].mxu0 %v3247
    %v3634 = vpop.f32.mrb[0].mxu0
    %v3635 = vadd.f32 0.0, %v3634
    %v3636 = vpop.f32.mrb[0].mxu0
    %v3637 = vadd.f32 0.0, %v3636
    %v3638 = vpop.f32.mrb[0].mxu0
    %v3639 = vadd.f32 0.0, %v3638
    %v3640 = vpop.f32.mrb[0].mxu0
    %v3641 = vadd.f32 0.0, %v3640
    %3642 = vmatprep.mubr.bf16.mxu0 %v3274
    %3643 = vmatmul.mubr.bf16.gmra.mrb[0].mxu0 %v3265
    %v3644 = vpop.f32.mrb[0].mxu0
    %v3645 = vadd.f32 0.0, %v3644
    %v3646 = vpop.f32.mrb[0].mxu0
    %v3647 = vadd.f32 0.0, %v3646
    %v3648 = vpop.f32.mrb[0].mxu0
    %v3649 = vadd.f32 0.0, %v3648
    %v3650 = vpop.f32.mrb[0].mxu0
    %v3651 = vadd.f32 0.0, %v3650
    %3652 = vmatprep.mubr.bf16.mxu0 %v3292
    %3653 = vmatmul.mubr.bf16.gmra.mrb[0].mxu0 %v3283
    %v3654 = vpop.f32.mrb[0].mxu0
    %v3655 = vadd.f32 0.0, %v3654
    %v3656 = vpop.f32.mrb[0].mxu0
    %v3657 = vadd.f32 0.0, %v3656
    %v3658 = vpop.f32.mrb[0].mxu0
    %v3659 = vadd.f32 0.0, %v3658
    %v3660 = vpop.f32.mrb[0].mxu0
    %v3661 = vadd.f32 0.0, %v3660
    %3662 = vmatprep.mubr.bf16.mxu0 %v3326
    %3663 = vmatmul.mubr.bf16.gmra.mrb[0].mxu0 %v3309
    %v3664 = vpop.f32.mrb[0].mxu0
    %v3665 = vadd.f32 0.0, %v3664
    %v3666 = vpop.f32.mrb[0].mxu0
    %v3667 = vadd.f32 0.0, %v3666
    %v3668 = vpop.f32.mrb[0].mxu0
    %v3669 = vadd.f32 0.0, %v3668
    %v3670 = vpop.f32.mrb[0].mxu0
    %v3671 = vadd.f32 0.0, %v3670
    %3672 = vmatprep.mubr.bf16.mxu0 %v3344
    %3673 = vmatmul.mubr.bf16.gmra.mrb[0].mxu0 %v3335
    %v3674 = vpop.f32.mrb[0].mxu0
    %v3675 = vadd.f32 0.0, %v3674
    %v3676 = vpop.f32.mrb[0].mxu0
    %v3677 = vadd.f32 0.0, %v3676
    %v3678 = vpop.f32.mrb[0].mxu0
    %v3679 = vadd.f32 0.0, %v3678
    %v3680 = vpop.f32.mrb[0].mxu0
    %v3681 = vadd.f32 0.0, %v3680
    %3682 = vmatprep.mubr.bf16.mxu0 %v3362
    %3683 = vmatmul.mubr.bf16.gmra.mrb[0].mxu0 %v3353
    %v3684 = vpop.f32.mrb[0].mxu0
    %v3685 = vadd.f32 0.0, %v3684
    %v3686 = vpop.f32.mrb[0].mxu0
    %v3687 = vadd.f32 0.0, %v3686
    %v3688 = vpop.f32.mrb[0].mxu0
    %v3689 = vadd.f32 0.0, %v3688
    %v3690 = vpop.f32.mrb[0].mxu0
    %v3691 = vadd.f32 0.0, %v3690
    %3692 = vmatprep.mubr.bf16.mxu0 %v3380
    %3693 = vmatmul.mubr.bf16.gmra.mrb[0].mxu0 %v3371
    %v3694 = vpop.f32.mrb[0].mxu0
    %v3695 = vadd.f32 0.0, %v3694
    %v3696 = vpop.f32.mrb[0].mxu0
    %v3697 = vadd.f32 0.0, %v3696
    %v3698 = vpop.f32.mrb[0].mxu0
    %v3699 = vadd.f32 0.0, %v3698
    %v3700 = vpop.f32.mrb[0].mxu0
    %v3701 = vadd.f32 0.0, %v3700
    %3702 = vdwg.mxu0
    %v3703 = vadd.f32 %v3137, %v3625
    %v3704 = vadd.f32 %v3138, %v3627
    %v3705 = vadd.f32 %v3139, %v3629
    %v3706 = vadd.f32 %v3140, %v3631
    %v3707 = vadd.f32 %v3141, %v3635
    %v3708 = vadd.f32 %v3142, %v3637
    %v3709 = vadd.f32 %v3143, %v3639
    %v3710 = vadd.f32 %v3144, %v3641
    %v3711 = vadd.f32 %v3145, %v3645
    %v3712 = vadd.f32 %v3146, %v3647
    %v3713 = vadd.f32 %v3147, %v3649
    %v3714 = vadd.f32 %v3148, %v3651
    %v3715 = vadd.f32 %v3149, %v3655
    %v3716 = vadd.f32 %v3150, %v3657
    %v3717 = vadd.f32 %v3151, %v3659
    %v3718 = vadd.f32 %v3152, %v3661
    %v3719 = vadd.f32 %v3153, %v3665
    %v3720 = vadd.f32 %v3154, %v3667
    %v3721 = vadd.f32 %v3155, %v3669
    %v3722 = vadd.f32 %v3156, %v3671
    %v3723 = vadd.f32 %v3157, %v3675
    %v3724 = vadd.f32 %v3158, %v3677
    %v3725 = vadd.f32 %v3159, %v3679
    %v3726 = vadd.f32 %v3160, %v3681
    %v3727 = vadd.f32 %v3161, %v3685
    %v3728 = vadd.f32 %v3162, %v3687
    %v3729 = vadd.f32 %v3163, %v3689
    %v3730 = vadd.f32 %v3164, %v3691
    %v3731 = vadd.f32 %v3165, %v3695
    %v3732 = vadd.f32 %v3166, %v3697
    %v3733 = vadd.f32 %v3167, %v3699
    %v3734 = vadd.f32 %v3168, %v3701
    %v3735 = vld [vmem:[#allocation2 + $0xa0] sm:$0xff]
    %v3736 = vld [vmem:[#allocation2 + $0xa8] sm:$0xff]
    %v3737 = vld [vmem:[#allocation2 + $0x160] sm:$0xff]
    %v3738 = vld [vmem:[#allocation2 + $0x168] sm:$0xff]
    %v3739 = vpack.c.bf16 %v2599, %v2597
    %v3740 = vpack.c.bf16 %v2600, %v2598
    %v3741 = vpack.c.bf16 %v2603, %v2601
    %v3742 = vpack.c.bf16 %v2604, %v2602
    %v3743 = vpack.c.bf16 %v2607, %v2605
    %v3744 = vpack.c.bf16 %v2608, %v2606
    %v3745 = vpack.c.bf16 %v3735, %v2609
    %v3746 = vpack.c.bf16 %v3736, %v2610
    %v3747 = vpack.c.bf16 %v2617, %v2615
    %v3748 = vpack.c.bf16 %v2618, %v2616
    %v3749 = vpack.c.bf16 %v2621, %v2619
    %v3750 = vpack.c.bf16 %v2622, %v2620
    %v3751 = vpack.c.bf16 %v2625, %v2623
    %v3752 = vpack.c.bf16 %v2626, %v2624
    %v3753 = vpack.c.bf16 %v3737, %v2627
    %v3754 = vpack.c.bf16 %v3738, %v2628
    %s3755 = scalar_lea.vmem [#allocation6], 1792
    %v3756 = vld [vmem:[%s3755] sm:$0xff]
    %v3757 = vld [vmem:[%s3755 + $0x8] sm:$0xff]
    %v3758 = vld [vmem:[%s3755 + $0x10] sm:$0xff]
    %v3759 = vld [vmem:[%s3755 + $0x18] sm:$0xff]
    %v3760 = vld [vmem:[%s3755 + $0x20] sm:$0xff]
    %v3761 = vld [vmem:[%s3755 + $0x28] sm:$0xff]
    %v3762 = vld [vmem:[%s3755 + $0x30] sm:$0xff]
    %v3763 = vld [vmem:[%s3755 + $0x38] sm:$0xff]
    %v3764 = vld [vmem:[%s3755 + $0x40] sm:$0xff]
    %v3765 = vld [vmem:[%s3755 + $0x48] sm:$0xff]
    %v3766 = vld [vmem:[%s3755 + $0x50] sm:$0xff]
    %v3767 = vld [vmem:[%s3755 + $0x58] sm:$0xff]
    %v3768 = vld [vmem:[%s3755 + $0x60] sm:$0xff]
    %v3769 = vld [vmem:[%s3755 + $0x68] sm:$0xff]
    %v3770 = vld [vmem:[%s3755 + $0x70] sm:$0xff]
    %v3771 = vld [vmem:[%s3755 + $0x78] sm:$0xff]
    %v3772 = vld [vmem:[%s3755 + $0x80] sm:$0xff]
    %v3773 = vld [vmem:[%s3755 + $0x88] sm:$0xff]
    %v3774 = vld [vmem:[%s3755 + $0x90] sm:$0xff]
    %v3775 = vld [vmem:[%s3755 + $0x98] sm:$0xff]
    %v3776 = vld [vmem:[%s3755 + $0xa0] sm:$0xff]
    %v3777 = vld [vmem:[%s3755 + $0xa8] sm:$0xff]
    %v3778 = vld [vmem:[%s3755 + $0xb0] sm:$0xff]
    %v3779 = vld [vmem:[%s3755 + $0xb8] sm:$0xff]
    %v3780 = vld [vmem:[%s3755 + $0xc0] sm:$0xff]
    %v3781 = vld [vmem:[%s3755 + $0xc8] sm:$0xff]
    %v3782 = vld [vmem:[%s3755 + $0xd0] sm:$0xff]
    %v3783 = vld [vmem:[%s3755 + $0xd8] sm:$0xff]
    %v3784 = vld [vmem:[%s3755 + $0xe0] sm:$0xff]
    %v3785 = vld [vmem:[%s3755 + $0xe8] sm:$0xff]
    %v3786 = vld [vmem:[%s3755 + $0xf0] sm:$0xff]
    %v3787 = vld [vmem:[%s3755 + $0xf8] sm:$0xff]
    %v3820 = vunpack.c.l.b16 %v3756
    %v3821 = vunpack.c.h.b16 %v3756
    %v3822 = vunpack.c.l.b16 %v3757
    %v3823 = vunpack.c.h.b16 %v3757
    %v3824 = vunpack.c.l.b16 %v3758
    %v3825 = vunpack.c.h.b16 %v3758
    %v3826 = vunpack.c.l.b16 %v3759
    %v3827 = vunpack.c.h.b16 %v3759
    %v3828 = vunpack.c.l.b16 %v3760
    %v3829 = vunpack.c.h.b16 %v3760
    %v3830 = vunpack.c.l.b16 %v3761
    %v3831 = vunpack.c.h.b16 %v3761
    %v3832 = vunpack.c.l.b16 %v3762
    %v3833 = vunpack.c.h.b16 %v3762
    %v3834 = vunpack.c.l.b16 %v3763
    %v3835 = vunpack.c.h.b16 %v3763
    %v3836 = vunpack.c.l.b16 %v3764
    %v3837 = vunpack.c.h.b16 %v3764
    %v3838 = vunpack.c.l.b16 %v3765
    %v3839 = vunpack.c.h.b16 %v3765
    %v3840 = vunpack.c.l.b16 %v3766
    %v3841 = vunpack.c.h.b16 %v3766
    %v3842 = vunpack.c.l.b16 %v3767
    %v3843 = vunpack.c.h.b16 %v3767
    %v3844 = vunpack.c.l.b16 %v3768
    %v3845 = vunpack.c.h.b16 %v3768
    %v3846 = vunpack.c.l.b16 %v3769
    %v3847 = vunpack.c.h.b16 %v3769
    %v3848 = vunpack.c.l.b16 %v3770
    %v3849 = vunpack.c.h.b16 %v3770
    %v3850 = vunpack.c.l.b16 %v3771
    %v3851 = vunpack.c.h.b16 %v3771
    %v3852 = vunpack.c.l.b16 %v3772
    %v3853 = vunpack.c.h.b16 %v3772
    %v3854 = vunpack.c.l.b16 %v3773
    %v3855 = vunpack.c.h.b16 %v3773
    %v3856 = vunpack.c.l.b16 %v3774
    %v3857 = vunpack.c.h.b16 %v3774
    %v3858 = vunpack.c.l.b16 %v3775
    %v3859 = vunpack.c.h.b16 %v3775
    %v3860 = vunpack.c.l.b16 %v3776
    %v3861 = vunpack.c.h.b16 %v3776
    %v3862 = vunpack.c.l.b16 %v3777
    %v3863 = vunpack.c.h.b16 %v3777
    %v3864 = vunpack.c.l.b16 %v3778
    %v3865 = vunpack.c.h.b16 %v3778
    %v3866 = vunpack.c.l.b16 %v3779
    %v3867 = vunpack.c.h.b16 %v3779
    %v3868 = vunpack.c.l.b16 %v3780
    %v3869 = vunpack.c.h.b16 %v3780
    %v3870 = vunpack.c.l.b16 %v3781
    %v3871 = vunpack.c.h.b16 %v3781
    %v3872 = vunpack.c.l.b16 %v3782
    %v3873 = vunpack.c.h.b16 %v3782
    %v3874 = vunpack.c.l.b16 %v3783
    %v3875 = vunpack.c.h.b16 %v3783
    %v3876 = vunpack.c.l.b16 %v3784
    %v3877 = vunpack.c.h.b16 %v3784
    %v3878 = vunpack.c.l.b16 %v3785
    %v3879 = vunpack.c.h.b16 %v3785
    %v3880 = vunpack.c.l.b16 %v3786
    %v3881 = vunpack.c.h.b16 %v3786
    %v3882 = vunpack.c.l.b16 %v3787
    %v3883 = vunpack.c.h.b16 %v3787
    %v3884 = vpack.c.b16 %v3822, %v3820
    %v3885 = vpack.c.b16 %v3823, %v3821
    %v3886 = vpack.c.b16 %v3826, %v3824
    %v3887 = vpack.c.b16 %v3827, %v3825
    %v3888 = vpack.c.b16 %v3830, %v3828
    %v3889 = vpack.c.b16 %v3831, %v3829
    %v3890 = vpack.c.b16 %v3834, %v3832
    %v3891 = vpack.c.b16 %v3835, %v3833
    %v3892 = vpack.c.b16 %v3838, %v3836
    %v3893 = vpack.c.b16 %v3839, %v3837
    %v3894 = vpack.c.b16 %v3842, %v3840
    %v3895 = vpack.c.b16 %v3843, %v3841
    %v3896 = vpack.c.b16 %v3846, %v3844
    %v3897 = vpack.c.b16 %v3847, %v3845
    %v3898 = vpack.c.b16 %v3850, %v3848
    %v3899 = vpack.c.b16 %v3851, %v3849
    %v3900 = vpack.c.b16 %v3854, %v3852
    %v3901 = vpack.c.b16 %v3855, %v3853
    %v3902 = vpack.c.b16 %v3858, %v3856
    %v3903 = vpack.c.b16 %v3859, %v3857
    %v3904 = vpack.c.b16 %v3862, %v3860
    %v3905 = vpack.c.b16 %v3863, %v3861
    %v3906 = vpack.c.b16 %v3866, %v3864
    %v3907 = vpack.c.b16 %v3867, %v3865
    %v3908 = vpack.c.b16 %v3870, %v3868
    %v3909 = vpack.c.b16 %v3871, %v3869
    %v3910 = vpack.c.b16 %v3874, %v3872
    %v3911 = vpack.c.b16 %v3875, %v3873
    %v3912 = vpack.c.b16 %v3878, %v3876
    %v3913 = vpack.c.b16 %v3879, %v3877
    %v3914 = vpack.c.b16 %v3882, %v3880
    %v3915 = vpack.c.b16 %v3883, %v3881
    %3948 = vmatprep.subr.bf16.mxu0 %v3885
    %3949 = vmatpush1.bf16.msra.mxu0 %v3884
    %3950 = vmatprep.subr.bf16.mxu0 %v3887
    %3951 = vmatpush1.bf16.msra.mxu0 %v3886
    %3952 = vmatprep.subr.bf16.mxu0 %v3889
    %3953 = vmatpush1.bf16.msra.mxu0 %v3888
    %3954 = vmatprep.subr.bf16.mxu0 %v3891
    %3955 = vmatpush1.bf16.msra.mxu0 %v3890
    %3956 = vmatprep.subr.bf16.mxu0 %v3893
    %3957 = vmatpush1.bf16.msra.mxu0 %v3892
    %3958 = vmatprep.subr.bf16.mxu0 %v3895
    %3959 = vmatpush1.bf16.msra.mxu0 %v3894
    %3960 = vmatprep.subr.bf16.mxu0 %v3897
    %3961 = vmatpush1.bf16.msra.mxu0 %v3896
    %3962 = vmatprep.subr.bf16.mxu0 %v3899
    %3963 = vmatpush1.bf16.msra.mxu0 %v3898
    %3964 = vmatprep.subr.bf16.mxu0 %v3901
    %3965 = vmatpush1.bf16.msra.mxu0 %v3900
    %3966 = vmatprep.subr.bf16.mxu0 %v3903
    %3967 = vmatpush1.bf16.msra.mxu0 %v3902
    %3968 = vmatprep.subr.bf16.mxu0 %v3905
    %3969 = vmatpush1.bf16.msra.mxu0 %v3904
    %3970 = vmatprep.subr.bf16.mxu0 %v3907
    %3971 = vmatpush1.bf16.msra.mxu0 %v3906
    %3972 = vmatprep.subr.bf16.mxu0 %v3909
    %3973 = vmatpush1.bf16.msra.mxu0 %v3908
    %3974 = vmatprep.subr.bf16.mxu0 %v3911
    %3975 = vmatpush1.bf16.msra.mxu0 %v3910
    %3976 = vmatprep.subr.bf16.mxu0 %v3913
    %3977 = vmatpush1.bf16.msra.mxu0 %v3912
    %3978 = vmatprep.subr.bf16.mxu0 %v3915
    %3979 = vmatpush1.bf16.msra.mxu0 %v3914
    %3980 = vmatprep.mubr.bf16.mxu0 %v3740
    %3981 = vmatmul.mubr.bf16.gmra.mrb[0].mxu0 %v3739
    %v3982 = vpop.f32.mrb[0].mxu0
    %v3983 = vadd.f32 0.0, %v3982
    %v3984 = vpop.f32.mrb[0].mxu0
    %v3985 = vadd.f32 0.0, %v3984
    %v3986 = vpop.f32.mrb[0].mxu0
    %v3987 = vadd.f32 0.0, %v3986
    %v3988 = vpop.f32.mrb[0].mxu0
    %v3989 = vadd.f32 0.0, %v3988
    %3990 = vmatprep.mubr.bf16.mxu0 %v3742
    %3991 = vmatmul.mubr.bf16.gmra.mrb[0].mxu0 %v3741
    %v3992 = vpop.f32.mrb[0].mxu0
    %v3993 = vadd.f32 0.0, %v3992
    %v3994 = vpop.f32.mrb[0].mxu0
    %v3995 = vadd.f32 0.0, %v3994
    %v3996 = vpop.f32.mrb[0].mxu0
    %v3997 = vadd.f32 0.0, %v3996
    %v3998 = vpop.f32.mrb[0].mxu0
    %v3999 = vadd.f32 0.0, %v3998
    %4000 = vmatprep.mubr.bf16.mxu0 %v3744
    %4001 = vmatmul.mubr.bf16.gmra.mrb[0].mxu0 %v3743
    %v4002 = vpop.f32.mrb[0].mxu0
    %v4003 = vadd.f32 0.0, %v4002
    %v4004 = vpop.f32.mrb[0].mxu0
    %v4005 = vadd.f32 0.0, %v4004
    %v4006 = vpop.f32.mrb[0].mxu0
    %v4007 = vadd.f32 0.0, %v4006
    %v4008 = vpop.f32.mrb[0].mxu0
    %v4009 = vadd.f32 0.0, %v4008
    %4010 = vmatprep.mubr.bf16.mxu0 %v3746
    %4011 = vmatmul.mubr.bf16.gmra.mrb[0].mxu0 %v3745
    %v4012 = vpop.f32.mrb[0].mxu0
    %v4013 = vadd.f32 0.0, %v4012
    %v4014 = vpop.f32.mrb[0].mxu0
    %v4015 = vadd.f32 0.0, %v4014
    %v4016 = vpop.f32.mrb[0].mxu0
    %v4017 = vadd.f32 0.0, %v4016
    %v4018 = vpop.f32.mrb[0].mxu0
    %v4019 = vadd.f32 0.0, %v4018
    %4020 = vmatprep.mubr.bf16.mxu0 %v3748
    %4021 = vmatmul.mubr.bf16.gmra.mrb[0].mxu0 %v3747
    %v4022 = vpop.f32.mrb[0].mxu0
    %v4023 = vadd.f32 0.0, %v4022
    %v4024 = vpop.f32.mrb[0].mxu0
    %v4025 = vadd.f32 0.0, %v4024
    %v4026 = vpop.f32.mrb[0].mxu0
    %v4027 = vadd.f32 0.0, %v4026
    %v4028 = vpop.f32.mrb[0].mxu0
    %v4029 = vadd.f32 0.0, %v4028
    %4030 = vmatprep.mubr.bf16.mxu0 %v3750
    %4031 = vmatmul.mubr.bf16.gmra.mrb[0].mxu0 %v3749
    %v4032 = vpop.f32.mrb[0].mxu0
    %v4033 = vadd.f32 0.0, %v4032
    %v4034 = vpop.f32.mrb[0].mxu0
    %v4035 = vadd.f32 0.0, %v4034
    %v4036 = vpop.f32.mrb[0].mxu0
    %v4037 = vadd.f32 0.0, %v4036
    %v4038 = vpop.f32.mrb[0].mxu0
    %v4039 = vadd.f32 0.0, %v4038
    %4040 = vmatprep.mubr.bf16.mxu0 %v3752
    %4041 = vmatmul.mubr.bf16.gmra.mrb[0].mxu0 %v3751
    %v4042 = vpop.f32.mrb[0].mxu0
    %v4043 = vadd.f32 0.0, %v4042
    %v4044 = vpop.f32.mrb[0].mxu0
    %v4045 = vadd.f32 0.0, %v4044
    %v4046 = vpop.f32.mrb[0].mxu0
    %v4047 = vadd.f32 0.0, %v4046
    %v4048 = vpop.f32.mrb[0].mxu0
    %v4049 = vadd.f32 0.0, %v4048
    %4050 = vmatprep.mubr.bf16.mxu0 %v3754
    %4051 = vmatmul.mubr.bf16.gmra.mrb[0].mxu0 %v3753
    %v4052 = vpop.f32.mrb[0].mxu0
    %v4053 = vadd.f32 0.0, %v4052
    %v4054 = vpop.f32.mrb[0].mxu0
    %v4055 = vadd.f32 0.0, %v4054
    %v4056 = vpop.f32.mrb[0].mxu0
    %v4057 = vadd.f32 0.0, %v4056
    %v4058 = vpop.f32.mrb[0].mxu0
    %v4059 = vadd.f32 0.0, %v4058
    %4060 = vdwg.mxu0
    %v4061 = vadd.f32 %v3703, %v3983
    %v4062 = vadd.f32 %v3704, %v3985
    %v4063 = vadd.f32 %v3705, %v3987
    %v4064 = vadd.f32 %v3706, %v3989
    %v4065 = vadd.f32 %v3707, %v3993
    %v4066 = vadd.f32 %v3708, %v3995
    %v4067 = vadd.f32 %v3709, %v3997
    %v4068 = vadd.f32 %v3710, %v3999
    %v4069 = vadd.f32 %v3711, %v4003
    %v4070 = vadd.f32 %v3712, %v4005
    %v4071 = vadd.f32 %v3713, %v4007
    %v4072 = vadd.f32 %v3714, %v4009
    %v4073 = vadd.f32 %v3715, %v4013
    %v4074 = vadd.f32 %v3716, %v4015
    %v4075 = vadd.f32 %v3717, %v4017
    %v4076 = vadd.f32 %v3718, %v4019
    %v4077 = vadd.f32 %v3719, %v4023
    %v4078 = vadd.f32 %v3720, %v4025
    %v4079 = vadd.f32 %v3721, %v4027
    %v4080 = vadd.f32 %v3722, %v4029
    %v4081 = vadd.f32 %v3723, %v4033
    %v4082 = vadd.f32 %v3724, %v4035
    %v4083 = vadd.f32 %v3725, %v4037
    %v4084 = vadd.f32 %v3726, %v4039
    %v4085 = vadd.f32 %v3727, %v4043
    %v4086 = vadd.f32 %v3728, %v4045
    %v4087 = vadd.f32 %v3729, %v4047
    %v4088 = vadd.f32 %v3730, %v4049
    %v4089 = vadd.f32 %v3731, %v4053
    %v4090 = vadd.f32 %v3732, %v4055
    %v4091 = vadd.f32 %v3733, %v4057
    %v4092 = vadd.f32 %v3734, %v4059
    %v4093 = vld [vmem:[#allocation2 + $0x30] sm:$0xfe]
    %v4094 = vld [vmem:[#allocation2 + $0x38] sm:$0xfe]
    %v4095 = vld [vmem:[#allocation2 + $0x40] sm:$0xff]
    %v4096 = vld [vmem:[#allocation2 + $0x48] sm:$0xff]
    %v4097 = vld [vmem:[#allocation2 + $0x50] sm:$0xff]
    %v4098 = vld [vmem:[#allocation2 + $0x58] sm:$0xff]
    %v4099 = vld [vmem:[#allocation2 + $0x60] sm:$0xff]
    %v4100 = vld [vmem:[#allocation2 + $0x68] sm:$0xff]
    %v4101 = vld [vmem:[#allocation2 + $0x70] sm:$0xff]
    %v4102 = vld [vmem:[#allocation2 + $0x78] sm:$0xff]
    %v4103 = vld [vmem:[#allocation2 + $0x80] sm:$0xff]
    %v4104 = vld [vmem:[#allocation2 + $0x88] sm:$0xff]
    %v4105 = vld [vmem:[#allocation2 + $0x90] sm:$0xff]
    %v4106 = vld [vmem:[#allocation2 + $0x98] sm:$0xff]
    %v4107 = vld [vmem:[#allocation2 + $0xa0] sm:$0xff]
    %v4108 = vld [vmem:[#allocation2 + $0xa8] sm:$0xff]
    %v4109 = vld [vmem:[#allocation2 + $0xb0] sm:$0x1]
    %v4110 = vld [vmem:[#allocation2 + $0xb8] sm:$0x1]
    %v4111 = vld [vmem:[#allocation2 + $0xf0] sm:$0xfe]
    %v4112 = vld [vmem:[#allocation2 + $0xf8] sm:$0xfe]
    %v4113 = vld [vmem:[#allocation2 + $0x100] sm:$0xff]
    %v4114 = vld [vmem:[#allocation2 + $0x108] sm:$0xff]
    %v4115 = vld [vmem:[#allocation2 + $0x110] sm:$0xff]
    %v4116 = vld [vmem:[#allocation2 + $0x118] sm:$0xff]
    %v4117 = vld [vmem:[#allocation2 + $0x120] sm:$0xff]
    %v4118 = vld [vmem:[#allocation2 + $0x128] sm:$0xff]
    %v4119 = vld [vmem:[#allocation2 + $0x130] sm:$0xff]
    %v4120 = vld [vmem:[#allocation2 + $0x138] sm:$0xff]
    %v4121 = vld [vmem:[#allocation2 + $0x140] sm:$0xff]
    %v4122 = vld [vmem:[#allocation2 + $0x148] sm:$0xff]
    %v4123 = vld [vmem:[#allocation2 + $0x150] sm:$0xff]
    %v4124 = vld [vmem:[#allocation2 + $0x158] sm:$0xff]
    %v4125 = vld [vmem:[#allocation2 + $0x160] sm:$0xff]
    %v4126 = vld [vmem:[#allocation2 + $0x168] sm:$0xff]
    %v4127 = vld [vmem:[#allocation2 + $0x170] sm:$0x1]
    %v4128 = vld [vmem:[#allocation2 + $0x178] sm:$0x1]
    %v4129 = vpack.c.bf16 %v4095, %v4093
    %v4130 = vpack.c.bf16 %v4096, %v4094
    %v4131 = vpack.c.bf16 %v4099, %v4097
    %v4132 = vpack.c.bf16 %v4100, %v4098
    %v4133 = vpack.c.bf16 %v4103, %v4101
    %v4134 = vpack.c.bf16 %v4104, %v4102
    %v4135 = vpack.c.bf16 %v4107, %v4105
    %v4136 = vpack.c.bf16 %v4108, %v4106
    %v4137 = vpack.c.bf16 %v4109, %v4109
    %v4138 = vpack.c.bf16 %v4110, %v4110
    %v4139 = vpack.c.bf16 %v4113, %v4111
    %v4140 = vpack.c.bf16 %v4114, %v4112
    %v4141 = vpack.c.bf16 %v4117, %v4115
    %v4142 = vpack.c.bf16 %v4118, %v4116
    %v4143 = vpack.c.bf16 %v4121, %v4119
    %v4144 = vpack.c.bf16 %v4122, %v4120
    %v4145 = vpack.c.bf16 %v4125, %v4123
    %v4146 = vpack.c.bf16 %v4126, %v4124
    %v4147 = vpack.c.bf16 %v4127, %v4127
    %v4148 = vpack.c.bf16 %v4128, %v4128
    %v4149 = vsel %vm1149, %v4129, 0
    %v4150 = vsel %vm1149, %v4130, 0
    %v4151 = vsel %vm1150, %v4131, 0
    %v4152 = vsel %vm1150, %v4132, 0
    %v4153 = vsel %vm1150, %v4133, 0
    %v4154 = vsel %vm1150, %v4134, 0
    %v4155 = vsel %vm1150, %v4135, 0
    %v4156 = vsel %vm1150, %v4136, 0
    %v4157 = vsel %vm1151, %v4137, 0
    %v4158 = vsel %vm1151, %v4138, 0
    %v4159 = vsel %vm1149, %v4139, 0
    %v4160 = vsel %vm1149, %v4140, 0
    %v4161 = vsel %vm1150, %v4141, 0
    %v4162 = vsel %vm1150, %v4142, 0
    %v4163 = vsel %vm1150, %v4143, 0
    %v4164 = vsel %vm1150, %v4144, 0
    %v4165 = vsel %vm1150, %v4145, 0
    %v4166 = vsel %vm1150, %v4146, 0
    %v4167 = vsel %vm1151, %v4147, 0
    %v4168 = vsel %vm1151, %v4148, 0
    %v4170 = vshrl.u32 %v4149, 16
    %v4172 = vshll.u32 %v4149, 16
    %v4174 = vrot.slane %v4172, 1
    %v4175 = vor.u32 %v4170, %v4174
    %v4177 = vshll.u32 %v4151, 16
    %v4179 = vrot.slane %v4177, 1
    %v4180 = vsel %vm1172, %v4175, %v4179
    %v4182 = vshrl.u32 %v4150, 16
    %v4184 = vshll.u32 %v4150, 16
    %v4186 = vrot.slane %v4184, 1
    %v4187 = vor.u32 %v4182, %v4186
    %v4189 = vshll.u32 %v4152, 16
    %v4191 = vrot.slane %v4189, 1
    %v4192 = vsel %vm1172, %v4187, %v4191
    %v4193 = vshrl.u32 %v4151, 16
    %v4195 = vor.u32 %v4193, %v4179
    %v4197 = vshll.u32 %v4153, 16
    %v4199 = vrot.slane %v4197, 1
    %v4200 = vsel %vm1172, %v4195, %v4199
    %v4201 = vshrl.u32 %v4152, 16
    %v4203 = vor.u32 %v4201, %v4191
    %v4205 = vshll.u32 %v4154, 16
    %v4207 = vrot.slane %v4205, 1
    %v4208 = vsel %vm1172, %v4203, %v4207
    %v4209 = vshrl.u32 %v4153, 16
    %v4211 = vor.u32 %v4209, %v4199
    %v4213 = vshll.u32 %v4155, 16
    %v4215 = vrot.slane %v4213, 1
    %v4216 = vsel %vm1172, %v4211, %v4215
    %v4217 = vshrl.u32 %v4154, 16
    %v4219 = vor.u32 %v4217, %v4207
    %v4221 = vshll.u32 %v4156, 16
    %v4223 = vrot.slane %v4221, 1
    %v4224 = vsel %vm1172, %v4219, %v4223
    %v4225 = vshrl.u32 %v4155, 16
    %v4227 = vor.u32 %v4225, %v4215
    %v4229 = vshll.u32 %v4157, 16
    %v4231 = vrot.slane %v4229, 1
    %v4232 = vsel %vm1172, %v4227, %v4231
    %v4233 = vshrl.u32 %v4156, 16
    %v4235 = vor.u32 %v4233, %v4223
    %v4237 = vshll.u32 %v4158, 16
    %v4239 = vrot.slane %v4237, 1
    %v4240 = vsel %vm1172, %v4235, %v4239
    %v4242 = vshrl.u32 %v4159, 16
    %v4244 = vshll.u32 %v4159, 16
    %v4246 = vrot.slane %v4244, 1
    %v4247 = vor.u32 %v4242, %v4246
    %v4249 = vshll.u32 %v4161, 16
    %v4251 = vrot.slane %v4249, 1
    %v4252 = vsel %vm1172, %v4247, %v4251
    %v4254 = vshrl.u32 %v4160, 16
    %v4256 = vshll.u32 %v4160, 16
    %v4258 = vrot.slane %v4256, 1
    %v4259 = vor.u32 %v4254, %v4258
    %v4261 = vshll.u32 %v4162, 16
    %v4263 = vrot.slane %v4261, 1
    %v4264 = vsel %vm1172, %v4259, %v4263
    %v4265 = vshrl.u32 %v4161, 16
    %v4267 = vor.u32 %v4265, %v4251
    %v4269 = vshll.u32 %v4163, 16
    %v4271 = vrot.slane %v4269, 1
    %v4272 = vsel %vm1172, %v4267, %v4271
    %v4273 = vshrl.u32 %v4162, 16
    %v4275 = vor.u32 %v4273, %v4263
    %v4277 = vshll.u32 %v4164, 16
    %v4279 = vrot.slane %v4277, 1
    %v4280 = vsel %vm1172, %v4275, %v4279
    %v4281 = vshrl.u32 %v4163, 16
    %v4283 = vor.u32 %v4281, %v4271
    %v4285 = vshll.u32 %v4165, 16
    %v4287 = vrot.slane %v4285, 1
    %v4288 = vsel %vm1172, %v4283, %v4287
    %v4289 = vshrl.u32 %v4164, 16
    %v4291 = vor.u32 %v4289, %v4279
    %v4293 = vshll.u32 %v4166, 16
    %v4295 = vrot.slane %v4293, 1
    %v4296 = vsel %vm1172, %v4291, %v4295
    %v4297 = vshrl.u32 %v4165, 16
    %v4299 = vor.u32 %v4297, %v4287
    %v4301 = vshll.u32 %v4167, 16
    %v4303 = vrot.slane %v4301, 1
    %v4304 = vsel %vm1172, %v4299, %v4303
    %v4305 = vshrl.u32 %v4166, 16
    %v4307 = vor.u32 %v4305, %v4295
    %v4309 = vshll.u32 %v4168, 16
    %v4311 = vrot.slane %v4309, 1
    %v4312 = vsel %vm1172, %v4307, %v4311
    %s4329 = scalar_lea.vmem [#allocation6], 2048
    %v4330 = vld [vmem:[%s4329] sm:$0xff]
    %v4331 = vld [vmem:[%s4329 + $0x8] sm:$0xff]
    %v4332 = vld [vmem:[%s4329 + $0x10] sm:$0xff]
    %v4333 = vld [vmem:[%s4329 + $0x18] sm:$0xff]
    %v4334 = vld [vmem:[%s4329 + $0x20] sm:$0xff]
    %v4335 = vld [vmem:[%s4329 + $0x28] sm:$0xff]
    %v4336 = vld [vmem:[%s4329 + $0x30] sm:$0xff]
    %v4337 = vld [vmem:[%s4329 + $0x38] sm:$0xff]
    %v4338 = vld [vmem:[%s4329 + $0x40] sm:$0xff]
    %v4339 = vld [vmem:[%s4329 + $0x48] sm:$0xff]
    %v4340 = vld [vmem:[%s4329 + $0x50] sm:$0xff]
    %v4341 = vld [vmem:[%s4329 + $0x58] sm:$0xff]
    %v4342 = vld [vmem:[%s4329 + $0x60] sm:$0xff]
    %v4343 = vld [vmem:[%s4329 + $0x68] sm:$0xff]
    %v4344 = vld [vmem:[%s4329 + $0x70] sm:$0xff]
    %v4345 = vld [vmem:[%s4329 + $0x78] sm:$0xff]
    %v4346 = vld [vmem:[%s4329 + $0x80] sm:$0xff]
    %v4347 = vld [vmem:[%s4329 + $0x88] sm:$0xff]
    %v4348 = vld [vmem:[%s4329 + $0x90] sm:$0xff]
    %v4349 = vld [vmem:[%s4329 + $0x98] sm:$0xff]
    %v4350 = vld [vmem:[%s4329 + $0xa0] sm:$0xff]
    %v4351 = vld [vmem:[%s4329 + $0xa8] sm:$0xff]
    %v4352 = vld [vmem:[%s4329 + $0xb0] sm:$0xff]
    %v4353 = vld [vmem:[%s4329 + $0xb8] sm:$0xff]
    %v4354 = vld [vmem:[%s4329 + $0xc0] sm:$0xff]
    %v4355 = vld [vmem:[%s4329 + $0xc8] sm:$0xff]
    %v4356 = vld [vmem:[%s4329 + $0xd0] sm:$0xff]
    %v4357 = vld [vmem:[%s4329 + $0xd8] sm:$0xff]
    %v4358 = vld [vmem:[%s4329 + $0xe0] sm:$0xff]
    %v4359 = vld [vmem:[%s4329 + $0xe8] sm:$0xff]
    %v4360 = vld [vmem:[%s4329 + $0xf0] sm:$0xff]
    %v4361 = vld [vmem:[%s4329 + $0xf8] sm:$0xff]
    %v4394 = vunpack.c.l.b16 %v4330
    %v4395 = vunpack.c.h.b16 %v4330
    %v4396 = vunpack.c.l.b16 %v4331
    %v4397 = vunpack.c.h.b16 %v4331
    %v4398 = vunpack.c.l.b16 %v4332
    %v4399 = vunpack.c.h.b16 %v4332
    %v4400 = vunpack.c.l.b16 %v4333
    %v4401 = vunpack.c.h.b16 %v4333
    %v4402 = vunpack.c.l.b16 %v4334
    %v4403 = vunpack.c.h.b16 %v4334
    %v4404 = vunpack.c.l.b16 %v4335
    %v4405 = vunpack.c.h.b16 %v4335
    %v4406 = vunpack.c.l.b16 %v4336
    %v4407 = vunpack.c.h.b16 %v4336
    %v4408 = vunpack.c.l.b16 %v4337
    %v4409 = vunpack.c.h.b16 %v4337
    %v4410 = vunpack.c.l.b16 %v4338
    %v4411 = vunpack.c.h.b16 %v4338
    %v4412 = vunpack.c.l.b16 %v4339
    %v4413 = vunpack.c.h.b16 %v4339
    %v4414 = vunpack.c.l.b16 %v4340
    %v4415 = vunpack.c.h.b16 %v4340
    %v4416 = vunpack.c.l.b16 %v4341
    %v4417 = vunpack.c.h.b16 %v4341
    %v4418 = vunpack.c.l.b16 %v4342
    %v4419 = vunpack.c.h.b16 %v4342
    %v4420 = vunpack.c.l.b16 %v4343
    %v4421 = vunpack.c.h.b16 %v4343
    %v4422 = vunpack.c.l.b16 %v4344
    %v4423 = vunpack.c.h.b16 %v4344
    %v4424 = vunpack.c.l.b16 %v4345
    %v4425 = vunpack.c.h.b16 %v4345
    %v4426 = vunpack.c.l.b16 %v4346
    %v4427 = vunpack.c.h.b16 %v4346
    %v4428 = vunpack.c.l.b16 %v4347
    %v4429 = vunpack.c.h.b16 %v4347
    %v4430 = vunpack.c.l.b16 %v4348
    %v4431 = vunpack.c.h.b16 %v4348
    %v4432 = vunpack.c.l.b16 %v4349
    %v4433 = vunpack.c.h.b16 %v4349
    %v4434 = vunpack.c.l.b16 %v4350
    %v4435 = vunpack.c.h.b16 %v4350
    %v4436 = vunpack.c.l.b16 %v4351
    %v4437 = vunpack.c.h.b16 %v4351
    %v4438 = vunpack.c.l.b16 %v4352
    %v4439 = vunpack.c.h.b16 %v4352
    %v4440 = vunpack.c.l.b16 %v4353
    %v4441 = vunpack.c.h.b16 %v4353
    %v4442 = vunpack.c.l.b16 %v4354
    %v4443 = vunpack.c.h.b16 %v4354
    %v4444 = vunpack.c.l.b16 %v4355
    %v4445 = vunpack.c.h.b16 %v4355
    %v4446 = vunpack.c.l.b16 %v4356
    %v4447 = vunpack.c.h.b16 %v4356
    %v4448 = vunpack.c.l.b16 %v4357
    %v4449 = vunpack.c.h.b16 %v4357
    %v4450 = vunpack.c.l.b16 %v4358
    %v4451 = vunpack.c.h.b16 %v4358
    %v4452 = vunpack.c.l.b16 %v4359
    %v4453 = vunpack.c.h.b16 %v4359
    %v4454 = vunpack.c.l.b16 %v4360
    %v4455 = vunpack.c.h.b16 %v4360
    %v4456 = vunpack.c.l.b16 %v4361
    %v4457 = vunpack.c.h.b16 %v4361
    %v4458 = vpack.c.b16 %v4396, %v4394
    %v4459 = vpack.c.b16 %v4397, %v4395
    %v4460 = vpack.c.b16 %v4400, %v4398
    %v4461 = vpack.c.b16 %v4401, %v4399
    %v4462 = vpack.c.b16 %v4404, %v4402
    %v4463 = vpack.c.b16 %v4405, %v4403
    %v4464 = vpack.c.b16 %v4408, %v4406
    %v4465 = vpack.c.b16 %v4409, %v4407
    %v4466 = vpack.c.b16 %v4412, %v4410
    %v4467 = vpack.c.b16 %v4413, %v4411
    %v4468 = vpack.c.b16 %v4416, %v4414
    %v4469 = vpack.c.b16 %v4417, %v4415
    %v4470 = vpack.c.b16 %v4420, %v4418
    %v4471 = vpack.c.b16 %v4421, %v4419
    %v4472 = vpack.c.b16 %v4424, %v4422
    %v4473 = vpack.c.b16 %v4425, %v4423
    %v4474 = vpack.c.b16 %v4428, %v4426
    %v4475 = vpack.c.b16 %v4429, %v4427
    %v4476 = vpack.c.b16 %v4432, %v4430
    %v4477 = vpack.c.b16 %v4433, %v4431
    %v4478 = vpack.c.b16 %v4436, %v4434
    %v4479 = vpack.c.b16 %v4437, %v4435
    %v4480 = vpack.c.b16 %v4440, %v4438
    %v4481 = vpack.c.b16 %v4441, %v4439
    %v4482 = vpack.c.b16 %v4444, %v4442
    %v4483 = vpack.c.b16 %v4445, %v4443
    %v4484 = vpack.c.b16 %v4448, %v4446
    %v4485 = vpack.c.b16 %v4449, %v4447
    %v4486 = vpack.c.b16 %v4452, %v4450
    %v4487 = vpack.c.b16 %v4453, %v4451
    %v4488 = vpack.c.b16 %v4456, %v4454
    %v4489 = vpack.c.b16 %v4457, %v4455
    %4522 = vmatprep.subr.bf16.mxu0 %v4459
    %4523 = vmatpush1.bf16.msra.mxu0 %v4458
    %4524 = vmatprep.subr.bf16.mxu0 %v4461
    %4525 = vmatpush1.bf16.msra.mxu0 %v4460
    %4526 = vmatprep.subr.bf16.mxu0 %v4463
    %4527 = vmatpush1.bf16.msra.mxu0 %v4462
    %4528 = vmatprep.subr.bf16.mxu0 %v4465
    %4529 = vmatpush1.bf16.msra.mxu0 %v4464
    %4530 = vmatprep.subr.bf16.mxu0 %v4467
    %4531 = vmatpush1.bf16.msra.mxu0 %v4466
    %4532 = vmatprep.subr.bf16.mxu0 %v4469
    %4533 = vmatpush1.bf16.msra.mxu0 %v4468
    %4534 = vmatprep.subr.bf16.mxu0 %v4471
    %4535 = vmatpush1.bf16.msra.mxu0 %v4470
    %4536 = vmatprep.subr.bf16.mxu0 %v4473
    %4537 = vmatpush1.bf16.msra.mxu0 %v4472
    %4538 = vmatprep.subr.bf16.mxu0 %v4475
    %4539 = vmatpush1.bf16.msra.mxu0 %v4474
    %4540 = vmatprep.subr.bf16.mxu0 %v4477
    %4541 = vmatpush1.bf16.msra.mxu0 %v4476
    %4542 = vmatprep.subr.bf16.mxu0 %v4479
    %4543 = vmatpush1.bf16.msra.mxu0 %v4478
    %4544 = vmatprep.subr.bf16.mxu0 %v4481
    %4545 = vmatpush1.bf16.msra.mxu0 %v4480
    %4546 = vmatprep.subr.bf16.mxu0 %v4483
    %4547 = vmatpush1.bf16.msra.mxu0 %v4482
    %4548 = vmatprep.subr.bf16.mxu0 %v4485
    %4549 = vmatpush1.bf16.msra.mxu0 %v4484
    %4550 = vmatprep.subr.bf16.mxu0 %v4487
    %4551 = vmatpush1.bf16.msra.mxu0 %v4486
    %4552 = vmatprep.subr.bf16.mxu0 %v4489
    %4553 = vmatpush1.bf16.msra.mxu0 %v4488
    %4554 = vmatprep.mubr.bf16.mxu0 %v4192
    %4555 = vmatmul.mubr.bf16.gmra.mrb[0].mxu0 %v4180
    %v4556 = vpop.f32.mrb[0].mxu0
    %v4557 = vadd.f32 0.0, %v4556
    %v4558 = vpop.f32.mrb[0].mxu0
    %v4559 = vadd.f32 0.0, %v4558
    %v4560 = vpop.f32.mrb[0].mxu0
    %v4561 = vadd.f32 0.0, %v4560
    %v4562 = vpop.f32.mrb[0].mxu0
    %v4563 = vadd.f32 0.0, %v4562
    %4564 = vmatprep.mubr.bf16.mxu0 %v4208
    %4565 = vmatmul.mubr.bf16.gmra.mrb[0].mxu0 %v4200
    %v4566 = vpop.f32.mrb[0].mxu0
    %v4567 = vadd.f32 0.0, %v4566
    %v4568 = vpop.f32.mrb[0].mxu0
    %v4569 = vadd.f32 0.0, %v4568
    %v4570 = vpop.f32.mrb[0].mxu0
    %v4571 = vadd.f32 0.0, %v4570
    %v4572 = vpop.f32.mrb[0].mxu0
    %v4573 = vadd.f32 0.0, %v4572
    %4574 = vmatprep.mubr.bf16.mxu0 %v4224
    %4575 = vmatmul.mubr.bf16.gmra.mrb[0].mxu0 %v4216
    %v4576 = vpop.f32.mrb[0].mxu0
    %v4577 = vadd.f32 0.0, %v4576
    %v4578 = vpop.f32.mrb[0].mxu0
    %v4579 = vadd.f32 0.0, %v4578
    %v4580 = vpop.f32.mrb[0].mxu0
    %v4581 = vadd.f32 0.0, %v4580
    %v4582 = vpop.f32.mrb[0].mxu0
    %v4583 = vadd.f32 0.0, %v4582
    %4584 = vmatprep.mubr.bf16.mxu0 %v4240
    %4585 = vmatmul.mubr.bf16.gmra.mrb[0].mxu0 %v4232
    %v4586 = vpop.f32.mrb[0].mxu0
    %v4587 = vadd.f32 0.0, %v4586
    %v4588 = vpop.f32.mrb[0].mxu0
    %v4589 = vadd.f32 0.0, %v4588
    %v4590 = vpop.f32.mrb[0].mxu0
    %v4591 = vadd.f32 0.0, %v4590
    %v4592 = vpop.f32.mrb[0].mxu0
    %v4593 = vadd.f32 0.0, %v4592
    %4594 = vmatprep.mubr.bf16.mxu0 %v4264
    %4595 = vmatmul.mubr.bf16.gmra.mrb[0].mxu0 %v4252
    %v4596 = vpop.f32.mrb[0].mxu0
    %v4597 = vadd.f32 0.0, %v4596
    %v4598 = vpop.f32.mrb[0].mxu0
    %v4599 = vadd.f32 0.0, %v4598
    %v4600 = vpop.f32.mrb[0].mxu0
    %v4601 = vadd.f32 0.0, %v4600
    %v4602 = vpop.f32.mrb[0].mxu0
    %v4603 = vadd.f32 0.0, %v4602
    %4604 = vmatprep.mubr.bf16.mxu0 %v4280
    %4605 = vmatmul.mubr.bf16.gmra.mrb[0].mxu0 %v4272
    %v4606 = vpop.f32.mrb[0].mxu0
    %v4607 = vadd.f32 0.0, %v4606
    %v4608 = vpop.f32.mrb[0].mxu0
    %v4609 = vadd.f32 0.0, %v4608
    %v4610 = vpop.f32.mrb[0].mxu0
    %v4611 = vadd.f32 0.0, %v4610
    %v4612 = vpop.f32.mrb[0].mxu0
    %v4613 = vadd.f32 0.0, %v4612
    %4614 = vmatprep.mubr.bf16.mxu0 %v4296
    %4615 = vmatmul.mubr.bf16.gmra.mrb[0].mxu0 %v4288
    %v4616 = vpop.f32.mrb[0].mxu0
    %v4617 = vadd.f32 0.0, %v4616
    %v4618 = vpop.f32.mrb[0].mxu0
    %v4619 = vadd.f32 0.0, %v4618
    %v4620 = vpop.f32.mrb[0].mxu0
    %v4621 = vadd.f32 0.0, %v4620
    %v4622 = vpop.f32.mrb[0].mxu0
    %v4623 = vadd.f32 0.0, %v4622
    %4624 = vmatprep.mubr.bf16.mxu0 %v4312
    %4625 = vmatmul.mubr.bf16.gmra.mrb[0].mxu0 %v4304
    %v4626 = vpop.f32.mrb[0].mxu0
    %v4627 = vadd.f32 0.0, %v4626
    %v4628 = vpop.f32.mrb[0].mxu0
    %v4629 = vadd.f32 0.0, %v4628
    %v4630 = vpop.f32.mrb[0].mxu0
    %v4631 = vadd.f32 0.0, %v4630
    %v4632 = vpop.f32.mrb[0].mxu0
    %v4633 = vadd.f32 0.0, %v4632
    %4634 = vdwg.mxu0
    %v4635 = vadd.f32 %v4061, %v4557
    %v4636 = vadd.f32 %v4062, %v4559
    %v4637 = vadd.f32 %v4063, %v4561
    %v4638 = vadd.f32 %v4064, %v4563
    %v4639 = vadd.f32 %v4065, %v4567
    %v4640 = vadd.f32 %v4066, %v4569
    %v4641 = vadd.f32 %v4067, %v4571
    %v4642 = vadd.f32 %v4068, %v4573
    %v4643 = vadd.f32 %v4069, %v4577
    %v4644 = vadd.f32 %v4070, %v4579
    %v4645 = vadd.f32 %v4071, %v4581
    %v4646 = vadd.f32 %v4072, %v4583
    %v4647 = vadd.f32 %v4073, %v4587
    %v4648 = vadd.f32 %v4074, %v4589
    %v4649 = vadd.f32 %v4075, %v4591
    %v4650 = vadd.f32 %v4076, %v4593
    %v4651 = vadd.f32 %v4077, %v4597
    %v4652 = vadd.f32 %v4078, %v4599
    %v4653 = vadd.f32 %v4079, %v4601
    %v4654 = vadd.f32 %v4080, %v4603
    %v4655 = vadd.f32 %v4081, %v4607
    %v4656 = vadd.f32 %v4082, %v4609
    %v4657 = vadd.f32 %v4083, %v4611
    %v4658 = vadd.f32 %v4084, %v4613
    %v4659 = vadd.f32 %v4085, %v4617
    %v4660 = vadd.f32 %v4086, %v4619
    %v4661 = vadd.f32 %v4087, %v4621
    %v4662 = vadd.f32 %v4088, %v4623
    %v4663 = vadd.f32 %v4089, %v4627
    %v4664 = vadd.f32 %v4090, %v4629
    %v4665 = vadd.f32 %v4091, %v4631
    %v4666 = vadd.f32 %v4092, %v4633
    %v4667 = vld [vmem:[#allocation8] sm:$0x3]
    %v4669 = vlaneseq
    %v4670 = vshrl.u32 %v4669, 7
    %v4671 = vsub.s32 0, %v4670
    %v4672 = vrot.slane %v4667, %v4671
    %v4673 = vlaneseq
    %v4674 = vshrl.u32 %v4673, 7
    %v4675 = vsub.s32 1, %v4674
    %v4676 = vrot.slane %v4667, %v4675
    %v4679 = vadd.f32 %v4635, %v4672
    %v4680 = vadd.f32 %v4636, %v4676
    %v4681 = vadd.f32 %v4637, %v4672
    %v4682 = vadd.f32 %v4638, %v4676
    %v4683 = vadd.f32 %v4639, %v4672
    %v4684 = vadd.f32 %v4640, %v4676
    %v4685 = vadd.f32 %v4641, %v4672
    %v4686 = vadd.f32 %v4642, %v4676
    %v4687 = vadd.f32 %v4643, %v4672
    %v4688 = vadd.f32 %v4644, %v4676
    %v4689 = vadd.f32 %v4645, %v4672
    %v4690 = vadd.f32 %v4646, %v4676
    %v4691 = vadd.f32 %v4647, %v4672
    %v4692 = vadd.f32 %v4648, %v4676
    %v4693 = vadd.f32 %v4649, %v4672
    %v4694 = vadd.f32 %v4650, %v4676
    %v4695 = vadd.f32 %v4651, %v4672
    %v4696 = vadd.f32 %v4652, %v4676
    %v4697 = vadd.f32 %v4653, %v4672
    %v4698 = vadd.f32 %v4654, %v4676
    %v4699 = vadd.f32 %v4655, %v4672
    %v4700 = vadd.f32 %v4656, %v4676
    %v4701 = vadd.f32 %v4657, %v4672
    %v4702 = vadd.f32 %v4658, %v4676
    %v4703 = vadd.f32 %v4659, %v4672
    %v4704 = vadd.f32 %v4660, %v4676
    %v4705 = vadd.f32 %v4661, %v4672
    %v4706 = vadd.f32 %v4662, %v4676
    %v4707 = vadd.f32 %v4663, %v4672
    %v4708 = vadd.f32 %v4664, %v4676
    %v4709 = vadd.f32 %v4665, %v4672
    %v4710 = vadd.f32 %v4666, %v4676
    %vm4711 = vcmp.gt.f32.partialorder %v4679, 0.0
    %vm4712 = vcmp.gt.f32.partialorder %v4680, 0.0
    %vm4713 = vcmp.gt.f32.partialorder %v4681, 0.0
    %vm4714 = vcmp.gt.f32.partialorder %v4682, 0.0
    %vm4715 = vcmp.gt.f32.partialorder %v4683, 0.0
    %vm4716 = vcmp.gt.f32.partialorder %v4684, 0.0
    %vm4717 = vcmp.gt.f32.partialorder %v4685, 0.0
    %vm4718 = vcmp.gt.f32.partialorder %v4686, 0.0
    %vm4719 = vcmp.gt.f32.partialorder %v4687, 0.0
    %vm4720 = vcmp.gt.f32.partialorder %v4688, 0.0
    %vm4721 = vcmp.gt.f32.partialorder %v4689, 0.0
    %vm4722 = vcmp.gt.f32.partialorder %v4690, 0.0
    %vm4723 = vcmp.gt.f32.partialorder %v4691, 0.0
    %vm4724 = vcmp.gt.f32.partialorder %v4692, 0.0
    %vm4725 = vcmp.gt.f32.partialorder %v4693, 0.0
    %vm4726 = vcmp.gt.f32.partialorder %v4694, 0.0
    %vm4727 = vcmp.gt.f32.partialorder %v4695, 0.0
    %vm4728 = vcmp.gt.f32.partialorder %v4696, 0.0
    %vm4729 = vcmp.gt.f32.partialorder %v4697, 0.0
    %vm4730 = vcmp.gt.f32.partialorder %v4698, 0.0
    %vm4731 = vcmp.gt.f32.partialorder %v4699, 0.0
    %vm4732 = vcmp.gt.f32.partialorder %v4700, 0.0
    %vm4733 = vcmp.gt.f32.partialorder %v4701, 0.0
    %vm4734 = vcmp.gt.f32.partialorder %v4702, 0.0
    %vm4735 = vcmp.gt.f32.partialorder %v4703, 0.0
    %vm4736 = vcmp.gt.f32.partialorder %v4704, 0.0
    %vm4737 = vcmp.gt.f32.partialorder %v4705, 0.0
    %vm4738 = vcmp.gt.f32.partialorder %v4706, 0.0
    %vm4739 = vcmp.gt.f32.partialorder %v4707, 0.0
    %vm4740 = vcmp.gt.f32.partialorder %v4708, 0.0
    %vm4741 = vcmp.gt.f32.partialorder %v4709, 0.0
    %vm4742 = vcmp.gt.f32.partialorder %v4710, 0.0
    %v4743 = vmul.f32 %v4679, 0.01
    %v4744 = vmul.f32 %v4680, 0.01
    %v4745 = vmul.f32 %v4681, 0.01
    %v4746 = vmul.f32 %v4682, 0.01
    %v4747 = vmul.f32 %v4683, 0.01
    %v4748 = vmul.f32 %v4684, 0.01
    %v4749 = vmul.f32 %v4685, 0.01
    %v4750 = vmul.f32 %v4686, 0.01
    %v4751 = vmul.f32 %v4687, 0.01
    %v4752 = vmul.f32 %v4688, 0.01
    %v4753 = vmul.f32 %v4689, 0.01
    %v4754 = vmul.f32 %v4690, 0.01
    %v4755 = vmul.f32 %v4691, 0.01
    %v4756 = vmul.f32 %v4692, 0.01
    %v4757 = vmul.f32 %v4693, 0.01
    %v4758 = vmul.f32 %v4694, 0.01
    %v4759 = vmul.f32 %v4695, 0.01
    %v4760 = vmul.f32 %v4696, 0.01
    %v4761 = vmul.f32 %v4697, 0.01
    %v4762 = vmul.f32 %v4698, 0.01
    %v4763 = vmul.f32 %v4699, 0.01
    %v4764 = vmul.f32 %v4700, 0.01
    %v4765 = vmul.f32 %v4701, 0.01
    %v4766 = vmul.f32 %v4702, 0.01
    %v4767 = vmul.f32 %v4703, 0.01
    %v4768 = vmul.f32 %v4704, 0.01
    %v4769 = vmul.f32 %v4705, 0.01
    %v4770 = vmul.f32 %v4706, 0.01
    %v4771 = vmul.f32 %v4707, 0.01
    %v4772 = vmul.f32 %v4708, 0.01
    %v4773 = vmul.f32 %v4709, 0.01
    %v4774 = vmul.f32 %v4710, 0.01
    %v4775 = vsel %vm4711, %v4679, %v4743
    %v4776 = vsel %vm4712, %v4680, %v4744
    %v4777 = vsel %vm4713, %v4681, %v4745
    %v4778 = vsel %vm4714, %v4682, %v4746
    %v4779 = vsel %vm4715, %v4683, %v4747
    %v4780 = vsel %vm4716, %v4684, %v4748
    %v4781 = vsel %vm4717, %v4685, %v4749
    %v4782 = vsel %vm4718, %v4686, %v4750
    %v4783 = vsel %vm4719, %v4687, %v4751
    %v4784 = vsel %vm4720, %v4688, %v4752
    %v4785 = vsel %vm4721, %v4689, %v4753
    %v4786 = vsel %vm4722, %v4690, %v4754
    %v4787 = vsel %vm4723, %v4691, %v4755
    %v4788 = vsel %vm4724, %v4692, %v4756
    %v4789 = vsel %vm4725, %v4693, %v4757
    %v4790 = vsel %vm4726, %v4694, %v4758
    %v4791 = vsel %vm4727, %v4695, %v4759
    %v4792 = vsel %vm4728, %v4696, %v4760
    %v4793 = vsel %vm4729, %v4697, %v4761
    %v4794 = vsel %vm4730, %v4698, %v4762
    %v4795 = vsel %vm4731, %v4699, %v4763
    %v4796 = vsel %vm4732, %v4700, %v4764
    %v4797 = vsel %vm4733, %v4701, %v4765
    %v4798 = vsel %vm4734, %v4702, %v4766
    %v4799 = vsel %vm4735, %v4703, %v4767
    %v4800 = vsel %vm4736, %v4704, %v4768
    %v4801 = vsel %vm4737, %v4705, %v4769
    %v4802 = vsel %vm4738, %v4706, %v4770
    %v4803 = vsel %vm4739, %v4707, %v4771
    %v4804 = vsel %vm4740, %v4708, %v4772
    %v4805 = vsel %vm4741, %v4709, %v4773
    %v4806 = vsel %vm4742, %v4710, %v4774
    %4807 = vst [vmem:[#allocation2 + $0x20] sm:$0xff] %v4775
    %4808 = vst [vmem:[#allocation2 + $0x28] sm:$0xff] %v4776
    %4809 = vst [vmem:[#allocation2 + $0x30] sm:$0xff] %v4777
    %4810 = vst [vmem:[#allocation2 + $0x38] sm:$0xff] %v4778
    %4811 = vst [vmem:[#allocation2 + $0x40] sm:$0xff] %v4779
    %4812 = vst [vmem:[#allocation2 + $0x48] sm:$0xff] %v4780
    %4813 = vst [vmem:[#allocation2 + $0x50] sm:$0xff] %v4781
    %4814 = vst [vmem:[#allocation2 + $0x58] sm:$0xff] %v4782
    %4815 = vst [vmem:[#allocation2 + $0x60] sm:$0xff] %v4783
    %4816 = vst [vmem:[#allocation2 + $0x68] sm:$0xff] %v4784
    %4817 = vst [vmem:[#allocation2 + $0x70] sm:$0xff] %v4785
    %4818 = vst [vmem:[#allocation2 + $0x78] sm:$0xff] %v4786
    %4819 = vst [vmem:[#allocation2 + $0x80] sm:$0xff] %v4787
    %4820 = vst [vmem:[#allocation2 + $0x88] sm:$0xff] %v4788
    %4821 = vst [vmem:[#allocation2 + $0x90] sm:$0xff] %v4789
    %4822 = vst [vmem:[#allocation2 + $0x98] sm:$0xff] %v4790
    %4823 = vst [vmem:[#allocation2 + $0xe0] sm:$0xff] %v4791
    %4824 = vst [vmem:[#allocation2 + $0xe8] sm:$0xff] %v4792
    %4825 = vst [vmem:[#allocation2 + $0xf0] sm:$0xff] %v4793
    %4826 = vst [vmem:[#allocation2 + $0xf8] sm:$0xff] %v4794
    %4827 = vst [vmem:[#allocation2 + $0x100] sm:$0xff] %v4795
    %4828 = vst [vmem:[#allocation2 + $0x108] sm:$0xff] %v4796
    %4829 = vst [vmem:[#allocation2 + $0x110] sm:$0xff] %v4797
    %4830 = vst [vmem:[#allocation2 + $0x118] sm:$0xff] %v4798
    %4831 = vst [vmem:[#allocation2 + $0x120] sm:$0xff] %v4799
    %4832 = vst [vmem:[#allocation2 + $0x128] sm:$0xff] %v4800
    %4833 = vst [vmem:[#allocation2 + $0x130] sm:$0xff] %v4801
    %4834 = vst [vmem:[#allocation2 + $0x138] sm:$0xff] %v4802
    %4835 = vst [vmem:[#allocation2 + $0x140] sm:$0xff] %v4803
    %4836 = vst [vmem:[#allocation2 + $0x148] sm:$0xff] %v4804
    %4837 = vst [vmem:[#allocation2 + $0x150] sm:$0xff] %v4805
    %4838 = vst [vmem:[#allocation2 + $0x158] sm:$0xff] %v4806
    %v4839 = vld [vmem:[#allocation2] sm:$0x80]
    %v4840 = vld [vmem:[#allocation2 + $0x8] sm:$0x80]
    %v4841 = vld [vmem:[#allocation2 + $0x10] sm:$0xff]
    %v4842 = vld [vmem:[#allocation2 + $0x18] sm:$0xff]
    %v4843 = vld [vmem:[#allocation2 + $0x20] sm:$0xff]
    %v4844 = vld [vmem:[#allocation2 + $0x28] sm:$0xff]
    %v4845 = vld [vmem:[#allocation2 + $0x30] sm:$0xff]
    %v4846 = vld [vmem:[#allocation2 + $0x38] sm:$0xff]
    %v4847 = vld [vmem:[#allocation2 + $0x40] sm:$0xff]
    %v4848 = vld [vmem:[#allocation2 + $0x48] sm:$0xff]
    %v4849 = vld [vmem:[#allocation2 + $0x50] sm:$0xff]
    %v4850 = vld [vmem:[#allocation2 + $0x58] sm:$0xff]
    %v4851 = vld [vmem:[#allocation2 + $0x60] sm:$0xff]
    %v4852 = vld [vmem:[#allocation2 + $0x68] sm:$0xff]
    %v4853 = vld [vmem:[#allocation2 + $0x70] sm:$0xff]
    %v4854 = vld [vmem:[#allocation2 + $0x78] sm:$0xff]
    %v4855 = vld [vmem:[#allocation2 + $0x80] sm:$0x7f]
    %v4856 = vld [vmem:[#allocation2 + $0x88] sm:$0x7f]
    %v4857 = vld [vmem:[#allocation2 + $0xc0] sm:$0x80]
    %v4858 = vld [vmem:[#allocation2 + $0xc8] sm:$0x80]
    %v4859 = vld [vmem:[#allocation2 + $0xd0] sm:$0xff]
    %v4860 = vld [vmem:[#allocation2 + $0xd8] sm:$0xff]
    %v4861 = vld [vmem:[#allocation2 + $0xe0] sm:$0xff]
    %v4862 = vld [vmem:[#allocation2 + $0xe8] sm:$0xff]
    %v4863 = vld [vmem:[#allocation2 + $0xf0] sm:$0xff]
    %v4864 = vld [vmem:[#allocation2 + $0xf8] sm:$0xff]
    %v4865 = vld [vmem:[#allocation2 + $0x100] sm:$0xff]
    %v4866 = vld [vmem:[#allocation2 + $0x108] sm:$0xff]
    %v4867 = vld [vmem:[#allocation2 + $0x110] sm:$0xff]
    %v4868 = vld [vmem:[#allocation2 + $0x118] sm:$0xff]
    %v4869 = vld [vmem:[#allocation2 + $0x120] sm:$0xff]
    %v4870 = vld [vmem:[#allocation2 + $0x128] sm:$0xff]
    %v4871 = vld [vmem:[#allocation2 + $0x130] sm:$0xff]
    %v4872 = vld [vmem:[#allocation2 + $0x138] sm:$0xff]
    %v4873 = vld [vmem:[#allocation2 + $0x140] sm:$0x7f]
    %v4874 = vld [vmem:[#allocation2 + $0x148] sm:$0x7f]
    %v4875 = vpack.c.bf16 %v4841, %v4839
    %v4876 = vpack.c.bf16 %v4842, %v4840
    %v4877 = vpack.c.bf16 %v4845, %v4843
    %v4878 = vpack.c.bf16 %v4846, %v4844
    %v4879 = vpack.c.bf16 %v4849, %v4847
    %v4880 = vpack.c.bf16 %v4850, %v4848
    %v4881 = vpack.c.bf16 %v4853, %v4851
    %v4882 = vpack.c.bf16 %v4854, %v4852
    %v4883 = vpack.c.bf16 %v4855, %v4855
    %v4884 = vpack.c.bf16 %v4856, %v4856
    %v4885 = vpack.c.bf16 %v4859, %v4857
    %v4886 = vpack.c.bf16 %v4860, %v4858
    %v4887 = vpack.c.bf16 %v4863, %v4861
    %v4888 = vpack.c.bf16 %v4864, %v4862
    %v4889 = vpack.c.bf16 %v4867, %v4865
    %v4890 = vpack.c.bf16 %v4868, %v4866
    %v4891 = vpack.c.bf16 %v4871, %v4869
    %v4892 = vpack.c.bf16 %v4872, %v4870
    %v4893 = vpack.c.bf16 %v4873, %v4873
    %v4894 = vpack.c.bf16 %v4874, %v4874
    %v4895 = vsel %vm234, %v4875, 0
    %v4896 = vsel %vm234, %v4876, 0
    %v4897 = vsel %vm235, %v4877, 0
    %v4898 = vsel %vm235, %v4878, 0
    %v4899 = vsel %vm235, %v4879, 0
    %v4900 = vsel %vm235, %v4880, 0
    %v4901 = vsel %vm235, %v4881, 0
    %v4902 = vsel %vm235, %v4882, 0
    %v4903 = vsel %vm234, %v4883, 0
    %v4904 = vsel %vm234, %v4884, 0
    %v4905 = vsel %vm234, %v4885, 0
    %v4906 = vsel %vm234, %v4886, 0
    %v4907 = vsel %vm235, %v4887, 0
    %v4908 = vsel %vm235, %v4888, 0
    %v4909 = vsel %vm235, %v4889, 0
    %v4910 = vsel %vm235, %v4890, 0
    %v4911 = vsel %vm235, %v4891, 0
    %v4912 = vsel %vm235, %v4892, 0
    %v4913 = vsel %vm234, %v4893, 0
    %v4914 = vsel %vm234, %v4894, 0
    %v4916 = vshrl.u32 %v4895, 16
    %v4918 = vrot.slane %v4916, 3
    %v4919 = vshll.u32 %v4895, 16
    %v4921 = vrot.slane %v4919, 4
    %v4922 = vor.u32 %v4918, %v4921
    %v4924 = vshrl.u32 %v4897, 16
    %v4926 = vrot.slane %v4924, 3
    %v4927 = vshll.u32 %v4897, 16
    %v4929 = vrot.slane %v4927, 4
    %v4930 = vor.u32 %v4926, %v4929
    %v4931 = vsel %vm256, %v4922, %v4930
    %v4933 = vshrl.u32 %v4896, 16
    %v4935 = vrot.slane %v4933, 3
    %v4936 = vshll.u32 %v4896, 16
    %v4938 = vrot.slane %v4936, 4
    %v4939 = vor.u32 %v4935, %v4938
    %v4941 = vshrl.u32 %v4898, 16
    %v4943 = vrot.slane %v4941, 3
    %v4944 = vshll.u32 %v4898, 16
    %v4946 = vrot.slane %v4944, 4
    %v4947 = vor.u32 %v4943, %v4946
    %v4948 = vsel %vm256, %v4939, %v4947
    %v4950 = vshrl.u32 %v4899, 16
    %v4952 = vrot.slane %v4950, 3
    %v4953 = vshll.u32 %v4899, 16
    %v4955 = vrot.slane %v4953, 4
    %v4956 = vor.u32 %v4952, %v4955
    %v4957 = vsel %vm256, %v4930, %v4956
    %v4959 = vshrl.u32 %v4900, 16
    %v4961 = vrot.slane %v4959, 3
    %v4962 = vshll.u32 %v4900, 16
    %v4964 = vrot.slane %v4962, 4
    %v4965 = vor.u32 %v4961, %v4964
    %v4966 = vsel %vm256, %v4947, %v4965
    %v4968 = vshrl.u32 %v4901, 16
    %v4970 = vrot.slane %v4968, 3
    %v4971 = vshll.u32 %v4901, 16
    %v4973 = vrot.slane %v4971, 4
    %v4974 = vor.u32 %v4970, %v4973
    %v4975 = vsel %vm256, %v4956, %v4974
    %v4977 = vshrl.u32 %v4902, 16
    %v4979 = vrot.slane %v4977, 3
    %v4980 = vshll.u32 %v4902, 16
    %v4982 = vrot.slane %v4980, 4
    %v4983 = vor.u32 %v4979, %v4982
    %v4984 = vsel %vm256, %v4965, %v4983
    %v4986 = vshrl.u32 %v4903, 16
    %v4988 = vrot.slane %v4986, 3
    %v4989 = vshll.u32 %v4903, 16
    %v4991 = vrot.slane %v4989, 4
    %v4992 = vor.u32 %v4988, %v4991
    %v4993 = vsel %vm256, %v4974, %v4992
    %v4995 = vshrl.u32 %v4904, 16
    %v4997 = vrot.slane %v4995, 3
    %v4998 = vshll.u32 %v4904, 16
    %v5000 = vrot.slane %v4998, 4
    %v5001 = vor.u32 %v4997, %v5000
    %v5002 = vsel %vm256, %v4983, %v5001
    %v5004 = vshrl.u32 %v4905, 16
    %v5006 = vrot.slane %v5004, 3
    %v5007 = vshll.u32 %v4905, 16
    %v5009 = vrot.slane %v5007, 4
    %v5010 = vor.u32 %v5006, %v5009
    %v5012 = vshrl.u32 %v4907, 16
    %v5014 = vrot.slane %v5012, 3
    %v5015 = vshll.u32 %v4907, 16
    %v5017 = vrot.slane %v5015, 4
    %v5018 = vor.u32 %v5014, %v5017
    %v5019 = vsel %vm256, %v5010, %v5018
    %v5021 = vshrl.u32 %v4906, 16
    %v5023 = vrot.slane %v5021, 3
    %v5024 = vshll.u32 %v4906, 16
    %v5026 = vrot.slane %v5024, 4
    %v5027 = vor.u32 %v5023, %v5026
    %v5029 = vshrl.u32 %v4908, 16
    %v5031 = vrot.slane %v5029, 3
    %v5032 = vshll.u32 %v4908, 16
    %v5034 = vrot.slane %v5032, 4
    %v5035 = vor.u32 %v5031, %v5034
    %v5036 = vsel %vm256, %v5027, %v5035
    %v5038 = vshrl.u32 %v4909, 16
    %v5040 = vrot.slane %v5038, 3
    %v5041 = vshll.u32 %v4909, 16
    %v5043 = vrot.slane %v5041, 4
    %v5044 = vor.u32 %v5040, %v5043
    %v5045 = vsel %vm256, %v5018, %v5044
    %v5047 = vshrl.u32 %v4910, 16
    %v5049 = vrot.slane %v5047, 3
    %v5050 = vshll.u32 %v4910, 16
    %v5052 = vrot.slane %v5050, 4
    %v5053 = vor.u32 %v5049, %v5052
    %v5054 = vsel %vm256, %v5035, %v5053
    %v5056 = vshrl.u32 %v4911, 16
    %v5058 = vrot.slane %v5056, 3
    %v5059 = vshll.u32 %v4911, 16
    %v5061 = vrot.slane %v5059, 4
    %v5062 = vor.u32 %v5058, %v5061
    %v5063 = vsel %vm256, %v5044, %v5062
    %v5065 = vshrl.u32 %v4912, 16
    %v5067 = vrot.slane %v5065, 3
    %v5068 = vshll.u32 %v4912, 16
    %v5070 = vrot.slane %v5068, 4
    %v5071 = vor.u32 %v5067, %v5070
    %v5072 = vsel %vm256, %v5053, %v5071
    %v5074 = vshrl.u32 %v4913, 16
    %v5076 = vrot.slane %v5074, 3
    %v5077 = vshll.u32 %v4913, 16
    %v5079 = vrot.slane %v5077, 4
    %v5080 = vor.u32 %v5076, %v5079
    %v5081 = vsel %vm256, %v5062, %v5080
    %v5083 = vshrl.u32 %v4914, 16
    %v5085 = vrot.slane %v5083, 3
    %v5086 = vshll.u32 %v4914, 16
    %v5088 = vrot.slane %v5086, 4
    %v5089 = vor.u32 %v5085, %v5088
    %v5090 = vsel %vm256, %v5071, %v5089
    %v5107 = vld [vmem:[#allocation9] sm:$0xff]
    %v5108 = vld [vmem:[#allocation9 + $0x8] sm:$0xff]
    %v5109 = vld [vmem:[#allocation9 + $0x10] sm:$0xff]
    %v5110 = vld [vmem:[#allocation9 + $0x18] sm:$0xff]
    %v5111 = vld [vmem:[#allocation9 + $0x20] sm:$0xff]
    %v5112 = vld [vmem:[#allocation9 + $0x28] sm:$0xff]
    %v5113 = vld [vmem:[#allocation9 + $0x30] sm:$0xff]
    %v5114 = vld [vmem:[#allocation9 + $0x38] sm:$0xff]
    %v5115 = vld [vmem:[#allocation9 + $0x40] sm:$0xff]
    %v5116 = vld [vmem:[#allocation9 + $0x48] sm:$0xff]
    %v5117 = vld [vmem:[#allocation9 + $0x50] sm:$0xff]
    %v5118 = vld [vmem:[#allocation9 + $0x58] sm:$0xff]
    %v5119 = vld [vmem:[#allocation9 + $0x60] sm:$0xff]
    %v5120 = vld [vmem:[#allocation9 + $0x68] sm:$0xff]
    %v5121 = vld [vmem:[#allocation9 + $0x70] sm:$0xff]
    %v5122 = vld [vmem:[#allocation9 + $0x78] sm:$0xff]
    %v5123 = vld [vmem:[#allocation9 + $0x80] sm:$0xff]
    %v5124 = vld [vmem:[#allocation9 + $0x88] sm:$0xff]
    %v5125 = vld [vmem:[#allocation9 + $0x90] sm:$0xff]
    %v5126 = vld [vmem:[#allocation9 + $0x98] sm:$0xff]
    %v5127 = vld [vmem:[#allocation9 + $0xa0] sm:$0xff]
    %v5128 = vld [vmem:[#allocation9 + $0xa8] sm:$0xff]
    %v5129 = vld [vmem:[#allocation9 + $0xb0] sm:$0xff]
    %v5130 = vld [vmem:[#allocation9 + $0xb8] sm:$0xff]
    %v5131 = vld [vmem:[#allocation9 + $0xc0] sm:$0xff]
    %v5132 = vld [vmem:[#allocation9 + $0xc8] sm:$0xff]
    %v5133 = vld [vmem:[#allocation9 + $0xd0] sm:$0xff]
    %v5134 = vld [vmem:[#allocation9 + $0xd8] sm:$0xff]
    %v5135 = vld [vmem:[#allocation9 + $0xe0] sm:$0xff]
    %v5136 = vld [vmem:[#allocation9 + $0xe8] sm:$0xff]
    %v5137 = vld [vmem:[#allocation9 + $0xf0] sm:$0xff]
    %v5138 = vld [vmem:[#allocation9 + $0xf8] sm:$0xff]
    %v5139 = vld [vmem:[#allocation2 + $0x80] sm:$0xff]
    %v5140 = vld [vmem:[#allocation2 + $0x88] sm:$0xff]
    %v5141 = vld [vmem:[#allocation2 + $0x140] sm:$0xff]
    %v5142 = vld [vmem:[#allocation2 + $0x148] sm:$0xff]
    %v5143 = vpack.c.bf16 %v4843, %v4841
    %v5144 = vpack.c.bf16 %v4844, %v4842
    %v5145 = vpack.c.bf16 %v4847, %v4845
    %v5146 = vpack.c.bf16 %v4848, %v4846
    %v5147 = vpack.c.bf16 %v4851, %v4849
    %v5148 = vpack.c.bf16 %v4852, %v4850
    %v5149 = vpack.c.bf16 %v5139, %v4853
    %v5150 = vpack.c.bf16 %v5140, %v4854
    %v5151 = vpack.c.bf16 %v4861, %v4859
    %v5152 = vpack.c.bf16 %v4862, %v4860
    %v5153 = vpack.c.bf16 %v4865, %v4863
    %v5154 = vpack.c.bf16 %v4866, %v4864
    %v5155 = vpack.c.bf16 %v4869, %v4867
    %v5156 = vpack.c.bf16 %v4870, %v4868
    %v5157 = vpack.c.bf16 %v5141, %v4871
    %v5158 = vpack.c.bf16 %v5142, %v4872
    %s5159 = scalar_lea.vmem [#allocation9], 256
    %v5160 = vld [vmem:[%s5159] sm:$0xff]
    %v5161 = vld [vmem:[%s5159 + $0x8] sm:$0xff]
    %v5162 = vld [vmem:[%s5159 + $0x10] sm:$0xff]
    %v5163 = vld [vmem:[%s5159 + $0x18] sm:$0xff]
    %v5164 = vld [vmem:[%s5159 + $0x20] sm:$0xff]
    %v5165 = vld [vmem:[%s5159 + $0x28] sm:$0xff]
    %v5166 = vld [vmem:[%s5159 + $0x30] sm:$0xff]
    %v5167 = vld [vmem:[%s5159 + $0x38] sm:$0xff]
    %v5168 = vld [vmem:[%s5159 + $0x40] sm:$0xff]
    %v5169 = vld [vmem:[%s5159 + $0x48] sm:$0xff]
    %v5170 = vld [vmem:[%s5159 + $0x50] sm:$0xff]
    %v5171 = vld [vmem:[%s5159 + $0x58] sm:$0xff]
    %v5172 = vld [vmem:[%s5159 + $0x60] sm:$0xff]
    %v5173 = vld [vmem:[%s5159 + $0x68] sm:$0xff]
    %v5174 = vld [vmem:[%s5159 + $0x70] sm:$0xff]
    %v5175 = vld [vmem:[%s5159 + $0x78] sm:$0xff]
    %v5176 = vld [vmem:[%s5159 + $0x80] sm:$0xff]
    %v5177 = vld [vmem:[%s5159 + $0x88] sm:$0xff]
    %v5178 = vld [vmem:[%s5159 + $0x90] sm:$0xff]
    %v5179 = vld [vmem:[%s5159 + $0x98] sm:$0xff]
    %v5180 = vld [vmem:[%s5159 + $0xa0] sm:$0xff]
    %v5181 = vld [vmem:[%s5159 + $0xa8] sm:$0xff]
    %v5182 = vld [vmem:[%s5159 + $0xb0] sm:$0xff]
    %v5183 = vld [vmem:[%s5159 + $0xb8] sm:$0xff]
    %v5184 = vld [vmem:[%s5159 + $0xc0] sm:$0xff]
    %v5185 = vld [vmem:[%s5159 + $0xc8] sm:$0xff]
    %v5186 = vld [vmem:[%s5159 + $0xd0] sm:$0xff]
    %v5187 = vld [vmem:[%s5159 + $0xd8] sm:$0xff]
    %v5188 = vld [vmem:[%s5159 + $0xe0] sm:$0xff]
    %v5189 = vld [vmem:[%s5159 + $0xe8] sm:$0xff]
    %v5190 = vld [vmem:[%s5159 + $0xf0] sm:$0xff]
    %v5191 = vld [vmem:[%s5159 + $0xf8] sm:$0xff]
    %v5224 = vunpack.c.l.b16 %v5160
    %v5225 = vunpack.c.h.b16 %v5160
    %v5226 = vunpack.c.l.b16 %v5161
    %v5227 = vunpack.c.h.b16 %v5161
    %v5228 = vunpack.c.l.b16 %v5162
    %v5229 = vunpack.c.h.b16 %v5162
    %v5230 = vunpack.c.l.b16 %v5163
    %v5231 = vunpack.c.h.b16 %v5163
    %v5232 = vunpack.c.l.b16 %v5164
    %v5233 = vunpack.c.h.b16 %v5164
    %v5234 = vunpack.c.l.b16 %v5165
    %v5235 = vunpack.c.h.b16 %v5165
    %v5236 = vunpack.c.l.b16 %v5166
    %v5237 = vunpack.c.h.b16 %v5166
    %v5238 = vunpack.c.l.b16 %v5167
    %v5239 = vunpack.c.h.b16 %v5167
    %v5240 = vunpack.c.l.b16 %v5168
    %v5241 = vunpack.c.h.b16 %v5168
    %v5242 = vunpack.c.l.b16 %v5169
    %v5243 = vunpack.c.h.b16 %v5169
    %v5244 = vunpack.c.l.b16 %v5170
    %v5245 = vunpack.c.h.b16 %v5170
    %v5246 = vunpack.c.l.b16 %v5171
    %v5247 = vunpack.c.h.b16 %v5171
    %v5248 = vunpack.c.l.b16 %v5172
    %v5249 = vunpack.c.h.b16 %v5172
    %v5250 = vunpack.c.l.b16 %v5173
    %v5251 = vunpack.c.h.b16 %v5173
    %v5252 = vunpack.c.l.b16 %v5174
    %v5253 = vunpack.c.h.b16 %v5174
    %v5254 = vunpack.c.l.b16 %v5175
    %v5255 = vunpack.c.h.b16 %v5175
    %v5256 = vunpack.c.l.b16 %v5176
    %v5257 = vunpack.c.h.b16 %v5176
    %v5258 = vunpack.c.l.b16 %v5177
    %v5259 = vunpack.c.h.b16 %v5177
    %v5260 = vunpack.c.l.b16 %v5178
    %v5261 = vunpack.c.h.b16 %v5178
    %v5262 = vunpack.c.l.b16 %v5179
    %v5263 = vunpack.c.h.b16 %v5179
    %v5264 = vunpack.c.l.b16 %v5180
    %v5265 = vunpack.c.h.b16 %v5180
    %v5266 = vunpack.c.l.b16 %v5181
    %v5267 = vunpack.c.h.b16 %v5181
    %v5268 = vunpack.c.l.b16 %v5182
    %v5269 = vunpack.c.h.b16 %v5182
    %v5270 = vunpack.c.l.b16 %v5183
    %v5271 = vunpack.c.h.b16 %v5183
    %v5272 = vunpack.c.l.b16 %v5184
    %v5273 = vunpack.c.h.b16 %v5184
    %v5274 = vunpack.c.l.b16 %v5185
    %v5275 = vunpack.c.h.b16 %v5185
    %v5276 = vunpack.c.l.b16 %v5186
    %v5277 = vunpack.c.h.b16 %v5186
    %v5278 = vunpack.c.l.b16 %v5187
    %v5279 = vunpack.c.h.b16 %v5187
    %v5280 = vunpack.c.l.b16 %v5188
    %v5281 = vunpack.c.h.b16 %v5188
    %v5282 = vunpack.c.l.b16 %v5189
    %v5283 = vunpack.c.h.b16 %v5189
    %v5284 = vunpack.c.l.b16 %v5190
    %v5285 = vunpack.c.h.b16 %v5190
    %v5286 = vunpack.c.l.b16 %v5191
    %v5287 = vunpack.c.h.b16 %v5191
    %v5288 = vpack.c.b16 %v5226, %v5224
    %v5289 = vpack.c.b16 %v5227, %v5225
    %v5290 = vpack.c.b16 %v5230, %v5228
    %v5291 = vpack.c.b16 %v5231, %v5229
    %v5292 = vpack.c.b16 %v5234, %v5232
    %v5293 = vpack.c.b16 %v5235, %v5233
    %v5294 = vpack.c.b16 %v5238, %v5236
    %v5295 = vpack.c.b16 %v5239, %v5237
    %v5296 = vpack.c.b16 %v5242, %v5240
    %v5297 = vpack.c.b16 %v5243, %v5241
    %v5298 = vpack.c.b16 %v5246, %v5244
    %v5299 = vpack.c.b16 %v5247, %v5245
    %v5300 = vpack.c.b16 %v5250, %v5248
    %v5301 = vpack.c.b16 %v5251, %v5249
    %v5302 = vpack.c.b16 %v5254, %v5252
    %v5303 = vpack.c.b16 %v5255, %v5253
    %v5304 = vpack.c.b16 %v5258, %v5256
    %v5305 = vpack.c.b16 %v5259, %v5257
    %v5306 = vpack.c.b16 %v5262, %v5260
    %v5307 = vpack.c.b16 %v5263, %v5261
    %v5308 = vpack.c.b16 %v5266, %v5264
    %v5309 = vpack.c.b16 %v5267, %v5265
    %v5310 = vpack.c.b16 %v5270, %v5268
    %v5311 = vpack.c.b16 %v5271, %v5269
    %v5312 = vpack.c.b16 %v5274, %v5272
    %v5313 = vpack.c.b16 %v5275, %v5273
    %v5314 = vpack.c.b16 %v5278, %v5276
    %v5315 = vpack.c.b16 %v5279, %v5277
    %v5316 = vpack.c.b16 %v5282, %v5280
    %v5317 = vpack.c.b16 %v5283, %v5281
    %v5318 = vpack.c.b16 %v5286, %v5284
    %v5319 = vpack.c.b16 %v5287, %v5285
    %5352 = vmatprep.subr.bf16.mxu0 %v5289
    %5353 = vmatpush1.bf16.msra.mxu0 %v5288
    %5354 = vmatprep.subr.bf16.mxu0 %v5291
    %5355 = vmatpush1.bf16.msra.mxu0 %v5290
    %5356 = vmatprep.subr.bf16.mxu0 %v5293
    %5357 = vmatpush1.bf16.msra.mxu0 %v5292
    %5358 = vmatprep.subr.bf16.mxu0 %v5295
    %5359 = vmatpush1.bf16.msra.mxu0 %v5294
    %5360 = vmatprep.subr.bf16.mxu0 %v5297
    %5361 = vmatpush1.bf16.msra.mxu0 %v5296
    %5362 = vmatprep.subr.bf16.mxu0 %v5299
    %5363 = vmatpush1.bf16.msra.mxu0 %v5298
    %5364 = vmatprep.subr.bf16.mxu0 %v5301
    %5365 = vmatpush1.bf16.msra.mxu0 %v5300
    %5366 = vmatprep.subr.bf16.mxu0 %v5303
    %5367 = vmatpush1.bf16.msra.mxu0 %v5302
    %5368 = vmatprep.subr.bf16.mxu0 %v5305
    %5369 = vmatpush1.bf16.msra.mxu0 %v5304
    %5370 = vmatprep.subr.bf16.mxu0 %v5307
    %5371 = vmatpush1.bf16.msra.mxu0 %v5306
    %5372 = vmatprep.subr.bf16.mxu0 %v5309
    %5373 = vmatpush1.bf16.msra.mxu0 %v5308
    %5374 = vmatprep.subr.bf16.mxu0 %v5311
    %5375 = vmatpush1.bf16.msra.mxu0 %v5310
    %5376 = vmatprep.subr.bf16.mxu0 %v5313
    %5377 = vmatpush1.bf16.msra.mxu0 %v5312
    %5378 = vmatprep.subr.bf16.mxu0 %v5315
    %5379 = vmatpush1.bf16.msra.mxu0 %v5314
    %5380 = vmatprep.subr.bf16.mxu0 %v5317
    %5381 = vmatpush1.bf16.msra.mxu0 %v5316
    %5382 = vmatprep.subr.bf16.mxu0 %v5319
    %5383 = vmatpush1.bf16.msra.mxu0 %v5318
    %5384 = vmatprep.mubr.bf16.mxu0 %v5144
    %5385 = vmatmul.mubr.bf16.gmra.mrb[0].mxu0 %v5143
    %v5386 = vpop.f32.mrb[0].mxu0
    %v5387 = vadd.f32 0.0, %v5386
    %v5388 = vpop.f32.mrb[0].mxu0
    %v5389 = vadd.f32 0.0, %v5388
    %v5390 = vpop.f32.mrb[0].mxu0
    %v5391 = vadd.f32 0.0, %v5390
    %v5392 = vpop.f32.mrb[0].mxu0
    %v5393 = vadd.f32 0.0, %v5392
    %5394 = vmatprep.mubr.bf16.mxu0 %v5146
    %5395 = vmatmul.mubr.bf16.gmra.mrb[0].mxu0 %v5145
    %v5396 = vpop.f32.mrb[0].mxu0
    %v5397 = vadd.f32 0.0, %v5396
    %v5398 = vpop.f32.mrb[0].mxu0
    %v5399 = vadd.f32 0.0, %v5398
    %v5400 = vpop.f32.mrb[0].mxu0
    %v5401 = vadd.f32 0.0, %v5400
    %v5402 = vpop.f32.mrb[0].mxu0
    %v5403 = vadd.f32 0.0, %v5402
    %5404 = vmatprep.mubr.bf16.mxu0 %v5148
    %5405 = vmatmul.mubr.bf16.gmra.mrb[0].mxu0 %v5147
    %v5406 = vpop.f32.mrb[0].mxu0
    %v5407 = vadd.f32 0.0, %v5406
    %v5408 = vpop.f32.mrb[0].mxu0
    %v5409 = vadd.f32 0.0, %v5408
    %v5410 = vpop.f32.mrb[0].mxu0
    %v5411 = vadd.f32 0.0, %v5410
    %v5412 = vpop.f32.mrb[0].mxu0
    %v5413 = vadd.f32 0.0, %v5412
    %5414 = vmatprep.mubr.bf16.mxu0 %v5150
    %5415 = vmatmul.mubr.bf16.gmra.mrb[0].mxu0 %v5149
    %v5416 = vpop.f32.mrb[0].mxu0
    %v5417 = vadd.f32 0.0, %v5416
    %v5418 = vpop.f32.mrb[0].mxu0
    %v5419 = vadd.f32 0.0, %v5418
    %v5420 = vpop.f32.mrb[0].mxu0
    %v5421 = vadd.f32 0.0, %v5420
    %v5422 = vpop.f32.mrb[0].mxu0
    %v5423 = vadd.f32 0.0, %v5422
    %5424 = vmatprep.mubr.bf16.mxu0 %v5152
    %5425 = vmatmul.mubr.bf16.gmra.mrb[0].mxu0 %v5151
    %v5426 = vpop.f32.mrb[0].mxu0
    %v5427 = vadd.f32 0.0, %v5426
    %v5428 = vpop.f32.mrb[0].mxu0
    %v5429 = vadd.f32 0.0, %v5428
    %v5430 = vpop.f32.mrb[0].mxu0
    %v5431 = vadd.f32 0.0, %v5430
    %v5432 = vpop.f32.mrb[0].mxu0
    %v5433 = vadd.f32 0.0, %v5432
    %5434 = vmatprep.mubr.bf16.mxu0 %v5154
    %5435 = vmatmul.mubr.bf16.gmra.mrb[0].mxu0 %v5153
    %v5436 = vpop.f32.mrb[0].mxu0
    %v5437 = vadd.f32 0.0, %v5436
    %v5438 = vpop.f32.mrb[0].mxu0
    %v5439 = vadd.f32 0.0, %v5438
    %v5440 = vpop.f32.mrb[0].mxu0
    %v5441 = vadd.f32 0.0, %v5440
    %v5442 = vpop.f32.mrb[0].mxu0
    %v5443 = vadd.f32 0.0, %v5442
    %5444 = vmatprep.mubr.bf16.mxu0 %v5156
    %5445 = vmatmul.mubr.bf16.gmra.mrb[0].mxu0 %v5155
    %v5446 = vpop.f32.mrb[0].mxu0
    %v5447 = vadd.f32 0.0, %v5446
    %v5448 = vpop.f32.mrb[0].mxu0
    %v5449 = vadd.f32 0.0, %v5448
    %v5450 = vpop.f32.mrb[0].mxu0
    %v5451 = vadd.f32 0.0, %v5450
    %v5452 = vpop.f32.mrb[0].mxu0
    %v5453 = vadd.f32 0.0, %v5452
    %5454 = vmatprep.mubr.bf16.mxu0 %v5158
    %5455 = vmatmul.mubr.bf16.gmra.mrb[0].mxu0 %v5157
    %v5456 = vpop.f32.mrb[0].mxu0
    %v5457 = vadd.f32 0.0, %v5456
    %v5458 = vpop.f32.mrb[0].mxu0
    %v5459 = vadd.f32 0.0, %v5458
    %v5460 = vpop.f32.mrb[0].mxu0
    %v5461 = vadd.f32 0.0, %v5460
    %v5462 = vpop.f32.mrb[0].mxu0
    %v5463 = vadd.f32 0.0, %v5462
    %5464 = vdwg.mxu0
    %v5497 = vunpack.c.l.b16 %v5107
    %v5498 = vunpack.c.h.b16 %v5107
    %v5499 = vunpack.c.l.b16 %v5108
    %v5500 = vunpack.c.h.b16 %v5108
    %v5501 = vunpack.c.l.b16 %v5109
    %v5502 = vunpack.c.h.b16 %v5109
    %v5503 = vunpack.c.l.b16 %v5110
    %v5504 = vunpack.c.h.b16 %v5110
    %v5505 = vunpack.c.l.b16 %v5111
    %v5506 = vunpack.c.h.b16 %v5111
    %v5507 = vunpack.c.l.b16 %v5112
    %v5508 = vunpack.c.h.b16 %v5112
    %v5509 = vunpack.c.l.b16 %v5113
    %v5510 = vunpack.c.h.b16 %v5113
    %v5511 = vunpack.c.l.b16 %v5114
    %v5512 = vunpack.c.h.b16 %v5114
    %v5513 = vunpack.c.l.b16 %v5115
    %v5514 = vunpack.c.h.b16 %v5115
    %v5515 = vunpack.c.l.b16 %v5116
    %v5516 = vunpack.c.h.b16 %v5116
    %v5517 = vunpack.c.l.b16 %v5117
    %v5518 = vunpack.c.h.b16 %v5117
    %v5519 = vunpack.c.l.b16 %v5118
    %v5520 = vunpack.c.h.b16 %v5118
    %v5521 = vunpack.c.l.b16 %v5119
    %v5522 = vunpack.c.h.b16 %v5119
    %v5523 = vunpack.c.l.b16 %v5120
    %v5524 = vunpack.c.h.b16 %v5120
    %v5525 = vunpack.c.l.b16 %v5121
    %v5526 = vunpack.c.h.b16 %v5121
    %v5527 = vunpack.c.l.b16 %v5122
    %v5528 = vunpack.c.h.b16 %v5122
    %v5529 = vunpack.c.l.b16 %v5123
    %v5530 = vunpack.c.h.b16 %v5123
    %v5531 = vunpack.c.l.b16 %v5124
    %v5532 = vunpack.c.h.b16 %v5124
    %v5533 = vunpack.c.l.b16 %v5125
    %v5534 = vunpack.c.h.b16 %v5125
    %v5535 = vunpack.c.l.b16 %v5126
    %v5536 = vunpack.c.h.b16 %v5126
    %v5537 = vunpack.c.l.b16 %v5127
    %v5538 = vunpack.c.h.b16 %v5127
    %v5539 = vunpack.c.l.b16 %v5128
    %v5540 = vunpack.c.h.b16 %v5128
    %v5541 = vunpack.c.l.b16 %v5129
    %v5542 = vunpack.c.h.b16 %v5129
    %v5543 = vunpack.c.l.b16 %v5130
    %v5544 = vunpack.c.h.b16 %v5130
    %v5545 = vunpack.c.l.b16 %v5131
    %v5546 = vunpack.c.h.b16 %v5131
    %v5547 = vunpack.c.l.b16 %v5132
    %v5548 = vunpack.c.h.b16 %v5132
    %v5549 = vunpack.c.l.b16 %v5133
    %v5550 = vunpack.c.h.b16 %v5133
    %v5551 = vunpack.c.l.b16 %v5134
    %v5552 = vunpack.c.h.b16 %v5134
    %v5553 = vunpack.c.l.b16 %v5135
    %v5554 = vunpack.c.h.b16 %v5135
    %v5555 = vunpack.c.l.b16 %v5136
    %v5556 = vunpack.c.h.b16 %v5136
    %v5557 = vunpack.c.l.b16 %v5137
    %v5558 = vunpack.c.h.b16 %v5137
    %v5559 = vunpack.c.l.b16 %v5138
    %v5560 = vunpack.c.h.b16 %v5138
    %v5561 = vpack.c.b16 %v5499, %v5497
    %v5562 = vpack.c.b16 %v5500, %v5498
    %v5563 = vpack.c.b16 %v5503, %v5501
    %v5564 = vpack.c.b16 %v5504, %v5502
    %v5565 = vpack.c.b16 %v5507, %v5505
    %v5566 = vpack.c.b16 %v5508, %v5506
    %v5567 = vpack.c.b16 %v5511, %v5509
    %v5568 = vpack.c.b16 %v5512, %v5510
    %v5569 = vpack.c.b16 %v5515, %v5513
    %v5570 = vpack.c.b16 %v5516, %v5514
    %v5571 = vpack.c.b16 %v5519, %v5517
    %v5572 = vpack.c.b16 %v5520, %v5518
    %v5573 = vpack.c.b16 %v5523, %v5521
    %v5574 = vpack.c.b16 %v5524, %v5522
    %v5575 = vpack.c.b16 %v5527, %v5525
    %v5576 = vpack.c.b16 %v5528, %v5526
    %v5577 = vpack.c.b16 %v5531, %v5529
    %v5578 = vpack.c.b16 %v5532, %v5530
    %v5579 = vpack.c.b16 %v5535, %v5533
    %v5580 = vpack.c.b16 %v5536, %v5534
    %v5581 = vpack.c.b16 %v5539, %v5537
    %v5582 = vpack.c.b16 %v5540, %v5538
    %v5583 = vpack.c.b16 %v5543, %v5541
    %v5584 = vpack.c.b16 %v5544, %v5542
    %v5585 = vpack.c.b16 %v5547, %v5545
    %v5586 = vpack.c.b16 %v5548, %v5546
    %v5587 = vpack.c.b16 %v5551, %v5549
    %v5588 = vpack.c.b16 %v5552, %v5550
    %v5589 = vpack.c.b16 %v5555, %v5553
    %v5590 = vpack.c.b16 %v5556, %v5554
    %v5591 = vpack.c.b16 %v5559, %v5557
    %v5592 = vpack.c.b16 %v5560, %v5558
    %5625 = vmatprep.subr.bf16.mxu0 %v5562
    %5626 = vmatpush1.bf16.msra.mxu0 %v5561
    %5627 = vmatprep.subr.bf16.mxu0 %v5564
    %5628 = vmatpush1.bf16.msra.mxu0 %v5563
    %5629 = vmatprep.subr.bf16.mxu0 %v5566
    %5630 = vmatpush1.bf16.msra.mxu0 %v5565
    %5631 = vmatprep.subr.bf16.mxu0 %v5568
    %5632 = vmatpush1.bf16.msra.mxu0 %v5567
    %5633 = vmatprep.subr.bf16.mxu0 %v5570
    %5634 = vmatpush1.bf16.msra.mxu0 %v5569
    %5635 = vmatprep.subr.bf16.mxu0 %v5572
    %5636 = vmatpush1.bf16.msra.mxu0 %v5571
    %5637 = vmatprep.subr.bf16.mxu0 %v5574
    %5638 = vmatpush1.bf16.msra.mxu0 %v5573
    %5639 = vmatprep.subr.bf16.mxu0 %v5576
    %5640 = vmatpush1.bf16.msra.mxu0 %v5575
    %5641 = vmatprep.subr.bf16.mxu0 %v5578
    %5642 = vmatpush1.bf16.msra.mxu0 %v5577
    %5643 = vmatprep.subr.bf16.mxu0 %v5580
    %5644 = vmatpush1.bf16.msra.mxu0 %v5579
    %5645 = vmatprep.subr.bf16.mxu0 %v5582
    %5646 = vmatpush1.bf16.msra.mxu0 %v5581
    %5647 = vmatprep.subr.bf16.mxu0 %v5584
    %5648 = vmatpush1.bf16.msra.mxu0 %v5583
    %5649 = vmatprep.subr.bf16.mxu0 %v5586
    %5650 = vmatpush1.bf16.msra.mxu0 %v5585
    %5651 = vmatprep.subr.bf16.mxu0 %v5588
    %5652 = vmatpush1.bf16.msra.mxu0 %v5587
    %5653 = vmatprep.subr.bf16.mxu0 %v5590
    %5654 = vmatpush1.bf16.msra.mxu0 %v5589
    %5655 = vmatprep.subr.bf16.mxu0 %v5592
    %5656 = vmatpush1.bf16.msra.mxu0 %v5591
    %5657 = vmatprep.mubr.bf16.mxu0 %v4948
    %5658 = vmatmul.mubr.bf16.gmra.mrb[0].mxu0 %v4931
    %v5659 = vpop.f32.mrb[0].mxu0
    %v5660 = vadd.f32 %v5387, %v5659
    %v5661 = vpop.f32.mrb[0].mxu0
    %v5662 = vadd.f32 %v5389, %v5661
    %v5663 = vpop.f32.mrb[0].mxu0
    %v5664 = vadd.f32 %v5391, %v5663
    %v5665 = vpop.f32.mrb[0].mxu0
    %v5666 = vadd.f32 %v5393, %v5665
    %5667 = vmatprep.mubr.bf16.mxu0 %v4966
    %5668 = vmatmul.mubr.bf16.gmra.mrb[0].mxu0 %v4957
    %v5669 = vpop.f32.mrb[0].mxu0
    %v5670 = vadd.f32 %v5397, %v5669
    %v5671 = vpop.f32.mrb[0].mxu0
    %v5672 = vadd.f32 %v5399, %v5671
    %v5673 = vpop.f32.mrb[0].mxu0
    %v5674 = vadd.f32 %v5401, %v5673
    %v5675 = vpop.f32.mrb[0].mxu0
    %v5676 = vadd.f32 %v5403, %v5675
    %5677 = vmatprep.mubr.bf16.mxu0 %v4984
    %5678 = vmatmul.mubr.bf16.gmra.mrb[0].mxu0 %v4975
    %v5679 = vpop.f32.mrb[0].mxu0
    %v5680 = vadd.f32 %v5407, %v5679
    %v5681 = vpop.f32.mrb[0].mxu0
    %v5682 = vadd.f32 %v5409, %v5681
    %v5683 = vpop.f32.mrb[0].mxu0
    %v5684 = vadd.f32 %v5411, %v5683
    %v5685 = vpop.f32.mrb[0].mxu0
    %v5686 = vadd.f32 %v5413, %v5685
    %5687 = vmatprep.mubr.bf16.mxu0 %v5002
    %5688 = vmatmul.mubr.bf16.gmra.mrb[0].mxu0 %v4993
    %v5689 = vpop.f32.mrb[0].mxu0
    %v5690 = vadd.f32 %v5417, %v5689
    %v5691 = vpop.f32.mrb[0].mxu0
    %v5692 = vadd.f32 %v5419, %v5691
    %v5693 = vpop.f32.mrb[0].mxu0
    %v5694 = vadd.f32 %v5421, %v5693
    %v5695 = vpop.f32.mrb[0].mxu0
    %v5696 = vadd.f32 %v5423, %v5695
    %5697 = vmatprep.mubr.bf16.mxu0 %v5036
    %5698 = vmatmul.mubr.bf16.gmra.mrb[0].mxu0 %v5019
    %v5699 = vpop.f32.mrb[0].mxu0
    %v5700 = vadd.f32 %v5427, %v5699
    %v5701 = vpop.f32.mrb[0].mxu0
    %v5702 = vadd.f32 %v5429, %v5701
    %v5703 = vpop.f32.mrb[0].mxu0
    %v5704 = vadd.f32 %v5431, %v5703
    %v5705 = vpop.f32.mrb[0].mxu0
    %v5706 = vadd.f32 %v5433, %v5705
    %5707 = vmatprep.mubr.bf16.mxu0 %v5054
    %5708 = vmatmul.mubr.bf16.gmra.mrb[0].mxu0 %v5045
    %v5709 = vpop.f32.mrb[0].mxu0
    %v5710 = vadd.f32 %v5437, %v5709
    %v5711 = vpop.f32.mrb[0].mxu0
    %v5712 = vadd.f32 %v5439, %v5711
    %v5713 = vpop.f32.mrb[0].mxu0
    %v5714 = vadd.f32 %v5441, %v5713
    %v5715 = vpop.f32.mrb[0].mxu0
    %v5716 = vadd.f32 %v5443, %v5715
    %5717 = vmatprep.mubr.bf16.mxu0 %v5072
    %5718 = vmatmul.mubr.bf16.gmra.mrb[0].mxu0 %v5063
    %v5719 = vpop.f32.mrb[0].mxu0
    %v5720 = vadd.f32 %v5447, %v5719
    %v5721 = vpop.f32.mrb[0].mxu0
    %v5722 = vadd.f32 %v5449, %v5721
    %v5723 = vpop.f32.mrb[0].mxu0
    %v5724 = vadd.f32 %v5451, %v5723
    %v5725 = vpop.f32.mrb[0].mxu0
    %v5726 = vadd.f32 %v5453, %v5725
    %5727 = vmatprep.mubr.bf16.mxu0 %v5090
    %5728 = vmatmul.mubr.bf16.gmra.mrb[0].mxu0 %v5081
    %v5729 = vpop.f32.mrb[0].mxu0
    %v5730 = vadd.f32 %v5457, %v5729
    %v5731 = vpop.f32.mrb[0].mxu0
    %v5732 = vadd.f32 %v5459, %v5731
    %v5733 = vpop.f32.mrb[0].mxu0
    %v5734 = vadd.f32 %v5461, %v5733
    %v5735 = vpop.f32.mrb[0].mxu0
    %v5736 = vadd.f32 %v5463, %v5735
    %5737 = vdwg.mxu0
    %v5738 = vld [vmem:[#allocation2 + $0x10] sm:$0xfe]
    %v5739 = vld [vmem:[#allocation2 + $0x18] sm:$0xfe]
    %v5740 = vld [vmem:[#allocation2 + $0x20] sm:$0xff]
    %v5741 = vld [vmem:[#allocation2 + $0x28] sm:$0xff]
    %v5742 = vld [vmem:[#allocation2 + $0x30] sm:$0xff]
    %v5743 = vld [vmem:[#allocation2 + $0x38] sm:$0xff]
    %v5744 = vld [vmem:[#allocation2 + $0x40] sm:$0xff]
    %v5745 = vld [vmem:[#allocation2 + $0x48] sm:$0xff]
    %v5746 = vld [vmem:[#allocation2 + $0x50] sm:$0xff]
    %v5747 = vld [vmem:[#allocation2 + $0x58] sm:$0xff]
    %v5748 = vld [vmem:[#allocation2 + $0x60] sm:$0xff]
    %v5749 = vld [vmem:[#allocation2 + $0x68] sm:$0xff]
    %v5750 = vld [vmem:[#allocation2 + $0x70] sm:$0xff]
    %v5751 = vld [vmem:[#allocation2 + $0x78] sm:$0xff]
    %v5752 = vld [vmem:[#allocation2 + $0x80] sm:$0xff]
    %v5753 = vld [vmem:[#allocation2 + $0x88] sm:$0xff]
    %v5754 = vld [vmem:[#allocation2 + $0x90] sm:$0x1]
    %v5755 = vld [vmem:[#allocation2 + $0x98] sm:$0x1]
    %v5756 = vld [vmem:[#allocation2 + $0xd0] sm:$0xfe]
    %v5757 = vld [vmem:[#allocation2 + $0xd8] sm:$0xfe]
    %v5758 = vld [vmem:[#allocation2 + $0xe0] sm:$0xff]
    %v5759 = vld [vmem:[#allocation2 + $0xe8] sm:$0xff]
    %v5760 = vld [vmem:[#allocation2 + $0xf0] sm:$0xff]
    %v5761 = vld [vmem:[#allocation2 + $0xf8] sm:$0xff]
    %v5762 = vld [vmem:[#allocation2 + $0x100] sm:$0xff]
    %v5763 = vld [vmem:[#allocation2 + $0x108] sm:$0xff]
    %v5764 = vld [vmem:[#allocation2 + $0x110] sm:$0xff]
    %v5765 = vld [vmem:[#allocation2 + $0x118] sm:$0xff]
    %v5766 = vld [vmem:[#allocation2 + $0x120] sm:$0xff]
    %v5767 = vld [vmem:[#allocation2 + $0x128] sm:$0xff]
    %v5768 = vld [vmem:[#allocation2 + $0x130] sm:$0xff]
    %v5769 = vld [vmem:[#allocation2 + $0x138] sm:$0xff]
    %v5770 = vld [vmem:[#allocation2 + $0x140] sm:$0xff]
    %v5771 = vld [vmem:[#allocation2 + $0x148] sm:$0xff]
    %v5772 = vld [vmem:[#allocation2 + $0x150] sm:$0x1]
    %v5773 = vld [vmem:[#allocation2 + $0x158] sm:$0x1]
    %v5774 = vpack.c.bf16 %v5740, %v5738
    %v5775 = vpack.c.bf16 %v5741, %v5739
    %v5776 = vpack.c.bf16 %v5744, %v5742
    %v5777 = vpack.c.bf16 %v5745, %v5743
    %v5778 = vpack.c.bf16 %v5748, %v5746
    %v5779 = vpack.c.bf16 %v5749, %v5747
    %v5780 = vpack.c.bf16 %v5752, %v5750
    %v5781 = vpack.c.bf16 %v5753, %v5751
    %v5782 = vpack.c.bf16 %v5754, %v5754
    %v5783 = vpack.c.bf16 %v5755, %v5755
    %v5784 = vpack.c.bf16 %v5758, %v5756
    %v5785 = vpack.c.bf16 %v5759, %v5757
    %v5786 = vpack.c.bf16 %v5762, %v5760
    %v5787 = vpack.c.bf16 %v5763, %v5761
    %v5788 = vpack.c.bf16 %v5766, %v5764
    %v5789 = vpack.c.bf16 %v5767, %v5765
    %v5790 = vpack.c.bf16 %v5770, %v5768
    %v5791 = vpack.c.bf16 %v5771, %v5769
    %v5792 = vpack.c.bf16 %v5772, %v5772
    %v5793 = vpack.c.bf16 %v5773, %v5773
    %v5794 = vsel %vm1149, %v5774, 0
    %v5795 = vsel %vm1149, %v5775, 0
    %v5796 = vsel %vm1150, %v5776, 0
    %v5797 = vsel %vm1150, %v5777, 0
    %v5798 = vsel %vm1150, %v5778, 0
    %v5799 = vsel %vm1150, %v5779, 0
    %v5800 = vsel %vm1150, %v5780, 0
    %v5801 = vsel %vm1150, %v5781, 0
    %v5802 = vsel %vm1151, %v5782, 0
    %v5803 = vsel %vm1151, %v5783, 0
    %v5804 = vsel %vm1149, %v5784, 0
    %v5805 = vsel %vm1149, %v5785, 0
    %v5806 = vsel %vm1150, %v5786, 0
    %v5807 = vsel %vm1150, %v5787, 0
    %v5808 = vsel %vm1150, %v5788, 0
    %v5809 = vsel %vm1150, %v5789, 0
    %v5810 = vsel %vm1150, %v5790, 0
    %v5811 = vsel %vm1150, %v5791, 0
    %v5812 = vsel %vm1151, %v5792, 0
    %v5813 = vsel %vm1151, %v5793, 0
    %v5815 = vshrl.u32 %v5794, 16
    %v5817 = vshll.u32 %v5794, 16
    %v5819 = vrot.slane %v5817, 1
    %v5820 = vor.u32 %v5815, %v5819
    %v5822 = vshll.u32 %v5796, 16
    %v5824 = vrot.slane %v5822, 1
    %v5825 = vsel %vm1172, %v5820, %v5824
    %v5827 = vshrl.u32 %v5795, 16
    %v5829 = vshll.u32 %v5795, 16
    %v5831 = vrot.slane %v5829, 1
    %v5832 = vor.u32 %v5827, %v5831
    %v5834 = vshll.u32 %v5797, 16
    %v5836 = vrot.slane %v5834, 1
    %v5837 = vsel %vm1172, %v5832, %v5836
    %v5838 = vshrl.u32 %v5796, 16
    %v5840 = vor.u32 %v5838, %v5824
    %v5842 = vshll.u32 %v5798, 16
    %v5844 = vrot.slane %v5842, 1
    %v5845 = vsel %vm1172, %v5840, %v5844
    %v5846 = vshrl.u32 %v5797, 16
    %v5848 = vor.u32 %v5846, %v5836
    %v5850 = vshll.u32 %v5799, 16
    %v5852 = vrot.slane %v5850, 1
    %v5853 = vsel %vm1172, %v5848, %v5852
    %v5854 = vshrl.u32 %v5798, 16
    %v5856 = vor.u32 %v5854, %v5844
    %v5858 = vshll.u32 %v5800, 16
    %v5860 = vrot.slane %v5858, 1
    %v5861 = vsel %vm1172, %v5856, %v5860
    %v5862 = vshrl.u32 %v5799, 16
    %v5864 = vor.u32 %v5862, %v5852
    %v5866 = vshll.u32 %v5801, 16
    %v5868 = vrot.slane %v5866, 1
    %v5869 = vsel %vm1172, %v5864, %v5868
    %v5870 = vshrl.u32 %v5800, 16
    %v5872 = vor.u32 %v5870, %v5860
    %v5874 = vshll.u32 %v5802, 16
    %v5876 = vrot.slane %v5874, 1
    %v5877 = vsel %vm1172, %v5872, %v5876
    %v5878 = vshrl.u32 %v5801, 16
    %v5880 = vor.u32 %v5878, %v5868
    %v5882 = vshll.u32 %v5803, 16
    %v5884 = vrot.slane %v5882, 1
    %v5885 = vsel %vm1172, %v5880, %v5884
    %v5887 = vshrl.u32 %v5804, 16
    %v5889 = vshll.u32 %v5804, 16
    %v5891 = vrot.slane %v5889, 1
    %v5892 = vor.u32 %v5887, %v5891
    %v5894 = vshll.u32 %v5806, 16
    %v5896 = vrot.slane %v5894, 1
    %v5897 = vsel %vm1172, %v5892, %v5896
    %v5899 = vshrl.u32 %v5805, 16
    %v5901 = vshll.u32 %v5805, 16
    %v5903 = vrot.slane %v5901, 1
    %v5904 = vor.u32 %v5899, %v5903
    %v5906 = vshll.u32 %v5807, 16
    %v5908 = vrot.slane %v5906, 1
    %v5909 = vsel %vm1172, %v5904, %v5908
    %v5910 = vshrl.u32 %v5806, 16
    %v5912 = vor.u32 %v5910, %v5896
    %v5914 = vshll.u32 %v5808, 16
    %v5916 = vrot.slane %v5914, 1
    %v5917 = vsel %vm1172, %v5912, %v5916
    %v5918 = vshrl.u32 %v5807, 16
    %v5920 = vor.u32 %v5918, %v5908
    %v5922 = vshll.u32 %v5809, 16
    %v5924 = vrot.slane %v5922, 1
    %v5925 = vsel %vm1172, %v5920, %v5924
    %v5926 = vshrl.u32 %v5808, 16
    %v5928 = vor.u32 %v5926, %v5916
    %v5930 = vshll.u32 %v5810, 16
    %v5932 = vrot.slane %v5930, 1
    %v5933 = vsel %vm1172, %v5928, %v5932
    %v5934 = vshrl.u32 %v5809, 16
    %v5936 = vor.u32 %v5934, %v5924
    %v5938 = vshll.u32 %v5811, 16
    %v5940 = vrot.slane %v5938, 1
    %v5941 = vsel %vm1172, %v5936, %v5940
    %v5942 = vshrl.u32 %v5810, 16
    %v5944 = vor.u32 %v5942, %v5932
    %v5946 = vshll.u32 %v5812, 16
    %v5948 = vrot.slane %v5946, 1
    %v5949 = vsel %vm1172, %v5944, %v5948
    %v5950 = vshrl.u32 %v5811, 16
    %v5952 = vor.u32 %v5950, %v5940
    %v5954 = vshll.u32 %v5813, 16
    %v5956 = vrot.slane %v5954, 1
    %v5957 = vsel %vm1172, %v5952, %v5956
    %s5974 = scalar_lea.vmem [#allocation9], 512
    %v5975 = vld [vmem:[%s5974] sm:$0xff]
    %v5976 = vld [vmem:[%s5974 + $0x8] sm:$0xff]
    %v5977 = vld [vmem:[%s5974 + $0x10] sm:$0xff]
    %v5978 = vld [vmem:[%s5974 + $0x18] sm:$0xff]
    %v5979 = vld [vmem:[%s5974 + $0x20] sm:$0xff]
    %v5980 = vld [vmem:[%s5974 + $0x28] sm:$0xff]
    %v5981 = vld [vmem:[%s5974 + $0x30] sm:$0xff]
    %v5982 = vld [vmem:[%s5974 + $0x38] sm:$0xff]
    %v5983 = vld [vmem:[%s5974 + $0x40] sm:$0xff]
    %v5984 = vld [vmem:[%s5974 + $0x48] sm:$0xff]
    %v5985 = vld [vmem:[%s5974 + $0x50] sm:$0xff]
    %v5986 = vld [vmem:[%s5974 + $0x58] sm:$0xff]
    %v5987 = vld [vmem:[%s5974 + $0x60] sm:$0xff]
    %v5988 = vld [vmem:[%s5974 + $0x68] sm:$0xff]
    %v5989 = vld [vmem:[%s5974 + $0x70] sm:$0xff]
    %v5990 = vld [vmem:[%s5974 + $0x78] sm:$0xff]
    %v5991 = vld [vmem:[%s5974 + $0x80] sm:$0xff]
    %v5992 = vld [vmem:[%s5974 + $0x88] sm:$0xff]
    %v5993 = vld [vmem:[%s5974 + $0x90] sm:$0xff]
    %v5994 = vld [vmem:[%s5974 + $0x98] sm:$0xff]
    %v5995 = vld [vmem:[%s5974 + $0xa0] sm:$0xff]
    %v5996 = vld [vmem:[%s5974 + $0xa8] sm:$0xff]
    %v5997 = vld [vmem:[%s5974 + $0xb0] sm:$0xff]
    %v5998 = vld [vmem:[%s5974 + $0xb8] sm:$0xff]
    %v5999 = vld [vmem:[%s5974 + $0xc0] sm:$0xff]
    %v6000 = vld [vmem:[%s5974 + $0xc8] sm:$0xff]
    %v6001 = vld [vmem:[%s5974 + $0xd0] sm:$0xff]
    %v6002 = vld [vmem:[%s5974 + $0xd8] sm:$0xff]
    %v6003 = vld [vmem:[%s5974 + $0xe0] sm:$0xff]
    %v6004 = vld [vmem:[%s5974 + $0xe8] sm:$0xff]
    %v6005 = vld [vmem:[%s5974 + $0xf0] sm:$0xff]
    %v6006 = vld [vmem:[%s5974 + $0xf8] sm:$0xff]
    %v6039 = vunpack.c.l.b16 %v5975
    %v6040 = vunpack.c.h.b16 %v5975
    %v6041 = vunpack.c.l.b16 %v5976
    %v6042 = vunpack.c.h.b16 %v5976
    %v6043 = vunpack.c.l.b16 %v5977
    %v6044 = vunpack.c.h.b16 %v5977
    %v6045 = vunpack.c.l.b16 %v5978
    %v6046 = vunpack.c.h.b16 %v5978
    %v6047 = vunpack.c.l.b16 %v5979
    %v6048 = vunpack.c.h.b16 %v5979
    %v6049 = vunpack.c.l.b16 %v5980
    %v6050 = vunpack.c.h.b16 %v5980
    %v6051 = vunpack.c.l.b16 %v5981
    %v6052 = vunpack.c.h.b16 %v5981
    %v6053 = vunpack.c.l.b16 %v5982
    %v6054 = vunpack.c.h.b16 %v5982
    %v6055 = vunpack.c.l.b16 %v5983
    %v6056 = vunpack.c.h.b16 %v5983
    %v6057 = vunpack.c.l.b16 %v5984
    %v6058 = vunpack.c.h.b16 %v5984
    %v6059 = vunpack.c.l.b16 %v5985
    %v6060 = vunpack.c.h.b16 %v5985
    %v6061 = vunpack.c.l.b16 %v5986
    %v6062 = vunpack.c.h.b16 %v5986
    %v6063 = vunpack.c.l.b16 %v5987
    %v6064 = vunpack.c.h.b16 %v5987
    %v6065 = vunpack.c.l.b16 %v5988
    %v6066 = vunpack.c.h.b16 %v5988
    %v6067 = vunpack.c.l.b16 %v5989
    %v6068 = vunpack.c.h.b16 %v5989
    %v6069 = vunpack.c.l.b16 %v5990
    %v6070 = vunpack.c.h.b16 %v5990
    %v6071 = vunpack.c.l.b16 %v5991
    %v6072 = vunpack.c.h.b16 %v5991
    %v6073 = vunpack.c.l.b16 %v5992
    %v6074 = vunpack.c.h.b16 %v5992
    %v6075 = vunpack.c.l.b16 %v5993
    %v6076 = vunpack.c.h.b16 %v5993
    %v6077 = vunpack.c.l.b16 %v5994
    %v6078 = vunpack.c.h.b16 %v5994
    %v6079 = vunpack.c.l.b16 %v5995
    %v6080 = vunpack.c.h.b16 %v5995
    %v6081 = vunpack.c.l.b16 %v5996
    %v6082 = vunpack.c.h.b16 %v5996
    %v6083 = vunpack.c.l.b16 %v5997
    %v6084 = vunpack.c.h.b16 %v5997
    %v6085 = vunpack.c.l.b16 %v5998
    %v6086 = vunpack.c.h.b16 %v5998
    %v6087 = vunpack.c.l.b16 %v5999
    %v6088 = vunpack.c.h.b16 %v5999
    %v6089 = vunpack.c.l.b16 %v6000
    %v6090 = vunpack.c.h.b16 %v6000
    %v6091 = vunpack.c.l.b16 %v6001
    %v6092 = vunpack.c.h.b16 %v6001
    %v6093 = vunpack.c.l.b16 %v6002
    %v6094 = vunpack.c.h.b16 %v6002
    %v6095 = vunpack.c.l.b16 %v6003
    %v6096 = vunpack.c.h.b16 %v6003
    %v6097 = vunpack.c.l.b16 %v6004
    %v6098 = vunpack.c.h.b16 %v6004
    %v6099 = vunpack.c.l.b16 %v6005
    %v6100 = vunpack.c.h.b16 %v6005
    %v6101 = vunpack.c.l.b16 %v6006
    %v6102 = vunpack.c.h.b16 %v6006
    %v6103 = vpack.c.b16 %v6041, %v6039
    %v6104 = vpack.c.b16 %v6042, %v6040
    %v6105 = vpack.c.b16 %v6045, %v6043
    %v6106 = vpack.c.b16 %v6046, %v6044
    %v6107 = vpack.c.b16 %v6049, %v6047
    %v6108 = vpack.c.b16 %v6050, %v6048
    %v6109 = vpack.c.b16 %v6053, %v6051
    %v6110 = vpack.c.b16 %v6054, %v6052
    %v6111 = vpack.c.b16 %v6057, %v6055
    %v6112 = vpack.c.b16 %v6058, %v6056
    %v6113 = vpack.c.b16 %v6061, %v6059
    %v6114 = vpack.c.b16 %v6062, %v6060
    %v6115 = vpack.c.b16 %v6065, %v6063
    %v6116 = vpack.c.b16 %v6066, %v6064
    %v6117 = vpack.c.b16 %v6069, %v6067
    %v6118 = vpack.c.b16 %v6070, %v6068
    %v6119 = vpack.c.b16 %v6073, %v6071
    %v6120 = vpack.c.b16 %v6074, %v6072
    %v6121 = vpack.c.b16 %v6077, %v6075
    %v6122 = vpack.c.b16 %v6078, %v6076
    %v6123 = vpack.c.b16 %v6081, %v6079
    %v6124 = vpack.c.b16 %v6082, %v6080
    %v6125 = vpack.c.b16 %v6085, %v6083
    %v6126 = vpack.c.b16 %v6086, %v6084
    %v6127 = vpack.c.b16 %v6089, %v6087
    %v6128 = vpack.c.b16 %v6090, %v6088
    %v6129 = vpack.c.b16 %v6093, %v6091
    %v6130 = vpack.c.b16 %v6094, %v6092
    %v6131 = vpack.c.b16 %v6097, %v6095
    %v6132 = vpack.c.b16 %v6098, %v6096
    %v6133 = vpack.c.b16 %v6101, %v6099
    %v6134 = vpack.c.b16 %v6102, %v6100
    %6167 = vmatprep.subr.bf16.mxu0 %v6104
    %6168 = vmatpush1.bf16.msra.mxu0 %v6103
    %6169 = vmatprep.subr.bf16.mxu0 %v6106
    %6170 = vmatpush1.bf16.msra.mxu0 %v6105
    %6171 = vmatprep.subr.bf16.mxu0 %v6108
    %6172 = vmatpush1.bf16.msra.mxu0 %v6107
    %6173 = vmatprep.subr.bf16.mxu0 %v6110
    %6174 = vmatpush1.bf16.msra.mxu0 %v6109
    %6175 = vmatprep.subr.bf16.mxu0 %v6112
    %6176 = vmatpush1.bf16.msra.mxu0 %v6111
    %6177 = vmatprep.subr.bf16.mxu0 %v6114
    %6178 = vmatpush1.bf16.msra.mxu0 %v6113
    %6179 = vmatprep.subr.bf16.mxu0 %v6116
    %6180 = vmatpush1.bf16.msra.mxu0 %v6115
    %6181 = vmatprep.subr.bf16.mxu0 %v6118
    %6182 = vmatpush1.bf16.msra.mxu0 %v6117
    %6183 = vmatprep.subr.bf16.mxu0 %v6120
    %6184 = vmatpush1.bf16.msra.mxu0 %v6119
    %6185 = vmatprep.subr.bf16.mxu0 %v6122
    %6186 = vmatpush1.bf16.msra.mxu0 %v6121
    %6187 = vmatprep.subr.bf16.mxu0 %v6124
    %6188 = vmatpush1.bf16.msra.mxu0 %v6123
    %6189 = vmatprep.subr.bf16.mxu0 %v6126
    %6190 = vmatpush1.bf16.msra.mxu0 %v6125
    %6191 = vmatprep.subr.bf16.mxu0 %v6128
    %6192 = vmatpush1.bf16.msra.mxu0 %v6127
    %6193 = vmatprep.subr.bf16.mxu0 %v6130
    %6194 = vmatpush1.bf16.msra.mxu0 %v6129
    %6195 = vmatprep.subr.bf16.mxu0 %v6132
    %6196 = vmatpush1.bf16.msra.mxu0 %v6131
    %6197 = vmatprep.subr.bf16.mxu0 %v6134
    %6198 = vmatpush1.bf16.msra.mxu0 %v6133
    %6199 = vmatprep.mubr.bf16.mxu0 %v5837
    %6200 = vmatmul.mubr.bf16.gmra.mrb[0].mxu0 %v5825
    %v6201 = vpop.f32.mrb[0].mxu0
    %v6202 = vadd.f32 0.0, %v6201
    %v6203 = vpop.f32.mrb[0].mxu0
    %v6204 = vadd.f32 0.0, %v6203
    %v6205 = vpop.f32.mrb[0].mxu0
    %v6206 = vadd.f32 0.0, %v6205
    %v6207 = vpop.f32.mrb[0].mxu0
    %v6208 = vadd.f32 0.0, %v6207
    %6209 = vmatprep.mubr.bf16.mxu0 %v5853
    %6210 = vmatmul.mubr.bf16.gmra.mrb[0].mxu0 %v5845
    %v6211 = vpop.f32.mrb[0].mxu0
    %v6212 = vadd.f32 0.0, %v6211
    %v6213 = vpop.f32.mrb[0].mxu0
    %v6214 = vadd.f32 0.0, %v6213
    %v6215 = vpop.f32.mrb[0].mxu0
    %v6216 = vadd.f32 0.0, %v6215
    %v6217 = vpop.f32.mrb[0].mxu0
    %v6218 = vadd.f32 0.0, %v6217
    %6219 = vmatprep.mubr.bf16.mxu0 %v5869
    %6220 = vmatmul.mubr.bf16.gmra.mrb[0].mxu0 %v5861
    %v6221 = vpop.f32.mrb[0].mxu0
    %v6222 = vadd.f32 0.0, %v6221
    %v6223 = vpop.f32.mrb[0].mxu0
    %v6224 = vadd.f32 0.0, %v6223
    %v6225 = vpop.f32.mrb[0].mxu0
    %v6226 = vadd.f32 0.0, %v6225
    %v6227 = vpop.f32.mrb[0].mxu0
    %v6228 = vadd.f32 0.0, %v6227
    %6229 = vmatprep.mubr.bf16.mxu0 %v5885
    %6230 = vmatmul.mubr.bf16.gmra.mrb[0].mxu0 %v5877
    %v6231 = vpop.f32.mrb[0].mxu0
    %v6232 = vadd.f32 0.0, %v6231
    %v6233 = vpop.f32.mrb[0].mxu0
    %v6234 = vadd.f32 0.0, %v6233
    %v6235 = vpop.f32.mrb[0].mxu0
    %v6236 = vadd.f32 0.0, %v6235
    %v6237 = vpop.f32.mrb[0].mxu0
    %v6238 = vadd.f32 0.0, %v6237
    %6239 = vmatprep.mubr.bf16.mxu0 %v5909
    %6240 = vmatmul.mubr.bf16.gmra.mrb[0].mxu0 %v5897
    %v6241 = vpop.f32.mrb[0].mxu0
    %v6242 = vadd.f32 0.0, %v6241
    %v6243 = vpop.f32.mrb[0].mxu0
    %v6244 = vadd.f32 0.0, %v6243
    %v6245 = vpop.f32.mrb[0].mxu0
    %v6246 = vadd.f32 0.0, %v6245
    %v6247 = vpop.f32.mrb[0].mxu0
    %v6248 = vadd.f32 0.0, %v6247
    %6249 = vmatprep.mubr.bf16.mxu0 %v5925
    %6250 = vmatmul.mubr.bf16.gmra.mrb[0].mxu0 %v5917
    %v6251 = vpop.f32.mrb[0].mxu0
    %v6252 = vadd.f32 0.0, %v6251
    %v6253 = vpop.f32.mrb[0].mxu0
    %v6254 = vadd.f32 0.0, %v6253
    %v6255 = vpop.f32.mrb[0].mxu0
    %v6256 = vadd.f32 0.0, %v6255
    %v6257 = vpop.f32.mrb[0].mxu0
    %v6258 = vadd.f32 0.0, %v6257
    %6259 = vmatprep.mubr.bf16.mxu0 %v5941
    %6260 = vmatmul.mubr.bf16.gmra.mrb[0].mxu0 %v5933
    %v6261 = vpop.f32.mrb[0].mxu0
    %v6262 = vadd.f32 0.0, %v6261
    %v6263 = vpop.f32.mrb[0].mxu0
    %v6264 = vadd.f32 0.0, %v6263
    %v6265 = vpop.f32.mrb[0].mxu0
    %v6266 = vadd.f32 0.0, %v6265
    %v6267 = vpop.f32.mrb[0].mxu0
    %v6268 = vadd.f32 0.0, %v6267
    %6269 = vmatprep.mubr.bf16.mxu0 %v5957
    %6270 = vmatmul.mubr.bf16.gmra.mrb[0].mxu0 %v5949
    %v6271 = vpop.f32.mrb[0].mxu0
    %v6272 = vadd.f32 0.0, %v6271
    %v6273 = vpop.f32.mrb[0].mxu0
    %v6274 = vadd.f32 0.0, %v6273
    %v6275 = vpop.f32.mrb[0].mxu0
    %v6276 = vadd.f32 0.0, %v6275
    %v6277 = vpop.f32.mrb[0].mxu0
    %v6278 = vadd.f32 0.0, %v6277
    %6279 = vdwg.mxu0
    %v6280 = vadd.f32 %v5660, %v6202
    %v6281 = vadd.f32 %v5662, %v6204
    %v6282 = vadd.f32 %v5664, %v6206
    %v6283 = vadd.f32 %v5666, %v6208
    %v6284 = vadd.f32 %v5670, %v6212
    %v6285 = vadd.f32 %v5672, %v6214
    %v6286 = vadd.f32 %v5674, %v6216
    %v6287 = vadd.f32 %v5676, %v6218
    %v6288 = vadd.f32 %v5680, %v6222
    %v6289 = vadd.f32 %v5682, %v6224
    %v6290 = vadd.f32 %v5684, %v6226
    %v6291 = vadd.f32 %v5686, %v6228
    %v6292 = vadd.f32 %v5690, %v6232
    %v6293 = vadd.f32 %v5692, %v6234
    %v6294 = vadd.f32 %v5694, %v6236
    %v6295 = vadd.f32 %v5696, %v6238
    %v6296 = vadd.f32 %v5700, %v6242
    %v6297 = vadd.f32 %v5702, %v6244
    %v6298 = vadd.f32 %v5704, %v6246
    %v6299 = vadd.f32 %v5706, %v6248
    %v6300 = vadd.f32 %v5710, %v6252
    %v6301 = vadd.f32 %v5712, %v6254
    %v6302 = vadd.f32 %v5714, %v6256
    %v6303 = vadd.f32 %v5716, %v6258
    %v6304 = vadd.f32 %v5720, %v6262
    %v6305 = vadd.f32 %v5722, %v6264
    %v6306 = vadd.f32 %v5724, %v6266
    %v6307 = vadd.f32 %v5726, %v6268
    %v6308 = vadd.f32 %v5730, %v6272
    %v6309 = vadd.f32 %v5732, %v6274
    %v6310 = vadd.f32 %v5734, %v6276
    %v6311 = vadd.f32 %v5736, %v6278
    %v6312 = vld [vmem:[#allocation2 + $0x10] sm:$0x80]
    %v6313 = vld [vmem:[#allocation2 + $0x18] sm:$0x80]
    %v6314 = vld [vmem:[#allocation2 + $0x90] sm:$0x7f]
    %v6315 = vld [vmem:[#allocation2 + $0x98] sm:$0x7f]
    %v6316 = vld [vmem:[#allocation2 + $0xd0] sm:$0x80]
    %v6317 = vld [vmem:[#allocation2 + $0xd8] sm:$0x80]
    %v6318 = vld [vmem:[#allocation2 + $0x150] sm:$0x7f]
    %v6319 = vld [vmem:[#allocation2 + $0x158] sm:$0x7f]
    %v6320 = vpack.c.bf16 %v5740, %v6312
    %v6321 = vpack.c.bf16 %v5741, %v6313
    %v6322 = vpack.c.bf16 %v6314, %v6314
    %v6323 = vpack.c.bf16 %v6315, %v6315
    %v6324 = vpack.c.bf16 %v5758, %v6316
    %v6325 = vpack.c.bf16 %v5759, %v6317
    %v6326 = vpack.c.bf16 %v6318, %v6318
    %v6327 = vpack.c.bf16 %v6319, %v6319
    %v6328 = vsel %vm234, %v6320, 0
    %v6329 = vsel %vm234, %v6321, 0
    %v6330 = vsel %vm235, %v5776, 0
    %v6331 = vsel %vm235, %v5777, 0
    %v6332 = vsel %vm235, %v5778, 0
    %v6333 = vsel %vm235, %v5779, 0
    %v6334 = vsel %vm235, %v5780, 0
    %v6335 = vsel %vm235, %v5781, 0
    %v6336 = vsel %vm234, %v6322, 0
    %v6337 = vsel %vm234, %v6323, 0
    %v6338 = vsel %vm234, %v6324, 0
    %v6339 = vsel %vm234, %v6325, 0
    %v6340 = vsel %vm235, %v5786, 0
    %v6341 = vsel %vm235, %v5787, 0
    %v6342 = vsel %vm235, %v5788, 0
    %v6343 = vsel %vm235, %v5789, 0
    %v6344 = vsel %vm235, %v5790, 0
    %v6345 = vsel %vm235, %v5791, 0
    %v6346 = vsel %vm234, %v6326, 0
    %v6347 = vsel %vm234, %v6327, 0
    %v6349 = vshrl.u32 %v6328, 16
    %v6351 = vrot.slane %v6349, 3
    %v6352 = vshll.u32 %v6328, 16
    %v6354 = vrot.slane %v6352, 4
    %v6355 = vor.u32 %v6351, %v6354
    %v6357 = vshrl.u32 %v6330, 16
    %v6359 = vrot.slane %v6357, 3
    %v6360 = vshll.u32 %v6330, 16
    %v6362 = vrot.slane %v6360, 4
    %v6363 = vor.u32 %v6359, %v6362
    %v6364 = vsel %vm256, %v6355, %v6363
    %v6366 = vshrl.u32 %v6329, 16
    %v6368 = vrot.slane %v6366, 3
    %v6369 = vshll.u32 %v6329, 16
    %v6371 = vrot.slane %v6369, 4
    %v6372 = vor.u32 %v6368, %v6371
    %v6374 = vshrl.u32 %v6331, 16
    %v6376 = vrot.slane %v6374, 3
    %v6377 = vshll.u32 %v6331, 16
    %v6379 = vrot.slane %v6377, 4
    %v6380 = vor.u32 %v6376, %v6379
    %v6381 = vsel %vm256, %v6372, %v6380
    %v6383 = vshrl.u32 %v6332, 16
    %v6385 = vrot.slane %v6383, 3
    %v6386 = vshll.u32 %v6332, 16
    %v6388 = vrot.slane %v6386, 4
    %v6389 = vor.u32 %v6385, %v6388
    %v6390 = vsel %vm256, %v6363, %v6389
    %v6392 = vshrl.u32 %v6333, 16
    %v6394 = vrot.slane %v6392, 3
    %v6395 = vshll.u32 %v6333, 16
    %v6397 = vrot.slane %v6395, 4
    %v6398 = vor.u32 %v6394, %v6397
    %v6399 = vsel %vm256, %v6380, %v6398
    %v6401 = vshrl.u32 %v6334, 16
    %v6403 = vrot.slane %v6401, 3
    %v6404 = vshll.u32 %v6334, 16
    %v6406 = vrot.slane %v6404, 4
    %v6407 = vor.u32 %v6403, %v6406
    %v6408 = vsel %vm256, %v6389, %v6407
    %v6410 = vshrl.u32 %v6335, 16
    %v6412 = vrot.slane %v6410, 3
    %v6413 = vshll.u32 %v6335, 16
    %v6415 = vrot.slane %v6413, 4
    %v6416 = vor.u32 %v6412, %v6415
    %v6417 = vsel %vm256, %v6398, %v6416
    %v6419 = vshrl.u32 %v6336, 16
    %v6421 = vrot.slane %v6419, 3
    %v6422 = vshll.u32 %v6336, 16
    %v6424 = vrot.slane %v6422, 4
    %v6425 = vor.u32 %v6421, %v6424
    %v6426 = vsel %vm256, %v6407, %v6425
    %v6428 = vshrl.u32 %v6337, 16
    %v6430 = vrot.slane %v6428, 3
    %v6431 = vshll.u32 %v6337, 16
    %v6433 = vrot.slane %v6431, 4
    %v6434 = vor.u32 %v6430, %v6433
    %v6435 = vsel %vm256, %v6416, %v6434
    %v6437 = vshrl.u32 %v6338, 16
    %v6439 = vrot.slane %v6437, 3
    %v6440 = vshll.u32 %v6338, 16
    %v6442 = vrot.slane %v6440, 4
    %v6443 = vor.u32 %v6439, %v6442
    %v6445 = vshrl.u32 %v6340, 16
    %v6447 = vrot.slane %v6445, 3
    %v6448 = vshll.u32 %v6340, 16
    %v6450 = vrot.slane %v6448, 4
    %v6451 = vor.u32 %v6447, %v6450
    %v6452 = vsel %vm256, %v6443, %v6451
    %v6454 = vshrl.u32 %v6339, 16
    %v6456 = vrot.slane %v6454, 3
    %v6457 = vshll.u32 %v6339, 16
    %v6459 = vrot.slane %v6457, 4
    %v6460 = vor.u32 %v6456, %v6459
    %v6462 = vshrl.u32 %v6341, 16
    %v6464 = vrot.slane %v6462, 3
    %v6465 = vshll.u32 %v6341, 16
    %v6467 = vrot.slane %v6465, 4
    %v6468 = vor.u32 %v6464, %v6467
    %v6469 = vsel %vm256, %v6460, %v6468
    %v6471 = vshrl.u32 %v6342, 16
    %v6473 = vrot.slane %v6471, 3
    %v6474 = vshll.u32 %v6342, 16
    %v6476 = vrot.slane %v6474, 4
    %v6477 = vor.u32 %v6473, %v6476
    %v6478 = vsel %vm256, %v6451, %v6477
    %v6480 = vshrl.u32 %v6343, 16
    %v6482 = vrot.slane %v6480, 3
    %v6483 = vshll.u32 %v6343, 16
    %v6485 = vrot.slane %v6483, 4
    %v6486 = vor.u32 %v6482, %v6485
    %v6487 = vsel %vm256, %v6468, %v6486
    %v6489 = vshrl.u32 %v6344, 16
    %v6491 = vrot.slane %v6489, 3
    %v6492 = vshll.u32 %v6344, 16
    %v6494 = vrot.slane %v6492, 4
    %v6495 = vor.u32 %v6491, %v6494
    %v6496 = vsel %vm256, %v6477, %v6495
    %v6498 = vshrl.u32 %v6345, 16
    %v6500 = vrot.slane %v6498, 3
    %v6501 = vshll.u32 %v6345, 16
    %v6503 = vrot.slane %v6501, 4
    %v6504 = vor.u32 %v6500, %v6503
    %v6505 = vsel %vm256, %v6486, %v6504
    %v6507 = vshrl.u32 %v6346, 16
    %v6509 = vrot.slane %v6507, 3
    %v6510 = vshll.u32 %v6346, 16
    %v6512 = vrot.slane %v6510, 4
    %v6513 = vor.u32 %v6509, %v6512
    %v6514 = vsel %vm256, %v6495, %v6513
    %v6516 = vshrl.u32 %v6347, 16
    %v6518 = vrot.slane %v6516, 3
    %v6519 = vshll.u32 %v6347, 16
    %v6521 = vrot.slane %v6519, 4
    %v6522 = vor.u32 %v6518, %v6521
    %v6523 = vsel %vm256, %v6504, %v6522
    %s6540 = scalar_lea.vmem [#allocation9], 768
    %v6541 = vld [vmem:[%s6540] sm:$0xff]
    %v6542 = vld [vmem:[%s6540 + $0x8] sm:$0xff]
    %v6543 = vld [vmem:[%s6540 + $0x10] sm:$0xff]
    %v6544 = vld [vmem:[%s6540 + $0x18] sm:$0xff]
    %v6545 = vld [vmem:[%s6540 + $0x20] sm:$0xff]
    %v6546 = vld [vmem:[%s6540 + $0x28] sm:$0xff]
    %v6547 = vld [vmem:[%s6540 + $0x30] sm:$0xff]
    %v6548 = vld [vmem:[%s6540 + $0x38] sm:$0xff]
    %v6549 = vld [vmem:[%s6540 + $0x40] sm:$0xff]
    %v6550 = vld [vmem:[%s6540 + $0x48] sm:$0xff]
    %v6551 = vld [vmem:[%s6540 + $0x50] sm:$0xff]
    %v6552 = vld [vmem:[%s6540 + $0x58] sm:$0xff]
    %v6553 = vld [vmem:[%s6540 + $0x60] sm:$0xff]
    %v6554 = vld [vmem:[%s6540 + $0x68] sm:$0xff]
    %v6555 = vld [vmem:[%s6540 + $0x70] sm:$0xff]
    %v6556 = vld [vmem:[%s6540 + $0x78] sm:$0xff]
    %v6557 = vld [vmem:[%s6540 + $0x80] sm:$0xff]
    %v6558 = vld [vmem:[%s6540 + $0x88] sm:$0xff]
    %v6559 = vld [vmem:[%s6540 + $0x90] sm:$0xff]
    %v6560 = vld [vmem:[%s6540 + $0x98] sm:$0xff]
    %v6561 = vld [vmem:[%s6540 + $0xa0] sm:$0xff]
    %v6562 = vld [vmem:[%s6540 + $0xa8] sm:$0xff]
    %v6563 = vld [vmem:[%s6540 + $0xb0] sm:$0xff]
    %v6564 = vld [vmem:[%s6540 + $0xb8] sm:$0xff]
    %v6565 = vld [vmem:[%s6540 + $0xc0] sm:$0xff]
    %v6566 = vld [vmem:[%s6540 + $0xc8] sm:$0xff]
    %v6567 = vld [vmem:[%s6540 + $0xd0] sm:$0xff]
    %v6568 = vld [vmem:[%s6540 + $0xd8] sm:$0xff]
    %v6569 = vld [vmem:[%s6540 + $0xe0] sm:$0xff]
    %v6570 = vld [vmem:[%s6540 + $0xe8] sm:$0xff]
    %v6571 = vld [vmem:[%s6540 + $0xf0] sm:$0xff]
    %v6572 = vld [vmem:[%s6540 + $0xf8] sm:$0xff]
    %v6605 = vunpack.c.l.b16 %v6541
    %v6606 = vunpack.c.h.b16 %v6541
    %v6607 = vunpack.c.l.b16 %v6542
    %v6608 = vunpack.c.h.b16 %v6542
    %v6609 = vunpack.c.l.b16 %v6543
    %v6610 = vunpack.c.h.b16 %v6543
    %v6611 = vunpack.c.l.b16 %v6544
    %v6612 = vunpack.c.h.b16 %v6544
    %v6613 = vunpack.c.l.b16 %v6545
    %v6614 = vunpack.c.h.b16 %v6545
    %v6615 = vunpack.c.l.b16 %v6546
    %v6616 = vunpack.c.h.b16 %v6546
    %v6617 = vunpack.c.l.b16 %v6547
    %v6618 = vunpack.c.h.b16 %v6547
    %v6619 = vunpack.c.l.b16 %v6548
    %v6620 = vunpack.c.h.b16 %v6548
    %v6621 = vunpack.c.l.b16 %v6549
    %v6622 = vunpack.c.h.b16 %v6549
    %v6623 = vunpack.c.l.b16 %v6550
    %v6624 = vunpack.c.h.b16 %v6550
    %v6625 = vunpack.c.l.b16 %v6551
    %v6626 = vunpack.c.h.b16 %v6551
    %v6627 = vunpack.c.l.b16 %v6552
    %v6628 = vunpack.c.h.b16 %v6552
    %v6629 = vunpack.c.l.b16 %v6553
    %v6630 = vunpack.c.h.b16 %v6553
    %v6631 = vunpack.c.l.b16 %v6554
    %v6632 = vunpack.c.h.b16 %v6554
    %v6633 = vunpack.c.l.b16 %v6555
    %v6634 = vunpack.c.h.b16 %v6555
    %v6635 = vunpack.c.l.b16 %v6556
    %v6636 = vunpack.c.h.b16 %v6556
    %v6637 = vunpack.c.l.b16 %v6557
    %v6638 = vunpack.c.h.b16 %v6557
    %v6639 = vunpack.c.l.b16 %v6558
    %v6640 = vunpack.c.h.b16 %v6558
    %v6641 = vunpack.c.l.b16 %v6559
    %v6642 = vunpack.c.h.b16 %v6559
    %v6643 = vunpack.c.l.b16 %v6560
    %v6644 = vunpack.c.h.b16 %v6560
    %v6645 = vunpack.c.l.b16 %v6561
    %v6646 = vunpack.c.h.b16 %v6561
    %v6647 = vunpack.c.l.b16 %v6562
    %v6648 = vunpack.c.h.b16 %v6562
    %v6649 = vunpack.c.l.b16 %v6563
    %v6650 = vunpack.c.h.b16 %v6563
    %v6651 = vunpack.c.l.b16 %v6564
    %v6652 = vunpack.c.h.b16 %v6564
    %v6653 = vunpack.c.l.b16 %v6565
    %v6654 = vunpack.c.h.b16 %v6565
    %v6655 = vunpack.c.l.b16 %v6566
    %v6656 = vunpack.c.h.b16 %v6566
    %v6657 = vunpack.c.l.b16 %v6567
    %v6658 = vunpack.c.h.b16 %v6567
    %v6659 = vunpack.c.l.b16 %v6568
    %v6660 = vunpack.c.h.b16 %v6568
    %v6661 = vunpack.c.l.b16 %v6569
    %v6662 = vunpack.c.h.b16 %v6569
    %v6663 = vunpack.c.l.b16 %v6570
    %v6664 = vunpack.c.h.b16 %v6570
    %v6665 = vunpack.c.l.b16 %v6571
    %v6666 = vunpack.c.h.b16 %v6571
    %v6667 = vunpack.c.l.b16 %v6572
    %v6668 = vunpack.c.h.b16 %v6572
    %v6669 = vpack.c.b16 %v6607, %v6605
    %v6670 = vpack.c.b16 %v6608, %v6606
    %v6671 = vpack.c.b16 %v6611, %v6609
    %v6672 = vpack.c.b16 %v6612, %v6610
    %v6673 = vpack.c.b16 %v6615, %v6613
    %v6674 = vpack.c.b16 %v6616, %v6614
    %v6675 = vpack.c.b16 %v6619, %v6617
    %v6676 = vpack.c.b16 %v6620, %v6618
    %v6677 = vpack.c.b16 %v6623, %v6621
    %v6678 = vpack.c.b16 %v6624, %v6622
    %v6679 = vpack.c.b16 %v6627, %v6625
    %v6680 = vpack.c.b16 %v6628, %v6626
    %v6681 = vpack.c.b16 %v6631, %v6629
    %v6682 = vpack.c.b16 %v6632, %v6630
    %v6683 = vpack.c.b16 %v6635, %v6633
    %v6684 = vpack.c.b16 %v6636, %v6634
    %v6685 = vpack.c.b16 %v6639, %v6637
    %v6686 = vpack.c.b16 %v6640, %v6638
    %v6687 = vpack.c.b16 %v6643, %v6641
    %v6688 = vpack.c.b16 %v6644, %v6642
    %v6689 = vpack.c.b16 %v6647, %v6645
    %v6690 = vpack.c.b16 %v6648, %v6646
    %v6691 = vpack.c.b16 %v6651, %v6649
    %v6692 = vpack.c.b16 %v6652, %v6650
    %v6693 = vpack.c.b16 %v6655, %v6653
    %v6694 = vpack.c.b16 %v6656, %v6654
    %v6695 = vpack.c.b16 %v6659, %v6657
    %v6696 = vpack.c.b16 %v6660, %v6658
    %v6697 = vpack.c.b16 %v6663, %v6661
    %v6698 = vpack.c.b16 %v6664, %v6662
    %v6699 = vpack.c.b16 %v6667, %v6665
    %v6700 = vpack.c.b16 %v6668, %v6666
    %6733 = vmatprep.subr.bf16.mxu0 %v6670
    %6734 = vmatpush1.bf16.msra.mxu0 %v6669
    %6735 = vmatprep.subr.bf16.mxu0 %v6672
    %6736 = vmatpush1.bf16.msra.mxu0 %v6671
    %6737 = vmatprep.subr.bf16.mxu0 %v6674
    %6738 = vmatpush1.bf16.msra.mxu0 %v6673
    %6739 = vmatprep.subr.bf16.mxu0 %v6676
    %6740 = vmatpush1.bf16.msra.mxu0 %v6675
    %6741 = vmatprep.subr.bf16.mxu0 %v6678
    %6742 = vmatpush1.bf16.msra.mxu0 %v6677
    %6743 = vmatprep.subr.bf16.mxu0 %v6680
    %6744 = vmatpush1.bf16.msra.mxu0 %v6679
    %6745 = vmatprep.subr.bf16.mxu0 %v6682
    %6746 = vmatpush1.bf16.msra.mxu0 %v6681
    %6747 = vmatprep.subr.bf16.mxu0 %v6684
    %6748 = vmatpush1.bf16.msra.mxu0 %v6683
    %6749 = vmatprep.subr.bf16.mxu0 %v6686
    %6750 = vmatpush1.bf16.msra.mxu0 %v6685
    %6751 = vmatprep.subr.bf16.mxu0 %v6688
    %6752 = vmatpush1.bf16.msra.mxu0 %v6687
    %6753 = vmatprep.subr.bf16.mxu0 %v6690
    %6754 = vmatpush1.bf16.msra.mxu0 %v6689
    %6755 = vmatprep.subr.bf16.mxu0 %v6692
    %6756 = vmatpush1.bf16.msra.mxu0 %v6691
    %6757 = vmatprep.subr.bf16.mxu0 %v6694
    %6758 = vmatpush1.bf16.msra.mxu0 %v6693
    %6759 = vmatprep.subr.bf16.mxu0 %v6696
    %6760 = vmatpush1.bf16.msra.mxu0 %v6695
    %6761 = vmatprep.subr.bf16.mxu0 %v6698
    %6762 = vmatpush1.bf16.msra.mxu0 %v6697
    %6763 = vmatprep.subr.bf16.mxu0 %v6700
    %6764 = vmatpush1.bf16.msra.mxu0 %v6699
    %6765 = vmatprep.mubr.bf16.mxu0 %v6381
    %6766 = vmatmul.mubr.bf16.gmra.mrb[0].mxu0 %v6364
    %v6767 = vpop.f32.mrb[0].mxu0
    %v6768 = vadd.f32 0.0, %v6767
    %v6769 = vpop.f32.mrb[0].mxu0
    %v6770 = vadd.f32 0.0, %v6769
    %v6771 = vpop.f32.mrb[0].mxu0
    %v6772 = vadd.f32 0.0, %v6771
    %v6773 = vpop.f32.mrb[0].mxu0
    %v6774 = vadd.f32 0.0, %v6773
    %6775 = vmatprep.mubr.bf16.mxu0 %v6399
    %6776 = vmatmul.mubr.bf16.gmra.mrb[0].mxu0 %v6390
    %v6777 = vpop.f32.mrb[0].mxu0
    %v6778 = vadd.f32 0.0, %v6777
    %v6779 = vpop.f32.mrb[0].mxu0
    %v6780 = vadd.f32 0.0, %v6779
    %v6781 = vpop.f32.mrb[0].mxu0
    %v6782 = vadd.f32 0.0, %v6781
    %v6783 = vpop.f32.mrb[0].mxu0
    %v6784 = vadd.f32 0.0, %v6783
    %6785 = vmatprep.mubr.bf16.mxu0 %v6417
    %6786 = vmatmul.mubr.bf16.gmra.mrb[0].mxu0 %v6408
    %v6787 = vpop.f32.mrb[0].mxu0
    %v6788 = vadd.f32 0.0, %v6787
    %v6789 = vpop.f32.mrb[0].mxu0
    %v6790 = vadd.f32 0.0, %v6789
    %v6791 = vpop.f32.mrb[0].mxu0
    %v6792 = vadd.f32 0.0, %v6791
    %v6793 = vpop.f32.mrb[0].mxu0
    %v6794 = vadd.f32 0.0, %v6793
    %6795 = vmatprep.mubr.bf16.mxu0 %v6435
    %6796 = vmatmul.mubr.bf16.gmra.mrb[0].mxu0 %v6426
    %v6797 = vpop.f32.mrb[0].mxu0
    %v6798 = vadd.f32 0.0, %v6797
    %v6799 = vpop.f32.mrb[0].mxu0
    %v6800 = vadd.f32 0.0, %v6799
    %v6801 = vpop.f32.mrb[0].mxu0
    %v6802 = vadd.f32 0.0, %v6801
    %v6803 = vpop.f32.mrb[0].mxu0
    %v6804 = vadd.f32 0.0, %v6803
    %6805 = vmatprep.mubr.bf16.mxu0 %v6469
    %6806 = vmatmul.mubr.bf16.gmra.mrb[0].mxu0 %v6452
    %v6807 = vpop.f32.mrb[0].mxu0
    %v6808 = vadd.f32 0.0, %v6807
    %v6809 = vpop.f32.mrb[0].mxu0
    %v6810 = vadd.f32 0.0, %v6809
    %v6811 = vpop.f32.mrb[0].mxu0
    %v6812 = vadd.f32 0.0, %v6811
    %v6813 = vpop.f32.mrb[0].mxu0
    %v6814 = vadd.f32 0.0, %v6813
    %6815 = vmatprep.mubr.bf16.mxu0 %v6487
    %6816 = vmatmul.mubr.bf16.gmra.mrb[0].mxu0 %v6478
    %v6817 = vpop.f32.mrb[0].mxu0
    %v6818 = vadd.f32 0.0, %v6817
    %v6819 = vpop.f32.mrb[0].mxu0
    %v6820 = vadd.f32 0.0, %v6819
    %v6821 = vpop.f32.mrb[0].mxu0
    %v6822 = vadd.f32 0.0, %v6821
    %v6823 = vpop.f32.mrb[0].mxu0
    %v6824 = vadd.f32 0.0, %v6823
    %6825 = vmatprep.mubr.bf16.mxu0 %v6505
    %6826 = vmatmul.mubr.bf16.gmra.mrb[0].mxu0 %v6496
    %v6827 = vpop.f32.mrb[0].mxu0
    %v6828 = vadd.f32 0.0, %v6827
    %v6829 = vpop.f32.mrb[0].mxu0
    %v6830 = vadd.f32 0.0, %v6829
    %v6831 = vpop.f32.mrb[0].mxu0
    %v6832 = vadd.f32 0.0, %v6831
    %v6833 = vpop.f32.mrb[0].mxu0
    %v6834 = vadd.f32 0.0, %v6833
    %6835 = vmatprep.mubr.bf16.mxu0 %v6523
    %6836 = vmatmul.mubr.bf16.gmra.mrb[0].mxu0 %v6514
    %v6837 = vpop.f32.mrb[0].mxu0
    %v6838 = vadd.f32 0.0, %v6837
    %v6839 = vpop.f32.mrb[0].mxu0
    %v6840 = vadd.f32 0.0, %v6839
    %v6841 = vpop.f32.mrb[0].mxu0
    %v6842 = vadd.f32 0.0, %v6841
    %v6843 = vpop.f32.mrb[0].mxu0
    %v6844 = vadd.f32 0.0, %v6843
    %6845 = vdwg.mxu0
    %v6846 = vadd.f32 %v6280, %v6768
    %v6847 = vadd.f32 %v6281, %v6770
    %v6848 = vadd.f32 %v6282, %v6772
    %v6849 = vadd.f32 %v6283, %v6774
    %v6850 = vadd.f32 %v6284, %v6778
    %v6851 = vadd.f32 %v6285, %v6780
    %v6852 = vadd.f32 %v6286, %v6782
    %v6853 = vadd.f32 %v6287, %v6784
    %v6854 = vadd.f32 %v6288, %v6788
    %v6855 = vadd.f32 %v6289, %v6790
    %v6856 = vadd.f32 %v6290, %v6792
    %v6857 = vadd.f32 %v6291, %v6794
    %v6858 = vadd.f32 %v6292, %v6798
    %v6859 = vadd.f32 %v6293, %v6800
    %v6860 = vadd.f32 %v6294, %v6802
    %v6861 = vadd.f32 %v6295, %v6804
    %v6862 = vadd.f32 %v6296, %v6808
    %v6863 = vadd.f32 %v6297, %v6810
    %v6864 = vadd.f32 %v6298, %v6812
    %v6865 = vadd.f32 %v6299, %v6814
    %v6866 = vadd.f32 %v6300, %v6818
    %v6867 = vadd.f32 %v6301, %v6820
    %v6868 = vadd.f32 %v6302, %v6822
    %v6869 = vadd.f32 %v6303, %v6824
    %v6870 = vadd.f32 %v6304, %v6828
    %v6871 = vadd.f32 %v6305, %v6830
    %v6872 = vadd.f32 %v6306, %v6832
    %v6873 = vadd.f32 %v6307, %v6834
    %v6874 = vadd.f32 %v6308, %v6838
    %v6875 = vadd.f32 %v6309, %v6840
    %v6876 = vadd.f32 %v6310, %v6842
    %v6877 = vadd.f32 %v6311, %v6844
    %v6878 = vld [vmem:[#allocation2 + $0x90] sm:$0xff]
    %v6879 = vld [vmem:[#allocation2 + $0x98] sm:$0xff]
    %v6880 = vld [vmem:[#allocation2 + $0x150] sm:$0xff]
    %v6881 = vld [vmem:[#allocation2 + $0x158] sm:$0xff]
    %v6882 = vpack.c.bf16 %v5742, %v5740
    %v6883 = vpack.c.bf16 %v5743, %v5741
    %v6884 = vpack.c.bf16 %v5746, %v5744
    %v6885 = vpack.c.bf16 %v5747, %v5745
    %v6886 = vpack.c.bf16 %v5750, %v5748
    %v6887 = vpack.c.bf16 %v5751, %v5749
    %v6888 = vpack.c.bf16 %v6878, %v5752
    %v6889 = vpack.c.bf16 %v6879, %v5753
    %v6890 = vpack.c.bf16 %v5760, %v5758
    %v6891 = vpack.c.bf16 %v5761, %v5759
    %v6892 = vpack.c.bf16 %v5764, %v5762
    %v6893 = vpack.c.bf16 %v5765, %v5763
    %v6894 = vpack.c.bf16 %v5768, %v5766
    %v6895 = vpack.c.bf16 %v5769, %v5767
    %v6896 = vpack.c.bf16 %v6880, %v5770
    %v6897 = vpack.c.bf16 %v6881, %v5771
    %s6898 = scalar_lea.vmem [#allocation9], 1024
    %v6899 = vld [vmem:[%s6898] sm:$0xff]
    %v6900 = vld [vmem:[%s6898 + $0x8] sm:$0xff]
    %v6901 = vld [vmem:[%s6898 + $0x10] sm:$0xff]
    %v6902 = vld [vmem:[%s6898 + $0x18] sm:$0xff]
    %v6903 = vld [vmem:[%s6898 + $0x20] sm:$0xff]
    %v6904 = vld [vmem:[%s6898 + $0x28] sm:$0xff]
    %v6905 = vld [vmem:[%s6898 + $0x30] sm:$0xff]
    %v6906 = vld [vmem:[%s6898 + $0x38] sm:$0xff]
    %v6907 = vld [vmem:[%s6898 + $0x40] sm:$0xff]
    %v6908 = vld [vmem:[%s6898 + $0x48] sm:$0xff]
    %v6909 = vld [vmem:[%s6898 + $0x50] sm:$0xff]
    %v6910 = vld [vmem:[%s6898 + $0x58] sm:$0xff]
    %v6911 = vld [vmem:[%s6898 + $0x60] sm:$0xff]
    %v6912 = vld [vmem:[%s6898 + $0x68] sm:$0xff]
    %v6913 = vld [vmem:[%s6898 + $0x70] sm:$0xff]
    %v6914 = vld [vmem:[%s6898 + $0x78] sm:$0xff]
    %v6915 = vld [vmem:[%s6898 + $0x80] sm:$0xff]
    %v6916 = vld [vmem:[%s6898 + $0x88] sm:$0xff]
    %v6917 = vld [vmem:[%s6898 + $0x90] sm:$0xff]
    %v6918 = vld [vmem:[%s6898 + $0x98] sm:$0xff]
    %v6919 = vld [vmem:[%s6898 + $0xa0] sm:$0xff]
    %v6920 = vld [vmem:[%s6898 + $0xa8] sm:$0xff]
    %v6921 = vld [vmem:[%s6898 + $0xb0] sm:$0xff]
    %v6922 = vld [vmem:[%s6898 + $0xb8] sm:$0xff]
    %v6923 = vld [vmem:[%s6898 + $0xc0] sm:$0xff]
    %v6924 = vld [vmem:[%s6898 + $0xc8] sm:$0xff]
    %v6925 = vld [vmem:[%s6898 + $0xd0] sm:$0xff]
    %v6926 = vld [vmem:[%s6898 + $0xd8] sm:$0xff]
    %v6927 = vld [vmem:[%s6898 + $0xe0] sm:$0xff]
    %v6928 = vld [vmem:[%s6898 + $0xe8] sm:$0xff]
    %v6929 = vld [vmem:[%s6898 + $0xf0] sm:$0xff]
    %v6930 = vld [vmem:[%s6898 + $0xf8] sm:$0xff]
    %v6963 = vunpack.c.l.b16 %v6899
    %v6964 = vunpack.c.h.b16 %v6899
    %v6965 = vunpack.c.l.b16 %v6900
    %v6966 = vunpack.c.h.b16 %v6900
    %v6967 = vunpack.c.l.b16 %v6901
    %v6968 = vunpack.c.h.b16 %v6901
    %v6969 = vunpack.c.l.b16 %v6902
    %v6970 = vunpack.c.h.b16 %v6902
    %v6971 = vunpack.c.l.b16 %v6903
    %v6972 = vunpack.c.h.b16 %v6903
    %v6973 = vunpack.c.l.b16 %v6904
    %v6974 = vunpack.c.h.b16 %v6904
    %v6975 = vunpack.c.l.b16 %v6905
    %v6976 = vunpack.c.h.b16 %v6905
    %v6977 = vunpack.c.l.b16 %v6906
    %v6978 = vunpack.c.h.b16 %v6906
    %v6979 = vunpack.c.l.b16 %v6907
    %v6980 = vunpack.c.h.b16 %v6907
    %v6981 = vunpack.c.l.b16 %v6908
    %v6982 = vunpack.c.h.b16 %v6908
    %v6983 = vunpack.c.l.b16 %v6909
    %v6984 = vunpack.c.h.b16 %v6909
    %v6985 = vunpack.c.l.b16 %v6910
    %v6986 = vunpack.c.h.b16 %v6910
    %v6987 = vunpack.c.l.b16 %v6911
    %v6988 = vunpack.c.h.b16 %v6911
    %v6989 = vunpack.c.l.b16 %v6912
    %v6990 = vunpack.c.h.b16 %v6912
    %v6991 = vunpack.c.l.b16 %v6913
    %v6992 = vunpack.c.h.b16 %v6913
    %v6993 = vunpack.c.l.b16 %v6914
    %v6994 = vunpack.c.h.b16 %v6914
    %v6995 = vunpack.c.l.b16 %v6915
    %v6996 = vunpack.c.h.b16 %v6915
    %v6997 = vunpack.c.l.b16 %v6916
    %v6998 = vunpack.c.h.b16 %v6916
    %v6999 = vunpack.c.l.b16 %v6917
    %v7000 = vunpack.c.h.b16 %v6917
    %v7001 = vunpack.c.l.b16 %v6918
    %v7002 = vunpack.c.h.b16 %v6918
    %v7003 = vunpack.c.l.b16 %v6919
    %v7004 = vunpack.c.h.b16 %v6919
    %v7005 = vunpack.c.l.b16 %v6920
    %v7006 = vunpack.c.h.b16 %v6920
    %v7007 = vunpack.c.l.b16 %v6921
    %v7008 = vunpack.c.h.b16 %v6921
    %v7009 = vunpack.c.l.b16 %v6922
    %v7010 = vunpack.c.h.b16 %v6922
    %v7011 = vunpack.c.l.b16 %v6923
    %v7012 = vunpack.c.h.b16 %v6923
    %v7013 = vunpack.c.l.b16 %v6924
    %v7014 = vunpack.c.h.b16 %v6924
    %v7015 = vunpack.c.l.b16 %v6925
    %v7016 = vunpack.c.h.b16 %v6925
    %v7017 = vunpack.c.l.b16 %v6926
    %v7018 = vunpack.c.h.b16 %v6926
    %v7019 = vunpack.c.l.b16 %v6927
    %v7020 = vunpack.c.h.b16 %v6927
    %v7021 = vunpack.c.l.b16 %v6928
    %v7022 = vunpack.c.h.b16 %v6928
    %v7023 = vunpack.c.l.b16 %v6929
    %v7024 = vunpack.c.h.b16 %v6929
    %v7025 = vunpack.c.l.b16 %v6930
    %v7026 = vunpack.c.h.b16 %v6930
    %v7027 = vpack.c.b16 %v6965, %v6963
    %v7028 = vpack.c.b16 %v6966, %v6964
    %v7029 = vpack.c.b16 %v6969, %v6967
    %v7030 = vpack.c.b16 %v6970, %v6968
    %v7031 = vpack.c.b16 %v6973, %v6971
    %v7032 = vpack.c.b16 %v6974, %v6972
    %v7033 = vpack.c.b16 %v6977, %v6975
    %v7034 = vpack.c.b16 %v6978, %v6976
    %v7035 = vpack.c.b16 %v6981, %v6979
    %v7036 = vpack.c.b16 %v6982, %v6980
    %v7037 = vpack.c.b16 %v6985, %v6983
    %v7038 = vpack.c.b16 %v6986, %v6984
    %v7039 = vpack.c.b16 %v6989, %v6987
    %v7040 = vpack.c.b16 %v6990, %v6988
    %v7041 = vpack.c.b16 %v6993, %v6991
    %v7042 = vpack.c.b16 %v6994, %v6992
    %v7043 = vpack.c.b16 %v6997, %v6995
    %v7044 = vpack.c.b16 %v6998, %v6996
    %v7045 = vpack.c.b16 %v7001, %v6999
    %v7046 = vpack.c.b16 %v7002, %v7000
    %v7047 = vpack.c.b16 %v7005, %v7003
    %v7048 = vpack.c.b16 %v7006, %v7004
    %v7049 = vpack.c.b16 %v7009, %v7007
    %v7050 = vpack.c.b16 %v7010, %v7008
    %v7051 = vpack.c.b16 %v7013, %v7011
    %v7052 = vpack.c.b16 %v7014, %v7012
    %v7053 = vpack.c.b16 %v7017, %v7015
    %v7054 = vpack.c.b16 %v7018, %v7016
    %v7055 = vpack.c.b16 %v7021, %v7019
    %v7056 = vpack.c.b16 %v7022, %v7020
    %v7057 = vpack.c.b16 %v7025, %v7023
    %v7058 = vpack.c.b16 %v7026, %v7024
    %7091 = vmatprep.subr.bf16.mxu0 %v7028
    %7092 = vmatpush1.bf16.msra.mxu0 %v7027
    %7093 = vmatprep.subr.bf16.mxu0 %v7030
    %7094 = vmatpush1.bf16.msra.mxu0 %v7029
    %7095 = vmatprep.subr.bf16.mxu0 %v7032
    %7096 = vmatpush1.bf16.msra.mxu0 %v7031
    %7097 = vmatprep.subr.bf16.mxu0 %v7034
    %7098 = vmatpush1.bf16.msra.mxu0 %v7033
    %7099 = vmatprep.subr.bf16.mxu0 %v7036
    %7100 = vmatpush1.bf16.msra.mxu0 %v7035
    %7101 = vmatprep.subr.bf16.mxu0 %v7038
    %7102 = vmatpush1.bf16.msra.mxu0 %v7037
    %7103 = vmatprep.subr.bf16.mxu0 %v7040
    %7104 = vmatpush1.bf16.msra.mxu0 %v7039
    %7105 = vmatprep.subr.bf16.mxu0 %v7042
    %7106 = vmatpush1.bf16.msra.mxu0 %v7041
    %7107 = vmatprep.subr.bf16.mxu0 %v7044
    %7108 = vmatpush1.bf16.msra.mxu0 %v7043
    %7109 = vmatprep.subr.bf16.mxu0 %v7046
    %7110 = vmatpush1.bf16.msra.mxu0 %v7045
    %7111 = vmatprep.subr.bf16.mxu0 %v7048
    %7112 = vmatpush1.bf16.msra.mxu0 %v7047
    %7113 = vmatprep.subr.bf16.mxu0 %v7050
    %7114 = vmatpush1.bf16.msra.mxu0 %v7049
    %7115 = vmatprep.subr.bf16.mxu0 %v7052
    %7116 = vmatpush1.bf16.msra.mxu0 %v7051
    %7117 = vmatprep.subr.bf16.mxu0 %v7054
    %7118 = vmatpush1.bf16.msra.mxu0 %v7053
    %7119 = vmatprep.subr.bf16.mxu0 %v7056
    %7120 = vmatpush1.bf16.msra.mxu0 %v7055
    %7121 = vmatprep.subr.bf16.mxu0 %v7058
    %7122 = vmatpush1.bf16.msra.mxu0 %v7057
    %7123 = vmatprep.mubr.bf16.mxu0 %v6883
    %7124 = vmatmul.mubr.bf16.gmra.mrb[0].mxu0 %v6882
    %v7125 = vpop.f32.mrb[0].mxu0
    %v7126 = vadd.f32 0.0, %v7125
    %v7127 = vpop.f32.mrb[0].mxu0
    %v7128 = vadd.f32 0.0, %v7127
    %v7129 = vpop.f32.mrb[0].mxu0
    %v7130 = vadd.f32 0.0, %v7129
    %v7131 = vpop.f32.mrb[0].mxu0
    %v7132 = vadd.f32 0.0, %v7131
    %7133 = vmatprep.mubr.bf16.mxu0 %v6885
    %7134 = vmatmul.mubr.bf16.gmra.mrb[0].mxu0 %v6884
    %v7135 = vpop.f32.mrb[0].mxu0
    %v7136 = vadd.f32 0.0, %v7135
    %v7137 = vpop.f32.mrb[0].mxu0
    %v7138 = vadd.f32 0.0, %v7137
    %v7139 = vpop.f32.mrb[0].mxu0
    %v7140 = vadd.f32 0.0, %v7139
    %v7141 = vpop.f32.mrb[0].mxu0
    %v7142 = vadd.f32 0.0, %v7141
    %7143 = vmatprep.mubr.bf16.mxu0 %v6887
    %7144 = vmatmul.mubr.bf16.gmra.mrb[0].mxu0 %v6886
    %v7145 = vpop.f32.mrb[0].mxu0
    %v7146 = vadd.f32 0.0, %v7145
    %v7147 = vpop.f32.mrb[0].mxu0
    %v7148 = vadd.f32 0.0, %v7147
    %v7149 = vpop.f32.mrb[0].mxu0
    %v7150 = vadd.f32 0.0, %v7149
    %v7151 = vpop.f32.mrb[0].mxu0
    %v7152 = vadd.f32 0.0, %v7151
    %7153 = vmatprep.mubr.bf16.mxu0 %v6889
    %7154 = vmatmul.mubr.bf16.gmra.mrb[0].mxu0 %v6888
    %v7155 = vpop.f32.mrb[0].mxu0
    %v7156 = vadd.f32 0.0, %v7155
    %v7157 = vpop.f32.mrb[0].mxu0
    %v7158 = vadd.f32 0.0, %v7157
    %v7159 = vpop.f32.mrb[0].mxu0
    %v7160 = vadd.f32 0.0, %v7159
    %v7161 = vpop.f32.mrb[0].mxu0
    %v7162 = vadd.f32 0.0, %v7161
    %7163 = vmatprep.mubr.bf16.mxu0 %v6891
    %7164 = vmatmul.mubr.bf16.gmra.mrb[0].mxu0 %v6890
    %v7165 = vpop.f32.mrb[0].mxu0
    %v7166 = vadd.f32 0.0, %v7165
    %v7167 = vpop.f32.mrb[0].mxu0
    %v7168 = vadd.f32 0.0, %v7167
    %v7169 = vpop.f32.mrb[0].mxu0
    %v7170 = vadd.f32 0.0, %v7169
    %v7171 = vpop.f32.mrb[0].mxu0
    %v7172 = vadd.f32 0.0, %v7171
    %7173 = vmatprep.mubr.bf16.mxu0 %v6893
    %7174 = vmatmul.mubr.bf16.gmra.mrb[0].mxu0 %v6892
    %v7175 = vpop.f32.mrb[0].mxu0
    %v7176 = vadd.f32 0.0, %v7175
    %v7177 = vpop.f32.mrb[0].mxu0
    %v7178 = vadd.f32 0.0, %v7177
    %v7179 = vpop.f32.mrb[0].mxu0
    %v7180 = vadd.f32 0.0, %v7179
    %v7181 = vpop.f32.mrb[0].mxu0
    %v7182 = vadd.f32 0.0, %v7181
    %7183 = vmatprep.mubr.bf16.mxu0 %v6895
    %7184 = vmatmul.mubr.bf16.gmra.mrb[0].mxu0 %v6894
    %v7185 = vpop.f32.mrb[0].mxu0
    %v7186 = vadd.f32 0.0, %v7185
    %v7187 = vpop.f32.mrb[0].mxu0
    %v7188 = vadd.f32 0.0, %v7187
    %v7189 = vpop.f32.mrb[0].mxu0
    %v7190 = vadd.f32 0.0, %v7189
    %v7191 = vpop.f32.mrb[0].mxu0
    %v7192 = vadd.f32 0.0, %v7191
    %7193 = vmatprep.mubr.bf16.mxu0 %v6897
    %7194 = vmatmul.mubr.bf16.gmra.mrb[0].mxu0 %v6896
    %v7195 = vpop.f32.mrb[0].mxu0
    %v7196 = vadd.f32 0.0, %v7195
    %v7197 = vpop.f32.mrb[0].mxu0
    %v7198 = vadd.f32 0.0, %v7197
    %v7199 = vpop.f32.mrb[0].mxu0
    %v7200 = vadd.f32 0.0, %v7199
    %v7201 = vpop.f32.mrb[0].mxu0
    %v7202 = vadd.f32 0.0, %v7201
    %7203 = vdwg.mxu0
    %v7204 = vadd.f32 %v6846, %v7126
    %v7205 = vadd.f32 %v6847, %v7128
    %v7206 = vadd.f32 %v6848, %v7130
    %v7207 = vadd.f32 %v6849, %v7132
    %v7208 = vadd.f32 %v6850, %v7136
    %v7209 = vadd.f32 %v6851, %v7138
    %v7210 = vadd.f32 %v6852, %v7140
    %v7211 = vadd.f32 %v6853, %v7142
    %v7212 = vadd.f32 %v6854, %v7146
    %v7213 = vadd.f32 %v6855, %v7148
    %v7214 = vadd.f32 %v6856, %v7150
    %v7215 = vadd.f32 %v6857, %v7152
    %v7216 = vadd.f32 %v6858, %v7156
    %v7217 = vadd.f32 %v6859, %v7158
    %v7218 = vadd.f32 %v6860, %v7160
    %v7219 = vadd.f32 %v6861, %v7162
    %v7220 = vadd.f32 %v6862, %v7166
    %v7221 = vadd.f32 %v6863, %v7168
    %v7222 = vadd.f32 %v6864, %v7170
    %v7223 = vadd.f32 %v6865, %v7172
    %v7224 = vadd.f32 %v6866, %v7176
    %v7225 = vadd.f32 %v6867, %v7178
    %v7226 = vadd.f32 %v6868, %v7180
    %v7227 = vadd.f32 %v6869, %v7182
    %v7228 = vadd.f32 %v6870, %v7186
    %v7229 = vadd.f32 %v6871, %v7188
    %v7230 = vadd.f32 %v6872, %v7190
    %v7231 = vadd.f32 %v6873, %v7192
    %v7232 = vadd.f32 %v6874, %v7196
    %v7233 = vadd.f32 %v6875, %v7198
    %v7234 = vadd.f32 %v6876, %v7200
    %v7235 = vadd.f32 %v6877, %v7202
    %v7236 = vld [vmem:[#allocation2 + $0x20] sm:$0xfe]
    %v7237 = vld [vmem:[#allocation2 + $0x28] sm:$0xfe]
    %v7238 = vld [vmem:[#allocation2 + $0x30] sm:$0xff]
    %v7239 = vld [vmem:[#allocation2 + $0x38] sm:$0xff]
    %v7240 = vld [vmem:[#allocation2 + $0x40] sm:$0xff]
    %v7241 = vld [vmem:[#allocation2 + $0x48] sm:$0xff]
    %v7242 = vld [vmem:[#allocation2 + $0x50] sm:$0xff]
    %v7243 = vld [vmem:[#allocation2 + $0x58] sm:$0xff]
    %v7244 = vld [vmem:[#allocation2 + $0x60] sm:$0xff]
    %v7245 = vld [vmem:[#allocation2 + $0x68] sm:$0xff]
    %v7246 = vld [vmem:[#allocation2 + $0x70] sm:$0xff]
    %v7247 = vld [vmem:[#allocation2 + $0x78] sm:$0xff]
    %v7248 = vld [vmem:[#allocation2 + $0x80] sm:$0xff]
    %v7249 = vld [vmem:[#allocation2 + $0x88] sm:$0xff]
    %v7250 = vld [vmem:[#allocation2 + $0x90] sm:$0xff]
    %v7251 = vld [vmem:[#allocation2 + $0x98] sm:$0xff]
    %v7252 = vld [vmem:[#allocation2 + $0xa0] sm:$0x1]
    %v7253 = vld [vmem:[#allocation2 + $0xa8] sm:$0x1]
    %v7254 = vld [vmem:[#allocation2 + $0xe0] sm:$0xfe]
    %v7255 = vld [vmem:[#allocation2 + $0xe8] sm:$0xfe]
    %v7256 = vld [vmem:[#allocation2 + $0xf0] sm:$0xff]
    %v7257 = vld [vmem:[#allocation2 + $0xf8] sm:$0xff]
    %v7258 = vld [vmem:[#allocation2 + $0x100] sm:$0xff]
    %v7259 = vld [vmem:[#allocation2 + $0x108] sm:$0xff]
    %v7260 = vld [vmem:[#allocation2 + $0x110] sm:$0xff]
    %v7261 = vld [vmem:[#allocation2 + $0x118] sm:$0xff]
    %v7262 = vld [vmem:[#allocation2 + $0x120] sm:$0xff]
    %v7263 = vld [vmem:[#allocation2 + $0x128] sm:$0xff]
    %v7264 = vld [vmem:[#allocation2 + $0x130] sm:$0xff]
    %v7265 = vld [vmem:[#allocation2 + $0x138] sm:$0xff]
    %v7266 = vld [vmem:[#allocation2 + $0x140] sm:$0xff]
    %v7267 = vld [vmem:[#allocation2 + $0x148] sm:$0xff]
    %v7268 = vld [vmem:[#allocation2 + $0x150] sm:$0xff]
    %v7269 = vld [vmem:[#allocation2 + $0x158] sm:$0xff]
    %v7270 = vld [vmem:[#allocation2 + $0x160] sm:$0x1]
    %v7271 = vld [vmem:[#allocation2 + $0x168] sm:$0x1]
    %v7272 = vpack.c.bf16 %v7238, %v7236
    %v7273 = vpack.c.bf16 %v7239, %v7237
    %v7274 = vpack.c.bf16 %v7242, %v7240
    %v7275 = vpack.c.bf16 %v7243, %v7241
    %v7276 = vpack.c.bf16 %v7246, %v7244
    %v7277 = vpack.c.bf16 %v7247, %v7245
    %v7278 = vpack.c.bf16 %v7250, %v7248
    %v7279 = vpack.c.bf16 %v7251, %v7249
    %v7280 = vpack.c.bf16 %v7252, %v7252
    %v7281 = vpack.c.bf16 %v7253, %v7253
    %v7282 = vpack.c.bf16 %v7256, %v7254
    %v7283 = vpack.c.bf16 %v7257, %v7255
    %v7284 = vpack.c.bf16 %v7260, %v7258
    %v7285 = vpack.c.bf16 %v7261, %v7259
    %v7286 = vpack.c.bf16 %v7264, %v7262
    %v7287 = vpack.c.bf16 %v7265, %v7263
    %v7288 = vpack.c.bf16 %v7268, %v7266
    %v7289 = vpack.c.bf16 %v7269, %v7267
    %v7290 = vpack.c.bf16 %v7270, %v7270
    %v7291 = vpack.c.bf16 %v7271, %v7271
    %v7292 = vsel %vm1149, %v7272, 0
    %v7293 = vsel %vm1149, %v7273, 0
    %v7294 = vsel %vm1150, %v7274, 0
    %v7295 = vsel %vm1150, %v7275, 0
    %v7296 = vsel %vm1150, %v7276, 0
    %v7297 = vsel %vm1150, %v7277, 0
    %v7298 = vsel %vm1150, %v7278, 0
    %v7299 = vsel %vm1150, %v7279, 0
    %v7300 = vsel %vm1151, %v7280, 0
    %v7301 = vsel %vm1151, %v7281, 0
    %v7302 = vsel %vm1149, %v7282, 0
    %v7303 = vsel %vm1149, %v7283, 0
    %v7304 = vsel %vm1150, %v7284, 0
    %v7305 = vsel %vm1150, %v7285, 0
    %v7306 = vsel %vm1150, %v7286, 0
    %v7307 = vsel %vm1150, %v7287, 0
    %v7308 = vsel %vm1150, %v7288, 0
    %v7309 = vsel %vm1150, %v7289, 0
    %v7310 = vsel %vm1151, %v7290, 0
    %v7311 = vsel %vm1151, %v7291, 0
    %v7313 = vshrl.u32 %v7292, 16
    %v7315 = vshll.u32 %v7292, 16
    %v7317 = vrot.slane %v7315, 1
    %v7318 = vor.u32 %v7313, %v7317
    %v7320 = vshll.u32 %v7294, 16
    %v7322 = vrot.slane %v7320, 1
    %v7323 = vsel %vm1172, %v7318, %v7322
    %v7325 = vshrl.u32 %v7293, 16
    %v7327 = vshll.u32 %v7293, 16
    %v7329 = vrot.slane %v7327, 1
    %v7330 = vor.u32 %v7325, %v7329
    %v7332 = vshll.u32 %v7295, 16
    %v7334 = vrot.slane %v7332, 1
    %v7335 = vsel %vm1172, %v7330, %v7334
    %v7336 = vshrl.u32 %v7294, 16
    %v7338 = vor.u32 %v7336, %v7322
    %v7340 = vshll.u32 %v7296, 16
    %v7342 = vrot.slane %v7340, 1
    %v7343 = vsel %vm1172, %v7338, %v7342
    %v7344 = vshrl.u32 %v7295, 16
    %v7346 = vor.u32 %v7344, %v7334
    %v7348 = vshll.u32 %v7297, 16
    %v7350 = vrot.slane %v7348, 1
    %v7351 = vsel %vm1172, %v7346, %v7350
    %v7352 = vshrl.u32 %v7296, 16
    %v7354 = vor.u32 %v7352, %v7342
    %v7356 = vshll.u32 %v7298, 16
    %v7358 = vrot.slane %v7356, 1
    %v7359 = vsel %vm1172, %v7354, %v7358
    %v7360 = vshrl.u32 %v7297, 16
    %v7362 = vor.u32 %v7360, %v7350
    %v7364 = vshll.u32 %v7299, 16
    %v7366 = vrot.slane %v7364, 1
    %v7367 = vsel %vm1172, %v7362, %v7366
    %v7368 = vshrl.u32 %v7298, 16
    %v7370 = vor.u32 %v7368, %v7358
    %v7372 = vshll.u32 %v7300, 16
    %v7374 = vrot.slane %v7372, 1
    %v7375 = vsel %vm1172, %v7370, %v7374
    %v7376 = vshrl.u32 %v7299, 16
    %v7378 = vor.u32 %v7376, %v7366
    %v7380 = vshll.u32 %v7301, 16
    %v7382 = vrot.slane %v7380, 1
    %v7383 = vsel %vm1172, %v7378, %v7382
    %v7385 = vshrl.u32 %v7302, 16
    %v7387 = vshll.u32 %v7302, 16
    %v7389 = vrot.slane %v7387, 1
    %v7390 = vor.u32 %v7385, %v7389
    %v7392 = vshll.u32 %v7304, 16
    %v7394 = vrot.slane %v7392, 1
    %v7395 = vsel %vm1172, %v7390, %v7394
    %v7397 = vshrl.u32 %v7303, 16
    %v7399 = vshll.u32 %v7303, 16
    %v7401 = vrot.slane %v7399, 1
    %v7402 = vor.u32 %v7397, %v7401
    %v7404 = vshll.u32 %v7305, 16
    %v7406 = vrot.slane %v7404, 1
    %v7407 = vsel %vm1172, %v7402, %v7406
    %v7408 = vshrl.u32 %v7304, 16
    %v7410 = vor.u32 %v7408, %v7394
    %v7412 = vshll.u32 %v7306, 16
    %v7414 = vrot.slane %v7412, 1
    %v7415 = vsel %vm1172, %v7410, %v7414
    %v7416 = vshrl.u32 %v7305, 16
    %v7418 = vor.u32 %v7416, %v7406
    %v7420 = vshll.u32 %v7307, 16
    %v7422 = vrot.slane %v7420, 1
    %v7423 = vsel %vm1172, %v7418, %v7422
    %v7424 = vshrl.u32 %v7306, 16
    %v7426 = vor.u32 %v7424, %v7414
    %v7428 = vshll.u32 %v7308, 16
    %v7430 = vrot.slane %v7428, 1
    %v7431 = vsel %vm1172, %v7426, %v7430
    %v7432 = vshrl.u32 %v7307, 16
    %v7434 = vor.u32 %v7432, %v7422
    %v7436 = vshll.u32 %v7309, 16
    %v7438 = vrot.slane %v7436, 1
    %v7439 = vsel %vm1172, %v7434, %v7438
    %v7440 = vshrl.u32 %v7308, 16
    %v7442 = vor.u32 %v7440, %v7430
    %v7444 = vshll.u32 %v7310, 16
    %v7446 = vrot.slane %v7444, 1
    %v7447 = vsel %vm1172, %v7442, %v7446
    %v7448 = vshrl.u32 %v7309, 16
    %v7450 = vor.u32 %v7448, %v7438
    %v7452 = vshll.u32 %v7311, 16
    %v7454 = vrot.slane %v7452, 1
    %v7455 = vsel %vm1172, %v7450, %v7454
    %s7472 = scalar_lea.vmem [#allocation9], 1280
    %v7473 = vld [vmem:[%s7472] sm:$0xff]
    %v7474 = vld [vmem:[%s7472 + $0x8] sm:$0xff]
    %v7475 = vld [vmem:[%s7472 + $0x10] sm:$0xff]
    %v7476 = vld [vmem:[%s7472 + $0x18] sm:$0xff]
    %v7477 = vld [vmem:[%s7472 + $0x20] sm:$0xff]
    %v7478 = vld [vmem:[%s7472 + $0x28] sm:$0xff]
    %v7479 = vld [vmem:[%s7472 + $0x30] sm:$0xff]
    %v7480 = vld [vmem:[%s7472 + $0x38] sm:$0xff]
    %v7481 = vld [vmem:[%s7472 + $0x40] sm:$0xff]
    %v7482 = vld [vmem:[%s7472 + $0x48] sm:$0xff]
    %v7483 = vld [vmem:[%s7472 + $0x50] sm:$0xff]
    %v7484 = vld [vmem:[%s7472 + $0x58] sm:$0xff]
    %v7485 = vld [vmem:[%s7472 + $0x60] sm:$0xff]
    %v7486 = vld [vmem:[%s7472 + $0x68] sm:$0xff]
    %v7487 = vld [vmem:[%s7472 + $0x70] sm:$0xff]
    %v7488 = vld [vmem:[%s7472 + $0x78] sm:$0xff]
    %v7489 = vld [vmem:[%s7472 + $0x80] sm:$0xff]
    %v7490 = vld [vmem:[%s7472 + $0x88] sm:$0xff]
    %v7491 = vld [vmem:[%s7472 + $0x90] sm:$0xff]
    %v7492 = vld [vmem:[%s7472 + $0x98] sm:$0xff]
    %v7493 = vld [vmem:[%s7472 + $0xa0] sm:$0xff]
    %v7494 = vld [vmem:[%s7472 + $0xa8] sm:$0xff]
    %v7495 = vld [vmem:[%s7472 + $0xb0] sm:$0xff]
    %v7496 = vld [vmem:[%s7472 + $0xb8] sm:$0xff]
    %v7497 = vld [vmem:[%s7472 + $0xc0] sm:$0xff]
    %v7498 = vld [vmem:[%s7472 + $0xc8] sm:$0xff]
    %v7499 = vld [vmem:[%s7472 + $0xd0] sm:$0xff]
    %v7500 = vld [vmem:[%s7472 + $0xd8] sm:$0xff]
    %v7501 = vld [vmem:[%s7472 + $0xe0] sm:$0xff]
    %v7502 = vld [vmem:[%s7472 + $0xe8] sm:$0xff]
    %v7503 = vld [vmem:[%s7472 + $0xf0] sm:$0xff]
    %v7504 = vld [vmem:[%s7472 + $0xf8] sm:$0xff]
    %v7537 = vunpack.c.l.b16 %v7473
    %v7538 = vunpack.c.h.b16 %v7473
    %v7539 = vunpack.c.l.b16 %v7474
    %v7540 = vunpack.c.h.b16 %v7474
    %v7541 = vunpack.c.l.b16 %v7475
    %v7542 = vunpack.c.h.b16 %v7475
    %v7543 = vunpack.c.l.b16 %v7476
    %v7544 = vunpack.c.h.b16 %v7476
    %v7545 = vunpack.c.l.b16 %v7477
    %v7546 = vunpack.c.h.b16 %v7477
    %v7547 = vunpack.c.l.b16 %v7478
    %v7548 = vunpack.c.h.b16 %v7478
    %v7549 = vunpack.c.l.b16 %v7479
    %v7550 = vunpack.c.h.b16 %v7479
    %v7551 = vunpack.c.l.b16 %v7480
    %v7552 = vunpack.c.h.b16 %v7480
    %v7553 = vunpack.c.l.b16 %v7481
    %v7554 = vunpack.c.h.b16 %v7481
    %v7555 = vunpack.c.l.b16 %v7482
    %v7556 = vunpack.c.h.b16 %v7482
    %v7557 = vunpack.c.l.b16 %v7483
    %v7558 = vunpack.c.h.b16 %v7483
    %v7559 = vunpack.c.l.b16 %v7484
    %v7560 = vunpack.c.h.b16 %v7484
    %v7561 = vunpack.c.l.b16 %v7485
    %v7562 = vunpack.c.h.b16 %v7485
    %v7563 = vunpack.c.l.b16 %v7486
    %v7564 = vunpack.c.h.b16 %v7486
    %v7565 = vunpack.c.l.b16 %v7487
    %v7566 = vunpack.c.h.b16 %v7487
    %v7567 = vunpack.c.l.b16 %v7488
    %v7568 = vunpack.c.h.b16 %v7488
    %v7569 = vunpack.c.l.b16 %v7489
    %v7570 = vunpack.c.h.b16 %v7489
    %v7571 = vunpack.c.l.b16 %v7490
    %v7572 = vunpack.c.h.b16 %v7490
    %v7573 = vunpack.c.l.b16 %v7491
    %v7574 = vunpack.c.h.b16 %v7491
    %v7575 = vunpack.c.l.b16 %v7492
    %v7576 = vunpack.c.h.b16 %v7492
    %v7577 = vunpack.c.l.b16 %v7493
    %v7578 = vunpack.c.h.b16 %v7493
    %v7579 = vunpack.c.l.b16 %v7494
    %v7580 = vunpack.c.h.b16 %v7494
    %v7581 = vunpack.c.l.b16 %v7495
    %v7582 = vunpack.c.h.b16 %v7495
    %v7583 = vunpack.c.l.b16 %v7496
    %v7584 = vunpack.c.h.b16 %v7496
    %v7585 = vunpack.c.l.b16 %v7497
    %v7586 = vunpack.c.h.b16 %v7497
    %v7587 = vunpack.c.l.b16 %v7498
    %v7588 = vunpack.c.h.b16 %v7498
    %v7589 = vunpack.c.l.b16 %v7499
    %v7590 = vunpack.c.h.b16 %v7499
    %v7591 = vunpack.c.l.b16 %v7500
    %v7592 = vunpack.c.h.b16 %v7500
    %v7593 = vunpack.c.l.b16 %v7501
    %v7594 = vunpack.c.h.b16 %v7501
    %v7595 = vunpack.c.l.b16 %v7502
    %v7596 = vunpack.c.h.b16 %v7502
    %v7597 = vunpack.c.l.b16 %v7503
    %v7598 = vunpack.c.h.b16 %v7503
    %v7599 = vunpack.c.l.b16 %v7504
    %v7600 = vunpack.c.h.b16 %v7504
    %v7601 = vpack.c.b16 %v7539, %v7537
    %v7602 = vpack.c.b16 %v7540, %v7538
    %v7603 = vpack.c.b16 %v7543, %v7541
    %v7604 = vpack.c.b16 %v7544, %v7542
    %v7605 = vpack.c.b16 %v7547, %v7545
    %v7606 = vpack.c.b16 %v7548, %v7546
    %v7607 = vpack.c.b16 %v7551, %v7549
    %v7608 = vpack.c.b16 %v7552, %v7550
    %v7609 = vpack.c.b16 %v7555, %v7553
    %v7610 = vpack.c.b16 %v7556, %v7554
    %v7611 = vpack.c.b16 %v7559, %v7557
    %v7612 = vpack.c.b16 %v7560, %v7558
    %v7613 = vpack.c.b16 %v7563, %v7561
    %v7614 = vpack.c.b16 %v7564, %v7562
    %v7615 = vpack.c.b16 %v7567, %v7565
    %v7616 = vpack.c.b16 %v7568, %v7566
    %v7617 = vpack.c.b16 %v7571, %v7569
    %v7618 = vpack.c.b16 %v7572, %v7570
    %v7619 = vpack.c.b16 %v7575, %v7573
    %v7620 = vpack.c.b16 %v7576, %v7574
    %v7621 = vpack.c.b16 %v7579, %v7577
    %v7622 = vpack.c.b16 %v7580, %v7578
    %v7623 = vpack.c.b16 %v7583, %v7581
    %v7624 = vpack.c.b16 %v7584, %v7582
    %v7625 = vpack.c.b16 %v7587, %v7585
    %v7626 = vpack.c.b16 %v7588, %v7586
    %v7627 = vpack.c.b16 %v7591, %v7589
    %v7628 = vpack.c.b16 %v7592, %v7590
    %v7629 = vpack.c.b16 %v7595, %v7593
    %v7630 = vpack.c.b16 %v7596, %v7594
    %v7631 = vpack.c.b16 %v7599, %v7597
    %v7632 = vpack.c.b16 %v7600, %v7598
    %7665 = vmatprep.subr.bf16.mxu0 %v7602
    %7666 = vmatpush1.bf16.msra.mxu0 %v7601
    %7667 = vmatprep.subr.bf16.mxu0 %v7604
    %7668 = vmatpush1.bf16.msra.mxu0 %v7603
    %7669 = vmatprep.subr.bf16.mxu0 %v7606
    %7670 = vmatpush1.bf16.msra.mxu0 %v7605
    %7671 = vmatprep.subr.bf16.mxu0 %v7608
    %7672 = vmatpush1.bf16.msra.mxu0 %v7607
    %7673 = vmatprep.subr.bf16.mxu0 %v7610
    %7674 = vmatpush1.bf16.msra.mxu0 %v7609
    %7675 = vmatprep.subr.bf16.mxu0 %v7612
    %7676 = vmatpush1.bf16.msra.mxu0 %v7611
    %7677 = vmatprep.subr.bf16.mxu0 %v7614
    %7678 = vmatpush1.bf16.msra.mxu0 %v7613
    %7679 = vmatprep.subr.bf16.mxu0 %v7616
    %7680 = vmatpush1.bf16.msra.mxu0 %v7615
    %7681 = vmatprep.subr.bf16.mxu0 %v7618
    %7682 = vmatpush1.bf16.msra.mxu0 %v7617
    %7683 = vmatprep.subr.bf16.mxu0 %v7620
    %7684 = vmatpush1.bf16.msra.mxu0 %v7619
    %7685 = vmatprep.subr.bf16.mxu0 %v7622
    %7686 = vmatpush1.bf16.msra.mxu0 %v7621
    %7687 = vmatprep.subr.bf16.mxu0 %v7624
    %7688 = vmatpush1.bf16.msra.mxu0 %v7623
    %7689 = vmatprep.subr.bf16.mxu0 %v7626
    %7690 = vmatpush1.bf16.msra.mxu0 %v7625
    %7691 = vmatprep.subr.bf16.mxu0 %v7628
    %7692 = vmatpush1.bf16.msra.mxu0 %v7627
    %7693 = vmatprep.subr.bf16.mxu0 %v7630
    %7694 = vmatpush1.bf16.msra.mxu0 %v7629
    %7695 = vmatprep.subr.bf16.mxu0 %v7632
    %7696 = vmatpush1.bf16.msra.mxu0 %v7631
    %7697 = vmatprep.mubr.bf16.mxu0 %v7335
    %7698 = vmatmul.mubr.bf16.gmra.mrb[0].mxu0 %v7323
    %v7699 = vpop.f32.mrb[0].mxu0
    %v7700 = vadd.f32 0.0, %v7699
    %v7701 = vpop.f32.mrb[0].mxu0
    %v7702 = vadd.f32 0.0, %v7701
    %v7703 = vpop.f32.mrb[0].mxu0
    %v7704 = vadd.f32 0.0, %v7703
    %v7705 = vpop.f32.mrb[0].mxu0
    %v7706 = vadd.f32 0.0, %v7705
    %7707 = vmatprep.mubr.bf16.mxu0 %v7351
    %7708 = vmatmul.mubr.bf16.gmra.mrb[0].mxu0 %v7343
    %v7709 = vpop.f32.mrb[0].mxu0
    %v7710 = vadd.f32 0.0, %v7709
    %v7711 = vpop.f32.mrb[0].mxu0
    %v7712 = vadd.f32 0.0, %v7711
    %v7713 = vpop.f32.mrb[0].mxu0
    %v7714 = vadd.f32 0.0, %v7713
    %v7715 = vpop.f32.mrb[0].mxu0
    %v7716 = vadd.f32 0.0, %v7715
    %7717 = vmatprep.mubr.bf16.mxu0 %v7367
    %7718 = vmatmul.mubr.bf16.gmra.mrb[0].mxu0 %v7359
    %v7719 = vpop.f32.mrb[0].mxu0
    %v7720 = vadd.f32 0.0, %v7719
    %v7721 = vpop.f32.mrb[0].mxu0
    %v7722 = vadd.f32 0.0, %v7721
    %v7723 = vpop.f32.mrb[0].mxu0
    %v7724 = vadd.f32 0.0, %v7723
    %v7725 = vpop.f32.mrb[0].mxu0
    %v7726 = vadd.f32 0.0, %v7725
    %7727 = vmatprep.mubr.bf16.mxu0 %v7383
    %7728 = vmatmul.mubr.bf16.gmra.mrb[0].mxu0 %v7375
    %v7729 = vpop.f32.mrb[0].mxu0
    %v7730 = vadd.f32 0.0, %v7729
    %v7731 = vpop.f32.mrb[0].mxu0
    %v7732 = vadd.f32 0.0, %v7731
    %v7733 = vpop.f32.mrb[0].mxu0
    %v7734 = vadd.f32 0.0, %v7733
    %v7735 = vpop.f32.mrb[0].mxu0
    %v7736 = vadd.f32 0.0, %v7735
    %7737 = vmatprep.mubr.bf16.mxu0 %v7407
    %7738 = vmatmul.mubr.bf16.gmra.mrb[0].mxu0 %v7395
    %v7739 = vpop.f32.mrb[0].mxu0
    %v7740 = vadd.f32 0.0, %v7739
    %v7741 = vpop.f32.mrb[0].mxu0
    %v7742 = vadd.f32 0.0, %v7741
    %v7743 = vpop.f32.mrb[0].mxu0
    %v7744 = vadd.f32 0.0, %v7743
    %v7745 = vpop.f32.mrb[0].mxu0
    %v7746 = vadd.f32 0.0, %v7745
    %7747 = vmatprep.mubr.bf16.mxu0 %v7423
    %7748 = vmatmul.mubr.bf16.gmra.mrb[0].mxu0 %v7415
    %v7749 = vpop.f32.mrb[0].mxu0
    %v7750 = vadd.f32 0.0, %v7749
    %v7751 = vpop.f32.mrb[0].mxu0
    %v7752 = vadd.f32 0.0, %v7751
    %v7753 = vpop.f32.mrb[0].mxu0
    %v7754 = vadd.f32 0.0, %v7753
    %v7755 = vpop.f32.mrb[0].mxu0
    %v7756 = vadd.f32 0.0, %v7755
    %7757 = vmatprep.mubr.bf16.mxu0 %v7439
    %7758 = vmatmul.mubr.bf16.gmra.mrb[0].mxu0 %v7431
    %v7759 = vpop.f32.mrb[0].mxu0
    %v7760 = vadd.f32 0.0, %v7759
    %v7761 = vpop.f32.mrb[0].mxu0
    %v7762 = vadd.f32 0.0, %v7761
    %v7763 = vpop.f32.mrb[0].mxu0
    %v7764 = vadd.f32 0.0, %v7763
    %v7765 = vpop.f32.mrb[0].mxu0
    %v7766 = vadd.f32 0.0, %v7765
    %7767 = vmatprep.mubr.bf16.mxu0 %v7455
    %7768 = vmatmul.mubr.bf16.gmra.mrb[0].mxu0 %v7447
    %v7769 = vpop.f32.mrb[0].mxu0
    %v7770 = vadd.f32 0.0, %v7769
    %v7771 = vpop.f32.mrb[0].mxu0
    %v7772 = vadd.f32 0.0, %v7771
    %v7773 = vpop.f32.mrb[0].mxu0
    %v7774 = vadd.f32 0.0, %v7773
    %v7775 = vpop.f32.mrb[0].mxu0
    %v7776 = vadd.f32 0.0, %v7775
    %7777 = vdwg.mxu0
    %v7778 = vadd.f32 %v7204, %v7700
    %v7779 = vadd.f32 %v7205, %v7702
    %v7780 = vadd.f32 %v7206, %v7704
    %v7781 = vadd.f32 %v7207, %v7706
    %v7782 = vadd.f32 %v7208, %v7710
    %v7783 = vadd.f32 %v7209, %v7712
    %v7784 = vadd.f32 %v7210, %v7714
    %v7785 = vadd.f32 %v7211, %v7716
    %v7786 = vadd.f32 %v7212, %v7720
    %v7787 = vadd.f32 %v7213, %v7722
    %v7788 = vadd.f32 %v7214, %v7724
    %v7789 = vadd.f32 %v7215, %v7726
    %v7790 = vadd.f32 %v7216, %v7730
    %v7791 = vadd.f32 %v7217, %v7732
    %v7792 = vadd.f32 %v7218, %v7734
    %v7793 = vadd.f32 %v7219, %v7736
    %v7794 = vadd.f32 %v7220, %v7740
    %v7795 = vadd.f32 %v7221, %v7742
    %v7796 = vadd.f32 %v7222, %v7744
    %v7797 = vadd.f32 %v7223, %v7746
    %v7798 = vadd.f32 %v7224, %v7750
    %v7799 = vadd.f32 %v7225, %v7752
    %v7800 = vadd.f32 %v7226, %v7754
    %v7801 = vadd.f32 %v7227, %v7756
    %v7802 = vadd.f32 %v7228, %v7760
    %v7803 = vadd.f32 %v7229, %v7762
    %v7804 = vadd.f32 %v7230, %v7764
    %v7805 = vadd.f32 %v7231, %v7766
    %v7806 = vadd.f32 %v7232, %v7770
    %v7807 = vadd.f32 %v7233, %v7772
    %v7808 = vadd.f32 %v7234, %v7774
    %v7809 = vadd.f32 %v7235, %v7776
    %v7810 = vld [vmem:[#allocation2 + $0x20] sm:$0x80]
    %v7811 = vld [vmem:[#allocation2 + $0x28] sm:$0x80]
    %v7812 = vld [vmem:[#allocation2 + $0xa0] sm:$0x7f]
    %v7813 = vld [vmem:[#allocation2 + $0xa8] sm:$0x7f]
    %v7814 = vld [vmem:[#allocation2 + $0xe0] sm:$0x80]
    %v7815 = vld [vmem:[#allocation2 + $0xe8] sm:$0x80]
    %v7816 = vld [vmem:[#allocation2 + $0x160] sm:$0x7f]
    %v7817 = vld [vmem:[#allocation2 + $0x168] sm:$0x7f]
    %v7818 = vpack.c.bf16 %v7238, %v7810
    %v7819 = vpack.c.bf16 %v7239, %v7811
    %v7820 = vpack.c.bf16 %v7812, %v7812
    %v7821 = vpack.c.bf16 %v7813, %v7813
    %v7822 = vpack.c.bf16 %v7256, %v7814
    %v7823 = vpack.c.bf16 %v7257, %v7815
    %v7824 = vpack.c.bf16 %v7816, %v7816
    %v7825 = vpack.c.bf16 %v7817, %v7817
    %v7826 = vsel %vm234, %v7818, 0
    %v7827 = vsel %vm234, %v7819, 0
    %v7828 = vsel %vm235, %v7274, 0
    %v7829 = vsel %vm235, %v7275, 0
    %v7830 = vsel %vm235, %v7276, 0
    %v7831 = vsel %vm235, %v7277, 0
    %v7832 = vsel %vm235, %v7278, 0
    %v7833 = vsel %vm235, %v7279, 0
    %v7834 = vsel %vm234, %v7820, 0
    %v7835 = vsel %vm234, %v7821, 0
    %v7836 = vsel %vm234, %v7822, 0
    %v7837 = vsel %vm234, %v7823, 0
    %v7838 = vsel %vm235, %v7284, 0
    %v7839 = vsel %vm235, %v7285, 0
    %v7840 = vsel %vm235, %v7286, 0
    %v7841 = vsel %vm235, %v7287, 0
    %v7842 = vsel %vm235, %v7288, 0
    %v7843 = vsel %vm235, %v7289, 0
    %v7844 = vsel %vm234, %v7824, 0
    %v7845 = vsel %vm234, %v7825, 0
    %v7847 = vshrl.u32 %v7826, 16
    %v7849 = vrot.slane %v7847, 3
    %v7850 = vshll.u32 %v7826, 16
    %v7852 = vrot.slane %v7850, 4
    %v7853 = vor.u32 %v7849, %v7852
    %v7855 = vshrl.u32 %v7828, 16
    %v7857 = vrot.slane %v7855, 3
    %v7858 = vshll.u32 %v7828, 16
    %v7860 = vrot.slane %v7858, 4
    %v7861 = vor.u32 %v7857, %v7860
    %v7862 = vsel %vm256, %v7853, %v7861
    %v7864 = vshrl.u32 %v7827, 16
    %v7866 = vrot.slane %v7864, 3
    %v7867 = vshll.u32 %v7827, 16
    %v7869 = vrot.slane %v7867, 4
    %v7870 = vor.u32 %v7866, %v7869
    %v7872 = vshrl.u32 %v7829, 16
    %v7874 = vrot.slane %v7872, 3
    %v7875 = vshll.u32 %v7829, 16
    %v7877 = vrot.slane %v7875, 4
    %v7878 = vor.u32 %v7874, %v7877
    %v7879 = vsel %vm256, %v7870, %v7878
    %v7881 = vshrl.u32 %v7830, 16
    %v7883 = vrot.slane %v7881, 3
    %v7884 = vshll.u32 %v7830, 16
    %v7886 = vrot.slane %v7884, 4
    %v7887 = vor.u32 %v7883, %v7886
    %v7888 = vsel %vm256, %v7861, %v7887
    %v7890 = vshrl.u32 %v7831, 16
    %v7892 = vrot.slane %v7890, 3
    %v7893 = vshll.u32 %v7831, 16
    %v7895 = vrot.slane %v7893, 4
    %v7896 = vor.u32 %v7892, %v7895
    %v7897 = vsel %vm256, %v7878, %v7896
    %v7899 = vshrl.u32 %v7832, 16
    %v7901 = vrot.slane %v7899, 3
    %v7902 = vshll.u32 %v7832, 16
    %v7904 = vrot.slane %v7902, 4
    %v7905 = vor.u32 %v7901, %v7904
    %v7906 = vsel %vm256, %v7887, %v7905
    %v7908 = vshrl.u32 %v7833, 16
    %v7910 = vrot.slane %v7908, 3
    %v7911 = vshll.u32 %v7833, 16
    %v7913 = vrot.slane %v7911, 4
    %v7914 = vor.u32 %v7910, %v7913
    %v7915 = vsel %vm256, %v7896, %v7914
    %v7917 = vshrl.u32 %v7834, 16
    %v7919 = vrot.slane %v7917, 3
    %v7920 = vshll.u32 %v7834, 16
    %v7922 = vrot.slane %v7920, 4
    %v7923 = vor.u32 %v7919, %v7922
    %v7924 = vsel %vm256, %v7905, %v7923
    %v7926 = vshrl.u32 %v7835, 16
    %v7928 = vrot.slane %v7926, 3
    %v7929 = vshll.u32 %v7835, 16
    %v7931 = vrot.slane %v7929, 4
    %v7932 = vor.u32 %v7928, %v7931
    %v7933 = vsel %vm256, %v7914, %v7932
    %v7935 = vshrl.u32 %v7836, 16
    %v7937 = vrot.slane %v7935, 3
    %v7938 = vshll.u32 %v7836, 16
    %v7940 = vrot.slane %v7938, 4
    %v7941 = vor.u32 %v7937, %v7940
    %v7943 = vshrl.u32 %v7838, 16
    %v7945 = vrot.slane %v7943, 3
    %v7946 = vshll.u32 %v7838, 16
    %v7948 = vrot.slane %v7946, 4
    %v7949 = vor.u32 %v7945, %v7948
    %v7950 = vsel %vm256, %v7941, %v7949
    %v7952 = vshrl.u32 %v7837, 16
    %v7954 = vrot.slane %v7952, 3
    %v7955 = vshll.u32 %v7837, 16
    %v7957 = vrot.slane %v7955, 4
    %v7958 = vor.u32 %v7954, %v7957
    %v7960 = vshrl.u32 %v7839, 16
    %v7962 = vrot.slane %v7960, 3
    %v7963 = vshll.u32 %v7839, 16
    %v7965 = vrot.slane %v7963, 4
    %v7966 = vor.u32 %v7962, %v7965
    %v7967 = vsel %vm256, %v7958, %v7966
    %v7969 = vshrl.u32 %v7840, 16
    %v7971 = vrot.slane %v7969, 3
    %v7972 = vshll.u32 %v7840, 16
    %v7974 = vrot.slane %v7972, 4
    %v7975 = vor.u32 %v7971, %v7974
    %v7976 = vsel %vm256, %v7949, %v7975
    %v7978 = vshrl.u32 %v7841, 16
    %v7980 = vrot.slane %v7978, 3
    %v7981 = vshll.u32 %v7841, 16
    %v7983 = vrot.slane %v7981, 4
    %v7984 = vor.u32 %v7980, %v7983
    %v7985 = vsel %vm256, %v7966, %v7984
    %v7987 = vshrl.u32 %v7842, 16
    %v7989 = vrot.slane %v7987, 3
    %v7990 = vshll.u32 %v7842, 16
    %v7992 = vrot.slane %v7990, 4
    %v7993 = vor.u32 %v7989, %v7992
    %v7994 = vsel %vm256, %v7975, %v7993
    %v7996 = vshrl.u32 %v7843, 16
    %v7998 = vrot.slane %v7996, 3
    %v7999 = vshll.u32 %v7843, 16
    %v8001 = vrot.slane %v7999, 4
    %v8002 = vor.u32 %v7998, %v8001
    %v8003 = vsel %vm256, %v7984, %v8002
    %v8005 = vshrl.u32 %v7844, 16
    %v8007 = vrot.slane %v8005, 3
    %v8008 = vshll.u32 %v7844, 16
    %v8010 = vrot.slane %v8008, 4
    %v8011 = vor.u32 %v8007, %v8010
    %v8012 = vsel %vm256, %v7993, %v8011
    %v8014 = vshrl.u32 %v7845, 16
    %v8016 = vrot.slane %v8014, 3
    %v8017 = vshll.u32 %v7845, 16
    %v8019 = vrot.slane %v8017, 4
    %v8020 = vor.u32 %v8016, %v8019
    %v8021 = vsel %vm256, %v8002, %v8020
    %s8038 = scalar_lea.vmem [#allocation9], 1536
    %v8039 = vld [vmem:[%s8038] sm:$0xff]
    %v8040 = vld [vmem:[%s8038 + $0x8] sm:$0xff]
    %v8041 = vld [vmem:[%s8038 + $0x10] sm:$0xff]
    %v8042 = vld [vmem:[%s8038 + $0x18] sm:$0xff]
    %v8043 = vld [vmem:[%s8038 + $0x20] sm:$0xff]
    %v8044 = vld [vmem:[%s8038 + $0x28] sm:$0xff]
    %v8045 = vld [vmem:[%s8038 + $0x30] sm:$0xff]
    %v8046 = vld [vmem:[%s8038 + $0x38] sm:$0xff]
    %v8047 = vld [vmem:[%s8038 + $0x40] sm:$0xff]
    %v8048 = vld [vmem:[%s8038 + $0x48] sm:$0xff]
    %v8049 = vld [vmem:[%s8038 + $0x50] sm:$0xff]
    %v8050 = vld [vmem:[%s8038 + $0x58] sm:$0xff]
    %v8051 = vld [vmem:[%s8038 + $0x60] sm:$0xff]
    %v8052 = vld [vmem:[%s8038 + $0x68] sm:$0xff]
    %v8053 = vld [vmem:[%s8038 + $0x70] sm:$0xff]
    %v8054 = vld [vmem:[%s8038 + $0x78] sm:$0xff]
    %v8055 = vld [vmem:[%s8038 + $0x80] sm:$0xff]
    %v8056 = vld [vmem:[%s8038 + $0x88] sm:$0xff]
    %v8057 = vld [vmem:[%s8038 + $0x90] sm:$0xff]
    %v8058 = vld [vmem:[%s8038 + $0x98] sm:$0xff]
    %v8059 = vld [vmem:[%s8038 + $0xa0] sm:$0xff]
    %v8060 = vld [vmem:[%s8038 + $0xa8] sm:$0xff]
    %v8061 = vld [vmem:[%s8038 + $0xb0] sm:$0xff]
    %v8062 = vld [vmem:[%s8038 + $0xb8] sm:$0xff]
    %v8063 = vld [vmem:[%s8038 + $0xc0] sm:$0xff]
    %v8064 = vld [vmem:[%s8038 + $0xc8] sm:$0xff]
    %v8065 = vld [vmem:[%s8038 + $0xd0] sm:$0xff]
    %v8066 = vld [vmem:[%s8038 + $0xd8] sm:$0xff]
    %v8067 = vld [vmem:[%s8038 + $0xe0] sm:$0xff]
    %v8068 = vld [vmem:[%s8038 + $0xe8] sm:$0xff]
    %v8069 = vld [vmem:[%s8038 + $0xf0] sm:$0xff]
    %v8070 = vld [vmem:[%s8038 + $0xf8] sm:$0xff]
    %v8103 = vunpack.c.l.b16 %v8039
    %v8104 = vunpack.c.h.b16 %v8039
    %v8105 = vunpack.c.l.b16 %v8040
    %v8106 = vunpack.c.h.b16 %v8040
    %v8107 = vunpack.c.l.b16 %v8041
    %v8108 = vunpack.c.h.b16 %v8041
    %v8109 = vunpack.c.l.b16 %v8042
    %v8110 = vunpack.c.h.b16 %v8042
    %v8111 = vunpack.c.l.b16 %v8043
    %v8112 = vunpack.c.h.b16 %v8043
    %v8113 = vunpack.c.l.b16 %v8044
    %v8114 = vunpack.c.h.b16 %v8044
    %v8115 = vunpack.c.l.b16 %v8045
    %v8116 = vunpack.c.h.b16 %v8045
    %v8117 = vunpack.c.l.b16 %v8046
    %v8118 = vunpack.c.h.b16 %v8046
    %v8119 = vunpack.c.l.b16 %v8047
    %v8120 = vunpack.c.h.b16 %v8047
    %v8121 = vunpack.c.l.b16 %v8048
    %v8122 = vunpack.c.h.b16 %v8048
    %v8123 = vunpack.c.l.b16 %v8049
    %v8124 = vunpack.c.h.b16 %v8049
    %v8125 = vunpack.c.l.b16 %v8050
    %v8126 = vunpack.c.h.b16 %v8050
    %v8127 = vunpack.c.l.b16 %v8051
    %v8128 = vunpack.c.h.b16 %v8051
    %v8129 = vunpack.c.l.b16 %v8052
    %v8130 = vunpack.c.h.b16 %v8052
    %v8131 = vunpack.c.l.b16 %v8053
    %v8132 = vunpack.c.h.b16 %v8053
    %v8133 = vunpack.c.l.b16 %v8054
    %v8134 = vunpack.c.h.b16 %v8054
    %v8135 = vunpack.c.l.b16 %v8055
    %v8136 = vunpack.c.h.b16 %v8055
    %v8137 = vunpack.c.l.b16 %v8056
    %v8138 = vunpack.c.h.b16 %v8056
    %v8139 = vunpack.c.l.b16 %v8057
    %v8140 = vunpack.c.h.b16 %v8057
    %v8141 = vunpack.c.l.b16 %v8058
    %v8142 = vunpack.c.h.b16 %v8058
    %v8143 = vunpack.c.l.b16 %v8059
    %v8144 = vunpack.c.h.b16 %v8059
    %v8145 = vunpack.c.l.b16 %v8060
    %v8146 = vunpack.c.h.b16 %v8060
    %v8147 = vunpack.c.l.b16 %v8061
    %v8148 = vunpack.c.h.b16 %v8061
    %v8149 = vunpack.c.l.b16 %v8062
    %v8150 = vunpack.c.h.b16 %v8062
    %v8151 = vunpack.c.l.b16 %v8063
    %v8152 = vunpack.c.h.b16 %v8063
    %v8153 = vunpack.c.l.b16 %v8064
    %v8154 = vunpack.c.h.b16 %v8064
    %v8155 = vunpack.c.l.b16 %v8065
    %v8156 = vunpack.c.h.b16 %v8065
    %v8157 = vunpack.c.l.b16 %v8066
    %v8158 = vunpack.c.h.b16 %v8066
    %v8159 = vunpack.c.l.b16 %v8067
    %v8160 = vunpack.c.h.b16 %v8067
    %v8161 = vunpack.c.l.b16 %v8068
    %v8162 = vunpack.c.h.b16 %v8068
    %v8163 = vunpack.c.l.b16 %v8069
    %v8164 = vunpack.c.h.b16 %v8069
    %v8165 = vunpack.c.l.b16 %v8070
    %v8166 = vunpack.c.h.b16 %v8070
    %v8167 = vpack.c.b16 %v8105, %v8103
    %v8168 = vpack.c.b16 %v8106, %v8104
    %v8169 = vpack.c.b16 %v8109, %v8107
    %v8170 = vpack.c.b16 %v8110, %v8108
    %v8171 = vpack.c.b16 %v8113, %v8111
    %v8172 = vpack.c.b16 %v8114, %v8112
    %v8173 = vpack.c.b16 %v8117, %v8115
    %v8174 = vpack.c.b16 %v8118, %v8116
    %v8175 = vpack.c.b16 %v8121, %v8119
    %v8176 = vpack.c.b16 %v8122, %v8120
    %v8177 = vpack.c.b16 %v8125, %v8123
    %v8178 = vpack.c.b16 %v8126, %v8124
    %v8179 = vpack.c.b16 %v8129, %v8127
    %v8180 = vpack.c.b16 %v8130, %v8128
    %v8181 = vpack.c.b16 %v8133, %v8131
    %v8182 = vpack.c.b16 %v8134, %v8132
    %v8183 = vpack.c.b16 %v8137, %v8135
    %v8184 = vpack.c.b16 %v8138, %v8136
    %v8185 = vpack.c.b16 %v8141, %v8139
    %v8186 = vpack.c.b16 %v8142, %v8140
    %v8187 = vpack.c.b16 %v8145, %v8143
    %v8188 = vpack.c.b16 %v8146, %v8144
    %v8189 = vpack.c.b16 %v8149, %v8147
    %v8190 = vpack.c.b16 %v8150, %v8148
    %v8191 = vpack.c.b16 %v8153, %v8151
    %v8192 = vpack.c.b16 %v8154, %v8152
    %v8193 = vpack.c.b16 %v8157, %v8155
    %v8194 = vpack.c.b16 %v8158, %v8156
    %v8195 = vpack.c.b16 %v8161, %v8159
    %v8196 = vpack.c.b16 %v8162, %v8160
    %v8197 = vpack.c.b16 %v8165, %v8163
    %v8198 = vpack.c.b16 %v8166, %v8164
    %8231 = vmatprep.subr.bf16.mxu0 %v8168
    %8232 = vmatpush1.bf16.msra.mxu0 %v8167
    %8233 = vmatprep.subr.bf16.mxu0 %v8170
    %8234 = vmatpush1.bf16.msra.mxu0 %v8169
    %8235 = vmatprep.subr.bf16.mxu0 %v8172
    %8236 = vmatpush1.bf16.msra.mxu0 %v8171
    %8237 = vmatprep.subr.bf16.mxu0 %v8174
    %8238 = vmatpush1.bf16.msra.mxu0 %v8173
    %8239 = vmatprep.subr.bf16.mxu0 %v8176
    %8240 = vmatpush1.bf16.msra.mxu0 %v8175
    %8241 = vmatprep.subr.bf16.mxu0 %v8178
    %8242 = vmatpush1.bf16.msra.mxu0 %v8177
    %8243 = vmatprep.subr.bf16.mxu0 %v8180
    %8244 = vmatpush1.bf16.msra.mxu0 %v8179
    %8245 = vmatprep.subr.bf16.mxu0 %v8182
    %8246 = vmatpush1.bf16.msra.mxu0 %v8181
    %8247 = vmatprep.subr.bf16.mxu0 %v8184
    %8248 = vmatpush1.bf16.msra.mxu0 %v8183
    %8249 = vmatprep.subr.bf16.mxu0 %v8186
    %8250 = vmatpush1.bf16.msra.mxu0 %v8185
    %8251 = vmatprep.subr.bf16.mxu0 %v8188
    %8252 = vmatpush1.bf16.msra.mxu0 %v8187
    %8253 = vmatprep.subr.bf16.mxu0 %v8190
    %8254 = vmatpush1.bf16.msra.mxu0 %v8189
    %8255 = vmatprep.subr.bf16.mxu0 %v8192
    %8256 = vmatpush1.bf16.msra.mxu0 %v8191
    %8257 = vmatprep.subr.bf16.mxu0 %v8194
    %8258 = vmatpush1.bf16.msra.mxu0 %v8193
    %8259 = vmatprep.subr.bf16.mxu0 %v8196
    %8260 = vmatpush1.bf16.msra.mxu0 %v8195
    %8261 = vmatprep.subr.bf16.mxu0 %v8198
    %8262 = vmatpush1.bf16.msra.mxu0 %v8197
    %8263 = vmatprep.mubr.bf16.mxu0 %v7879
    %8264 = vmatmul.mubr.bf16.gmra.mrb[0].mxu0 %v7862
    %v8265 = vpop.f32.mrb[0].mxu0
    %v8266 = vadd.f32 0.0, %v8265
    %v8267 = vpop.f32.mrb[0].mxu0
    %v8268 = vadd.f32 0.0, %v8267
    %v8269 = vpop.f32.mrb[0].mxu0
    %v8270 = vadd.f32 0.0, %v8269
    %v8271 = vpop.f32.mrb[0].mxu0
    %v8272 = vadd.f32 0.0, %v8271
    %8273 = vmatprep.mubr.bf16.mxu0 %v7897
    %8274 = vmatmul.mubr.bf16.gmra.mrb[0].mxu0 %v7888
    %v8275 = vpop.f32.mrb[0].mxu0
    %v8276 = vadd.f32 0.0, %v8275
    %v8277 = vpop.f32.mrb[0].mxu0
    %v8278 = vadd.f32 0.0, %v8277
    %v8279 = vpop.f32.mrb[0].mxu0
    %v8280 = vadd.f32 0.0, %v8279
    %v8281 = vpop.f32.mrb[0].mxu0
    %v8282 = vadd.f32 0.0, %v8281
    %8283 = vmatprep.mubr.bf16.mxu0 %v7915
    %8284 = vmatmul.mubr.bf16.gmra.mrb[0].mxu0 %v7906
    %v8285 = vpop.f32.mrb[0].mxu0
    %v8286 = vadd.f32 0.0, %v8285
    %v8287 = vpop.f32.mrb[0].mxu0
    %v8288 = vadd.f32 0.0, %v8287
    %v8289 = vpop.f32.mrb[0].mxu0
    %v8290 = vadd.f32 0.0, %v8289
    %v8291 = vpop.f32.mrb[0].mxu0
    %v8292 = vadd.f32 0.0, %v8291
    %8293 = vmatprep.mubr.bf16.mxu0 %v7933
    %8294 = vmatmul.mubr.bf16.gmra.mrb[0].mxu0 %v7924
    %v8295 = vpop.f32.mrb[0].mxu0
    %v8296 = vadd.f32 0.0, %v8295
    %v8297 = vpop.f32.mrb[0].mxu0
    %v8298 = vadd.f32 0.0, %v8297
    %v8299 = vpop.f32.mrb[0].mxu0
    %v8300 = vadd.f32 0.0, %v8299
    %v8301 = vpop.f32.mrb[0].mxu0
    %v8302 = vadd.f32 0.0, %v8301
    %8303 = vmatprep.mubr.bf16.mxu0 %v7967
    %8304 = vmatmul.mubr.bf16.gmra.mrb[0].mxu0 %v7950
    %v8305 = vpop.f32.mrb[0].mxu0
    %v8306 = vadd.f32 0.0, %v8305
    %v8307 = vpop.f32.mrb[0].mxu0
    %v8308 = vadd.f32 0.0, %v8307
    %v8309 = vpop.f32.mrb[0].mxu0
    %v8310 = vadd.f32 0.0, %v8309
    %v8311 = vpop.f32.mrb[0].mxu0
    %v8312 = vadd.f32 0.0, %v8311
    %8313 = vmatprep.mubr.bf16.mxu0 %v7985
    %8314 = vmatmul.mubr.bf16.gmra.mrb[0].mxu0 %v7976
    %v8315 = vpop.f32.mrb[0].mxu0
    %v8316 = vadd.f32 0.0, %v8315
    %v8317 = vpop.f32.mrb[0].mxu0
    %v8318 = vadd.f32 0.0, %v8317
    %v8319 = vpop.f32.mrb[0].mxu0
    %v8320 = vadd.f32 0.0, %v8319
    %v8321 = vpop.f32.mrb[0].mxu0
    %v8322 = vadd.f32 0.0, %v8321
    %8323 = vmatprep.mubr.bf16.mxu0 %v8003
    %8324 = vmatmul.mubr.bf16.gmra.mrb[0].mxu0 %v7994
    %v8325 = vpop.f32.mrb[0].mxu0
    %v8326 = vadd.f32 0.0, %v8325
    %v8327 = vpop.f32.mrb[0].mxu0
    %v8328 = vadd.f32 0.0, %v8327
    %v8329 = vpop.f32.mrb[0].mxu0
    %v8330 = vadd.f32 0.0, %v8329
    %v8331 = vpop.f32.mrb[0].mxu0
    %v8332 = vadd.f32 0.0, %v8331
    %8333 = vmatprep.mubr.bf16.mxu0 %v8021
    %8334 = vmatmul.mubr.bf16.gmra.mrb[0].mxu0 %v8012
    %v8335 = vpop.f32.mrb[0].mxu0
    %v8336 = vadd.f32 0.0, %v8335
    %v8337 = vpop.f32.mrb[0].mxu0
    %v8338 = vadd.f32 0.0, %v8337
    %v8339 = vpop.f32.mrb[0].mxu0
    %v8340 = vadd.f32 0.0, %v8339
    %v8341 = vpop.f32.mrb[0].mxu0
    %v8342 = vadd.f32 0.0, %v8341
    %8343 = vdwg.mxu0
    %v8344 = vadd.f32 %v7778, %v8266
    %v8345 = vadd.f32 %v7779, %v8268
    %v8346 = vadd.f32 %v7780, %v8270
    %v8347 = vadd.f32 %v7781, %v8272
    %v8348 = vadd.f32 %v7782, %v8276
    %v8349 = vadd.f32 %v7783, %v8278
    %v8350 = vadd.f32 %v7784, %v8280
    %v8351 = vadd.f32 %v7785, %v8282
    %v8352 = vadd.f32 %v7786, %v8286
    %v8353 = vadd.f32 %v7787, %v8288
    %v8354 = vadd.f32 %v7788, %v8290
    %v8355 = vadd.f32 %v7789, %v8292
    %v8356 = vadd.f32 %v7790, %v8296
    %v8357 = vadd.f32 %v7791, %v8298
    %v8358 = vadd.f32 %v7792, %v8300
    %v8359 = vadd.f32 %v7793, %v8302
    %v8360 = vadd.f32 %v7794, %v8306
    %v8361 = vadd.f32 %v7795, %v8308
    %v8362 = vadd.f32 %v7796, %v8310
    %v8363 = vadd.f32 %v7797, %v8312
    %v8364 = vadd.f32 %v7798, %v8316
    %v8365 = vadd.f32 %v7799, %v8318
    %v8366 = vadd.f32 %v7800, %v8320
    %v8367 = vadd.f32 %v7801, %v8322
    %v8368 = vadd.f32 %v7802, %v8326
    %v8369 = vadd.f32 %v7803, %v8328
    %v8370 = vadd.f32 %v7804, %v8330
    %v8371 = vadd.f32 %v7805, %v8332
    %v8372 = vadd.f32 %v7806, %v8336
    %v8373 = vadd.f32 %v7807, %v8338
    %v8374 = vadd.f32 %v7808, %v8340
    %v8375 = vadd.f32 %v7809, %v8342
    %v8376 = vld [vmem:[#allocation2 + $0xa0] sm:$0xff]
    %v8377 = vld [vmem:[#allocation2 + $0xa8] sm:$0xff]
    %v8378 = vld [vmem:[#allocation2 + $0x160] sm:$0xff]
    %v8379 = vld [vmem:[#allocation2 + $0x168] sm:$0xff]
    %v8380 = vpack.c.bf16 %v7240, %v7238
    %v8381 = vpack.c.bf16 %v7241, %v7239
    %v8382 = vpack.c.bf16 %v7244, %v7242
    %v8383 = vpack.c.bf16 %v7245, %v7243
    %v8384 = vpack.c.bf16 %v7248, %v7246
    %v8385 = vpack.c.bf16 %v7249, %v7247
    %v8386 = vpack.c.bf16 %v8376, %v7250
    %v8387 = vpack.c.bf16 %v8377, %v7251
    %v8388 = vpack.c.bf16 %v7258, %v7256
    %v8389 = vpack.c.bf16 %v7259, %v7257
    %v8390 = vpack.c.bf16 %v7262, %v7260
    %v8391 = vpack.c.bf16 %v7263, %v7261
    %v8392 = vpack.c.bf16 %v7266, %v7264
    %v8393 = vpack.c.bf16 %v7267, %v7265
    %v8394 = vpack.c.bf16 %v8378, %v7268
    %v8395 = vpack.c.bf16 %v8379, %v7269
    %s8396 = scalar_lea.vmem [#allocation9], 1792
    %v8397 = vld [vmem:[%s8396] sm:$0xff]
    %v8398 = vld [vmem:[%s8396 + $0x8] sm:$0xff]
    %v8399 = vld [vmem:[%s8396 + $0x10] sm:$0xff]
    %v8400 = vld [vmem:[%s8396 + $0x18] sm:$0xff]
    %v8401 = vld [vmem:[%s8396 + $0x20] sm:$0xff]
    %v8402 = vld [vmem:[%s8396 + $0x28] sm:$0xff]
    %v8403 = vld [vmem:[%s8396 + $0x30] sm:$0xff]
    %v8404 = vld [vmem:[%s8396 + $0x38] sm:$0xff]
    %v8405 = vld [vmem:[%s8396 + $0x40] sm:$0xff]
    %v8406 = vld [vmem:[%s8396 + $0x48] sm:$0xff]
    %v8407 = vld [vmem:[%s8396 + $0x50] sm:$0xff]
    %v8408 = vld [vmem:[%s8396 + $0x58] sm:$0xff]
    %v8409 = vld [vmem:[%s8396 + $0x60] sm:$0xff]
    %v8410 = vld [vmem:[%s8396 + $0x68] sm:$0xff]
    %v8411 = vld [vmem:[%s8396 + $0x70] sm:$0xff]
    %v8412 = vld [vmem:[%s8396 + $0x78] sm:$0xff]
    %v8413 = vld [vmem:[%s8396 + $0x80] sm:$0xff]
    %v8414 = vld [vmem:[%s8396 + $0x88] sm:$0xff]
    %v8415 = vld [vmem:[%s8396 + $0x90] sm:$0xff]
    %v8416 = vld [vmem:[%s8396 + $0x98] sm:$0xff]
    %v8417 = vld [vmem:[%s8396 + $0xa0] sm:$0xff]
    %v8418 = vld [vmem:[%s8396 + $0xa8] sm:$0xff]
    %v8419 = vld [vmem:[%s8396 + $0xb0] sm:$0xff]
    %v8420 = vld [vmem:[%s8396 + $0xb8] sm:$0xff]
    %v8421 = vld [vmem:[%s8396 + $0xc0] sm:$0xff]
    %v8422 = vld [vmem:[%s8396 + $0xc8] sm:$0xff]
    %v8423 = vld [vmem:[%s8396 + $0xd0] sm:$0xff]
    %v8424 = vld [vmem:[%s8396 + $0xd8] sm:$0xff]
    %v8425 = vld [vmem:[%s8396 + $0xe0] sm:$0xff]
    %v8426 = vld [vmem:[%s8396 + $0xe8] sm:$0xff]
    %v8427 = vld [vmem:[%s8396 + $0xf0] sm:$0xff]
    %v8428 = vld [vmem:[%s8396 + $0xf8] sm:$0xff]
    %v8461 = vunpack.c.l.b16 %v8397
    %v8462 = vunpack.c.h.b16 %v8397
    %v8463 = vunpack.c.l.b16 %v8398
    %v8464 = vunpack.c.h.b16 %v8398
    %v8465 = vunpack.c.l.b16 %v8399
    %v8466 = vunpack.c.h.b16 %v8399
    %v8467 = vunpack.c.l.b16 %v8400
    %v8468 = vunpack.c.h.b16 %v8400
    %v8469 = vunpack.c.l.b16 %v8401
    %v8470 = vunpack.c.h.b16 %v8401
    %v8471 = vunpack.c.l.b16 %v8402
    %v8472 = vunpack.c.h.b16 %v8402
    %v8473 = vunpack.c.l.b16 %v8403
    %v8474 = vunpack.c.h.b16 %v8403
    %v8475 = vunpack.c.l.b16 %v8404
    %v8476 = vunpack.c.h.b16 %v8404
    %v8477 = vunpack.c.l.b16 %v8405
    %v8478 = vunpack.c.h.b16 %v8405
    %v8479 = vunpack.c.l.b16 %v8406
    %v8480 = vunpack.c.h.b16 %v8406
    %v8481 = vunpack.c.l.b16 %v8407
    %v8482 = vunpack.c.h.b16 %v8407
    %v8483 = vunpack.c.l.b16 %v8408
    %v8484 = vunpack.c.h.b16 %v8408
    %v8485 = vunpack.c.l.b16 %v8409
    %v8486 = vunpack.c.h.b16 %v8409
    %v8487 = vunpack.c.l.b16 %v8410
    %v8488 = vunpack.c.h.b16 %v8410
    %v8489 = vunpack.c.l.b16 %v8411
    %v8490 = vunpack.c.h.b16 %v8411
    %v8491 = vunpack.c.l.b16 %v8412
    %v8492 = vunpack.c.h.b16 %v8412
    %v8493 = vunpack.c.l.b16 %v8413
    %v8494 = vunpack.c.h.b16 %v8413
    %v8495 = vunpack.c.l.b16 %v8414
    %v8496 = vunpack.c.h.b16 %v8414
    %v8497 = vunpack.c.l.b16 %v8415
    %v8498 = vunpack.c.h.b16 %v8415
    %v8499 = vunpack.c.l.b16 %v8416
    %v8500 = vunpack.c.h.b16 %v8416
    %v8501 = vunpack.c.l.b16 %v8417
    %v8502 = vunpack.c.h.b16 %v8417
    %v8503 = vunpack.c.l.b16 %v8418
    %v8504 = vunpack.c.h.b16 %v8418
    %v8505 = vunpack.c.l.b16 %v8419
    %v8506 = vunpack.c.h.b16 %v8419
    %v8507 = vunpack.c.l.b16 %v8420
    %v8508 = vunpack.c.h.b16 %v8420
    %v8509 = vunpack.c.l.b16 %v8421
    %v8510 = vunpack.c.h.b16 %v8421
    %v8511 = vunpack.c.l.b16 %v8422
    %v8512 = vunpack.c.h.b16 %v8422
    %v8513 = vunpack.c.l.b16 %v8423
    %v8514 = vunpack.c.h.b16 %v8423
    %v8515 = vunpack.c.l.b16 %v8424
    %v8516 = vunpack.c.h.b16 %v8424
    %v8517 = vunpack.c.l.b16 %v8425
    %v8518 = vunpack.c.h.b16 %v8425
    %v8519 = vunpack.c.l.b16 %v8426
    %v8520 = vunpack.c.h.b16 %v8426
    %v8521 = vunpack.c.l.b16 %v8427
    %v8522 = vunpack.c.h.b16 %v8427
    %v8523 = vunpack.c.l.b16 %v8428
    %v8524 = vunpack.c.h.b16 %v8428
    %v8525 = vpack.c.b16 %v8463, %v8461
    %v8526 = vpack.c.b16 %v8464, %v8462
    %v8527 = vpack.c.b16 %v8467, %v8465
    %v8528 = vpack.c.b16 %v8468, %v8466
    %v8529 = vpack.c.b16 %v8471, %v8469
    %v8530 = vpack.c.b16 %v8472, %v8470
    %v8531 = vpack.c.b16 %v8475, %v8473
    %v8532 = vpack.c.b16 %v8476, %v8474
    %v8533 = vpack.c.b16 %v8479, %v8477
    %v8534 = vpack.c.b16 %v8480, %v8478
    %v8535 = vpack.c.b16 %v8483, %v8481
    %v8536 = vpack.c.b16 %v8484, %v8482
    %v8537 = vpack.c.b16 %v8487, %v8485
    %v8538 = vpack.c.b16 %v8488, %v8486
    %v8539 = vpack.c.b16 %v8491, %v8489
    %v8540 = vpack.c.b16 %v8492, %v8490
    %v8541 = vpack.c.b16 %v8495, %v8493
    %v8542 = vpack.c.b16 %v8496, %v8494
    %v8543 = vpack.c.b16 %v8499, %v8497
    %v8544 = vpack.c.b16 %v8500, %v8498
    %v8545 = vpack.c.b16 %v8503, %v8501
    %v8546 = vpack.c.b16 %v8504, %v8502
    %v8547 = vpack.c.b16 %v8507, %v8505
    %v8548 = vpack.c.b16 %v8508, %v8506
    %v8549 = vpack.c.b16 %v8511, %v8509
    %v8550 = vpack.c.b16 %v8512, %v8510
    %v8551 = vpack.c.b16 %v8515, %v8513
    %v8552 = vpack.c.b16 %v8516, %v8514
    %v8553 = vpack.c.b16 %v8519, %v8517
    %v8554 = vpack.c.b16 %v8520, %v8518
    %v8555 = vpack.c.b16 %v8523, %v8521
    %v8556 = vpack.c.b16 %v8524, %v8522
    %8589 = vmatprep.subr.bf16.mxu0 %v8526
    %8590 = vmatpush1.bf16.msra.mxu0 %v8525
    %8591 = vmatprep.subr.bf16.mxu0 %v8528
    %8592 = vmatpush1.bf16.msra.mxu0 %v8527
    %8593 = vmatprep.subr.bf16.mxu0 %v8530
    %8594 = vmatpush1.bf16.msra.mxu0 %v8529
    %8595 = vmatprep.subr.bf16.mxu0 %v8532
    %8596 = vmatpush1.bf16.msra.mxu0 %v8531
    %8597 = vmatprep.subr.bf16.mxu0 %v8534
    %8598 = vmatpush1.bf16.msra.mxu0 %v8533
    %8599 = vmatprep.subr.bf16.mxu0 %v8536
    %8600 = vmatpush1.bf16.msra.mxu0 %v8535
    %8601 = vmatprep.subr.bf16.mxu0 %v8538
    %8602 = vmatpush1.bf16.msra.mxu0 %v8537
    %8603 = vmatprep.subr.bf16.mxu0 %v8540
    %8604 = vmatpush1.bf16.msra.mxu0 %v8539
    %8605 = vmatprep.subr.bf16.mxu0 %v8542
    %8606 = vmatpush1.bf16.msra.mxu0 %v8541
    %8607 = vmatprep.subr.bf16.mxu0 %v8544
    %8608 = vmatpush1.bf16.msra.mxu0 %v8543
    %8609 = vmatprep.subr.bf16.mxu0 %v8546
    %8610 = vmatpush1.bf16.msra.mxu0 %v8545
    %8611 = vmatprep.subr.bf16.mxu0 %v8548
    %8612 = vmatpush1.bf16.msra.mxu0 %v8547
    %8613 = vmatprep.subr.bf16.mxu0 %v8550
    %8614 = vmatpush1.bf16.msra.mxu0 %v8549
    %8615 = vmatprep.subr.bf16.mxu0 %v8552
    %8616 = vmatpush1.bf16.msra.mxu0 %v8551
    %8617 = vmatprep.subr.bf16.mxu0 %v8554
    %8618 = vmatpush1.bf16.msra.mxu0 %v8553
    %8619 = vmatprep.subr.bf16.mxu0 %v8556
    %8620 = vmatpush1.bf16.msra.mxu0 %v8555
    %8621 = vmatprep.mubr.bf16.mxu0 %v8381
    %8622 = vmatmul.mubr.bf16.gmra.mrb[0].mxu0 %v8380
    %v8623 = vpop.f32.mrb[0].mxu0
    %v8624 = vadd.f32 0.0, %v8623
    %v8625 = vpop.f32.mrb[0].mxu0
    %v8626 = vadd.f32 0.0, %v8625
    %v8627 = vpop.f32.mrb[0].mxu0
    %v8628 = vadd.f32 0.0, %v8627
    %v8629 = vpop.f32.mrb[0].mxu0
    %v8630 = vadd.f32 0.0, %v8629
    %8631 = vmatprep.mubr.bf16.mxu0 %v8383
    %8632 = vmatmul.mubr.bf16.gmra.mrb[0].mxu0 %v8382
    %v8633 = vpop.f32.mrb[0].mxu0
    %v8634 = vadd.f32 0.0, %v8633
    %v8635 = vpop.f32.mrb[0].mxu0
    %v8636 = vadd.f32 0.0, %v8635
    %v8637 = vpop.f32.mrb[0].mxu0
    %v8638 = vadd.f32 0.0, %v8637
    %v8639 = vpop.f32.mrb[0].mxu0
    %v8640 = vadd.f32 0.0, %v8639
    %8641 = vmatprep.mubr.bf16.mxu0 %v8385
    %8642 = vmatmul.mubr.bf16.gmra.mrb[0].mxu0 %v8384
    %v8643 = vpop.f32.mrb[0].mxu0
    %v8644 = vadd.f32 0.0, %v8643
    %v8645 = vpop.f32.mrb[0].mxu0
    %v8646 = vadd.f32 0.0, %v8645
    %v8647 = vpop.f32.mrb[0].mxu0
    %v8648 = vadd.f32 0.0, %v8647
    %v8649 = vpop.f32.mrb[0].mxu0
    %v8650 = vadd.f32 0.0, %v8649
    %8651 = vmatprep.mubr.bf16.mxu0 %v8387
    %8652 = vmatmul.mubr.bf16.gmra.mrb[0].mxu0 %v8386
    %v8653 = vpop.f32.mrb[0].mxu0
    %v8654 = vadd.f32 0.0, %v8653
    %v8655 = vpop.f32.mrb[0].mxu0
    %v8656 = vadd.f32 0.0, %v8655
    %v8657 = vpop.f32.mrb[0].mxu0
    %v8658 = vadd.f32 0.0, %v8657
    %v8659 = vpop.f32.mrb[0].mxu0
    %v8660 = vadd.f32 0.0, %v8659
    %8661 = vmatprep.mubr.bf16.mxu0 %v8389
    %8662 = vmatmul.mubr.bf16.gmra.mrb[0].mxu0 %v8388
    %v8663 = vpop.f32.mrb[0].mxu0
    %v8664 = vadd.f32 0.0, %v8663
    %v8665 = vpop.f32.mrb[0].mxu0
    %v8666 = vadd.f32 0.0, %v8665
    %v8667 = vpop.f32.mrb[0].mxu0
    %v8668 = vadd.f32 0.0, %v8667
    %v8669 = vpop.f32.mrb[0].mxu0
    %v8670 = vadd.f32 0.0, %v8669
    %8671 = vmatprep.mubr.bf16.mxu0 %v8391
    %8672 = vmatmul.mubr.bf16.gmra.mrb[0].mxu0 %v8390
    %v8673 = vpop.f32.mrb[0].mxu0
    %v8674 = vadd.f32 0.0, %v8673
    %v8675 = vpop.f32.mrb[0].mxu0
    %v8676 = vadd.f32 0.0, %v8675
    %v8677 = vpop.f32.mrb[0].mxu0
    %v8678 = vadd.f32 0.0, %v8677
    %v8679 = vpop.f32.mrb[0].mxu0
    %v8680 = vadd.f32 0.0, %v8679
    %8681 = vmatprep.mubr.bf16.mxu0 %v8393
    %8682 = vmatmul.mubr.bf16.gmra.mrb[0].mxu0 %v8392
    %v8683 = vpop.f32.mrb[0].mxu0
    %v8684 = vadd.f32 0.0, %v8683
    %v8685 = vpop.f32.mrb[0].mxu0
    %v8686 = vadd.f32 0.0, %v8685
    %v8687 = vpop.f32.mrb[0].mxu0
    %v8688 = vadd.f32 0.0, %v8687
    %v8689 = vpop.f32.mrb[0].mxu0
    %v8690 = vadd.f32 0.0, %v8689
    %8691 = vmatprep.mubr.bf16.mxu0 %v8395
    %8692 = vmatmul.mubr.bf16.gmra.mrb[0].mxu0 %v8394
    %v8693 = vpop.f32.mrb[0].mxu0
    %v8694 = vadd.f32 0.0, %v8693
    %v8695 = vpop.f32.mrb[0].mxu0
    %v8696 = vadd.f32 0.0, %v8695
    %v8697 = vpop.f32.mrb[0].mxu0
    %v8698 = vadd.f32 0.0, %v8697
    %v8699 = vpop.f32.mrb[0].mxu0
    %v8700 = vadd.f32 0.0, %v8699
    %8701 = vdwg.mxu0
    %v8702 = vadd.f32 %v8344, %v8624
    %v8703 = vadd.f32 %v8345, %v8626
    %v8704 = vadd.f32 %v8346, %v8628
    %v8705 = vadd.f32 %v8347, %v8630
    %v8706 = vadd.f32 %v8348, %v8634
    %v8707 = vadd.f32 %v8349, %v8636
    %v8708 = vadd.f32 %v8350, %v8638
    %v8709 = vadd.f32 %v8351, %v8640
    %v8710 = vadd.f32 %v8352, %v8644
    %v8711 = vadd.f32 %v8353, %v8646
    %v8712 = vadd.f32 %v8354, %v8648
    %v8713 = vadd.f32 %v8355, %v8650
    %v8714 = vadd.f32 %v8356, %v8654
    %v8715 = vadd.f32 %v8357, %v8656
    %v8716 = vadd.f32 %v8358, %v8658
    %v8717 = vadd.f32 %v8359, %v8660
    %v8718 = vadd.f32 %v8360, %v8664
    %v8719 = vadd.f32 %v8361, %v8666
    %v8720 = vadd.f32 %v8362, %v8668
    %v8721 = vadd.f32 %v8363, %v8670
    %v8722 = vadd.f32 %v8364, %v8674
    %v8723 = vadd.f32 %v8365, %v8676
    %v8724 = vadd.f32 %v8366, %v8678
    %v8725 = vadd.f32 %v8367, %v8680
    %v8726 = vadd.f32 %v8368, %v8684
    %v8727 = vadd.f32 %v8369, %v8686
    %v8728 = vadd.f32 %v8370, %v8688
    %v8729 = vadd.f32 %v8371, %v8690
    %v8730 = vadd.f32 %v8372, %v8694
    %v8731 = vadd.f32 %v8373, %v8696
    %v8732 = vadd.f32 %v8374, %v8698
    %v8733 = vadd.f32 %v8375, %v8700
    %v8734 = vld [vmem:[#allocation2 + $0x30] sm:$0xfe]
    %v8735 = vld [vmem:[#allocation2 + $0x38] sm:$0xfe]
    %v8736 = vld [vmem:[#allocation2 + $0x40] sm:$0xff]
    %v8737 = vld [vmem:[#allocation2 + $0x48] sm:$0xff]
    %v8738 = vld [vmem:[#allocation2 + $0x50] sm:$0xff]
    %v8739 = vld [vmem:[#allocation2 + $0x58] sm:$0xff]
    %v8740 = vld [vmem:[#allocation2 + $0x60] sm:$0xff]
    %v8741 = vld [vmem:[#allocation2 + $0x68] sm:$0xff]
    %v8742 = vld [vmem:[#allocation2 + $0x70] sm:$0xff]
    %v8743 = vld [vmem:[#allocation2 + $0x78] sm:$0xff]
    %v8744 = vld [vmem:[#allocation2 + $0x80] sm:$0xff]
    %v8745 = vld [vmem:[#allocation2 + $0x88] sm:$0xff]
    %v8746 = vld [vmem:[#allocation2 + $0x90] sm:$0xff]
    %v8747 = vld [vmem:[#allocation2 + $0x98] sm:$0xff]
    %v8748 = vld [vmem:[#allocation2 + $0xa0] sm:$0xff]
    %v8749 = vld [vmem:[#allocation2 + $0xa8] sm:$0xff]
    %v8750 = vld [vmem:[#allocation2 + $0xb0] sm:$0x1]
    %v8751 = vld [vmem:[#allocation2 + $0xb8] sm:$0x1]
    %v8752 = vld [vmem:[#allocation2 + $0xf0] sm:$0xfe]
    %v8753 = vld [vmem:[#allocation2 + $0xf8] sm:$0xfe]
    %v8754 = vld [vmem:[#allocation2 + $0x100] sm:$0xff]
    %v8755 = vld [vmem:[#allocation2 + $0x108] sm:$0xff]
    %v8756 = vld [vmem:[#allocation2 + $0x110] sm:$0xff]
    %v8757 = vld [vmem:[#allocation2 + $0x118] sm:$0xff]
    %v8758 = vld [vmem:[#allocation2 + $0x120] sm:$0xff]
    %v8759 = vld [vmem:[#allocation2 + $0x128] sm:$0xff]
    %v8760 = vld [vmem:[#allocation2 + $0x130] sm:$0xff]
    %v8761 = vld [vmem:[#allocation2 + $0x138] sm:$0xff]
    %v8762 = vld [vmem:[#allocation2 + $0x140] sm:$0xff]
    %v8763 = vld [vmem:[#allocation2 + $0x148] sm:$0xff]
    %v8764 = vld [vmem:[#allocation2 + $0x150] sm:$0xff]
    %v8765 = vld [vmem:[#allocation2 + $0x158] sm:$0xff]
    %v8766 = vld [vmem:[#allocation2 + $0x160] sm:$0xff]
    %v8767 = vld [vmem:[#allocation2 + $0x168] sm:$0xff]
    %v8768 = vld [vmem:[#allocation2 + $0x170] sm:$0x1]
    %v8769 = vld [vmem:[#allocation2 + $0x178] sm:$0x1]
    %v8770 = vpack.c.bf16 %v8736, %v8734
    %v8771 = vpack.c.bf16 %v8737, %v8735
    %v8772 = vpack.c.bf16 %v8740, %v8738
    %v8773 = vpack.c.bf16 %v8741, %v8739
    %v8774 = vpack.c.bf16 %v8744, %v8742
    %v8775 = vpack.c.bf16 %v8745, %v8743
    %v8776 = vpack.c.bf16 %v8748, %v8746
    %v8777 = vpack.c.bf16 %v8749, %v8747
    %v8778 = vpack.c.bf16 %v8750, %v8750
    %v8779 = vpack.c.bf16 %v8751, %v8751
    %v8780 = vpack.c.bf16 %v8754, %v8752
    %v8781 = vpack.c.bf16 %v8755, %v8753
    %v8782 = vpack.c.bf16 %v8758, %v8756
    %v8783 = vpack.c.bf16 %v8759, %v8757
    %v8784 = vpack.c.bf16 %v8762, %v8760
    %v8785 = vpack.c.bf16 %v8763, %v8761
    %v8786 = vpack.c.bf16 %v8766, %v8764
    %v8787 = vpack.c.bf16 %v8767, %v8765
    %v8788 = vpack.c.bf16 %v8768, %v8768
    %v8789 = vpack.c.bf16 %v8769, %v8769
    %v8790 = vsel %vm1149, %v8770, 0
    %v8791 = vsel %vm1149, %v8771, 0
    %v8792 = vsel %vm1150, %v8772, 0
    %v8793 = vsel %vm1150, %v8773, 0
    %v8794 = vsel %vm1150, %v8774, 0
    %v8795 = vsel %vm1150, %v8775, 0
    %v8796 = vsel %vm1150, %v8776, 0
    %v8797 = vsel %vm1150, %v8777, 0
    %v8798 = vsel %vm1151, %v8778, 0
    %v8799 = vsel %vm1151, %v8779, 0
    %v8800 = vsel %vm1149, %v8780, 0
    %v8801 = vsel %vm1149, %v8781, 0
    %v8802 = vsel %vm1150, %v8782, 0
    %v8803 = vsel %vm1150, %v8783, 0
    %v8804 = vsel %vm1150, %v8784, 0
    %v8805 = vsel %vm1150, %v8785, 0
    %v8806 = vsel %vm1150, %v8786, 0
    %v8807 = vsel %vm1150, %v8787, 0
    %v8808 = vsel %vm1151, %v8788, 0
    %v8809 = vsel %vm1151, %v8789, 0
    %v8811 = vshrl.u32 %v8790, 16
    %v8813 = vshll.u32 %v8790, 16
    %v8815 = vrot.slane %v8813, 1
    %v8816 = vor.u32 %v8811, %v8815
    %v8818 = vshll.u32 %v8792, 16
    %v8820 = vrot.slane %v8818, 1
    %v8821 = vsel %vm1172, %v8816, %v8820
    %v8823 = vshrl.u32 %v8791, 16
    %v8825 = vshll.u32 %v8791, 16
    %v8827 = vrot.slane %v8825, 1
    %v8828 = vor.u32 %v8823, %v8827
    %v8830 = vshll.u32 %v8793, 16
    %v8832 = vrot.slane %v8830, 1
    %v8833 = vsel %vm1172, %v8828, %v8832
    %v8834 = vshrl.u32 %v8792, 16
    %v8836 = vor.u32 %v8834, %v8820
    %v8838 = vshll.u32 %v8794, 16
    %v8840 = vrot.slane %v8838, 1
    %v8841 = vsel %vm1172, %v8836, %v8840
    %v8842 = vshrl.u32 %v8793, 16
    %v8844 = vor.u32 %v8842, %v8832
    %v8846 = vshll.u32 %v8795, 16
    %v8848 = vrot.slane %v8846, 1
    %v8849 = vsel %vm1172, %v8844, %v8848
    %v8850 = vshrl.u32 %v8794, 16
    %v8852 = vor.u32 %v8850, %v8840
    %v8854 = vshll.u32 %v8796, 16
    %v8856 = vrot.slane %v8854, 1
    %v8857 = vsel %vm1172, %v8852, %v8856
    %v8858 = vshrl.u32 %v8795, 16
    %v8860 = vor.u32 %v8858, %v8848
    %v8862 = vshll.u32 %v8797, 16
    %v8864 = vrot.slane %v8862, 1
    %v8865 = vsel %vm1172, %v8860, %v8864
    %v8866 = vshrl.u32 %v8796, 16
    %v8868 = vor.u32 %v8866, %v8856
    %v8870 = vshll.u32 %v8798, 16
    %v8872 = vrot.slane %v8870, 1
    %v8873 = vsel %vm1172, %v8868, %v8872
    %v8874 = vshrl.u32 %v8797, 16
    %v8876 = vor.u32 %v8874, %v8864
    %v8878 = vshll.u32 %v8799, 16
    %v8880 = vrot.slane %v8878, 1
    %v8881 = vsel %vm1172, %v8876, %v8880
    %v8883 = vshrl.u32 %v8800, 16
    %v8885 = vshll.u32 %v8800, 16
    %v8887 = vrot.slane %v8885, 1
    %v8888 = vor.u32 %v8883, %v8887
    %v8890 = vshll.u32 %v8802, 16
    %v8892 = vrot.slane %v8890, 1
    %v8893 = vsel %vm1172, %v8888, %v8892
    %v8895 = vshrl.u32 %v8801, 16
    %v8897 = vshll.u32 %v8801, 16
    %v8899 = vrot.slane %v8897, 1
    %v8900 = vor.u32 %v8895, %v8899
    %v8902 = vshll.u32 %v8803, 16
    %v8904 = vrot.slane %v8902, 1
    %v8905 = vsel %vm1172, %v8900, %v8904
    %v8906 = vshrl.u32 %v8802, 16
    %v8908 = vor.u32 %v8906, %v8892
    %v8910 = vshll.u32 %v8804, 16
    %v8912 = vrot.slane %v8910, 1
    %v8913 = vsel %vm1172, %v8908, %v8912
    %v8914 = vshrl.u32 %v8803, 16
    %v8916 = vor.u32 %v8914, %v8904
    %v8918 = vshll.u32 %v8805, 16
    %v8920 = vrot.slane %v8918, 1
    %v8921 = vsel %vm1172, %v8916, %v8920
    %v8922 = vshrl.u32 %v8804, 16
    %v8924 = vor.u32 %v8922, %v8912
    %v8926 = vshll.u32 %v8806, 16
    %v8928 = vrot.slane %v8926, 1
    %v8929 = vsel %vm1172, %v8924, %v8928
    %v8930 = vshrl.u32 %v8805, 16
    %v8932 = vor.u32 %v8930, %v8920
    %v8934 = vshll.u32 %v8807, 16
    %v8936 = vrot.slane %v8934, 1
    %v8937 = vsel %vm1172, %v8932, %v8936
    %v8938 = vshrl.u32 %v8806, 16
    %v8940 = vor.u32 %v8938, %v8928
    %v8942 = vshll.u32 %v8808, 16
    %v8944 = vrot.slane %v8942, 1
    %v8945 = vsel %vm1172, %v8940, %v8944
    %v8946 = vshrl.u32 %v8807, 16
    %v8948 = vor.u32 %v8946, %v8936
    %v8950 = vshll.u32 %v8809, 16
    %v8952 = vrot.slane %v8950, 1
    %v8953 = vsel %vm1172, %v8948, %v8952
    %s8970 = scalar_lea.vmem [#allocation9], 2048
    %v8971 = vld [vmem:[%s8970] sm:$0xff]
    %v8972 = vld [vmem:[%s8970 + $0x8] sm:$0xff]
    %v8973 = vld [vmem:[%s8970 + $0x10] sm:$0xff]
    %v8974 = vld [vmem:[%s8970 + $0x18] sm:$0xff]
    %v8975 = vld [vmem:[%s8970 + $0x20] sm:$0xff]
    %v8976 = vld [vmem:[%s8970 + $0x28] sm:$0xff]
    %v8977 = vld [vmem:[%s8970 + $0x30] sm:$0xff]
    %v8978 = vld [vmem:[%s8970 + $0x38] sm:$0xff]
    %v8979 = vld [vmem:[%s8970 + $0x40] sm:$0xff]
    %v8980 = vld [vmem:[%s8970 + $0x48] sm:$0xff]
    %v8981 = vld [vmem:[%s8970 + $0x50] sm:$0xff]
    %v8982 = vld [vmem:[%s8970 + $0x58] sm:$0xff]
    %v8983 = vld [vmem:[%s8970 + $0x60] sm:$0xff]
    %v8984 = vld [vmem:[%s8970 + $0x68] sm:$0xff]
    %v8985 = vld [vmem:[%s8970 + $0x70] sm:$0xff]
    %v8986 = vld [vmem:[%s8970 + $0x78] sm:$0xff]
    %v8987 = vld [vmem:[%s8970 + $0x80] sm:$0xff]
    %v8988 = vld [vmem:[%s8970 + $0x88] sm:$0xff]
    %v8989 = vld [vmem:[%s8970 + $0x90] sm:$0xff]
    %v8990 = vld [vmem:[%s8970 + $0x98] sm:$0xff]
    %v8991 = vld [vmem:[%s8970 + $0xa0] sm:$0xff]
    %v8992 = vld [vmem:[%s8970 + $0xa8] sm:$0xff]
    %v8993 = vld [vmem:[%s8970 + $0xb0] sm:$0xff]
    %v8994 = vld [vmem:[%s8970 + $0xb8] sm:$0xff]
    %v8995 = vld [vmem:[%s8970 + $0xc0] sm:$0xff]
    %v8996 = vld [vmem:[%s8970 + $0xc8] sm:$0xff]
    %v8997 = vld [vmem:[%s8970 + $0xd0] sm:$0xff]
    %v8998 = vld [vmem:[%s8970 + $0xd8] sm:$0xff]
    %v8999 = vld [vmem:[%s8970 + $0xe0] sm:$0xff]
    %v9000 = vld [vmem:[%s8970 + $0xe8] sm:$0xff]
    %v9001 = vld [vmem:[%s8970 + $0xf0] sm:$0xff]
    %v9002 = vld [vmem:[%s8970 + $0xf8] sm:$0xff]
    %v9035 = vunpack.c.l.b16 %v8971
    %v9036 = vunpack.c.h.b16 %v8971
    %v9037 = vunpack.c.l.b16 %v8972
    %v9038 = vunpack.c.h.b16 %v8972
    %v9039 = vunpack.c.l.b16 %v8973
    %v9040 = vunpack.c.h.b16 %v8973
    %v9041 = vunpack.c.l.b16 %v8974
    %v9042 = vunpack.c.h.b16 %v8974
    %v9043 = vunpack.c.l.b16 %v8975
    %v9044 = vunpack.c.h.b16 %v8975
    %v9045 = vunpack.c.l.b16 %v8976
    %v9046 = vunpack.c.h.b16 %v8976
    %v9047 = vunpack.c.l.b16 %v8977
    %v9048 = vunpack.c.h.b16 %v8977
    %v9049 = vunpack.c.l.b16 %v8978
    %v9050 = vunpack.c.h.b16 %v8978
    %v9051 = vunpack.c.l.b16 %v8979
    %v9052 = vunpack.c.h.b16 %v8979
    %v9053 = vunpack.c.l.b16 %v8980
    %v9054 = vunpack.c.h.b16 %v8980
    %v9055 = vunpack.c.l.b16 %v8981
    %v9056 = vunpack.c.h.b16 %v8981
    %v9057 = vunpack.c.l.b16 %v8982
    %v9058 = vunpack.c.h.b16 %v8982
    %v9059 = vunpack.c.l.b16 %v8983
    %v9060 = vunpack.c.h.b16 %v8983
    %v9061 = vunpack.c.l.b16 %v8984
    %v9062 = vunpack.c.h.b16 %v8984
    %v9063 = vunpack.c.l.b16 %v8985
    %v9064 = vunpack.c.h.b16 %v8985
    %v9065 = vunpack.c.l.b16 %v8986
    %v9066 = vunpack.c.h.b16 %v8986
    %v9067 = vunpack.c.l.b16 %v8987
    %v9068 = vunpack.c.h.b16 %v8987
    %v9069 = vunpack.c.l.b16 %v8988
    %v9070 = vunpack.c.h.b16 %v8988
    %v9071 = vunpack.c.l.b16 %v8989
    %v9072 = vunpack.c.h.b16 %v8989
    %v9073 = vunpack.c.l.b16 %v8990
    %v9074 = vunpack.c.h.b16 %v8990
    %v9075 = vunpack.c.l.b16 %v8991
    %v9076 = vunpack.c.h.b16 %v8991
    %v9077 = vunpack.c.l.b16 %v8992
    %v9078 = vunpack.c.h.b16 %v8992
    %v9079 = vunpack.c.l.b16 %v8993
    %v9080 = vunpack.c.h.b16 %v8993
    %v9081 = vunpack.c.l.b16 %v8994
    %v9082 = vunpack.c.h.b16 %v8994
    %v9083 = vunpack.c.l.b16 %v8995
    %v9084 = vunpack.c.h.b16 %v8995
    %v9085 = vunpack.c.l.b16 %v8996
    %v9086 = vunpack.c.h.b16 %v8996
    %v9087 = vunpack.c.l.b16 %v8997
    %v9088 = vunpack.c.h.b16 %v8997
    %v9089 = vunpack.c.l.b16 %v8998
    %v9090 = vunpack.c.h.b16 %v8998
    %v9091 = vunpack.c.l.b16 %v8999
    %v9092 = vunpack.c.h.b16 %v8999
    %v9093 = vunpack.c.l.b16 %v9000
    %v9094 = vunpack.c.h.b16 %v9000
    %v9095 = vunpack.c.l.b16 %v9001
    %v9096 = vunpack.c.h.b16 %v9001
    %v9097 = vunpack.c.l.b16 %v9002
    %v9098 = vunpack.c.h.b16 %v9002
    %v9099 = vpack.c.b16 %v9037, %v9035
    %v9100 = vpack.c.b16 %v9038, %v9036
    %v9101 = vpack.c.b16 %v9041, %v9039
    %v9102 = vpack.c.b16 %v9042, %v9040
    %v9103 = vpack.c.b16 %v9045, %v9043
    %v9104 = vpack.c.b16 %v9046, %v9044
    %v9105 = vpack.c.b16 %v9049, %v9047
    %v9106 = vpack.c.b16 %v9050, %v9048
    %v9107 = vpack.c.b16 %v9053, %v9051
    %v9108 = vpack.c.b16 %v9054, %v9052
    %v9109 = vpack.c.b16 %v9057, %v9055
    %v9110 = vpack.c.b16 %v9058, %v9056
    %v9111 = vpack.c.b16 %v9061, %v9059
    %v9112 = vpack.c.b16 %v9062, %v9060
    %v9113 = vpack.c.b16 %v9065, %v9063
    %v9114 = vpack.c.b16 %v9066, %v9064
    %v9115 = vpack.c.b16 %v9069, %v9067
    %v9116 = vpack.c.b16 %v9070, %v9068
    %v9117 = vpack.c.b16 %v9073, %v9071
    %v9118 = vpack.c.b16 %v9074, %v9072
    %v9119 = vpack.c.b16 %v9077, %v9075
    %v9120 = vpack.c.b16 %v9078, %v9076
    %v9121 = vpack.c.b16 %v9081, %v9079
    %v9122 = vpack.c.b16 %v9082, %v9080
    %v9123 = vpack.c.b16 %v9085, %v9083
    %v9124 = vpack.c.b16 %v9086, %v9084
    %v9125 = vpack.c.b16 %v9089, %v9087
    %v9126 = vpack.c.b16 %v9090, %v9088
    %v9127 = vpack.c.b16 %v9093, %v9091
    %v9128 = vpack.c.b16 %v9094, %v9092
    %v9129 = vpack.c.b16 %v9097, %v9095
    %v9130 = vpack.c.b16 %v9098, %v9096
    %9163 = vmatprep.subr.bf16.mxu0 %v9100
    %9164 = vmatpush1.bf16.msra.mxu0 %v9099
    %9165 = vmatprep.subr.bf16.mxu0 %v9102
    %9166 = vmatpush1.bf16.msra.mxu0 %v9101
    %9167 = vmatprep.subr.bf16.mxu0 %v9104
    %9168 = vmatpush1.bf16.msra.mxu0 %v9103
    %9169 = vmatprep.subr.bf16.mxu0 %v9106
    %9170 = vmatpush1.bf16.msra.mxu0 %v9105
    %9171 = vmatprep.subr.bf16.mxu0 %v9108
    %9172 = vmatpush1.bf16.msra.mxu0 %v9107
    %9173 = vmatprep.subr.bf16.mxu0 %v9110
    %9174 = vmatpush1.bf16.msra.mxu0 %v9109
    %9175 = vmatprep.subr.bf16.mxu0 %v9112
    %9176 = vmatpush1.bf16.msra.mxu0 %v9111
    %9177 = vmatprep.subr.bf16.mxu0 %v9114
    %9178 = vmatpush1.bf16.msra.mxu0 %v9113
    %9179 = vmatprep.subr.bf16.mxu0 %v9116
    %9180 = vmatpush1.bf16.msra.mxu0 %v9115
    %9181 = vmatprep.subr.bf16.mxu0 %v9118
    %9182 = vmatpush1.bf16.msra.mxu0 %v9117
    %9183 = vmatprep.subr.bf16.mxu0 %v9120
    %9184 = vmatpush1.bf16.msra.mxu0 %v9119
    %9185 = vmatprep.subr.bf16.mxu0 %v9122
    %9186 = vmatpush1.bf16.msra.mxu0 %v9121
    %9187 = vmatprep.subr.bf16.mxu0 %v9124
    %9188 = vmatpush1.bf16.msra.mxu0 %v9123
    %9189 = vmatprep.subr.bf16.mxu0 %v9126
    %9190 = vmatpush1.bf16.msra.mxu0 %v9125
    %9191 = vmatprep.subr.bf16.mxu0 %v9128
    %9192 = vmatpush1.bf16.msra.mxu0 %v9127
    %9193 = vmatprep.subr.bf16.mxu0 %v9130
    %9194 = vmatpush1.bf16.msra.mxu0 %v9129
    %9195 = vmatprep.mubr.bf16.mxu0 %v8833
    %9196 = vmatmul.mubr.bf16.gmra.mrb[0].mxu0 %v8821
    %v9197 = vpop.f32.mrb[0].mxu0
    %v9198 = vadd.f32 0.0, %v9197
    %v9199 = vpop.f32.mrb[0].mxu0
    %v9200 = vadd.f32 0.0, %v9199
    %v9201 = vpop.f32.mrb[0].mxu0
    %v9202 = vadd.f32 0.0, %v9201
    %v9203 = vpop.f32.mrb[0].mxu0
    %v9204 = vadd.f32 0.0, %v9203
    %9205 = vmatprep.mubr.bf16.mxu0 %v8849
    %9206 = vmatmul.mubr.bf16.gmra.mrb[0].mxu0 %v8841
    %v9207 = vpop.f32.mrb[0].mxu0
    %v9208 = vadd.f32 0.0, %v9207
    %v9209 = vpop.f32.mrb[0].mxu0
    %v9210 = vadd.f32 0.0, %v9209
    %v9211 = vpop.f32.mrb[0].mxu0
    %v9212 = vadd.f32 0.0, %v9211
    %v9213 = vpop.f32.mrb[0].mxu0
    %v9214 = vadd.f32 0.0, %v9213
    %9215 = vmatprep.mubr.bf16.mxu0 %v8865
    %9216 = vmatmul.mubr.bf16.gmra.mrb[0].mxu0 %v8857
    %v9217 = vpop.f32.mrb[0].mxu0
    %v9218 = vadd.f32 0.0, %v9217
    %v9219 = vpop.f32.mrb[0].mxu0
    %v9220 = vadd.f32 0.0, %v9219
    %v9221 = vpop.f32.mrb[0].mxu0
    %v9222 = vadd.f32 0.0, %v9221
    %v9223 = vpop.f32.mrb[0].mxu0
    %v9224 = vadd.f32 0.0, %v9223
    %9225 = vmatprep.mubr.bf16.mxu0 %v8881
    %9226 = vmatmul.mubr.bf16.gmra.mrb[0].mxu0 %v8873
    %v9227 = vpop.f32.mrb[0].mxu0
    %v9228 = vadd.f32 0.0, %v9227
    %v9229 = vpop.f32.mrb[0].mxu0
    %v9230 = vadd.f32 0.0, %v9229
    %v9231 = vpop.f32.mrb[0].mxu0
    %v9232 = vadd.f32 0.0, %v9231
    %v9233 = vpop.f32.mrb[0].mxu0
    %v9234 = vadd.f32 0.0, %v9233
    %9235 = vmatprep.mubr.bf16.mxu0 %v8905
    %9236 = vmatmul.mubr.bf16.gmra.mrb[0].mxu0 %v8893
    %v9237 = vpop.f32.mrb[0].mxu0
    %v9238 = vadd.f32 0.0, %v9237
    %v9239 = vpop.f32.mrb[0].mxu0
    %v9240 = vadd.f32 0.0, %v9239
    %v9241 = vpop.f32.mrb[0].mxu0
    %v9242 = vadd.f32 0.0, %v9241
    %v9243 = vpop.f32.mrb[0].mxu0
    %v9244 = vadd.f32 0.0, %v9243
    %9245 = vmatprep.mubr.bf16.mxu0 %v8921
    %9246 = vmatmul.mubr.bf16.gmra.mrb[0].mxu0 %v8913
    %v9247 = vpop.f32.mrb[0].mxu0
    %v9248 = vadd.f32 0.0, %v9247
    %v9249 = vpop.f32.mrb[0].mxu0
    %v9250 = vadd.f32 0.0, %v9249
    %v9251 = vpop.f32.mrb[0].mxu0
    %v9252 = vadd.f32 0.0, %v9251
    %v9253 = vpop.f32.mrb[0].mxu0
    %v9254 = vadd.f32 0.0, %v9253
    %9255 = vmatprep.mubr.bf16.mxu0 %v8937
    %9256 = vmatmul.mubr.bf16.gmra.mrb[0].mxu0 %v8929
    %v9257 = vpop.f32.mrb[0].mxu0
    %v9258 = vadd.f32 0.0, %v9257
    %v9259 = vpop.f32.mrb[0].mxu0
    %v9260 = vadd.f32 0.0, %v9259
    %v9261 = vpop.f32.mrb[0].mxu0
    %v9262 = vadd.f32 0.0, %v9261
    %v9263 = vpop.f32.mrb[0].mxu0
    %v9264 = vadd.f32 0.0, %v9263
    %9265 = vmatprep.mubr.bf16.mxu0 %v8953
    %9266 = vmatmul.mubr.bf16.gmra.mrb[0].mxu0 %v8945
    %v9267 = vpop.f32.mrb[0].mxu0
    %v9268 = vadd.f32 0.0, %v9267
    %v9269 = vpop.f32.mrb[0].mxu0
    %v9270 = vadd.f32 0.0, %v9269
    %v9271 = vpop.f32.mrb[0].mxu0
    %v9272 = vadd.f32 0.0, %v9271
    %v9273 = vpop.f32.mrb[0].mxu0
    %v9274 = vadd.f32 0.0, %v9273
    %9275 = vdwg.mxu0
    %v9276 = vadd.f32 %v8702, %v9198
    %v9277 = vadd.f32 %v8703, %v9200
    %v9278 = vadd.f32 %v8704, %v9202
    %v9279 = vadd.f32 %v8705, %v9204
    %v9280 = vadd.f32 %v8706, %v9208
    %v9281 = vadd.f32 %v8707, %v9210
    %v9282 = vadd.f32 %v8708, %v9212
    %v9283 = vadd.f32 %v8709, %v9214
    %v9284 = vadd.f32 %v8710, %v9218
    %v9285 = vadd.f32 %v8711, %v9220
    %v9286 = vadd.f32 %v8712, %v9222
    %v9287 = vadd.f32 %v8713, %v9224
    %v9288 = vadd.f32 %v8714, %v9228
    %v9289 = vadd.f32 %v8715, %v9230
    %v9290 = vadd.f32 %v8716, %v9232
    %v9291 = vadd.f32 %v8717, %v9234
    %v9292 = vadd.f32 %v8718, %v9238
    %v9293 = vadd.f32 %v8719, %v9240
    %v9294 = vadd.f32 %v8720, %v9242
    %v9295 = vadd.f32 %v8721, %v9244
    %v9296 = vadd.f32 %v8722, %v9248
    %v9297 = vadd.f32 %v8723, %v9250
    %v9298 = vadd.f32 %v8724, %v9252
    %v9299 = vadd.f32 %v8725, %v9254
    %v9300 = vadd.f32 %v8726, %v9258
    %v9301 = vadd.f32 %v8727, %v9260
    %v9302 = vadd.f32 %v8728, %v9262
    %v9303 = vadd.f32 %v8729, %v9264
    %v9304 = vadd.f32 %v8730, %v9268
    %v9305 = vadd.f32 %v8731, %v9270
    %v9306 = vadd.f32 %v8732, %v9272
    %v9307 = vadd.f32 %v8733, %v9274
    %v9308 = vld [vmem:[#allocation11] sm:$0x3]
    %v9310 = vlaneseq
    %v9311 = vshrl.u32 %v9310, 7
    %v9312 = vsub.s32 0, %v9311
    %v9313 = vrot.slane %v9308, %v9312
    %v9314 = vlaneseq
    %v9315 = vshrl.u32 %v9314, 7
    %v9316 = vsub.s32 1, %v9315
    %v9317 = vrot.slane %v9308, %v9316
    %v9320 = vadd.f32 %v9276, %v9313
    %v9321 = vadd.f32 %v9277, %v9317
    %v9322 = vadd.f32 %v9278, %v9313
    %v9323 = vadd.f32 %v9279, %v9317
    %v9324 = vadd.f32 %v9280, %v9313
    %v9325 = vadd.f32 %v9281, %v9317
    %v9326 = vadd.f32 %v9282, %v9313
    %v9327 = vadd.f32 %v9283, %v9317
    %v9328 = vadd.f32 %v9284, %v9313
    %v9329 = vadd.f32 %v9285, %v9317
    %v9330 = vadd.f32 %v9286, %v9313
    %v9331 = vadd.f32 %v9287, %v9317
    %v9332 = vadd.f32 %v9288, %v9313
    %v9333 = vadd.f32 %v9289, %v9317
    %v9334 = vadd.f32 %v9290, %v9313
    %v9335 = vadd.f32 %v9291, %v9317
    %v9336 = vadd.f32 %v9292, %v9313
    %v9337 = vadd.f32 %v9293, %v9317
    %v9338 = vadd.f32 %v9294, %v9313
    %v9339 = vadd.f32 %v9295, %v9317
    %v9340 = vadd.f32 %v9296, %v9313
    %v9341 = vadd.f32 %v9297, %v9317
    %v9342 = vadd.f32 %v9298, %v9313
    %v9343 = vadd.f32 %v9299, %v9317
    %v9344 = vadd.f32 %v9300, %v9313
    %v9345 = vadd.f32 %v9301, %v9317
    %v9346 = vadd.f32 %v9302, %v9313
    %v9347 = vadd.f32 %v9303, %v9317
    %v9348 = vadd.f32 %v9304, %v9313
    %v9349 = vadd.f32 %v9305, %v9317
    %v9350 = vadd.f32 %v9306, %v9313
    %v9351 = vadd.f32 %v9307, %v9317
    %9352 = vst [vmem:[#allocation12] sm:$0xff] %v9320
    %9353 = vst [vmem:[#allocation12 + $0x8] sm:$0xff] %v9321
    %9354 = vst [vmem:[#allocation12 + $0x10] sm:$0xff] %v9322
    %9355 = vst [vmem:[#allocation12 + $0x18] sm:$0xff] %v9323
    %9356 = vst [vmem:[#allocation12 + $0x20] sm:$0xff] %v9324
    %9357 = vst [vmem:[#allocation12 + $0x28] sm:$0xff] %v9325
    %9358 = vst [vmem:[#allocation12 + $0x30] sm:$0xff] %v9326
    %9359 = vst [vmem:[#allocation12 + $0x38] sm:$0xff] %v9327
    %9360 = vst [vmem:[#allocation12 + $0x40] sm:$0xff] %v9328
    %9361 = vst [vmem:[#allocation12 + $0x48] sm:$0xff] %v9329
    %9362 = vst [vmem:[#allocation12 + $0x50] sm:$0xff] %v9330
    %9363 = vst [vmem:[#allocation12 + $0x58] sm:$0xff] %v9331
    %9364 = vst [vmem:[#allocation12 + $0x60] sm:$0xff] %v9332
    %9365 = vst [vmem:[#allocation12 + $0x68] sm:$0xff] %v9333
    %9366 = vst [vmem:[#allocation12 + $0x70] sm:$0xff] %v9334
    %9367 = vst [vmem:[#allocation12 + $0x78] sm:$0xff] %v9335
    %9368 = vst [vmem:[#allocation12 + $0x80] sm:$0xff] %v9336
    %9369 = vst [vmem:[#allocation12 + $0x88] sm:$0xff] %v9337
    %9370 = vst [vmem:[#allocation12 + $0x90] sm:$0xff] %v9338
    %9371 = vst [vmem:[#allocation12 + $0x98] sm:$0xff] %v9339
    %9372 = vst [vmem:[#allocation12 + $0xa0] sm:$0xff] %v9340
    %9373 = vst [vmem:[#allocation12 + $0xa8] sm:$0xff] %v9341
    %9374 = vst [vmem:[#allocation12 + $0xb0] sm:$0xff] %v9342
    %9375 = vst [vmem:[#allocation12 + $0xb8] sm:$0xff] %v9343
    %9376 = vst [vmem:[#allocation12 + $0xc0] sm:$0xff] %v9344
    %9377 = vst [vmem:[#allocation12 + $0xc8] sm:$0xff] %v9345
    %9378 = vst [vmem:[#allocation12 + $0xd0] sm:$0xff] %v9346
    %9379 = vst [vmem:[#allocation12 + $0xd8] sm:$0xff] %v9347
    %9380 = vst [vmem:[#allocation12 + $0xe0] sm:$0xff] %v9348
    %9381 = vst [vmem:[#allocation12 + $0xe8] sm:$0xff] %v9349
    %9382 = vst [vmem:[#allocation12 + $0xf0] sm:$0xff] %v9350
    %9383 = vst [vmem:[#allocation12 + $0xf8] sm:$0xff] %v9351
    // Predicated region
    $region42: #{tpu_custom_call.1} parent=1 // pred_check
      _
    $region43: #{tpu_custom_call.1} parent=1 // pred_check_branch
      %9385 = sbr.rel (0) target = $region45
    $region44: #{tpu_custom_call.1} parent=1 // pred_region
      %s9387 = ssub.s32 4096, 4096
      %9388 = vsyncadd [#allocation5], %s9387
      %s9389 = sshll.u32 [#allocation12], 4
      %s9390 = int_to_ptr.vmem [resolvable:$true] %s9389
      %9395 = dma.vmem_to_hbm [thread:$0]  %s9390, 4096, %s5, [#allocation5], 256, 256, 16
    $region45: #{tpu_custom_call.1} parent=1 // pred_fallthru
      _
    // Predicated region
    $region46: #{tpu_custom_call.1} parent=1 // pred_check
      _
    $region47: #{tpu_custom_call.1} parent=1 // pred_check_branch
      %9397 = sbr.rel (0) target = $region49
    $region48: #{tpu_custom_call.1} parent=1 // pred_region
      %9398 = dma.done [#allocation5], 4096
    $region49: #{tpu_custom_call.1} parent=1 // pred_fallthru
      _
    %9399 = vsyncpa [#allocation4], 1
    %9400 = vsyncpa [#allocation7], 1
    %9401 = vsyncpa [#allocation10], 1
    %9402 = vsyncpa [#allocation5], 1

</llo_original>
